<compile_context>
chip_gen: v5e
topology: v5e:2x2
jax: 0.10.0
libtpu: 0.0.40
codegen_flags: <defaults>
</compile_context>

<pallas_src>
import jax
import jax.numpy as jnp
from jax.experimental import pallas as pl
from jax.experimental.pallas import tpu as pltpu

H = 16                 # board height
W = 16                 # board width
HW = H * W             # 256 pixels per board
C_PLANES = 4           # BoardToTensor output planes
HIDDEN = 32            # resnet hidden channels
HEAD_PAD = 8           # head weight rows padded up to one sublane tile
PAD_SEG = 32           # zero rows between boards (>= W+1, multiple of 8)
SEG = PAD_SEG + HW     # 288 rows per board segment

assert PAD_SEG >= W + 1 and PAD_SEG % 8 == 0


# ----------------------- in-kernel 3x3 conv helper ---------------------------
def _conv3x3(pad_ref, get_w, bias_row, mask_l, mask_r, L, *, relu):
    """Same-padded 3x3 conv over a batched, zero-padded flat activation slab.

    pad_ref : (R, Cin) slab; board b's pixels live at rows
              [b*SEG + PAD_SEG, b*SEG + PAD_SEG + HW); pad rows are zero.
    get_w   : k -> (Cin, Cout) per-tap weight, k = dh*3 + dw.
    The +-1 column shifts wrap across board rows in the flat layout; mask_l /
    mask_r (per output row) zero the wrapped column partial sums.  Top/bottom
    and cross-board taps read zero pad rows.
    """
    acc_c = None   # dw == 1 taps (never wrap)
    acc_l = None   # dw == 0 taps (invalid where col == 0)
    acc_r = None   # dw == 2 taps (invalid where col == W-1)
    for dh in range(3):
        for dw in range(3):
            start = PAD_SEG + (dh - 1) * W + (dw - 1)
            a = pad_ref[pl.ds(start, L), :]                       # (L, Cin)
            t = jnp.dot(a, get_w(dh * 3 + dw),
                        preferred_element_type=jnp.float32)       # (L, Cout)
            if dw == 0:
                acc_l = t if acc_l is None else acc_l + t
            elif dw == 1:
                acc_c = t if acc_c is None else acc_c + t
            else:
                acc_r = t if acc_r is None else acc_r + t
    acc = acc_c + mask_l * acc_l + mask_r * acc_r + bias_row
    if relu:
        acc = jnp.maximum(acc, 0.0)
    return acc                                                    # (L, Cout) f32


# ----------------------- fused forward kernel --------------------------------
def _make_kernel(bt):
    L = bt * SEG                # conv output rows per step
    R = L + 2 * PAD_SEG         # slab rows (extra trailing pad covers tap reach)

    def kernel(player_ref,               # SMEM (B_pad,) int32  (scalar prefetch)
               board_ref,                # (bt*HW, 1) int32
               mask_ref,                 # (L, 8) f32 constant (l, r, valid, ...)
               sw_ref,                   # stem : (9, 4, HIDDEN)
               wblk_ref,                 # block: (2, 9, HIDDEN, HIDDEN)
               bias_ref,                 # (3, HIDDEN)  [stem, conv1, conv2]
               hw_ref,                   # head : (HEAD_PAD, HIDDEN)
               out_ref,                  # (1, HEAD_PAD, L) f32
               pad_x, pad_a, pad_b):     # VMEM scratch slabs
        step = pl.program_id(0)

        # ---- zero ONLY the border rows; interiors are fully rewritten each
        # step and the per-board pad rows are kept zero by the valid mask.
        zx = jnp.zeros((PAD_SEG, C_PLANES), jnp.float32)
        zh = jnp.zeros((PAD_SEG, HIDDEN), jnp.float32)
        pad_x[pl.ds(L, 2 * PAD_SEG), :] = jnp.zeros((2 * PAD_SEG, C_PLANES),
                                                    jnp.float32)
        pad_a[pl.ds(0, PAD_SEG), :] = zh
        pad_a[pl.ds(L + PAD_SEG, PAD_SEG), :] = zh
        pad_b[pl.ds(0, PAD_SEG), :] = zh
        pad_b[pl.ds(L + PAD_SEG, PAD_SEG), :] = zh

        # ---- BoardToTensor: (own, opponent, empty, to-move) planes per board
        lane = jax.lax.broadcasted_iota(jnp.int32, (HW, C_PLANES), 1)
        for b in range(bt):
            pad_x[pl.ds(b * SEG, PAD_SEG), :] = zx          # leading pad rows
            player = player_ref[step * bt + b]              # int32 in {1, 2}
            bd = board_ref[pl.ds(b * HW, HW), :]            # (HW, 1) int32
            bvals = jnp.broadcast_to(bd, (HW, C_PLANES))
            target = jnp.where(lane == 0, player,
                               jnp.where(lane == 1, 3 - player, 0))
            planes = (bvals == target).astype(jnp.float32)  # planes 0,1,2
            to_move = (player == 1).astype(jnp.float32)
            x = jnp.where(lane == 3, to_move, planes)       # (HW, 4) f32
            pad_x[pl.ds(b * SEG + PAD_SEG, HW), :] = x

        mask_l = mask_ref[:, 0:1]                           # (L, 1)
        mask_r = mask_ref[:, 1:2]
        valid = mask_ref[:, 2:3]                            # 1 on data rows

        # ---- stem conv3x3 + ReLU
        h0 = _conv3x3(pad_x, lambda k: sw_ref[k], bias_ref[0:1, :],
                      mask_l, mask_r, L, relu=True)
        pad_a[pl.ds(PAD_SEG, L), :] = h0 * valid

        # ---- residual block: conv-relu-conv + skip + relu (VMEM resident)
        y1 = _conv3x3(pad_a, lambda k: wblk_ref[0, k], bias_ref[1:2, :],
                      mask_l, mask_r, L, relu=True)
        pad_b[pl.ds(PAD_SEG, L), :] = y1 * valid
        y2 = _conv3x3(pad_b, lambda k: wblk_ref[1, k], bias_ref[2:3, :],
                      mask_l, mask_r, L, relu=False)
        h1 = jnp.maximum(y2 + pad_a[pl.ds(PAD_SEG, L), :], 0.0)   # (L, HIDDEN)

        # ---- 1x1 policy head: trans-B dot -> lane-dense (HEAD_PAD, L) logits
        logits = jax.lax.dot_general(
            hw_ref[...], h1, (((1,), (1,)), ((), ())),
            preferred_element_type=jnp.float32)              # (HEAD_PAD, L)
        out_ref[0] = logits

    return kernel


# ----------------------- wrapper ---------------------------------------------
def _prep_conv_w(w_oihw):
    """(Cout, Cin, 3, 3) OIHW -> (9, Cin, Cout) per-tap weights, k = dh*3+dw."""
    o, i, kh, kw = w_oihw.shape
    assert (kh, kw) == (3, 3)
    return jnp.transpose(w_oihw, (2, 3, 1, 0)).reshape(9, i, o).astype(jnp.float32)


def _choose_bt(batch):
    # Amortize the grid-step fixed cost over many boards, but keep >= 2 grid
    # steps whenever possible so v7x's two TensorCores can shard the batch.
    if batch <= 1:
        return 1
    return max(1, min(8, batch // 2))


def board_wrapper_forward(board, player, params):
    B = board.shape[0]
    bt = _choose_bt(B)
    g = -(-B // bt)                       # number of grid steps
    b_pad = g * bt
    L = bt * SEG
    R = L + 2 * PAD_SEG

    if b_pad != B:                        # pad batch to a multiple of bt
        board = jnp.concatenate(
            [board, jnp.zeros((b_pad - B, H, W), board.dtype)], axis=0)
        player = jnp.concatenate(
            [player, jnp.ones((b_pad - B,), player.dtype)], axis=0)

    board_flat = board.reshape(b_pad * HW, 1).astype(jnp.int32)

    # Per-output-row masks (constant across steps -> DMA'd once):
    #   col 0: kills the dw==0 (left) wrapped column sum where col == 0
    #   col 1: kills the dw==2 (right) wrapped column sum where col == W-1
    #   col 2: 1 on real board rows, 0 on inter-board junk rows
    q = jnp.arange(L, dtype=jnp.int32) % SEG
    col = q % W
    is_data = q < HW
    masks = jnp.stack([
        jnp.where(is_data & (col == 0), 0.0, 1.0),
        jnp.where(is_data & (col == W - 1), 0.0, 1.0),
        is_data.astype(jnp.float32),
    ], axis=1).astype(jnp.float32)
    masks = jnp.pad(masks, ((0, 0), (0, 8 - masks.shape[1])))       # (L, 8)

    sw = _prep_conv_w(params["stem_w"])                             # (9, 4, 32)
    wblk = jnp.stack([_prep_conv_w(params["block"]["w1"]),
                      _prep_conv_w(params["block"]["w2"])], axis=0)  # (2,9,32,32)
    biases = jnp.stack([params["stem_b"], params["block"]["b1"],
                        params["block"]["b2"]], axis=0).astype(jnp.float32)
    hw = jnp.zeros((HEAD_PAD, HIDDEN), jnp.float32).at[0].set(
        params["head_w"].reshape(HIDDEN).astype(jnp.float32))
    hb = params["head_b"].reshape(()).astype(jnp.float32)

    out = pl.pallas_call(
        _make_kernel(bt),
        out_shape=jax.ShapeDtypeStruct((g, HEAD_PAD, L), jnp.float32),
        grid_spec=pltpu.PrefetchScalarGridSpec(
            num_scalar_prefetch=1,
            grid=(g,),
            in_specs=[
                pl.BlockSpec((bt * HW, 1), lambda i, p: (i, 0)),        # boards
                pl.BlockSpec((L, 8), lambda i, p: (0, 0)),              # masks
                pl.BlockSpec((9, C_PLANES, HIDDEN), lambda i, p: (0, 0, 0)),
                pl.BlockSpec((2, 9, HIDDEN, HIDDEN), lambda i, p: (0, 0, 0, 0)),
                pl.BlockSpec((3, HIDDEN), lambda i, p: (0, 0)),
                pl.BlockSpec((HEAD_PAD, HIDDEN), lambda i, p: (0, 0)),
            ],
            out_specs=pl.BlockSpec((1, HEAD_PAD, L), lambda i, p: (i, 0, 0)),
            scratch_shapes=[
                pltpu.VMEM((R, C_PLANES), jnp.float32),   # padded input planes
                pltpu.VMEM((R, HIDDEN), jnp.float32),     # padded stem output
                pltpu.VMEM((R, HIDDEN), jnp.float32),     # padded block mid
            ],
        ),
        compiler_params=pltpu.CompilerParams(
            dimension_semantics=("parallel",)),           # shards steps on v7x
    )(player.astype(jnp.int32), board_flat, masks, sw, wblk, biases, hw)

    # Strip the HEAD_PAD padding rows, per-board junk rows and batch padding;
    # fold in the head bias.
    logits = out[:, 0, :].reshape(b_pad, SEG)[:, :HW][:B] + hb
    return logits                                          # (B, HW) policy logits


def init_params(key):
    ks = jax.random.split(key, 8)
    n = lambda k, s: (0.1 * jax.random.normal(k, s, jnp.float32))
    return {
        "stem_w": n(ks[0], (HIDDEN, C_PLANES, 3, 3)),
        "stem_b": n(ks[1], (HIDDEN,)),
        "block": {
            "w1": n(ks[2], (HIDDEN, HIDDEN, 3, 3)),
            "b1": n(ks[3], (HIDDEN,)),
            "w2": n(ks[4], (HIDDEN, HIDDEN, 3, 3)),
            "b2": n(ks[5], (HIDDEN,)),
        },
        "head_w": n(ks[6], (1, HIDDEN, 1, 1)),
        "head_b": n(ks[7], (1,)),
    }


if __name__ == "__main__":
    key = jax.random.PRNGKey(0)
    k_board, k_player, k_params = jax.random.split(key, 3)

    B = 2
    board = jax.random.randint(k_board, (B, H, W), 0, 3, dtype=jnp.int32)
    player = jax.random.randint(k_player, (B,), 1, 3, dtype=jnp.int32)
    params = init_params(k_params)

    out = jax.jit(board_wrapper_forward)(board, player, params)
    out = jax.block_until_ready(out)
    assert out.shape == (B, HW) and out.dtype == jnp.float32
    print("KERNEL_OK")
</pallas_src>

<mosaic_0001>
module attributes {stable_mosaic.version = 11 : i64} {
  func.func @kernel(%arg0: i32, %arg1: memref<2xi32, #tpu.memory_space<smem>>, %arg2: memref<256x1xi32, #tpu.memory_space<vmem>>, %arg3: memref<288x8xf32, #tpu.memory_space<vmem>>, %arg4: memref<9x4x32xf32, #tpu.memory_space<vmem>>, %arg5: memref<2x9x32x32xf32, #tpu.memory_space<vmem>>, %arg6: memref<3x32xf32, #tpu.memory_space<vmem>>, %arg7: memref<8x32xf32, #tpu.memory_space<vmem>>, %arg8: memref<1x8x288xf32, #tpu.memory_space<vmem>>, %arg9: memref<352x4xf32, #tpu.memory_space<vmem>>, %arg10: memref<352x32xf32, #tpu.memory_space<vmem>>, %arg11: memref<352x32xf32, #tpu.memory_space<vmem>>) attributes {dimension_semantics = [#tpu.dimension_semantics<parallel>], iteration_bounds = array<i64: 2>, scalar_prefetch = 1 : i64, scratch_operands = 3 : i64, tpu.core_type = #tpu.core_type<tc>, window_params = [{transform_indices = @transform_0, window_bounds = array<i64: 256, 1>}, {pipeline_mode = #tpu.pipeline_mode<synchronous>, transform_indices = @transform_1, window_bounds = array<i64: 288, 8>}, {pipeline_mode = #tpu.pipeline_mode<synchronous>, transform_indices = @transform_2, window_bounds = array<i64: 9, 4, 32>}, {pipeline_mode = #tpu.pipeline_mode<synchronous>, transform_indices = @transform_3, window_bounds = array<i64: 2, 9, 32, 32>}, {pipeline_mode = #tpu.pipeline_mode<synchronous>, transform_indices = @transform_4, window_bounds = array<i64: 3, 32>}, {pipeline_mode = #tpu.pipeline_mode<synchronous>, transform_indices = @transform_5, window_bounds = array<i64: 8, 32>}, {transform_indices = @transform_6, window_bounds = array<i64: 1, 8, 288>}]} {
    %cst = arith.constant 0.000000e+00 : f32
    %0 = vector.broadcast %cst : f32 to vector<32x4xf32>
    %cst_0 = arith.constant 0.000000e+00 : f32
    %1 = vector.broadcast %cst_0 : f32 to vector<32x32xf32>
    %cst_1 = arith.constant 0.000000e+00 : f32
    %2 = vector.broadcast %cst_1 : f32 to vector<64x4xf32>
    %c288 = arith.constant 288 : index
    %c0 = arith.constant 0 : index
    %3 = vector.load %arg9[%c288, %c0] : memref<352x4xf32, #tpu.memory_space<vmem>>, vector<64x4xf32>
    tpu.vector_store %arg9[%c288, %c0], %2 {strides = array<i32>} : memref<352x4xf32, #tpu.memory_space<vmem>>, vector<64x4xf32>,
    %c0_2 = arith.constant 0 : index
    %c0_3 = arith.constant 0 : index
    %4 = vector.load %arg10[%c0_2, %c0_3] : memref<352x32xf32, #tpu.memory_space<vmem>>, vector<32x32xf32>
    tpu.vector_store %arg10[%c0_2, %c0_3], %1 {strides = array<i32>} : memref<352x32xf32, #tpu.memory_space<vmem>>, vector<32x32xf32>,
    %c320 = arith.constant 320 : index
    %c0_4 = arith.constant 0 : index
    %5 = vector.load %arg10[%c320, %c0_4] : memref<352x32xf32, #tpu.memory_space<vmem>>, vector<32x32xf32>
    tpu.vector_store %arg10[%c320, %c0_4], %1 {strides = array<i32>} : memref<352x32xf32, #tpu.memory_space<vmem>>, vector<32x32xf32>,
    %c0_5 = arith.constant 0 : index
    %c0_6 = arith.constant 0 : index
    %6 = vector.load %arg11[%c0_5, %c0_6] : memref<352x32xf32, #tpu.memory_space<vmem>>, vector<32x32xf32>
    tpu.vector_store %arg11[%c0_5, %c0_6], %1 {strides = array<i32>} : memref<352x32xf32, #tpu.memory_space<vmem>>, vector<32x32xf32>,
    %c320_7 = arith.constant 320 : index
    %c0_8 = arith.constant 0 : index
    %7 = vector.load %arg11[%c320_7, %c0_8] : memref<352x32xf32, #tpu.memory_space<vmem>>, vector<32x32xf32>
    tpu.vector_store %arg11[%c320_7, %c0_8], %1 {strides = array<i32>} : memref<352x32xf32, #tpu.memory_space<vmem>>, vector<32x32xf32>,
    %8 = tpu.iota {dimensions = array<i32: 1>} : vector<256x4xi32>
    %c0_9 = arith.constant 0 : index
    %c0_10 = arith.constant 0 : index
    %9 = vector.load %arg9[%c0_9, %c0_10] : memref<352x4xf32, #tpu.memory_space<vmem>>, vector<32x4xf32>
    tpu.vector_store %arg9[%c0_9, %c0_10], %0 {strides = array<i32>} : memref<352x4xf32, #tpu.memory_space<vmem>>, vector<32x4xf32>,
    %c1_i32 = arith.constant 1 : i32
    %10 = arith.muli %arg0, %c1_i32 : i32
    %c0_i32 = arith.constant 0 : i32
    %11 = arith.addi %10, %c0_i32 : i32
    %12 = arith.index_cast %11 : i32 to index
    %13 = memref.load %arg1[%12] : memref<2xi32, #tpu.memory_space<smem>>
    %c0_11 = arith.constant 0 : index
    %c0_12 = arith.constant 0 : index
    %14 = vector.load %arg2[%c0_11, %c0_12] : memref<256x1xi32, #tpu.memory_space<vmem>>, vector<256x1xi32>
    %15 = vector.shape_cast %14 : vector<256x1xi32> to vector<256x1xi32>
    %16 = vector.broadcast %15 : vector<256x1xi32> to vector<256x4xi32>
    %c0_i32_13 = arith.constant 0 : i32
    %17 = vector.broadcast %c0_i32_13 : i32 to vector<256x4xi32>
    %18 = arith.cmpi eq, %8, %17 : vector<256x4xi32>
    %c1_i32_14 = arith.constant 1 : i32
    %19 = vector.broadcast %c1_i32_14 : i32 to vector<256x4xi32>
    %20 = arith.cmpi eq, %8, %19 : vector<256x4xi32>
    %c3_i32 = arith.constant 3 : i32
    %21 = arith.subi %c3_i32, %13 : i32
    %c0_i32_15 = arith.constant 0 : i32
    %22 = vector.broadcast %21 : i32 to vector<256x4xi32>
    %23 = vector.broadcast %c0_i32_15 : i32 to vector<256x4xi32>
    %24 = arith.select %20, %22, %23 : vector<256x4xi1>, vector<256x4xi32>
    %25 = vector.broadcast %13 : i32 to vector<256x4xi32>
    %26 = arith.select %18, %25, %24 : vector<256x4xi1>, vector<256x4xi32>
    %27 = arith.cmpi eq, %16, %26 : vector<256x4xi32>
    %28 = arith.extui %27 : vector<256x4xi1> to vector<256x4xi32>
    %29 = arith.sitofp %28 : vector<256x4xi32> to vector<256x4xf32>
    %c1_i32_16 = arith.constant 1 : i32
    %30 = arith.cmpi eq, %13, %c1_i32_16 : i32
    %31 = arith.extui %30 : i1 to i32
    %32 = arith.sitofp %31 : i32 to f32
    %c3_i32_17 = arith.constant 3 : i32
    %33 = vector.broadcast %c3_i32_17 : i32 to vector<256x4xi32>
    %34 = arith.cmpi eq, %8, %33 : vector<256x4xi32>
    %35 = vector.broadcast %32 : f32 to vector<256x4xf32>
    %36 = arith.select %34, %35, %29 : vector<256x4xi1>, vector<256x4xf32>
    %c32 = arith.constant 32 : index
    %c0_18 = arith.constant 0 : index
    %37 = vector.load %arg9[%c32, %c0_18] : memref<352x4xf32, #tpu.memory_space<vmem>>, vector<256x4xf32>
    tpu.vector_store %arg9[%c32, %c0_18], %36 {strides = array<i32>} : memref<352x4xf32, #tpu.memory_space<vmem>>, vector<256x4xf32>,
    %c0_19 = arith.constant 0 : index
    %c0_20 = arith.constant 0 : index
    %38 = vector.load %arg3[%c0_19, %c0_20] : memref<288x8xf32, #tpu.memory_space<vmem>>, vector<288x1xf32>
    %c0_21 = arith.constant 0 : index
    %c1 = arith.constant 1 : index
    %39 = vector.load %arg3[%c0_21, %c1] : memref<288x8xf32, #tpu.memory_space<vmem>>, vector<288x1xf32>
    %c0_22 = arith.constant 0 : index
    %c2 = arith.constant 2 : index
    %40 = vector.load %arg3[%c0_22, %c2] : memref<288x8xf32, #tpu.memory_space<vmem>>, vector<288x1xf32>
    %c0_23 = arith.constant 0 : index
    %c0_24 = arith.constant 0 : index
    %41 = vector.load %arg6[%c0_23, %c0_24] : memref<3x32xf32, #tpu.memory_space<vmem>>, vector<1x32xf32>
    %c15 = arith.constant 15 : index
    %c0_25 = arith.constant 0 : index
    %42 = vector.load %arg9[%c15, %c0_25] : memref<352x4xf32, #tpu.memory_space<vmem>>, vector<288x4xf32>
    %c0_26 = arith.constant 0 : index
    %c0_27 = arith.constant 0 : index
    %c0_28 = arith.constant 0 : index
    %43 = vector.load %arg4[%c0_26, %c0_27, %c0_28] : memref<9x4x32xf32, #tpu.memory_space<vmem>>, vector<1x4x32xf32>
    %44 = vector.shape_cast %43 : vector<1x4x32xf32> to vector<4x32xf32>
    %cst_29 = arith.constant dense<0.000000e+00> : vector<288x32xf32>
    %45 = tpu.matmul %42, %44, %cst_29 {dimension_numbers = #tpu.dot_dimension_numbers<[1], [0], [0], [1], [0, 0, 1, 1], [], []>} : vector<288x4xf32>, vector<4x32xf32>, vector<288x32xf32> -> vector<288x32xf32>
    %c16 = arith.constant 16 : index
    %c0_30 = arith.constant 0 : index
    %46 = vector.load %arg9[%c16, %c0_30] : memref<352x4xf32, #tpu.memory_space<vmem>>, vector<288x4xf32>
    %c1_31 = arith.constant 1 : index
    %c0_32 = arith.constant 0 : index
    %c0_33 = arith.constant 0 : index
    %47 = vector.load %arg4[%c1_31, %c0_32, %c0_33] : memref<9x4x32xf32, #tpu.memory_space<vmem>>, vector<1x4x32xf32>
    %48 = vector.shape_cast %47 : vector<1x4x32xf32> to vector<4x32xf32>
    %cst_34 = arith.constant dense<0.000000e+00> : vector<288x32xf32>
    %49 = tpu.matmul %46, %48, %cst_34 {dimension_numbers = #tpu.dot_dimension_numbers<[1], [0], [0], [1], [0, 0, 1, 1], [], []>} : vector<288x4xf32>, vector<4x32xf32>, vector<288x32xf32> -> vector<288x32xf32>
    %c17 = arith.constant 17 : index
    %c0_35 = arith.constant 0 : index
    %50 = vector.load %arg9[%c17, %c0_35] : memref<352x4xf32, #tpu.memory_space<vmem>>, vector<288x4xf32>
    %c2_36 = arith.constant 2 : index
    %c0_37 = arith.constant 0 : index
    %c0_38 = arith.constant 0 : index
    %51 = vector.load %arg4[%c2_36, %c0_37, %c0_38] : memref<9x4x32xf32, #tpu.memory_space<vmem>>, vector<1x4x32xf32>
    %52 = vector.shape_cast %51 : vector<1x4x32xf32> to vector<4x32xf32>
    %cst_39 = arith.constant dense<0.000000e+00> : vector<288x32xf32>
    %53 = tpu.matmul %50, %52, %cst_39 {dimension_numbers = #tpu.dot_dimension_numbers<[1], [0], [0], [1], [0, 0, 1, 1], [], []>} : vector<288x4xf32>, vector<4x32xf32>, vector<288x32xf32> -> vector<288x32xf32>
    %c31 = arith.constant 31 : index
    %c0_40 = arith.constant 0 : index
    %54 = vector.load %arg9[%c31, %c0_40] : memref<352x4xf32, #tpu.memory_space<vmem>>, vector<288x4xf32>
    %c3 = arith.constant 3 : index
    %c0_41 = arith.constant 0 : index
    %c0_42 = arith.constant 0 : index
    %55 = vector.load %arg4[%c3, %c0_41, %c0_42] : memref<9x4x32xf32, #tpu.memory_space<vmem>>, vector<1x4x32xf32>
    %56 = vector.shape_cast %55 : vector<1x4x32xf32> to vector<4x32xf32>
    %cst_43 = arith.constant dense<0.000000e+00> : vector<288x32xf32>
    %57 = tpu.matmul %54, %56, %cst_43 {dimension_numbers = #tpu.dot_dimension_numbers<[1], [0], [0], [1], [0, 0, 1, 1], [], []>} : vector<288x4xf32>, vector<4x32xf32>, vector<288x32xf32> -> vector<288x32xf32>
    %58 = arith.addf %45, %57 : vector<288x32xf32>
    %c32_44 = arith.constant 32 : index
    %c0_45 = arith.constant 0 : index
    %59 = vector.load %arg9[%c32_44, %c0_45] : memref<352x4xf32, #tpu.memory_space<vmem>>, vector<288x4xf32>
    %c4 = arith.constant 4 : index
    %c0_46 = arith.constant 0 : index
    %c0_47 = arith.constant 0 : index
    %60 = vector.load %arg4[%c4, %c0_46, %c0_47] : memref<9x4x32xf32, #tpu.memory_space<vmem>>, vector<1x4x32xf32>
    %61 = vector.shape_cast %60 : vector<1x4x32xf32> to vector<4x32xf32>
    %cst_48 = arith.constant dense<0.000000e+00> : vector<288x32xf32>
    %62 = tpu.matmul %59, %61, %cst_48 {dimension_numbers = #tpu.dot_dimension_numbers<[1], [0], [0], [1], [0, 0, 1, 1], [], []>} : vector<288x4xf32>, vector<4x32xf32>, vector<288x32xf32> -> vector<288x32xf32>
    %63 = arith.addf %49, %62 : vector<288x32xf32>
    %c33 = arith.constant 33 : index
    %c0_49 = arith.constant 0 : index
    %64 = vector.load %arg9[%c33, %c0_49] : memref<352x4xf32, #tpu.memory_space<vmem>>, vector<288x4xf32>
    %c5 = arith.constant 5 : index
    %c0_50 = arith.constant 0 : index
    %c0_51 = arith.constant 0 : index
    %65 = vector.load %arg4[%c5, %c0_50, %c0_51] : memref<9x4x32xf32, #tpu.memory_space<vmem>>, vector<1x4x32xf32>
    %66 = vector.shape_cast %65 : vector<1x4x32xf32> to vector<4x32xf32>
    %cst_52 = arith.constant dense<0.000000e+00> : vector<288x32xf32>
    %67 = tpu.matmul %64, %66, %cst_52 {dimension_numbers = #tpu.dot_dimension_numbers<[1], [0], [0], [1], [0, 0, 1, 1], [], []>} : vector<288x4xf32>, vector<4x32xf32>, vector<288x32xf32> -> vector<288x32xf32>
    %68 = arith.addf %53, %67 : vector<288x32xf32>
    %c47 = arith.constant 47 : index
    %c0_53 = arith.constant 0 : index
    %69 = vector.load %arg9[%c47, %c0_53] : memref<352x4xf32, #tpu.memory_space<vmem>>, vector<288x4xf32>
    %c6 = arith.constant 6 : index
    %c0_54 = arith.constant 0 : index
    %c0_55 = arith.constant 0 : index
    %70 = vector.load %arg4[%c6, %c0_54, %c0_55] : memref<9x4x32xf32, #tpu.memory_space<vmem>>, vector<1x4x32xf32>
    %71 = vector.shape_cast %70 : vector<1x4x32xf32> to vector<4x32xf32>
    %cst_56 = arith.constant dense<0.000000e+00> : vector<288x32xf32>
    %72 = tpu.matmul %69, %71, %cst_56 {dimension_numbers = #tpu.dot_dimension_numbers<[1], [0], [0], [1], [0, 0, 1, 1], [], []>} : vector<288x4xf32>, vector<4x32xf32>, vector<288x32xf32> -> vector<288x32xf32>
    %73 = arith.addf %58, %72 : vector<288x32xf32>
    %c48 = arith.constant 48 : index
    %c0_57 = arith.constant 0 : index
    %74 = vector.load %arg9[%c48, %c0_57] : memref<352x4xf32, #tpu.memory_space<vmem>>, vector<288x4xf32>
    %c7 = arith.constant 7 : index
    %c0_58 = arith.constant 0 : index
    %c0_59 = arith.constant 0 : index
    %75 = vector.load %arg4[%c7, %c0_58, %c0_59] : memref<9x4x32xf32, #tpu.memory_space<vmem>>, vector<1x4x32xf32>
    %76 = vector.shape_cast %75 : vector<1x4x32xf32> to vector<4x32xf32>
    %cst_60 = arith.constant dense<0.000000e+00> : vector<288x32xf32>
    %77 = tpu.matmul %74, %76, %cst_60 {dimension_numbers = #tpu.dot_dimension_numbers<[1], [0], [0], [1], [0, 0, 1, 1], [], []>} : vector<288x4xf32>, vector<4x32xf32>, vector<288x32xf32> -> vector<288x32xf32>
    %78 = arith.addf %63, %77 : vector<288x32xf32>
    %c49 = arith.constant 49 : index
    %c0_61 = arith.constant 0 : index
    %79 = vector.load %arg9[%c49, %c0_61] : memref<352x4xf32, #tpu.memory_space<vmem>>, vector<288x4xf32>
    %c8 = arith.constant 8 : index
    %c0_62 = arith.constant 0 : index
    %c0_63 = arith.constant 0 : index
    %80 = vector.load %arg4[%c8, %c0_62, %c0_63] : memref<9x4x32xf32, #tpu.memory_space<vmem>>, vector<1x4x32xf32>
    %81 = vector.shape_cast %80 : vector<1x4x32xf32> to vector<4x32xf32>
    %cst_64 = arith.constant dense<0.000000e+00> : vector<288x32xf32>
    %82 = tpu.matmul %79, %81, %cst_64 {dimension_numbers = #tpu.dot_dimension_numbers<[1], [0], [0], [1], [0, 0, 1, 1], [], []>} : vector<288x4xf32>, vector<4x32xf32>, vector<288x32xf32> -> vector<288x32xf32>
    %83 = arith.addf %68, %82 : vector<288x32xf32>
    %84 = vector.broadcast %38 : vector<288x1xf32> to vector<288x32xf32>
    %85 = arith.mulf %84, %73 : vector<288x32xf32>
    %86 = arith.addf %78, %85 : vector<288x32xf32>
    %87 = vector.broadcast %39 : vector<288x1xf32> to vector<288x32xf32>
    %88 = arith.mulf %87, %83 : vector<288x32xf32>
    %89 = arith.addf %86, %88 : vector<288x32xf32>
    %90 = vector.broadcast %41 : vector<1x32xf32> to vector<288x32xf32>
    %91 = arith.addf %89, %90 : vector<288x32xf32>
    %cst_65 = arith.constant 0.000000e+00 : f32
    %92 = vector.broadcast %cst_65 : f32 to vector<288x32xf32>
    %93 = arith.maximumf %91, %92 : vector<288x32xf32>
    %94 = vector.broadcast %40 : vector<288x1xf32> to vector<288x32xf32>
    %95 = arith.mulf %93, %94 : vector<288x32xf32>
    %c32_66 = arith.constant 32 : index
    %c0_67 = arith.constant 0 : index
    %96 = vector.load %arg10[%c32_66, %c0_67] : memref<352x32xf32, #tpu.memory_space<vmem>>, vector<288x32xf32>
    tpu.vector_store %arg10[%c32_66, %c0_67], %95 {strides = array<i32>} : memref<352x32xf32, #tpu.memory_space<vmem>>, vector<288x32xf32>,
    %c1_68 = arith.constant 1 : index
    %c0_69 = arith.constant 0 : index
    %97 = vector.load %arg6[%c1_68, %c0_69] : memref<3x32xf32, #tpu.memory_space<vmem>>, vector<1x32xf32>
    %c15_70 = arith.constant 15 : index
    %c0_71 = arith.constant 0 : index
    %98 = vector.load %arg10[%c15_70, %c0_71] : memref<352x32xf32, #tpu.memory_space<vmem>>, vector<288x32xf32>
    %c0_72 = arith.constant 0 : index
    %c0_73 = arith.constant 0 : index
    %c0_74 = arith.constant 0 : index
    %c0_75 = arith.constant 0 : index
    %99 = vector.load %arg5[%c0_72, %c0_73, %c0_74, %c0_75] : memref<2x9x32x32xf32, #tpu.memory_space<vmem>>, vector<1x1x32x32xf32>
    %100 = vector.shape_cast %99 : vector<1x1x32x32xf32> to vector<32x32xf32>
    %cst_76 = arith.constant dense<0.000000e+00> : vector<288x32xf32>
    %101 = tpu.matmul %98, %100, %cst_76 {dimension_numbers = #tpu.dot_dimension_numbers<[1], [0], [0], [1], [0, 0, 1, 1], [], []>} : vector<288x32xf32>, vector<32x32xf32>, vector<288x32xf32> -> vector<288x32xf32>
    %c16_77 = arith.constant 16 : index
    %c0_78 = arith.constant 0 : index
    %102 = vector.load %arg10[%c16_77, %c0_78] : memref<352x32xf32, #tpu.memory_space<vmem>>, vector<288x32xf32>
    %c0_79 = arith.constant 0 : index
    %c1_80 = arith.constant 1 : index
    %c0_81 = arith.constant 0 : index
    %c0_82 = arith.constant 0 : index
    %103 = vector.load %arg5[%c0_79, %c1_80, %c0_81, %c0_82] : memref<2x9x32x32xf32, #tpu.memory_space<vmem>>, vector<1x1x32x32xf32>
    %104 = vector.shape_cast %103 : vector<1x1x32x32xf32> to vector<32x32xf32>
    %cst_83 = arith.constant dense<0.000000e+00> : vector<288x32xf32>
    %105 = tpu.matmul %102, %104, %cst_83 {dimension_numbers = #tpu.dot_dimension_numbers<[1], [0], [0], [1], [0, 0, 1, 1], [], []>} : vector<288x32xf32>, vector<32x32xf32>, vector<288x32xf32> -> vector<288x32xf32>
    %c17_84 = arith.constant 17 : index
    %c0_85 = arith.constant 0 : index
    %106 = vector.load %arg10[%c17_84, %c0_85] : memref<352x32xf32, #tpu.memory_space<vmem>>, vector<288x32xf32>
    %c0_86 = arith.constant 0 : index
    %c2_87 = arith.constant 2 : index
    %c0_88 = arith.constant 0 : index
    %c0_89 = arith.constant 0 : index
    %107 = vector.load %arg5[%c0_86, %c2_87, %c0_88, %c0_89] : memref<2x9x32x32xf32, #tpu.memory_space<vmem>>, vector<1x1x32x32xf32>
    %108 = vector.shape_cast %107 : vector<1x1x32x32xf32> to vector<32x32xf32>
    %cst_90 = arith.constant dense<0.000000e+00> : vector<288x32xf32>
    %109 = tpu.matmul %106, %108, %cst_90 {dimension_numbers = #tpu.dot_dimension_numbers<[1], [0], [0], [1], [0, 0, 1, 1], [], []>} : vector<288x32xf32>, vector<32x32xf32>, vector<288x32xf32> -> vector<288x32xf32>
    %c31_91 = arith.constant 31 : index
    %c0_92 = arith.constant 0 : index
    %110 = vector.load %arg10[%c31_91, %c0_92] : memref<352x32xf32, #tpu.memory_space<vmem>>, vector<288x32xf32>
    %c0_93 = arith.constant 0 : index
    %c3_94 = arith.constant 3 : index
    %c0_95 = arith.constant 0 : index
    %c0_96 = arith.constant 0 : index
    %111 = vector.load %arg5[%c0_93, %c3_94, %c0_95, %c0_96] : memref<2x9x32x32xf32, #tpu.memory_space<vmem>>, vector<1x1x32x32xf32>
    %112 = vector.shape_cast %111 : vector<1x1x32x32xf32> to vector<32x32xf32>
    %cst_97 = arith.constant dense<0.000000e+00> : vector<288x32xf32>
    %113 = tpu.matmul %110, %112, %cst_97 {dimension_numbers = #tpu.dot_dimension_numbers<[1], [0], [0], [1], [0, 0, 1, 1], [], []>} : vector<288x32xf32>, vector<32x32xf32>, vector<288x32xf32> -> vector<288x32xf32>
    %114 = arith.addf %101, %113 : vector<288x32xf32>
    %c32_98 = arith.constant 32 : index
    %c0_99 = arith.constant 0 : index
    %115 = vector.load %arg10[%c32_98, %c0_99] : memref<352x32xf32, #tpu.memory_space<vmem>>, vector<288x32xf32>
    %c0_100 = arith.constant 0 : index
    %c4_101 = arith.constant 4 : index
    %c0_102 = arith.constant 0 : index
    %c0_103 = arith.constant 0 : index
    %116 = vector.load %arg5[%c0_100, %c4_101, %c0_102, %c0_103] : memref<2x9x32x32xf32, #tpu.memory_space<vmem>>, vector<1x1x32x32xf32>
    %117 = vector.shape_cast %116 : vector<1x1x32x32xf32> to vector<32x32xf32>
    %cst_104 = arith.constant dense<0.000000e+00> : vector<288x32xf32>
    %118 = tpu.matmul %115, %117, %cst_104 {dimension_numbers = #tpu.dot_dimension_numbers<[1], [0], [0], [1], [0, 0, 1, 1], [], []>} : vector<288x32xf32>, vector<32x32xf32>, vector<288x32xf32> -> vector<288x32xf32>
    %119 = arith.addf %105, %118 : vector<288x32xf32>
    %c33_105 = arith.constant 33 : index
    %c0_106 = arith.constant 0 : index
    %120 = vector.load %arg10[%c33_105, %c0_106] : memref<352x32xf32, #tpu.memory_space<vmem>>, vector<288x32xf32>
    %c0_107 = arith.constant 0 : index
    %c5_108 = arith.constant 5 : index
    %c0_109 = arith.constant 0 : index
    %c0_110 = arith.constant 0 : index
    %121 = vector.load %arg5[%c0_107, %c5_108, %c0_109, %c0_110] : memref<2x9x32x32xf32, #tpu.memory_space<vmem>>, vector<1x1x32x32xf32>
    %122 = vector.shape_cast %121 : vector<1x1x32x32xf32> to vector<32x32xf32>
    %cst_111 = arith.constant dense<0.000000e+00> : vector<288x32xf32>
    %123 = tpu.matmul %120, %122, %cst_111 {dimension_numbers = #tpu.dot_dimension_numbers<[1], [0], [0], [1], [0, 0, 1, 1], [], []>} : vector<288x32xf32>, vector<32x32xf32>, vector<288x32xf32> -> vector<288x32xf32>
    %124 = arith.addf %109, %123 : vector<288x32xf32>
    %c47_112 = arith.constant 47 : index
    %c0_113 = arith.constant 0 : index
    %125 = vector.load %arg10[%c47_112, %c0_113] : memref<352x32xf32, #tpu.memory_space<vmem>>, vector<288x32xf32>
    %c0_114 = arith.constant 0 : index
    %c6_115 = arith.constant 6 : index
    %c0_116 = arith.constant 0 : index
    %c0_117 = arith.constant 0 : index
    %126 = vector.load %arg5[%c0_114, %c6_115, %c0_116, %c0_117] : memref<2x9x32x32xf32, #tpu.memory_space<vmem>>, vector<1x1x32x32xf32>
    %127 = vector.shape_cast %126 : vector<1x1x32x32xf32> to vector<32x32xf32>
    %cst_118 = arith.constant dense<0.000000e+00> : vector<288x32xf32>
    %128 = tpu.matmul %125, %127, %cst_118 {dimension_numbers = #tpu.dot_dimension_numbers<[1], [0], [0], [1], [0, 0, 1, 1], [], []>} : vector<288x32xf32>, vector<32x32xf32>, vector<288x32xf32> -> vector<288x32xf32>
    %129 = arith.addf %114, %128 : vector<288x32xf32>
    %c48_119 = arith.constant 48 : index
    %c0_120 = arith.constant 0 : index
    %130 = vector.load %arg10[%c48_119, %c0_120] : memref<352x32xf32, #tpu.memory_space<vmem>>, vector<288x32xf32>
    %c0_121 = arith.constant 0 : index
    %c7_122 = arith.constant 7 : index
    %c0_123 = arith.constant 0 : index
    %c0_124 = arith.constant 0 : index
    %131 = vector.load %arg5[%c0_121, %c7_122, %c0_123, %c0_124] : memref<2x9x32x32xf32, #tpu.memory_space<vmem>>, vector<1x1x32x32xf32>
    %132 = vector.shape_cast %131 : vector<1x1x32x32xf32> to vector<32x32xf32>
    %cst_125 = arith.constant dense<0.000000e+00> : vector<288x32xf32>
    %133 = tpu.matmul %130, %132, %cst_125 {dimension_numbers = #tpu.dot_dimension_numbers<[1], [0], [0], [1], [0, 0, 1, 1], [], []>} : vector<288x32xf32>, vector<32x32xf32>, vector<288x32xf32> -> vector<288x32xf32>
    %134 = arith.addf %119, %133 : vector<288x32xf32>
    %c49_126 = arith.constant 49 : index
    %c0_127 = arith.constant 0 : index
    %135 = vector.load %arg10[%c49_126, %c0_127] : memref<352x32xf32, #tpu.memory_space<vmem>>, vector<288x32xf32>
    %c0_128 = arith.constant 0 : index
    %c8_129 = arith.constant 8 : index
    %c0_130 = arith.constant 0 : index
    %c0_131 = arith.constant 0 : index
    %136 = vector.load %arg5[%c0_128, %c8_129, %c0_130, %c0_131] : memref<2x9x32x32xf32, #tpu.memory_space<vmem>>, vector<1x1x32x32xf32>
    %137 = vector.shape_cast %136 : vector<1x1x32x32xf32> to vector<32x32xf32>
    %cst_132 = arith.constant dense<0.000000e+00> : vector<288x32xf32>
    %138 = tpu.matmul %135, %137, %cst_132 {dimension_numbers = #tpu.dot_dimension_numbers<[1], [0], [0], [1], [0, 0, 1, 1], [], []>} : vector<288x32xf32>, vector<32x32xf32>, vector<288x32xf32> -> vector<288x32xf32>
    %139 = arith.addf %124, %138 : vector<288x32xf32>
    %140 = vector.broadcast %38 : vector<288x1xf32> to vector<288x32xf32>
    %141 = arith.mulf %140, %129 : vector<288x32xf32>
    %142 = arith.addf %134, %141 : vector<288x32xf32>
    %143 = vector.broadcast %39 : vector<288x1xf32> to vector<288x32xf32>
    %144 = arith.mulf %143, %139 : vector<288x32xf32>
    %145 = arith.addf %142, %144 : vector<288x32xf32>
    %146 = vector.broadcast %97 : vector<1x32xf32> to vector<288x32xf32>
    %147 = arith.addf %145, %146 : vector<288x32xf32>
    %cst_133 = arith.constant 0.000000e+00 : f32
    %148 = vector.broadcast %cst_133 : f32 to vector<288x32xf32>
    %149 = arith.maximumf %147, %148 : vector<288x32xf32>
    %150 = vector.broadcast %40 : vector<288x1xf32> to vector<288x32xf32>
    %151 = arith.mulf %149, %150 : vector<288x32xf32>
    %c32_134 = arith.constant 32 : index
    %c0_135 = arith.constant 0 : index
    %152 = vector.load %arg11[%c32_134, %c0_135] : memref<352x32xf32, #tpu.memory_space<vmem>>, vector<288x32xf32>
    tpu.vector_store %arg11[%c32_134, %c0_135], %151 {strides = array<i32>} : memref<352x32xf32, #tpu.memory_space<vmem>>, vector<288x32xf32>,
    %c2_136 = arith.constant 2 : index
    %c0_137 = arith.constant 0 : index
    %153 = vector.load %arg6[%c2_136, %c0_137] : memref<3x32xf32, #tpu.memory_space<vmem>>, vector<1x32xf32>
    %c15_138 = arith.constant 15 : index
    %c0_139 = arith.constant 0 : index
    %154 = vector.load %arg11[%c15_138, %c0_139] : memref<352x32xf32, #tpu.memory_space<vmem>>, vector<288x32xf32>
    %c1_140 = arith.constant 1 : index
    %c0_141 = arith.constant 0 : index
    %c0_142 = arith.constant 0 : index
    %c0_143 = arith.constant 0 : index
    %155 = vector.load %arg5[%c1_140, %c0_141, %c0_142, %c0_143] : memref<2x9x32x32xf32, #tpu.memory_space<vmem>>, vector<1x1x32x32xf32>
    %156 = vector.shape_cast %155 : vector<1x1x32x32xf32> to vector<32x32xf32>
    %cst_144 = arith.constant dense<0.000000e+00> : vector<288x32xf32>
    %157 = tpu.matmul %154, %156, %cst_144 {dimension_numbers = #tpu.dot_dimension_numbers<[1], [0], [0], [1], [0, 0, 1, 1], [], []>} : vector<288x32xf32>, vector<32x32xf32>, vector<288x32xf32> -> vector<288x32xf32>
    %c16_145 = arith.constant 16 : index
    %c0_146 = arith.constant 0 : index
    %158 = vector.load %arg11[%c16_145, %c0_146] : memref<352x32xf32, #tpu.memory_space<vmem>>, vector<288x32xf32>
    %c1_147 = arith.constant 1 : index
    %c1_148 = arith.constant 1 : index
    %c0_149 = arith.constant 0 : index
    %c0_150 = arith.constant 0 : index
    %159 = vector.load %arg5[%c1_147, %c1_148, %c0_149, %c0_150] : memref<2x9x32x32xf32, #tpu.memory_space<vmem>>, vector<1x1x32x32xf32>
    %160 = vector.shape_cast %159 : vector<1x1x32x32xf32> to vector<32x32xf32>
    %cst_151 = arith.constant dense<0.000000e+00> : vector<288x32xf32>
    %161 = tpu.matmul %158, %160, %cst_151 {dimension_numbers = #tpu.dot_dimension_numbers<[1], [0], [0], [1], [0, 0, 1, 1], [], []>} : vector<288x32xf32>, vector<32x32xf32>, vector<288x32xf32> -> vector<288x32xf32>
    %c17_152 = arith.constant 17 : index
    %c0_153 = arith.constant 0 : index
    %162 = vector.load %arg11[%c17_152, %c0_153] : memref<352x32xf32, #tpu.memory_space<vmem>>, vector<288x32xf32>
    %c1_154 = arith.constant 1 : index
    %c2_155 = arith.constant 2 : index
    %c0_156 = arith.constant 0 : index
    %c0_157 = arith.constant 0 : index
    %163 = vector.load %arg5[%c1_154, %c2_155, %c0_156, %c0_157] : memref<2x9x32x32xf32, #tpu.memory_space<vmem>>, vector<1x1x32x32xf32>
    %164 = vector.shape_cast %163 : vector<1x1x32x32xf32> to vector<32x32xf32>
    %cst_158 = arith.constant dense<0.000000e+00> : vector<288x32xf32>
    %165 = tpu.matmul %162, %164, %cst_158 {dimension_numbers = #tpu.dot_dimension_numbers<[1], [0], [0], [1], [0, 0, 1, 1], [], []>} : vector<288x32xf32>, vector<32x32xf32>, vector<288x32xf32> -> vector<288x32xf32>
    %c31_159 = arith.constant 31 : index
    %c0_160 = arith.constant 0 : index
    %166 = vector.load %arg11[%c31_159, %c0_160] : memref<352x32xf32, #tpu.memory_space<vmem>>, vector<288x32xf32>
    %c1_161 = arith.constant 1 : index
    %c3_162 = arith.constant 3 : index
    %c0_163 = arith.constant 0 : index
    %c0_164 = arith.constant 0 : index
    %167 = vector.load %arg5[%c1_161, %c3_162, %c0_163, %c0_164] : memref<2x9x32x32xf32, #tpu.memory_space<vmem>>, vector<1x1x32x32xf32>
    %168 = vector.shape_cast %167 : vector<1x1x32x32xf32> to vector<32x32xf32>
    %cst_165 = arith.constant dense<0.000000e+00> : vector<288x32xf32>
    %169 = tpu.matmul %166, %168, %cst_165 {dimension_numbers = #tpu.dot_dimension_numbers<[1], [0], [0], [1], [0, 0, 1, 1], [], []>} : vector<288x32xf32>, vector<32x32xf32>, vector<288x32xf32> -> vector<288x32xf32>
    %170 = arith.addf %157, %169 : vector<288x32xf32>
    %c32_166 = arith.constant 32 : index
    %c0_167 = arith.constant 0 : index
    %171 = vector.load %arg11[%c32_166, %c0_167] : memref<352x32xf32, #tpu.memory_space<vmem>>, vector<288x32xf32>
    %c1_168 = arith.constant 1 : index
    %c4_169 = arith.constant 4 : index
    %c0_170 = arith.constant 0 : index
    %c0_171 = arith.constant 0 : index
    %172 = vector.load %arg5[%c1_168, %c4_169, %c0_170, %c0_171] : memref<2x9x32x32xf32, #tpu.memory_space<vmem>>, vector<1x1x32x32xf32>
    %173 = vector.shape_cast %172 : vector<1x1x32x32xf32> to vector<32x32xf32>
    %cst_172 = arith.constant dense<0.000000e+00> : vector<288x32xf32>
    %174 = tpu.matmul %171, %173, %cst_172 {dimension_numbers = #tpu.dot_dimension_numbers<[1], [0], [0], [1], [0, 0, 1, 1], [], []>} : vector<288x32xf32>, vector<32x32xf32>, vector<288x32xf32> -> vector<288x32xf32>
    %175 = arith.addf %161, %174 : vector<288x32xf32>
    %c33_173 = arith.constant 33 : index
    %c0_174 = arith.constant 0 : index
    %176 = vector.load %arg11[%c33_173, %c0_174] : memref<352x32xf32, #tpu.memory_space<vmem>>, vector<288x32xf32>
    %c1_175 = arith.constant 1 : index
    %c5_176 = arith.constant 5 : index
    %c0_177 = arith.constant 0 : index
    %c0_178 = arith.constant 0 : index
    %177 = vector.load %arg5[%c1_175, %c5_176, %c0_177, %c0_178] : memref<2x9x32x32xf32, #tpu.memory_space<vmem>>, vector<1x1x32x32xf32>
    %178 = vector.shape_cast %177 : vector<1x1x32x32xf32> to vector<32x32xf32>
    %cst_179 = arith.constant dense<0.000000e+00> : vector<288x32xf32>
    %179 = tpu.matmul %176, %178, %cst_179 {dimension_numbers = #tpu.dot_dimension_numbers<[1], [0], [0], [1], [0, 0, 1, 1], [], []>} : vector<288x32xf32>, vector<32x32xf32>, vector<288x32xf32> -> vector<288x32xf32>
    %180 = arith.addf %165, %179 : vector<288x32xf32>
    %c47_180 = arith.constant 47 : index
    %c0_181 = arith.constant 0 : index
    %181 = vector.load %arg11[%c47_180, %c0_181] : memref<352x32xf32, #tpu.memory_space<vmem>>, vector<288x32xf32>
    %c1_182 = arith.constant 1 : index
    %c6_183 = arith.constant 6 : index
    %c0_184 = arith.constant 0 : index
    %c0_185 = arith.constant 0 : index
    %182 = vector.load %arg5[%c1_182, %c6_183, %c0_184, %c0_185] : memref<2x9x32x32xf32, #tpu.memory_space<vmem>>, vector<1x1x32x32xf32>
    %183 = vector.shape_cast %182 : vector<1x1x32x32xf32> to vector<32x32xf32>
    %cst_186 = arith.constant dense<0.000000e+00> : vector<288x32xf32>
    %184 = tpu.matmul %181, %183, %cst_186 {dimension_numbers = #tpu.dot_dimension_numbers<[1], [0], [0], [1], [0, 0, 1, 1], [], []>} : vector<288x32xf32>, vector<32x32xf32>, vector<288x32xf32> -> vector<288x32xf32>
    %185 = arith.addf %170, %184 : vector<288x32xf32>
    %c48_187 = arith.constant 48 : index
    %c0_188 = arith.constant 0 : index
    %186 = vector.load %arg11[%c48_187, %c0_188] : memref<352x32xf32, #tpu.memory_space<vmem>>, vector<288x32xf32>
    %c1_189 = arith.constant 1 : index
    %c7_190 = arith.constant 7 : index
    %c0_191 = arith.constant 0 : index
    %c0_192 = arith.constant 0 : index
    %187 = vector.load %arg5[%c1_189, %c7_190, %c0_191, %c0_192] : memref<2x9x32x32xf32, #tpu.memory_space<vmem>>, vector<1x1x32x32xf32>
    %188 = vector.shape_cast %187 : vector<1x1x32x32xf32> to vector<32x32xf32>
    %cst_193 = arith.constant dense<0.000000e+00> : vector<288x32xf32>
    %189 = tpu.matmul %186, %188, %cst_193 {dimension_numbers = #tpu.dot_dimension_numbers<[1], [0], [0], [1], [0, 0, 1, 1], [], []>} : vector<288x32xf32>, vector<32x32xf32>, vector<288x32xf32> -> vector<288x32xf32>
    %190 = arith.addf %175, %189 : vector<288x32xf32>
    %c49_194 = arith.constant 49 : index
    %c0_195 = arith.constant 0 : index
    %191 = vector.load %arg11[%c49_194, %c0_195] : memref<352x32xf32, #tpu.memory_space<vmem>>, vector<288x32xf32>
    %c1_196 = arith.constant 1 : index
    %c8_197 = arith.constant 8 : index
    %c0_198 = arith.constant 0 : index
    %c0_199 = arith.constant 0 : index
    %192 = vector.load %arg5[%c1_196, %c8_197, %c0_198, %c0_199] : memref<2x9x32x32xf32, #tpu.memory_space<vmem>>, vector<1x1x32x32xf32>
    %193 = vector.shape_cast %192 : vector<1x1x32x32xf32> to vector<32x32xf32>
    %cst_200 = arith.constant dense<0.000000e+00> : vector<288x32xf32>
    %194 = tpu.matmul %191, %193, %cst_200 {dimension_numbers = #tpu.dot_dimension_numbers<[1], [0], [0], [1], [0, 0, 1, 1], [], []>} : vector<288x32xf32>, vector<32x32xf32>, vector<288x32xf32> -> vector<288x32xf32>
    %195 = arith.addf %180, %194 : vector<288x32xf32>
    %196 = vector.broadcast %38 : vector<288x1xf32> to vector<288x32xf32>
    %197 = arith.mulf %196, %185 : vector<288x32xf32>
    %198 = arith.addf %190, %197 : vector<288x32xf32>
    %199 = vector.broadcast %39 : vector<288x1xf32> to vector<288x32xf32>
    %200 = arith.mulf %199, %195 : vector<288x32xf32>
    %201 = arith.addf %198, %200 : vector<288x32xf32>
    %202 = vector.broadcast %153 : vector<1x32xf32> to vector<288x32xf32>
    %203 = arith.addf %201, %202 : vector<288x32xf32>
    %c32_201 = arith.constant 32 : index
    %c0_202 = arith.constant 0 : index
    %204 = vector.load %arg10[%c32_201, %c0_202] : memref<352x32xf32, #tpu.memory_space<vmem>>, vector<288x32xf32>
    %205 = arith.addf %203, %204 : vector<288x32xf32>
    %cst_203 = arith.constant 0.000000e+00 : f32
    %206 = vector.broadcast %cst_203 : f32 to vector<288x32xf32>
    %207 = arith.maximumf %205, %206 : vector<288x32xf32>
    %c0_204 = arith.constant 0 : index
    %c0_205 = arith.constant 0 : index
    %208 = vector.load %arg7[%c0_204, %c0_205] : memref<8x32xf32, #tpu.memory_space<vmem>>, vector<8x32xf32>
    %cst_206 = arith.constant dense<0.000000e+00> : vector<8x288xf32>
    %209 = tpu.matmul %208, %207, %cst_206 {dimension_numbers = #tpu.dot_dimension_numbers<[1], [1], [0], [0], [0, 0, 1, 0], [], []>} : vector<8x32xf32>, vector<288x32xf32>, vector<8x288xf32> -> vector<8x288xf32>
    %c0_207 = arith.constant 0 : index
    %c0_208 = arith.constant 0 : index
    %c0_209 = arith.constant 0 : index
    %210 = vector.load %arg8[%c0_207, %c0_208, %c0_209] : memref<1x8x288xf32, #tpu.memory_space<vmem>>, vector<1x8x288xf32>
    %211 = vector.shape_cast %210 : vector<1x8x288xf32> to vector<8x288xf32>
    %212 = vector.shape_cast %209 : vector<8x288xf32> to vector<1x8x288xf32>
    tpu.vector_store %arg8[%c0_207, %c0_208, %c0_209], %212 {strides = array<i32>} : memref<1x8x288xf32, #tpu.memory_space<vmem>>, vector<1x8x288xf32>,
    return
  }
  func.func @transform_0(%arg0: i32, %arg1: memref<2xi32, #tpu.memory_space<smem>>) -> (i32, i32) {
    %c0_i32 = arith.constant 0 : i32
    %c0_i32_0 = arith.constant 0 : i32
    return %arg0, %c0_i32 : i32, i32
  }
  func.func @transform_1(%arg0: i32, %arg1: memref<2xi32, #tpu.memory_space<smem>>) -> (i32, i32) {
    %c0_i32 = arith.constant 0 : i32
    %c0_i32_0 = arith.constant 0 : i32
    %c0_i32_1 = arith.constant 0 : i32
    return %c0_i32, %c0_i32_0 : i32, i32
  }
  func.func @transform_2(%arg0: i32, %arg1: memref<2xi32, #tpu.memory_space<smem>>) -> (i32, i32, i32) {
    %c0_i32 = arith.constant 0 : i32
    %c0_i32_0 = arith.constant 0 : i32
    %c0_i32_1 = arith.constant 0 : i32
    %c0_i32_2 = arith.constant 0 : i32
    return %c0_i32, %c0_i32_0, %c0_i32_1 : i32, i32, i32
  }
  func.func @transform_3(%arg0: i32, %arg1: memref<2xi32, #tpu.memory_space<smem>>) -> (i32, i32, i32, i32) {
    %c0_i32 = arith.constant 0 : i32
    %c0_i32_0 = arith.constant 0 : i32
    %c0_i32_1 = arith.constant 0 : i32
    %c0_i32_2 = arith.constant 0 : i32
    %c0_i32_3 = arith.constant 0 : i32
    return %c0_i32, %c0_i32_0, %c0_i32_1, %c0_i32_2 : i32, i32, i32, i32
  }
  func.func @transform_4(%arg0: i32, %arg1: memref<2xi32, #tpu.memory_space<smem>>) -> (i32, i32) {
    %c0_i32 = arith.constant 0 : i32
    %c0_i32_0 = arith.constant 0 : i32
    %c0_i32_1 = arith.constant 0 : i32
    return %c0_i32, %c0_i32_0 : i32, i32
  }
  func.func @transform_5(%arg0: i32, %arg1: memref<2xi32, #tpu.memory_space<smem>>) -> (i32, i32) {
    %c0_i32 = arith.constant 0 : i32
    %c0_i32_0 = arith.constant 0 : i32
    %c0_i32_1 = arith.constant 0 : i32
    return %c0_i32, %c0_i32_0 : i32, i32
  }
  func.func @transform_6(%arg0: i32, %arg1: memref<2xi32, #tpu.memory_space<smem>>) -> (i32, i32, i32) {
    %c0_i32 = arith.constant 0 : i32
    %c0_i32_0 = arith.constant 0 : i32
    %c0_i32_1 = arith.constant 0 : i32
    return %arg0, %c0_i32, %c0_i32_0 : i32, i32, i32
  }
}

</mosaic_0001>

<llo_original>
// kernel: board_wrapper_forward.1
$region0: #{board_wrapper_forward.1}
  #allocation0 [shape = 'u32[]', space=smem, size = 0x4, offset = 0x4, fixed_abs, tag = 'smem constant byte address 0x4 - core index']
  #allocation1 [shape = 'u32[72,128]{1,0:T(1,128)}', space=vmem, size = 0x9000, scoped, tag = 'internal scratch']
  #allocation2 [shape = 'f32[352,4]{1,0:T(8,128)}', space=vmem, size = 0x2c000, scoped, tag = 'scratch operand']
  #allocation3 [shape = 'f32[352,32]{1,0:T(8,128)}', space=vmem, size = 0x2c000, scoped, tag = 'scratch operand']
  #allocation4 [shape = 'f32[352,32]{1,0:T(8,128)}', space=vmem, size = 0x2c000, scoped, tag = 'scratch operand']
  #allocation5 [shape = 's32[1]{0}', space=sflag, size = 0x4, scoped, tag = 'scoped memory for board_wrapper_forward.1']
  #allocation6 [shape = 'u8[512]{0}', space=smem, size = 0x200, scoped, tag = 'prefetched SMEM operand 0']
  %s0 = inlined_call_operand.vmem [shape: s32[2], index: 0, kind: input, shape index: {}]
  %s1 = inlined_call_operand.vmem [shape: s32[512,1], index: 1, kind: input, shape index: {}]
  %s2 = inlined_call_operand.vmem [shape: f32[288,8], index: 2, kind: input, shape index: {}]
  %s3 = inlined_call_operand.vmem [shape: f32[9,4,32], index: 3, kind: input, shape index: {}]
  %s4 = inlined_call_operand.vmem [shape: f32[2,9,32,32], index: 4, kind: input, shape index: {}]
  %s5 = inlined_call_operand.vmem [shape: f32[3,32], index: 5, kind: input, shape index: {}]
  %s6 = inlined_call_operand.vmem [shape: f32[8,32], index: 6, kind: input, shape index: {}]
  %s7 = inlined_call_operand.vmem [shape: f32[2,8,288], index: 7, kind: output, shape index: {}]
  %s8 = sld [smem:[#allocation0]]
  $region57: #{board_wrapper_forward.1} parent=0
    _
  %s10 = ssub.s32 1, %s8
  %s11 = scalar_select 0, %s10, %s8
  %s13 = sshll.u32 %s0, 4
  %s14 = int_to_ptr.vmem [resolvable:$true] %s13
  %16 = dma.vmem_to_smem %s14, 16, [#allocation6], [#allocation5]
  %18 = dma.done [#allocation5], 16
  %19 = sfence
  loop: start=0, step=1, limit=4
  $region2: #{board_wrapper_forward.1} parent=0 // loop_pre_header
    _
  $region3: #{board_wrapper_forward.1} parent=0 // loop_header
    %s21 = sphi 0, %s25
    %p22 = scmp.ge.s32.totalorder %s21, 4
    %s31 = sphi 0, %s33
    %s34 = sphi 0, %s31
    %s35 = sphi 0, %s34
    %s51 = sphi 0, %s35
    %s55 = sphi 0, %s55
    %s57 = sphi 0, %s55
    %s58 = sphi 0, %s57
    %s72 = sphi 0, %s58
    %s76 = sphi 0, %s76
    %s78 = sphi 0, %s76
    %s79 = sphi 0, %s78
    %s93 = sphi 0, %s79
    %s97 = sphi 0, %s97
    %s99 = sphi 0, %s97
    %s100 = sphi 0, %s99
    %s114 = sphi 0, %s100
    %s118 = sphi 0, %s118
    %s120 = sphi 0, %s118
    %s121 = sphi 0, %s120
    %s135 = sphi 0, %s121
    %s139 = sphi 0, %s139
    %s141 = sphi 0, %s139
    %s142 = sphi 0, %s141
    %s156 = sphi 0, %s142
    %s162 = sphi 0, %s164
    %s165 = sphi 0, %s162
    %s166 = sphi 0, %s165
    %s182 = sphi 0, %s166
  $region4: #{board_wrapper_forward.1} parent=0 // loop_header_branch
    %24 = sbr.rel (%p22) target = $region8
  $region5: #{board_wrapper_forward.1} parent=0 // loop_body
    %s26 = ssub.s32 %s21, 1
    %s27 = ssub.s32 %s21, 2
    %s28 = sadd.s32 %s21, 1
    %s29 = ssub.s32 %s21, %s28
    %p30 = scmp.eq.s32.totalorder %s29, 0
    %s32 = sadd.s32 %s31, 1
    %s33 = scalar_select %p30, %s31, %s32
    %p36 = pneg %p30
    %p37 = scmp.eq.s32.totalorder %s21, 1
    %p38 = por %p36, %p37
    %p39 = scmp.ne.s32.totalorder %s31, %s34
    %p40 = scmp.eq.s32.totalorder %s21, 0
    %p41 = por %p39, %p40
    %p42 = scmp.ne.s32.totalorder %s31, %s34
    %p43 = scmp.eq.s32.totalorder %s26, 1
    %p44 = por %p42, %p43
    %p45 = scmp.ne.s32.totalorder %s34, %s35
    %p46 = scmp.eq.s32.totalorder %s26, 0
    %p47 = por %p45, %p46
    %p48 = scmp.ne.s32.totalorder %s34, %s35
    %p49 = scmp.eq.s32.totalorder %s27, 1
    %p50 = por %p48, %p49
    %p52 = scmp.ne.s32.totalorder %s35, %s51
    %p53 = scmp.eq.s32.totalorder %s27, 0
    %p54 = por %p52, %p53
    %s56 = sadd.s32 %s55, 1
    %p59 = scmp.eq.s32.totalorder %s21, 1
    %p60 = scmp.ne.s32.totalorder %s55, %s57
    %p61 = scmp.eq.s32.totalorder %s21, 0
    %p62 = por %p60, %p61
    %p63 = scmp.ne.s32.totalorder %s55, %s57
    %p64 = scmp.eq.s32.totalorder %s26, 1
    %p65 = por %p63, %p64
    %p66 = scmp.ne.s32.totalorder %s57, %s58
    %p67 = scmp.eq.s32.totalorder %s26, 0
    %p68 = por %p66, %p67
    %p69 = scmp.ne.s32.totalorder %s57, %s58
    %p70 = scmp.eq.s32.totalorder %s27, 1
    %p71 = por %p69, %p70
    %p73 = scmp.ne.s32.totalorder %s58, %s72
    %p74 = scmp.eq.s32.totalorder %s27, 0
    %p75 = por %p73, %p74
    %s77 = sadd.s32 %s76, 1
    %p80 = scmp.eq.s32.totalorder %s21, 1
    %p81 = scmp.ne.s32.totalorder %s76, %s78
    %p82 = scmp.eq.s32.totalorder %s21, 0
    %p83 = por %p81, %p82
    %p84 = scmp.ne.s32.totalorder %s76, %s78
    %p85 = scmp.eq.s32.totalorder %s26, 1
    %p86 = por %p84, %p85
    %p87 = scmp.ne.s32.totalorder %s78, %s79
    %p88 = scmp.eq.s32.totalorder %s26, 0
    %p89 = por %p87, %p88
    %p90 = scmp.ne.s32.totalorder %s78, %s79
    %p91 = scmp.eq.s32.totalorder %s27, 1
    %p92 = por %p90, %p91
    %p94 = scmp.ne.s32.totalorder %s79, %s93
    %p95 = scmp.eq.s32.totalorder %s27, 0
    %p96 = por %p94, %p95
    %s98 = sadd.s32 %s97, 1
    %p101 = scmp.eq.s32.totalorder %s21, 1
    %p102 = scmp.ne.s32.totalorder %s97, %s99
    %p103 = scmp.eq.s32.totalorder %s21, 0
    %p104 = por %p102, %p103
    %p105 = scmp.ne.s32.totalorder %s97, %s99
    %p106 = scmp.eq.s32.totalorder %s26, 1
    %p107 = por %p105, %p106
    %p108 = scmp.ne.s32.totalorder %s99, %s100
    %p109 = scmp.eq.s32.totalorder %s26, 0
    %p110 = por %p108, %p109
    %p111 = scmp.ne.s32.totalorder %s99, %s100
    %p112 = scmp.eq.s32.totalorder %s27, 1
    %p113 = por %p111, %p112
    %p115 = scmp.ne.s32.totalorder %s100, %s114
    %p116 = scmp.eq.s32.totalorder %s27, 0
    %p117 = por %p115, %p116
    %s119 = sadd.s32 %s118, 1
    %p122 = scmp.eq.s32.totalorder %s21, 1
    %p123 = scmp.ne.s32.totalorder %s118, %s120
    %p124 = scmp.eq.s32.totalorder %s21, 0
    %p125 = por %p123, %p124
    %p126 = scmp.ne.s32.totalorder %s118, %s120
    %p127 = scmp.eq.s32.totalorder %s26, 1
    %p128 = por %p126, %p127
    %p129 = scmp.ne.s32.totalorder %s120, %s121
    %p130 = scmp.eq.s32.totalorder %s26, 0
    %p131 = por %p129, %p130
    %p132 = scmp.ne.s32.totalorder %s120, %s121
    %p133 = scmp.eq.s32.totalorder %s27, 1
    %p134 = por %p132, %p133
    %p136 = scmp.ne.s32.totalorder %s121, %s135
    %p137 = scmp.eq.s32.totalorder %s27, 0
    %p138 = por %p136, %p137
    %s140 = sadd.s32 %s139, 1
    %p143 = scmp.eq.s32.totalorder %s21, 1
    %p144 = scmp.ne.s32.totalorder %s139, %s141
    %p145 = scmp.eq.s32.totalorder %s21, 0
    %p146 = por %p144, %p145
    %p147 = scmp.ne.s32.totalorder %s139, %s141
    %p148 = scmp.eq.s32.totalorder %s26, 1
    %p149 = por %p147, %p148
    %p150 = scmp.ne.s32.totalorder %s141, %s142
    %p151 = scmp.eq.s32.totalorder %s26, 0
    %p152 = por %p150, %p151
    %p153 = scmp.ne.s32.totalorder %s141, %s142
    %p154 = scmp.eq.s32.totalorder %s27, 1
    %p155 = por %p153, %p154
    %p157 = scmp.ne.s32.totalorder %s142, %s156
    %p158 = scmp.eq.s32.totalorder %s27, 0
    %p159 = por %p157, %p158
    %s160 = ssub.s32 %s21, %s28
    %p161 = scmp.eq.s32.totalorder %s160, 0
    %s163 = sadd.s32 %s162, 1
    %s164 = scalar_select %p161, %s162, %s163
    %p167 = pneg %p161
    %p168 = scmp.eq.s32.totalorder %s21, 1
    %p169 = por %p167, %p168
    %p170 = scmp.ne.s32.totalorder %s162, %s165
    %p171 = scmp.eq.s32.totalorder %s21, 0
    %p172 = por %p170, %p171
    %p173 = scmp.ne.s32.totalorder %s162, %s165
    %p174 = scmp.eq.s32.totalorder %s26, 1
    %p175 = por %p173, %p174
    %p176 = scmp.ne.s32.totalorder %s165, %s166
    %p177 = scmp.eq.s32.totalorder %s26, 0
    %p178 = por %p176, %p177
    %p179 = scmp.ne.s32.totalorder %s165, %s166
    %p180 = scmp.eq.s32.totalorder %s27, 1
    %p181 = por %p179, %p180
    %p183 = scmp.ne.s32.totalorder %s166, %s182
    %p184 = scmp.eq.s32.totalorder %s27, 0
    %p185 = por %p183, %p184
    %p186 = scmp.le.s32.totalorder 1, %s21
    %p187 = scmp.lt.s32.totalorder %s21, 3
    %p188 = pnand %p186, %p187
    %p189 = pneg %p188
    // Predicated region
    $region9: #{board_wrapper_forward.1} parent=5 // pred_check
      _
    $region10: #{board_wrapper_forward.1} parent=5 // pred_check_branch
      %191 = sbr.rel (%p188) target = $region12
    $region11: #{board_wrapper_forward.1} parent=5 // pred_region
      %s192 = ssub.s32 %s21, 1
      // Predicated region
      $region13: #{board_wrapper_forward.1} parent=11 // pred_check
        %p193 = pneg %p68
      $region14: #{board_wrapper_forward.1} parent=11 // pred_check_branch
        %195 = sbr.rel (%p193) target = $region16
      $region15: #{board_wrapper_forward.1} parent=11 // pred_region
        _
      $region16: #{board_wrapper_forward.1} parent=11 // pred_fallthru
        _
      // Predicated region
      $region17: #{board_wrapper_forward.1} parent=11 // pred_check
        %p196 = pneg %p89
      $region18: #{board_wrapper_forward.1} parent=11 // pred_check_branch
        %198 = sbr.rel (%p196) target = $region20
      $region19: #{board_wrapper_forward.1} parent=11 // pred_region
        _
      $region20: #{board_wrapper_forward.1} parent=11 // pred_fallthru
        _
      // Predicated region
      $region21: #{board_wrapper_forward.1} parent=11 // pred_check
        %p199 = pneg %p110
      $region22: #{board_wrapper_forward.1} parent=11 // pred_check_branch
        %201 = sbr.rel (%p199) target = $region24
      $region23: #{board_wrapper_forward.1} parent=11 // pred_region
        _
      $region24: #{board_wrapper_forward.1} parent=11 // pred_fallthru
        _
      // Predicated region
      $region25: #{board_wrapper_forward.1} parent=11 // pred_check
        %p202 = pneg %p131
      $region26: #{board_wrapper_forward.1} parent=11 // pred_check_branch
        %204 = sbr.rel (%p202) target = $region28
      $region27: #{board_wrapper_forward.1} parent=11 // pred_region
        _
      $region28: #{board_wrapper_forward.1} parent=11 // pred_fallthru
        _
      // Predicated region
      $region29: #{board_wrapper_forward.1} parent=11 // pred_check
        %p205 = pneg %p152
      $region30: #{board_wrapper_forward.1} parent=11 // pred_check_branch
        %207 = sbr.rel (%p205) target = $region32
      $region31: #{board_wrapper_forward.1} parent=11 // pred_region
        _
      $region32: #{board_wrapper_forward.1} parent=11 // pred_fallthru
        _
    $region12: #{board_wrapper_forward.1} parent=5 // pred_fallthru
      _
    %p208 = scmp.lt.s32.totalorder %s21, 2
    // Predicated region
    $region33: #{board_wrapper_forward.1} parent=5 // pred_check
      %p209 = pneg %p208
    $region34: #{board_wrapper_forward.1} parent=5 // pred_check_branch
      %211 = sbr.rel (%p209) target = $region36
    $region35: #{board_wrapper_forward.1} parent=5 // pred_region
      // Predicated region
      $region37: #{board_wrapper_forward.1} parent=35 // pred_check
        %p212 = pneg %p41
      $region38: #{board_wrapper_forward.1} parent=35 // pred_check_branch
        %214 = sbr.rel (%p212) target = $region40
      $region39: #{board_wrapper_forward.1} parent=35 // pred_region
        %s215 = smul.u32 32, %s21
        %p216 = scmp.lt.s32.totalorder %s215, 63
        %s217 = scalar_select %p216, %s215, 63
        %s218 = smul.addr %s217, 8
        %s219 = scalar_lea.vmem %s1, %s218
        %s220 = smul.u32 32, %s21
      $region40: #{board_wrapper_forward.1} parent=35 // pred_fallthru
        _
    $region36: #{board_wrapper_forward.1} parent=5 // pred_fallthru
      _
    %p221 = scmp.le.s32.totalorder 1, %s21
    %p222 = scmp.lt.s32.totalorder %s21, 3
    %p223 = pnand %p221, %p222
    %p224 = pneg %p223
    // Predicated region
    $region41: #{board_wrapper_forward.1} parent=5 // pred_check
      _
    $region42: #{board_wrapper_forward.1} parent=5 // pred_check_branch
      %226 = sbr.rel (%p223) target = $region44
    $region43: #{board_wrapper_forward.1} parent=5 // pred_region
      %s227 = ssub.s32 %s21, 1
      %s228 = smul.u32 32, %s26
      %p229 = scmp.lt.s32.totalorder %s228, 63
      %s230 = scalar_select %p229, %s228, 63
      %s231 = smul.addr %s230, 8
      %s232 = scalar_lea.vmem %s1, %s231
      %p233 = pneg %p47
      %p234 = pneg %p44
      %p235 = pneg %p68
      %p236 = pneg %p65
      %p237 = pneg %p89
      %p238 = pneg %p86
      %p239 = pneg %p110
      %p240 = pneg %p107
      %p241 = pneg %p131
      %p242 = pneg %p128
      %p243 = pneg %p152
      %p244 = pneg %p149
      %p245 = pneg %p178
      %p246 = pneg %p175
      %p247 = scmp.lt.s32.totalorder %s26, 1
      %s248 = scalar_select %p247, %s26, 1
      %s249 = smul.addr %s248, 3
      %s250 = smul.addr %s249, 8
      %s251 = scalar_lea.vmem %s7, %s250
      %s252 = smul.u32 32, %s26
      %p253 = scmp.lt.s32.totalorder %s252, 63
      %s254 = scalar_select %p253, %s252, 63
      %s255 = smul.addr %s254, 8
      %s256 = scalar_lea.vmem %s1, %s255
      %s257 = smul.u32 32, %s26
      %p258 = scmp.lt.s32.totalorder %s26, 1
      %s259 = scalar_select %p258, %s26, 1
      %s260 = smul.addr %s259, 3
      %s261 = smul.addr %s260, 8
      %s262 = scalar_lea.vmem %s7, %s261
      %vm263 = vcmask 31744
      %264 = vst.msk [vmem:[#allocation2 + $0x120] sm:$0xff] %vm263, 0.0
      %265 = vst.msk [vmem:[#allocation2 + $0x128] sm:$0xff] %vm263, 0.0
      %266 = vst.msk [vmem:[#allocation2 + $0x130] sm:$0xff] %vm263, 0.0
      %267 = vst.msk [vmem:[#allocation2 + $0x138] sm:$0xff] %vm263, 0.0
      %268 = vst.msk [vmem:[#allocation2 + $0x140] sm:$0xff] %vm263, 0.0
      %269 = vst.msk [vmem:[#allocation2 + $0x148] sm:$0xff] %vm263, 0.0
      %270 = vst.msk [vmem:[#allocation2 + $0x150] sm:$0xff] %vm263, 0.0
      %271 = vst.msk [vmem:[#allocation2 + $0x158] sm:$0xff] %vm263, 0.0
      %vm272 = vcmask 261120
      %273 = vst.msk [vmem:[#allocation3] sm:$0xff] %vm272, 0.0
      %274 = vst.msk [vmem:[#allocation3 + $0x8] sm:$0xff] %vm272, 0.0
      %275 = vst.msk [vmem:[#allocation3 + $0x10] sm:$0xff] %vm272, 0.0
      %276 = vst.msk [vmem:[#allocation3 + $0x18] sm:$0xff] %vm272, 0.0
      %277 = vst.msk [vmem:[#allocation3 + $0x140] sm:$0xff] %vm272, 0.0
      %278 = vst.msk [vmem:[#allocation3 + $0x148] sm:$0xff] %vm272, 0.0
      %279 = vst.msk [vmem:[#allocation3 + $0x150] sm:$0xff] %vm272, 0.0
      %280 = vst.msk [vmem:[#allocation3 + $0x158] sm:$0xff] %vm272, 0.0
      %281 = vst.msk [vmem:[#allocation4] sm:$0xff] %vm272, 0.0
      %282 = vst.msk [vmem:[#allocation4 + $0x8] sm:$0xff] %vm272, 0.0
      %283 = vst.msk [vmem:[#allocation4 + $0x10] sm:$0xff] %vm272, 0.0
      %284 = vst.msk [vmem:[#allocation4 + $0x18] sm:$0xff] %vm272, 0.0
      %285 = vst.msk [vmem:[#allocation4 + $0x140] sm:$0xff] %vm272, 0.0
      %286 = vst.msk [vmem:[#allocation4 + $0x148] sm:$0xff] %vm272, 0.0
      %287 = vst.msk [vmem:[#allocation4 + $0x150] sm:$0xff] %vm272, 0.0
      %288 = vst.msk [vmem:[#allocation4 + $0x158] sm:$0xff] %vm272, 0.0
      %v289 = vlaneseq
      %v290 = vand.u32 %v289, 127
      %291 = vst.msk [vmem:[#allocation2] sm:$0xff] %vm263, 0.0
      %292 = vst.msk [vmem:[#allocation2 + $0x8] sm:$0xff] %vm263, 0.0
      %293 = vst.msk [vmem:[#allocation2 + $0x10] sm:$0xff] %vm263, 0.0
      %294 = vst.msk [vmem:[#allocation2 + $0x18] sm:$0xff] %vm263, 0.0
      %s295 = sld [smem:[#allocation6 + %s26]]
      %v296 = vld [vmem:[%s256] sm:$0xff]
      %v297 = vld [vmem:[%s256 + $0x8] sm:$0xff]
      %v298 = vld [vmem:[%s256 + $0x10] sm:$0xff]
      %v299 = vld [vmem:[%s256 + $0x18] sm:$0xff]
      %v300 = vld [vmem:[%s256 + $0x20] sm:$0xff]
      %v301 = vld [vmem:[%s256 + $0x28] sm:$0xff]
      %v302 = vld [vmem:[%s256 + $0x30] sm:$0xff]
      %v303 = vld [vmem:[%s256 + $0x38] sm:$0xff]
      %v304 = vld [vmem:[%s256 + $0x40] sm:$0xff]
      %v305 = vld [vmem:[%s256 + $0x48] sm:$0xff]
      %v306 = vld [vmem:[%s256 + $0x50] sm:$0xff]
      %v307 = vld [vmem:[%s256 + $0x58] sm:$0xff]
      %v308 = vld [vmem:[%s256 + $0x60] sm:$0xff]
      %v309 = vld [vmem:[%s256 + $0x68] sm:$0xff]
      %v310 = vld [vmem:[%s256 + $0x70] sm:$0xff]
      %v311 = vld [vmem:[%s256 + $0x78] sm:$0xff]
      %v312 = vld [vmem:[%s256 + $0x80] sm:$0xff]
      %v313 = vld [vmem:[%s256 + $0x88] sm:$0xff]
      %v314 = vld [vmem:[%s256 + $0x90] sm:$0xff]
      %v315 = vld [vmem:[%s256 + $0x98] sm:$0xff]
      %v316 = vld [vmem:[%s256 + $0xa0] sm:$0xff]
      %v317 = vld [vmem:[%s256 + $0xa8] sm:$0xff]
      %v318 = vld [vmem:[%s256 + $0xb0] sm:$0xff]
      %v319 = vld [vmem:[%s256 + $0xb8] sm:$0xff]
      %v320 = vld [vmem:[%s256 + $0xc0] sm:$0xff]
      %v321 = vld [vmem:[%s256 + $0xc8] sm:$0xff]
      %v322 = vld [vmem:[%s256 + $0xd0] sm:$0xff]
      %v323 = vld [vmem:[%s256 + $0xd8] sm:$0xff]
      %v324 = vld [vmem:[%s256 + $0xe0] sm:$0xff]
      %v325 = vld [vmem:[%s256 + $0xe8] sm:$0xff]
      %v326 = vld [vmem:[%s256 + $0xf0] sm:$0xff]
      %v327 = vld [vmem:[%s256 + $0xf8] sm:$0xff]
      %328 = vset.pattern.permute.xlu0 0
      %329 = vperm.xlu0 %328, %v296
      %v330 = vpop.permute.xlu0 %329
      %331 = vset.pattern.permute.xlu0 0
      %332 = vperm.xlu0 %331, %v297
      %v333 = vpop.permute.xlu0 %332
      %334 = vset.pattern.permute.xlu0 0
      %335 = vperm.xlu0 %334, %v298
      %v336 = vpop.permute.xlu0 %335
      %337 = vset.pattern.permute.xlu0 0
      %338 = vperm.xlu0 %337, %v299
      %v339 = vpop.permute.xlu0 %338
      %340 = vset.pattern.permute.xlu0 0
      %341 = vperm.xlu0 %340, %v300
      %v342 = vpop.permute.xlu0 %341
      %343 = vset.pattern.permute.xlu0 0
      %344 = vperm.xlu0 %343, %v301
      %v345 = vpop.permute.xlu0 %344
      %346 = vset.pattern.permute.xlu0 0
      %347 = vperm.xlu0 %346, %v302
      %v348 = vpop.permute.xlu0 %347
      %349 = vset.pattern.permute.xlu0 0
      %350 = vperm.xlu0 %349, %v303
      %v351 = vpop.permute.xlu0 %350
      %352 = vset.pattern.permute.xlu0 0
      %353 = vperm.xlu0 %352, %v304
      %v354 = vpop.permute.xlu0 %353
      %355 = vset.pattern.permute.xlu0 0
      %356 = vperm.xlu0 %355, %v305
      %v357 = vpop.permute.xlu0 %356
      %358 = vset.pattern.permute.xlu0 0
      %359 = vperm.xlu0 %358, %v306
      %v360 = vpop.permute.xlu0 %359
      %361 = vset.pattern.permute.xlu0 0
      %362 = vperm.xlu0 %361, %v307
      %v363 = vpop.permute.xlu0 %362
      %364 = vset.pattern.permute.xlu0 0
      %365 = vperm.xlu0 %364, %v308
      %v366 = vpop.permute.xlu0 %365
      %367 = vset.pattern.permute.xlu0 0
      %368 = vperm.xlu0 %367, %v309
      %v369 = vpop.permute.xlu0 %368
      %370 = vset.pattern.permute.xlu0 0
      %371 = vperm.xlu0 %370, %v310
      %v372 = vpop.permute.xlu0 %371
      %373 = vset.pattern.permute.xlu0 0
      %374 = vperm.xlu0 %373, %v311
      %v375 = vpop.permute.xlu0 %374
      %376 = vset.pattern.permute.xlu0 0
      %377 = vperm.xlu0 %376, %v312
      %v378 = vpop.permute.xlu0 %377
      %379 = vset.pattern.permute.xlu0 0
      %380 = vperm.xlu0 %379, %v313
      %v381 = vpop.permute.xlu0 %380
      %382 = vset.pattern.permute.xlu0 0
      %383 = vperm.xlu0 %382, %v314
      %v384 = vpop.permute.xlu0 %383
      %385 = vset.pattern.permute.xlu0 0
      %386 = vperm.xlu0 %385, %v315
      %v387 = vpop.permute.xlu0 %386
      %388 = vset.pattern.permute.xlu0 0
      %389 = vperm.xlu0 %388, %v316
      %v390 = vpop.permute.xlu0 %389
      %391 = vset.pattern.permute.xlu0 0
      %392 = vperm.xlu0 %391, %v317
      %v393 = vpop.permute.xlu0 %392
      %394 = vset.pattern.permute.xlu0 0
      %395 = vperm.xlu0 %394, %v318
      %v396 = vpop.permute.xlu0 %395
      %397 = vset.pattern.permute.xlu0 0
      %398 = vperm.xlu0 %397, %v319
      %v399 = vpop.permute.xlu0 %398
      %400 = vset.pattern.permute.xlu0 0
      %401 = vperm.xlu0 %400, %v320
      %v402 = vpop.permute.xlu0 %401
      %403 = vset.pattern.permute.xlu0 0
      %404 = vperm.xlu0 %403, %v321
      %v405 = vpop.permute.xlu0 %404
      %406 = vset.pattern.permute.xlu0 0
      %407 = vperm.xlu0 %406, %v322
      %v408 = vpop.permute.xlu0 %407
      %409 = vset.pattern.permute.xlu0 0
      %410 = vperm.xlu0 %409, %v323
      %v411 = vpop.permute.xlu0 %410
      %412 = vset.pattern.permute.xlu0 0
      %413 = vperm.xlu0 %412, %v324
      %v414 = vpop.permute.xlu0 %413
      %415 = vset.pattern.permute.xlu0 0
      %416 = vperm.xlu0 %415, %v325
      %v417 = vpop.permute.xlu0 %416
      %418 = vset.pattern.permute.xlu0 0
      %419 = vperm.xlu0 %418, %v326
      %v420 = vpop.permute.xlu0 %419
      %421 = vset.pattern.permute.xlu0 0
      %422 = vperm.xlu0 %421, %v327
      %v423 = vpop.permute.xlu0 %422
      %vm424 = vcmp.eq.s32.totalorder %v290, 0
      %vm425 = vcmp.eq.s32.totalorder %v290, 1
      %s426 = ssub.s32 3, %s295
      %v427 = vstv %s426
      %v428 = vsel %vm425, %v427, 0
      %v429 = vstv %s295
      %v430 = vsel %vm424, %v429, %v428
      %vm431 = vcmp.eq.s32.totalorder %v330, %v430
      %vm432 = vcmp.eq.s32.totalorder %v333, %v430
      %vm433 = vcmp.eq.s32.totalorder %v336, %v430
      %vm434 = vcmp.eq.s32.totalorder %v339, %v430
      %vm435 = vcmp.eq.s32.totalorder %v342, %v430
      %vm436 = vcmp.eq.s32.totalorder %v345, %v430
      %vm437 = vcmp.eq.s32.totalorder %v348, %v430
      %vm438 = vcmp.eq.s32.totalorder %v351, %v430
      %vm439 = vcmp.eq.s32.totalorder %v354, %v430
      %vm440 = vcmp.eq.s32.totalorder %v357, %v430
      %vm441 = vcmp.eq.s32.totalorder %v360, %v430
      %vm442 = vcmp.eq.s32.totalorder %v363, %v430
      %vm443 = vcmp.eq.s32.totalorder %v366, %v430
      %vm444 = vcmp.eq.s32.totalorder %v369, %v430
      %vm445 = vcmp.eq.s32.totalorder %v372, %v430
      %vm446 = vcmp.eq.s32.totalorder %v375, %v430
      %vm447 = vcmp.eq.s32.totalorder %v378, %v430
      %vm448 = vcmp.eq.s32.totalorder %v381, %v430
      %vm449 = vcmp.eq.s32.totalorder %v384, %v430
      %vm450 = vcmp.eq.s32.totalorder %v387, %v430
      %vm451 = vcmp.eq.s32.totalorder %v390, %v430
      %vm452 = vcmp.eq.s32.totalorder %v393, %v430
      %vm453 = vcmp.eq.s32.totalorder %v396, %v430
      %vm454 = vcmp.eq.s32.totalorder %v399, %v430
      %vm455 = vcmp.eq.s32.totalorder %v402, %v430
      %vm456 = vcmp.eq.s32.totalorder %v405, %v430
      %vm457 = vcmp.eq.s32.totalorder %v408, %v430
      %vm458 = vcmp.eq.s32.totalorder %v411, %v430
      %vm459 = vcmp.eq.s32.totalorder %v414, %v430
      %vm460 = vcmp.eq.s32.totalorder %v417, %v430
      %vm461 = vcmp.eq.s32.totalorder %v420, %v430
      %vm462 = vcmp.eq.s32.totalorder %v423, %v430
      %v463 = vsel %vm431, 1, 0
      %v464 = vsel %vm432, 1, 0
      %v465 = vsel %vm433, 1, 0
      %v466 = vsel %vm434, 1, 0
      %v467 = vsel %vm435, 1, 0
      %v468 = vsel %vm436, 1, 0
      %v469 = vsel %vm437, 1, 0
      %v470 = vsel %vm438, 1, 0
      %v471 = vsel %vm439, 1, 0
      %v472 = vsel %vm440, 1, 0
      %v473 = vsel %vm441, 1, 0
      %v474 = vsel %vm442, 1, 0
      %v475 = vsel %vm443, 1, 0
      %v476 = vsel %vm444, 1, 0
      %v477 = vsel %vm445, 1, 0
      %v478 = vsel %vm446, 1, 0
      %v479 = vsel %vm447, 1, 0
      %v480 = vsel %vm448, 1, 0
      %v481 = vsel %vm449, 1, 0
      %v482 = vsel %vm450, 1, 0
      %v483 = vsel %vm451, 1, 0
      %v484 = vsel %vm452, 1, 0
      %v485 = vsel %vm453, 1, 0
      %v486 = vsel %vm454, 1, 0
      %v487 = vsel %vm455, 1, 0
      %v488 = vsel %vm456, 1, 0
      %v489 = vsel %vm457, 1, 0
      %v490 = vsel %vm458, 1, 0
      %v491 = vsel %vm459, 1, 0
      %v492 = vsel %vm460, 1, 0
      %v493 = vsel %vm461, 1, 0
      %v494 = vsel %vm462, 1, 0
      %v495 = vcvt.s32.f32 %v463
      %v496 = vcvt.s32.f32 %v464
      %v497 = vcvt.s32.f32 %v465
      %v498 = vcvt.s32.f32 %v466
      %v499 = vcvt.s32.f32 %v467
      %v500 = vcvt.s32.f32 %v468
      %v501 = vcvt.s32.f32 %v469
      %v502 = vcvt.s32.f32 %v470
      %v503 = vcvt.s32.f32 %v471
      %v504 = vcvt.s32.f32 %v472
      %v505 = vcvt.s32.f32 %v473
      %v506 = vcvt.s32.f32 %v474
      %v507 = vcvt.s32.f32 %v475
      %v508 = vcvt.s32.f32 %v476
      %v509 = vcvt.s32.f32 %v477
      %v510 = vcvt.s32.f32 %v478
      %v511 = vcvt.s32.f32 %v479
      %v512 = vcvt.s32.f32 %v480
      %v513 = vcvt.s32.f32 %v481
      %v514 = vcvt.s32.f32 %v482
      %v515 = vcvt.s32.f32 %v483
      %v516 = vcvt.s32.f32 %v484
      %v517 = vcvt.s32.f32 %v485
      %v518 = vcvt.s32.f32 %v486
      %v519 = vcvt.s32.f32 %v487
      %v520 = vcvt.s32.f32 %v488
      %v521 = vcvt.s32.f32 %v489
      %v522 = vcvt.s32.f32 %v490
      %v523 = vcvt.s32.f32 %v491
      %v524 = vcvt.s32.f32 %v492
      %v525 = vcvt.s32.f32 %v493
      %v526 = vcvt.s32.f32 %v494
      %p527 = scmp.eq.s32.totalorder %s295, 1
      %s528 = scalar_select %p527, 1, 0
      %s529 = scvt.s32.f32 %s528
      %vm530 = vcmp.eq.s32.totalorder %v290, 3
      %v531 = vstv %s529
      %v532 = vsel %vm530, %v531, %v495
      %v533 = vsel %vm530, %v531, %v496
      %v534 = vsel %vm530, %v531, %v497
      %v535 = vsel %vm530, %v531, %v498
      %v536 = vsel %vm530, %v531, %v499
      %v537 = vsel %vm530, %v531, %v500
      %v538 = vsel %vm530, %v531, %v501
      %v539 = vsel %vm530, %v531, %v502
      %v540 = vsel %vm530, %v531, %v503
      %v541 = vsel %vm530, %v531, %v504
      %v542 = vsel %vm530, %v531, %v505
      %v543 = vsel %vm530, %v531, %v506
      %v544 = vsel %vm530, %v531, %v507
      %v545 = vsel %vm530, %v531, %v508
      %v546 = vsel %vm530, %v531, %v509
      %v547 = vsel %vm530, %v531, %v510
      %v548 = vsel %vm530, %v531, %v511
      %v549 = vsel %vm530, %v531, %v512
      %v550 = vsel %vm530, %v531, %v513
      %v551 = vsel %vm530, %v531, %v514
      %v552 = vsel %vm530, %v531, %v515
      %v553 = vsel %vm530, %v531, %v516
      %v554 = vsel %vm530, %v531, %v517
      %v555 = vsel %vm530, %v531, %v518
      %v556 = vsel %vm530, %v531, %v519
      %v557 = vsel %vm530, %v531, %v520
      %v558 = vsel %vm530, %v531, %v521
      %v559 = vsel %vm530, %v531, %v522
      %v560 = vsel %vm530, %v531, %v523
      %v561 = vsel %vm530, %v531, %v524
      %v562 = vsel %vm530, %v531, %v525
      %v563 = vsel %vm530, %v531, %v526
      %564 = vst.msk [vmem:[#allocation2 + $0x20] sm:$0xff] %vm263, %v532
      %565 = vst.msk [vmem:[#allocation2 + $0x28] sm:$0xff] %vm263, %v533
      %566 = vst.msk [vmem:[#allocation2 + $0x30] sm:$0xff] %vm263, %v534
      %567 = vst.msk [vmem:[#allocation2 + $0x38] sm:$0xff] %vm263, %v535
      %568 = vst.msk [vmem:[#allocation2 + $0x40] sm:$0xff] %vm263, %v536
      %569 = vst.msk [vmem:[#allocation2 + $0x48] sm:$0xff] %vm263, %v537
      %570 = vst.msk [vmem:[#allocation2 + $0x50] sm:$0xff] %vm263, %v538
      %571 = vst.msk [vmem:[#allocation2 + $0x58] sm:$0xff] %vm263, %v539
      %572 = vst.msk [vmem:[#allocation2 + $0x60] sm:$0xff] %vm263, %v540
      %573 = vst.msk [vmem:[#allocation2 + $0x68] sm:$0xff] %vm263, %v541
      %574 = vst.msk [vmem:[#allocation2 + $0x70] sm:$0xff] %vm263, %v542
      %575 = vst.msk [vmem:[#allocation2 + $0x78] sm:$0xff] %vm263, %v543
      %576 = vst.msk [vmem:[#allocation2 + $0x80] sm:$0xff] %vm263, %v544
      %577 = vst.msk [vmem:[#allocation2 + $0x88] sm:$0xff] %vm263, %v545
      %578 = vst.msk [vmem:[#allocation2 + $0x90] sm:$0xff] %vm263, %v546
      %579 = vst.msk [vmem:[#allocation2 + $0x98] sm:$0xff] %vm263, %v547
      %580 = vst.msk [vmem:[#allocation2 + $0xa0] sm:$0xff] %vm263, %v548
      %581 = vst.msk [vmem:[#allocation2 + $0xa8] sm:$0xff] %vm263, %v549
      %582 = vst.msk [vmem:[#allocation2 + $0xb0] sm:$0xff] %vm263, %v550
      %583 = vst.msk [vmem:[#allocation2 + $0xb8] sm:$0xff] %vm263, %v551
      %584 = vst.msk [vmem:[#allocation2 + $0xc0] sm:$0xff] %vm263, %v552
      %585 = vst.msk [vmem:[#allocation2 + $0xc8] sm:$0xff] %vm263, %v553
      %586 = vst.msk [vmem:[#allocation2 + $0xd0] sm:$0xff] %vm263, %v554
      %587 = vst.msk [vmem:[#allocation2 + $0xd8] sm:$0xff] %vm263, %v555
      %588 = vst.msk [vmem:[#allocation2 + $0xe0] sm:$0xff] %vm263, %v556
      %589 = vst.msk [vmem:[#allocation2 + $0xe8] sm:$0xff] %vm263, %v557
      %590 = vst.msk [vmem:[#allocation2 + $0xf0] sm:$0xff] %vm263, %v558
      %591 = vst.msk [vmem:[#allocation2 + $0xf8] sm:$0xff] %vm263, %v559
      %592 = vst.msk [vmem:[#allocation2 + $0x100] sm:$0xff] %vm263, %v560
      %593 = vst.msk [vmem:[#allocation2 + $0x108] sm:$0xff] %vm263, %v561
      %594 = vst.msk [vmem:[#allocation2 + $0x110] sm:$0xff] %vm263, %v562
      %595 = vst.msk [vmem:[#allocation2 + $0x118] sm:$0xff] %vm263, %v563
      %v596 = vld [vmem:[%s2] sm:$0xff]
      %v597 = vld [vmem:[%s2 + $0x8] sm:$0xff]
      %v598 = vld [vmem:[%s2 + $0x10] sm:$0xff]
      %v599 = vld [vmem:[%s2 + $0x18] sm:$0xff]
      %v600 = vld [vmem:[%s2 + $0x20] sm:$0xff]
      %v601 = vld [vmem:[%s2 + $0x28] sm:$0xff]
      %v602 = vld [vmem:[%s2 + $0x30] sm:$0xff]
      %v603 = vld [vmem:[%s2 + $0x38] sm:$0xff]
      %v604 = vld [vmem:[%s2 + $0x40] sm:$0xff]
      %v605 = vld [vmem:[%s2 + $0x48] sm:$0xff]
      %v606 = vld [vmem:[%s2 + $0x50] sm:$0xff]
      %v607 = vld [vmem:[%s2 + $0x58] sm:$0xff]
      %v608 = vld [vmem:[%s2 + $0x60] sm:$0xff]
      %v609 = vld [vmem:[%s2 + $0x68] sm:$0xff]
      %v610 = vld [vmem:[%s2 + $0x70] sm:$0xff]
      %v611 = vld [vmem:[%s2 + $0x78] sm:$0xff]
      %v612 = vld [vmem:[%s2 + $0x80] sm:$0xff]
      %v613 = vld [vmem:[%s2 + $0x88] sm:$0xff]
      %v614 = vld [vmem:[%s2 + $0x90] sm:$0xff]
      %v615 = vld [vmem:[%s2 + $0x98] sm:$0xff]
      %v616 = vld [vmem:[%s2 + $0xa0] sm:$0xff]
      %v617 = vld [vmem:[%s2 + $0xa8] sm:$0xff]
      %v618 = vld [vmem:[%s2 + $0xb0] sm:$0xff]
      %v619 = vld [vmem:[%s2 + $0xb8] sm:$0xff]
      %v620 = vld [vmem:[%s2 + $0xc0] sm:$0xff]
      %v621 = vld [vmem:[%s2 + $0xc8] sm:$0xff]
      %v622 = vld [vmem:[%s2 + $0xd0] sm:$0xff]
      %v623 = vld [vmem:[%s2 + $0xd8] sm:$0xff]
      %v624 = vld [vmem:[%s2 + $0xe0] sm:$0xff]
      %v625 = vld [vmem:[%s2 + $0xe8] sm:$0xff]
      %v626 = vld [vmem:[%s2 + $0xf0] sm:$0xff]
      %v627 = vld [vmem:[%s2 + $0xf8] sm:$0xff]
      %v628 = vld [vmem:[%s2 + $0x100] sm:$0xff]
      %v629 = vld [vmem:[%s2 + $0x108] sm:$0xff]
      %v630 = vld [vmem:[%s2 + $0x110] sm:$0xff]
      %v631 = vld [vmem:[%s2 + $0x118] sm:$0xff]
      %v632 = vld [vmem:[%s5] sm:$0x1]
      %v633 = vld [vmem:[#allocation2 + $0xf] sm:$0xff]
      %v634 = vld [vmem:[#allocation2 + $0x17] sm:$0xff]
      %v635 = vld [vmem:[#allocation2 + $0x1f] sm:$0xff]
      %v636 = vld [vmem:[#allocation2 + $0x27] sm:$0xff]
      %v637 = vld [vmem:[#allocation2 + $0x2f] sm:$0xff]
      %v638 = vld [vmem:[#allocation2 + $0x37] sm:$0xff]
      %v639 = vld [vmem:[#allocation2 + $0x3f] sm:$0xff]
      %v640 = vld [vmem:[#allocation2 + $0x47] sm:$0xff]
      %v641 = vld [vmem:[#allocation2 + $0x4f] sm:$0xff]
      %v642 = vld [vmem:[#allocation2 + $0x57] sm:$0xff]
      %v643 = vld [vmem:[#allocation2 + $0x5f] sm:$0xff]
      %v644 = vld [vmem:[#allocation2 + $0x67] sm:$0xff]
      %v645 = vld [vmem:[#allocation2 + $0x6f] sm:$0xff]
      %v646 = vld [vmem:[#allocation2 + $0x77] sm:$0xff]
      %v647 = vld [vmem:[#allocation2 + $0x7f] sm:$0xff]
      %v648 = vld [vmem:[#allocation2 + $0x87] sm:$0xff]
      %v649 = vld [vmem:[#allocation2 + $0x8f] sm:$0xff]
      %v650 = vld [vmem:[#allocation2 + $0x97] sm:$0xff]
      %v651 = vld [vmem:[#allocation2 + $0x9f] sm:$0xff]
      %v652 = vld [vmem:[#allocation2 + $0xa7] sm:$0xff]
      %v653 = vld [vmem:[#allocation2 + $0xaf] sm:$0xff]
      %v654 = vld [vmem:[#allocation2 + $0xb7] sm:$0xff]
      %v655 = vld [vmem:[#allocation2 + $0xbf] sm:$0xff]
      %v656 = vld [vmem:[#allocation2 + $0xc7] sm:$0xff]
      %v657 = vld [vmem:[#allocation2 + $0xcf] sm:$0xff]
      %v658 = vld [vmem:[#allocation2 + $0xd7] sm:$0xff]
      %v659 = vld [vmem:[#allocation2 + $0xdf] sm:$0xff]
      %v660 = vld [vmem:[#allocation2 + $0xe7] sm:$0xff]
      %v661 = vld [vmem:[#allocation2 + $0xef] sm:$0xff]
      %v662 = vld [vmem:[#allocation2 + $0xf7] sm:$0xff]
      %v663 = vld [vmem:[#allocation2 + $0xff] sm:$0xff]
      %v664 = vld [vmem:[#allocation2 + $0x107] sm:$0xff]
      %v665 = vld [vmem:[#allocation2 + $0x10f] sm:$0xff]
      %v666 = vld [vmem:[#allocation2 + $0x117] sm:$0xff]
      %v667 = vld [vmem:[#allocation2 + $0x11f] sm:$0xff]
      %v668 = vld [vmem:[#allocation2 + $0x127] sm:$0xff]
      %v669 = vld [vmem:[%s3] sm:$0xf]
      %v670 = vld [vmem:[#allocation2 + $0x10] sm:$0xff]
      %v671 = vld [vmem:[#allocation2 + $0x18] sm:$0xff]
      %v672 = vld [vmem:[#allocation2 + $0x20] sm:$0xff]
      %v673 = vld [vmem:[#allocation2 + $0x28] sm:$0xff]
      %v674 = vld [vmem:[#allocation2 + $0x30] sm:$0xff]
      %v675 = vld [vmem:[#allocation2 + $0x38] sm:$0xff]
      %v676 = vld [vmem:[#allocation2 + $0x40] sm:$0xff]
      %v677 = vld [vmem:[#allocation2 + $0x48] sm:$0xff]
      %v678 = vld [vmem:[#allocation2 + $0x50] sm:$0xff]
      %v679 = vld [vmem:[#allocation2 + $0x58] sm:$0xff]
      %v680 = vld [vmem:[#allocation2 + $0x60] sm:$0xff]
      %v681 = vld [vmem:[#allocation2 + $0x68] sm:$0xff]
      %v682 = vld [vmem:[#allocation2 + $0x70] sm:$0xff]
      %v683 = vld [vmem:[#allocation2 + $0x78] sm:$0xff]
      %v684 = vld [vmem:[#allocation2 + $0x80] sm:$0xff]
      %v685 = vld [vmem:[#allocation2 + $0x88] sm:$0xff]
      %v686 = vld [vmem:[#allocation2 + $0x90] sm:$0xff]
      %v687 = vld [vmem:[#allocation2 + $0x98] sm:$0xff]
      %v688 = vld [vmem:[#allocation2 + $0xa0] sm:$0xff]
      %v689 = vld [vmem:[#allocation2 + $0xa8] sm:$0xff]
      %v690 = vld [vmem:[#allocation2 + $0xb0] sm:$0xff]
      %v691 = vld [vmem:[#allocation2 + $0xb8] sm:$0xff]
      %v692 = vld [vmem:[#allocation2 + $0xc0] sm:$0xff]
      %v693 = vld [vmem:[#allocation2 + $0xc8] sm:$0xff]
      %v694 = vld [vmem:[#allocation2 + $0xd0] sm:$0xff]
      %v695 = vld [vmem:[#allocation2 + $0xd8] sm:$0xff]
      %v696 = vld [vmem:[#allocation2 + $0xe0] sm:$0xff]
      %v697 = vld [vmem:[#allocation2 + $0xe8] sm:$0xff]
      %v698 = vld [vmem:[#allocation2 + $0xf0] sm:$0xff]
      %v699 = vld [vmem:[#allocation2 + $0xf8] sm:$0xff]
      %v700 = vld [vmem:[#allocation2 + $0x100] sm:$0xff]
      %v701 = vld [vmem:[#allocation2 + $0x108] sm:$0xff]
      %v702 = vld [vmem:[#allocation2 + $0x110] sm:$0xff]
      %v703 = vld [vmem:[#allocation2 + $0x118] sm:$0xff]
      %v704 = vld [vmem:[#allocation2 + $0x120] sm:$0xff]
      %v705 = vld [vmem:[#allocation2 + $0x128] sm:$0xff]
      %s706 = scalar_lea.vmem %s3, 4
      %v707 = vld [vmem:[%s706] sm:$0xf]
      %v708 = vld [vmem:[#allocation2 + $0x11] sm:$0xff]
      %v709 = vld [vmem:[#allocation2 + $0x19] sm:$0xff]
      %v710 = vld [vmem:[#allocation2 + $0x21] sm:$0xff]
      %v711 = vld [vmem:[#allocation2 + $0x29] sm:$0xff]
      %v712 = vld [vmem:[#allocation2 + $0x31] sm:$0xff]
      %v713 = vld [vmem:[#allocation2 + $0x39] sm:$0xff]
      %v714 = vld [vmem:[#allocation2 + $0x41] sm:$0xff]
      %v715 = vld [vmem:[#allocation2 + $0x49] sm:$0xff]
      %v716 = vld [vmem:[#allocation2 + $0x51] sm:$0xff]
      %v717 = vld [vmem:[#allocation2 + $0x59] sm:$0xff]
      %v718 = vld [vmem:[#allocation2 + $0x61] sm:$0xff]
      %v719 = vld [vmem:[#allocation2 + $0x69] sm:$0xff]
      %v720 = vld [vmem:[#allocation2 + $0x71] sm:$0xff]
      %v721 = vld [vmem:[#allocation2 + $0x79] sm:$0xff]
      %v722 = vld [vmem:[#allocation2 + $0x81] sm:$0xff]
      %v723 = vld [vmem:[#allocation2 + $0x89] sm:$0xff]
      %v724 = vld [vmem:[#allocation2 + $0x91] sm:$0xff]
      %v725 = vld [vmem:[#allocation2 + $0x99] sm:$0xff]
      %v726 = vld [vmem:[#allocation2 + $0xa1] sm:$0xff]
      %v727 = vld [vmem:[#allocation2 + $0xa9] sm:$0xff]
      %v728 = vld [vmem:[#allocation2 + $0xb1] sm:$0xff]
      %v729 = vld [vmem:[#allocation2 + $0xb9] sm:$0xff]
      %v730 = vld [vmem:[#allocation2 + $0xc1] sm:$0xff]
      %v731 = vld [vmem:[#allocation2 + $0xc9] sm:$0xff]
      %v732 = vld [vmem:[#allocation2 + $0xd1] sm:$0xff]
      %v733 = vld [vmem:[#allocation2 + $0xd9] sm:$0xff]
      %v734 = vld [vmem:[#allocation2 + $0xe1] sm:$0xff]
      %v735 = vld [vmem:[#allocation2 + $0xe9] sm:$0xff]
      %v736 = vld [vmem:[#allocation2 + $0xf1] sm:$0xff]
      %v737 = vld [vmem:[#allocation2 + $0xf9] sm:$0xff]
      %v738 = vld [vmem:[#allocation2 + $0x101] sm:$0xff]
      %v739 = vld [vmem:[#allocation2 + $0x109] sm:$0xff]
      %v740 = vld [vmem:[#allocation2 + $0x111] sm:$0xff]
      %v741 = vld [vmem:[#allocation2 + $0x119] sm:$0xff]
      %v742 = vld [vmem:[#allocation2 + $0x121] sm:$0xff]
      %v743 = vld [vmem:[#allocation2 + $0x129] sm:$0xff]
      %s744 = scalar_lea.vmem %s3, 8
      %v745 = vld [vmem:[%s744] sm:$0xf]
      %v746 = vld [vmem:[#allocation2 + $0x12f] sm:$0xff]
      %v747 = vld [vmem:[#allocation2 + $0x137] sm:$0xff]
      %s748 = scalar_lea.vmem %s3, 12
      %v749 = vld [vmem:[%s748] sm:$0xf]
      %v751 = vsel %vm263, %v635, 0
      %v754 = vsel %vm263, %v636, 0
      %v757 = vsel %vm263, %v637, 0
      %v760 = vsel %vm263, %v638, 0
      %v763 = vsel %vm263, %v639, 0
      %v766 = vsel %vm263, %v640, 0
      %v769 = vsel %vm263, %v641, 0
      %v772 = vsel %vm263, %v642, 0
      %v775 = vsel %vm263, %v643, 0
      %v778 = vsel %vm263, %v644, 0
      %v781 = vsel %vm263, %v645, 0
      %v784 = vsel %vm263, %v646, 0
      %v787 = vsel %vm263, %v647, 0
      %v790 = vsel %vm263, %v648, 0
      %v793 = vsel %vm263, %v649, 0
      %v796 = vsel %vm263, %v650, 0
      %v799 = vsel %vm263, %v651, 0
      %v802 = vsel %vm263, %v652, 0
      %v805 = vsel %vm263, %v653, 0
      %v808 = vsel %vm263, %v654, 0
      %v811 = vsel %vm263, %v655, 0
      %v814 = vsel %vm263, %v656, 0
      %v817 = vsel %vm263, %v657, 0
      %v820 = vsel %vm263, %v658, 0
      %v823 = vsel %vm263, %v659, 0
      %v826 = vsel %vm263, %v660, 0
      %v829 = vsel %vm263, %v661, 0
      %v832 = vsel %vm263, %v662, 0
      %v835 = vsel %vm263, %v663, 0
      %v838 = vsel %vm263, %v664, 0
      %v841 = vsel %vm263, %v665, 0
      %v844 = vsel %vm263, %v666, 0
      %v847 = vsel %vm263, %v667, 0
      %v850 = vsel %vm263, %v668, 0
      %v853 = vsel %vm263, %v746, 0
      %v856 = vsel %vm263, %v747, 0
      %vm858 = vcmask 1043456
      %v860 = vsel %vm858, %v749, 0
      %862 = vmatpush.msra.mxu0 0.0
      %863 = vmatpush.msra.mxu0 0.0
      %864 = vmatpush.msra.mxu0 0.0
      %865 = vmatpush.msra.mxu0 0.0
      %866 = vmatpush.msra.mxu0 0.0
      %867 = vmatpush.msra.mxu0 0.0
      %868 = vmatpush.msra.mxu0 0.0
      %869 = vmatpush.msra.mxu0 0.0
      %870 = vmatpush.msra.mxu0 0.0
      %871 = vmatpush.msra.mxu0 0.0
      %872 = vmatpush.msra.mxu0 0.0
      %873 = vmatpush.msra.mxu0 0.0
      %874 = vmatpush.msra.mxu0 0.0
      %875 = vmatpush.msra.mxu0 0.0
      %876 = vmatpush.msra.mxu0 0.0
      %877 = vmatpush.msra.mxu0 %v860
      %878 = vmatmul.f32.gmra.mxu0 %v751
      %v879 = vpop.f32.mrf.mxu0
      %v880 = vadd.f32 0.0, %v879
      %881 = vmatmul.f32.gmra.mxu0 %v754
      %v882 = vpop.f32.mrf.mxu0
      %v883 = vadd.f32 0.0, %v882
      %884 = vmatmul.f32.gmra.mxu0 %v757
      %v885 = vpop.f32.mrf.mxu0
      %v886 = vadd.f32 0.0, %v885
      %887 = vmatmul.f32.gmra.mxu0 %v760
      %v888 = vpop.f32.mrf.mxu0
      %v889 = vadd.f32 0.0, %v888
      %890 = vmatmul.f32.gmra.mxu0 %v763
      %v891 = vpop.f32.mrf.mxu0
      %v892 = vadd.f32 0.0, %v891
      %893 = vmatmul.f32.gmra.mxu0 %v766
      %v894 = vpop.f32.mrf.mxu0
      %v895 = vadd.f32 0.0, %v894
      %896 = vmatmul.f32.gmra.mxu0 %v769
      %v897 = vpop.f32.mrf.mxu0
      %v898 = vadd.f32 0.0, %v897
      %899 = vmatmul.f32.gmra.mxu0 %v772
      %v900 = vpop.f32.mrf.mxu0
      %v901 = vadd.f32 0.0, %v900
      %902 = vmatmul.f32.gmra.mxu0 %v775
      %v903 = vpop.f32.mrf.mxu0
      %v904 = vadd.f32 0.0, %v903
      %905 = vmatmul.f32.gmra.mxu0 %v778
      %v906 = vpop.f32.mrf.mxu0
      %v907 = vadd.f32 0.0, %v906
      %908 = vmatmul.f32.gmra.mxu0 %v781
      %v909 = vpop.f32.mrf.mxu0
      %v910 = vadd.f32 0.0, %v909
      %911 = vmatmul.f32.gmra.mxu0 %v784
      %v912 = vpop.f32.mrf.mxu0
      %v913 = vadd.f32 0.0, %v912
      %914 = vmatmul.f32.gmra.mxu0 %v787
      %v915 = vpop.f32.mrf.mxu0
      %v916 = vadd.f32 0.0, %v915
      %917 = vmatmul.f32.gmra.mxu0 %v790
      %v918 = vpop.f32.mrf.mxu0
      %v919 = vadd.f32 0.0, %v918
      %920 = vmatmul.f32.gmra.mxu0 %v793
      %v921 = vpop.f32.mrf.mxu0
      %v922 = vadd.f32 0.0, %v921
      %923 = vmatmul.f32.gmra.mxu0 %v796
      %v924 = vpop.f32.mrf.mxu0
      %v925 = vadd.f32 0.0, %v924
      %926 = vmatmul.f32.gmra.mxu0 %v799
      %v927 = vpop.f32.mrf.mxu0
      %v928 = vadd.f32 0.0, %v927
      %929 = vmatmul.f32.gmra.mxu0 %v802
      %v930 = vpop.f32.mrf.mxu0
      %v931 = vadd.f32 0.0, %v930
      %932 = vmatmul.f32.gmra.mxu0 %v805
      %v933 = vpop.f32.mrf.mxu0
      %v934 = vadd.f32 0.0, %v933
      %935 = vmatmul.f32.gmra.mxu0 %v808
      %v936 = vpop.f32.mrf.mxu0
      %v937 = vadd.f32 0.0, %v936
      %938 = vmatmul.f32.gmra.mxu0 %v811
      %v939 = vpop.f32.mrf.mxu0
      %v940 = vadd.f32 0.0, %v939
      %941 = vmatmul.f32.gmra.mxu0 %v814
      %v942 = vpop.f32.mrf.mxu0
      %v943 = vadd.f32 0.0, %v942
      %944 = vmatmul.f32.gmra.mxu0 %v817
      %v945 = vpop.f32.mrf.mxu0
      %v946 = vadd.f32 0.0, %v945
      %947 = vmatmul.f32.gmra.mxu0 %v820
      %v948 = vpop.f32.mrf.mxu0
      %v949 = vadd.f32 0.0, %v948
      %950 = vmatmul.f32.gmra.mxu0 %v823
      %v951 = vpop.f32.mrf.mxu0
      %v952 = vadd.f32 0.0, %v951
      %953 = vmatmul.f32.gmra.mxu0 %v826
      %v954 = vpop.f32.mrf.mxu0
      %v955 = vadd.f32 0.0, %v954
      %956 = vmatmul.f32.gmra.mxu0 %v829
      %v957 = vpop.f32.mrf.mxu0
      %v958 = vadd.f32 0.0, %v957
      %959 = vmatmul.f32.gmra.mxu0 %v832
      %v960 = vpop.f32.mrf.mxu0
      %v961 = vadd.f32 0.0, %v960
      %962 = vmatmul.f32.gmra.mxu0 %v835
      %v963 = vpop.f32.mrf.mxu0
      %v964 = vadd.f32 0.0, %v963
      %965 = vmatmul.f32.gmra.mxu0 %v838
      %v966 = vpop.f32.mrf.mxu0
      %v967 = vadd.f32 0.0, %v966
      %968 = vmatmul.f32.gmra.mxu0 %v841
      %v969 = vpop.f32.mrf.mxu0
      %v970 = vadd.f32 0.0, %v969
      %971 = vmatmul.f32.gmra.mxu0 %v844
      %v972 = vpop.f32.mrf.mxu0
      %v973 = vadd.f32 0.0, %v972
      %974 = vmatmul.f32.gmra.mxu0 %v847
      %v975 = vpop.f32.mrf.mxu0
      %v976 = vadd.f32 0.0, %v975
      %977 = vmatmul.f32.gmra.mxu0 %v850
      %v978 = vpop.f32.mrf.mxu0
      %v979 = vadd.f32 0.0, %v978
      %980 = vmatmul.f32.gmra.mxu0 %v853
      %v981 = vpop.f32.mrf.mxu0
      %v982 = vadd.f32 0.0, %v981
      %983 = vmatmul.f32.gmra.mxu0 %v856
      %v984 = vpop.f32.mrf.mxu0
      %v985 = vadd.f32 0.0, %v984
      %986 = vdwg.mxu0
      %v988 = vsel %vm263, %v633, 0
      %v991 = vsel %vm263, %v634, 0
      %v994 = vsel %vm858, %v669, 0
      %996 = vmatpush.msra.mxu0 0.0
      %997 = vmatpush.msra.mxu0 0.0
      %998 = vmatpush.msra.mxu0 0.0
      %999 = vmatpush.msra.mxu0 0.0
      %1000 = vmatpush.msra.mxu0 0.0
      %1001 = vmatpush.msra.mxu0 0.0
      %1002 = vmatpush.msra.mxu0 0.0
      %1003 = vmatpush.msra.mxu0 0.0
      %1004 = vmatpush.msra.mxu0 0.0
      %1005 = vmatpush.msra.mxu0 0.0
      %1006 = vmatpush.msra.mxu0 0.0
      %1007 = vmatpush.msra.mxu0 0.0
      %1008 = vmatpush.msra.mxu0 0.0
      %1009 = vmatpush.msra.mxu0 0.0
      %1010 = vmatpush.msra.mxu0 0.0
      %1011 = vmatpush.msra.mxu0 %v994
      %1012 = vmatmul.f32.gmra.mxu0 %v988
      %v1013 = vpop.f32.mrf.mxu0
      %v1014 = vadd.f32 %v880, %v1013
      %1015 = vmatmul.f32.gmra.mxu0 %v991
      %v1016 = vpop.f32.mrf.mxu0
      %v1017 = vadd.f32 %v883, %v1016
      %1018 = vmatmul.f32.gmra.mxu0 %v751
      %v1019 = vpop.f32.mrf.mxu0
      %v1020 = vadd.f32 %v886, %v1019
      %1021 = vmatmul.f32.gmra.mxu0 %v754
      %v1022 = vpop.f32.mrf.mxu0
      %v1023 = vadd.f32 %v889, %v1022
      %1024 = vmatmul.f32.gmra.mxu0 %v757
      %v1025 = vpop.f32.mrf.mxu0
      %v1026 = vadd.f32 %v892, %v1025
      %1027 = vmatmul.f32.gmra.mxu0 %v760
      %v1028 = vpop.f32.mrf.mxu0
      %v1029 = vadd.f32 %v895, %v1028
      %1030 = vmatmul.f32.gmra.mxu0 %v763
      %v1031 = vpop.f32.mrf.mxu0
      %v1032 = vadd.f32 %v898, %v1031
      %1033 = vmatmul.f32.gmra.mxu0 %v766
      %v1034 = vpop.f32.mrf.mxu0
      %v1035 = vadd.f32 %v901, %v1034
      %1036 = vmatmul.f32.gmra.mxu0 %v769
      %v1037 = vpop.f32.mrf.mxu0
      %v1038 = vadd.f32 %v904, %v1037
      %1039 = vmatmul.f32.gmra.mxu0 %v772
      %v1040 = vpop.f32.mrf.mxu0
      %v1041 = vadd.f32 %v907, %v1040
      %1042 = vmatmul.f32.gmra.mxu0 %v775
      %v1043 = vpop.f32.mrf.mxu0
      %v1044 = vadd.f32 %v910, %v1043
      %1045 = vmatmul.f32.gmra.mxu0 %v778
      %v1046 = vpop.f32.mrf.mxu0
      %v1047 = vadd.f32 %v913, %v1046
      %1048 = vmatmul.f32.gmra.mxu0 %v781
      %v1049 = vpop.f32.mrf.mxu0
      %v1050 = vadd.f32 %v916, %v1049
      %1051 = vmatmul.f32.gmra.mxu0 %v784
      %v1052 = vpop.f32.mrf.mxu0
      %v1053 = vadd.f32 %v919, %v1052
      %1054 = vmatmul.f32.gmra.mxu0 %v787
      %v1055 = vpop.f32.mrf.mxu0
      %v1056 = vadd.f32 %v922, %v1055
      %1057 = vmatmul.f32.gmra.mxu0 %v790
      %v1058 = vpop.f32.mrf.mxu0
      %v1059 = vadd.f32 %v925, %v1058
      %1060 = vmatmul.f32.gmra.mxu0 %v793
      %v1061 = vpop.f32.mrf.mxu0
      %v1062 = vadd.f32 %v928, %v1061
      %1063 = vmatmul.f32.gmra.mxu0 %v796
      %v1064 = vpop.f32.mrf.mxu0
      %v1065 = vadd.f32 %v931, %v1064
      %1066 = vmatmul.f32.gmra.mxu0 %v799
      %v1067 = vpop.f32.mrf.mxu0
      %v1068 = vadd.f32 %v934, %v1067
      %1069 = vmatmul.f32.gmra.mxu0 %v802
      %v1070 = vpop.f32.mrf.mxu0
      %v1071 = vadd.f32 %v937, %v1070
      %1072 = vmatmul.f32.gmra.mxu0 %v805
      %v1073 = vpop.f32.mrf.mxu0
      %v1074 = vadd.f32 %v940, %v1073
      %1075 = vmatmul.f32.gmra.mxu0 %v808
      %v1076 = vpop.f32.mrf.mxu0
      %v1077 = vadd.f32 %v943, %v1076
      %1078 = vmatmul.f32.gmra.mxu0 %v811
      %v1079 = vpop.f32.mrf.mxu0
      %v1080 = vadd.f32 %v946, %v1079
      %1081 = vmatmul.f32.gmra.mxu0 %v814
      %v1082 = vpop.f32.mrf.mxu0
      %v1083 = vadd.f32 %v949, %v1082
      %1084 = vmatmul.f32.gmra.mxu0 %v817
      %v1085 = vpop.f32.mrf.mxu0
      %v1086 = vadd.f32 %v952, %v1085
      %1087 = vmatmul.f32.gmra.mxu0 %v820
      %v1088 = vpop.f32.mrf.mxu0
      %v1089 = vadd.f32 %v955, %v1088
      %1090 = vmatmul.f32.gmra.mxu0 %v823
      %v1091 = vpop.f32.mrf.mxu0
      %v1092 = vadd.f32 %v958, %v1091
      %1093 = vmatmul.f32.gmra.mxu0 %v826
      %v1094 = vpop.f32.mrf.mxu0
      %v1095 = vadd.f32 %v961, %v1094
      %1096 = vmatmul.f32.gmra.mxu0 %v829
      %v1097 = vpop.f32.mrf.mxu0
      %v1098 = vadd.f32 %v964, %v1097
      %1099 = vmatmul.f32.gmra.mxu0 %v832
      %v1100 = vpop.f32.mrf.mxu0
      %v1101 = vadd.f32 %v967, %v1100
      %1102 = vmatmul.f32.gmra.mxu0 %v835
      %v1103 = vpop.f32.mrf.mxu0
      %v1104 = vadd.f32 %v970, %v1103
      %1105 = vmatmul.f32.gmra.mxu0 %v838
      %v1106 = vpop.f32.mrf.mxu0
      %v1107 = vadd.f32 %v973, %v1106
      %1108 = vmatmul.f32.gmra.mxu0 %v841
      %v1109 = vpop.f32.mrf.mxu0
      %v1110 = vadd.f32 %v976, %v1109
      %1111 = vmatmul.f32.gmra.mxu0 %v844
      %v1112 = vpop.f32.mrf.mxu0
      %v1113 = vadd.f32 %v979, %v1112
      %1114 = vmatmul.f32.gmra.mxu0 %v847
      %v1115 = vpop.f32.mrf.mxu0
      %v1116 = vadd.f32 %v982, %v1115
      %1117 = vmatmul.f32.gmra.mxu0 %v850
      %v1118 = vpop.f32.mrf.mxu0
      %v1119 = vadd.f32 %v985, %v1118
      %1120 = vdwg.mxu0
      %v1121 = vld [vmem:[#allocation2 + $0x20] sm:$0xff]
      %v1122 = vld [vmem:[#allocation2 + $0x28] sm:$0xff]
      %v1123 = vld [vmem:[#allocation2 + $0x30] sm:$0xff]
      %v1124 = vld [vmem:[#allocation2 + $0x38] sm:$0xff]
      %v1125 = vld [vmem:[#allocation2 + $0x40] sm:$0xff]
      %v1126 = vld [vmem:[#allocation2 + $0x48] sm:$0xff]
      %v1127 = vld [vmem:[#allocation2 + $0x50] sm:$0xff]
      %v1128 = vld [vmem:[#allocation2 + $0x58] sm:$0xff]
      %v1129 = vld [vmem:[#allocation2 + $0x60] sm:$0xff]
      %v1130 = vld [vmem:[#allocation2 + $0x68] sm:$0xff]
      %v1131 = vld [vmem:[#allocation2 + $0x70] sm:$0xff]
      %v1132 = vld [vmem:[#allocation2 + $0x78] sm:$0xff]
      %v1133 = vld [vmem:[#allocation2 + $0x80] sm:$0xff]
      %v1134 = vld [vmem:[#allocation2 + $0x88] sm:$0xff]
      %v1135 = vld [vmem:[#allocation2 + $0x90] sm:$0xff]
      %v1136 = vld [vmem:[#allocation2 + $0x98] sm:$0xff]
      %v1137 = vld [vmem:[#allocation2 + $0xa0] sm:$0xff]
      %v1138 = vld [vmem:[#allocation2 + $0xa8] sm:$0xff]
      %v1139 = vld [vmem:[#allocation2 + $0xb0] sm:$0xff]
      %v1140 = vld [vmem:[#allocation2 + $0xb8] sm:$0xff]
      %v1141 = vld [vmem:[#allocation2 + $0xc0] sm:$0xff]
      %v1142 = vld [vmem:[#allocation2 + $0xc8] sm:$0xff]
      %v1143 = vld [vmem:[#allocation2 + $0xd0] sm:$0xff]
      %v1144 = vld [vmem:[#allocation2 + $0xd8] sm:$0xff]
      %v1145 = vld [vmem:[#allocation2 + $0xe0] sm:$0xff]
      %v1146 = vld [vmem:[#allocation2 + $0xe8] sm:$0xff]
      %v1147 = vld [vmem:[#allocation2 + $0xf0] sm:$0xff]
      %v1148 = vld [vmem:[#allocation2 + $0xf8] sm:$0xff]
      %v1149 = vld [vmem:[#allocation2 + $0x100] sm:$0xff]
      %v1150 = vld [vmem:[#allocation2 + $0x108] sm:$0xff]
      %v1151 = vld [vmem:[#allocation2 + $0x110] sm:$0xff]
      %v1152 = vld [vmem:[#allocation2 + $0x118] sm:$0xff]
      %v1153 = vld [vmem:[#allocation2 + $0x120] sm:$0xff]
      %v1154 = vld [vmem:[#allocation2 + $0x128] sm:$0xff]
      %v1155 = vld [vmem:[#allocation2 + $0x130] sm:$0xff]
      %v1156 = vld [vmem:[#allocation2 + $0x138] sm:$0xff]
      %s1157 = scalar_lea.vmem %s3, 16
      %v1158 = vld [vmem:[%s1157] sm:$0xf]
      %v1160 = vsel %vm263, %v1121, 0
      %v1163 = vsel %vm263, %v1122, 0
      %v1166 = vsel %vm263, %v1123, 0
      %v1169 = vsel %vm263, %v1124, 0
      %v1172 = vsel %vm263, %v1125, 0
      %v1175 = vsel %vm263, %v1126, 0
      %v1178 = vsel %vm263, %v1127, 0
      %v1181 = vsel %vm263, %v1128, 0
      %v1184 = vsel %vm263, %v1129, 0
      %v1187 = vsel %vm263, %v1130, 0
      %v1190 = vsel %vm263, %v1131, 0
      %v1193 = vsel %vm263, %v1132, 0
      %v1196 = vsel %vm263, %v1133, 0
      %v1199 = vsel %vm263, %v1134, 0
      %v1202 = vsel %vm263, %v1135, 0
      %v1205 = vsel %vm263, %v1136, 0
      %v1208 = vsel %vm263, %v1137, 0
      %v1211 = vsel %vm263, %v1138, 0
      %v1214 = vsel %vm263, %v1139, 0
      %v1217 = vsel %vm263, %v1140, 0
      %v1220 = vsel %vm263, %v1141, 0
      %v1223 = vsel %vm263, %v1142, 0
      %v1226 = vsel %vm263, %v1143, 0
      %v1229 = vsel %vm263, %v1144, 0
      %v1232 = vsel %vm263, %v1145, 0
      %v1235 = vsel %vm263, %v1146, 0
      %v1238 = vsel %vm263, %v1147, 0
      %v1241 = vsel %vm263, %v1148, 0
      %v1244 = vsel %vm263, %v1149, 0
      %v1247 = vsel %vm263, %v1150, 0
      %v1250 = vsel %vm263, %v1151, 0
      %v1253 = vsel %vm263, %v1152, 0
      %v1256 = vsel %vm263, %v1153, 0
      %v1259 = vsel %vm263, %v1154, 0
      %v1262 = vsel %vm263, %v1155, 0
      %v1265 = vsel %vm263, %v1156, 0
      %v1268 = vsel %vm858, %v1158, 0
      %1270 = vmatpush.msra.mxu0 0.0
      %1271 = vmatpush.msra.mxu0 0.0
      %1272 = vmatpush.msra.mxu0 0.0
      %1273 = vmatpush.msra.mxu0 0.0
      %1274 = vmatpush.msra.mxu0 0.0
      %1275 = vmatpush.msra.mxu0 0.0
      %1276 = vmatpush.msra.mxu0 0.0
      %1277 = vmatpush.msra.mxu0 0.0
      %1278 = vmatpush.msra.mxu0 0.0
      %1279 = vmatpush.msra.mxu0 0.0
      %1280 = vmatpush.msra.mxu0 0.0
      %1281 = vmatpush.msra.mxu0 0.0
      %1282 = vmatpush.msra.mxu0 0.0
      %1283 = vmatpush.msra.mxu0 0.0
      %1284 = vmatpush.msra.mxu0 0.0
      %1285 = vmatpush.msra.mxu0 %v1268
      %1286 = vmatmul.f32.gmra.mxu0 %v1160
      %v1287 = vpop.f32.mrf.mxu0
      %v1288 = vadd.f32 0.0, %v1287
      %1289 = vmatmul.f32.gmra.mxu0 %v1163
      %v1290 = vpop.f32.mrf.mxu0
      %v1291 = vadd.f32 0.0, %v1290
      %1292 = vmatmul.f32.gmra.mxu0 %v1166
      %v1293 = vpop.f32.mrf.mxu0
      %v1294 = vadd.f32 0.0, %v1293
      %1295 = vmatmul.f32.gmra.mxu0 %v1169
      %v1296 = vpop.f32.mrf.mxu0
      %v1297 = vadd.f32 0.0, %v1296
      %1298 = vmatmul.f32.gmra.mxu0 %v1172
      %v1299 = vpop.f32.mrf.mxu0
      %v1300 = vadd.f32 0.0, %v1299
      %1301 = vmatmul.f32.gmra.mxu0 %v1175
      %v1302 = vpop.f32.mrf.mxu0
      %v1303 = vadd.f32 0.0, %v1302
      %1304 = vmatmul.f32.gmra.mxu0 %v1178
      %v1305 = vpop.f32.mrf.mxu0
      %v1306 = vadd.f32 0.0, %v1305
      %1307 = vmatmul.f32.gmra.mxu0 %v1181
      %v1308 = vpop.f32.mrf.mxu0
      %v1309 = vadd.f32 0.0, %v1308
      %1310 = vmatmul.f32.gmra.mxu0 %v1184
      %v1311 = vpop.f32.mrf.mxu0
      %v1312 = vadd.f32 0.0, %v1311
      %1313 = vmatmul.f32.gmra.mxu0 %v1187
      %v1314 = vpop.f32.mrf.mxu0
      %v1315 = vadd.f32 0.0, %v1314
      %1316 = vmatmul.f32.gmra.mxu0 %v1190
      %v1317 = vpop.f32.mrf.mxu0
      %v1318 = vadd.f32 0.0, %v1317
      %1319 = vmatmul.f32.gmra.mxu0 %v1193
      %v1320 = vpop.f32.mrf.mxu0
      %v1321 = vadd.f32 0.0, %v1320
      %1322 = vmatmul.f32.gmra.mxu0 %v1196
      %v1323 = vpop.f32.mrf.mxu0
      %v1324 = vadd.f32 0.0, %v1323
      %1325 = vmatmul.f32.gmra.mxu0 %v1199
      %v1326 = vpop.f32.mrf.mxu0
      %v1327 = vadd.f32 0.0, %v1326
      %1328 = vmatmul.f32.gmra.mxu0 %v1202
      %v1329 = vpop.f32.mrf.mxu0
      %v1330 = vadd.f32 0.0, %v1329
      %1331 = vmatmul.f32.gmra.mxu0 %v1205
      %v1332 = vpop.f32.mrf.mxu0
      %v1333 = vadd.f32 0.0, %v1332
      %1334 = vmatmul.f32.gmra.mxu0 %v1208
      %v1335 = vpop.f32.mrf.mxu0
      %v1336 = vadd.f32 0.0, %v1335
      %1337 = vmatmul.f32.gmra.mxu0 %v1211
      %v1338 = vpop.f32.mrf.mxu0
      %v1339 = vadd.f32 0.0, %v1338
      %1340 = vmatmul.f32.gmra.mxu0 %v1214
      %v1341 = vpop.f32.mrf.mxu0
      %v1342 = vadd.f32 0.0, %v1341
      %1343 = vmatmul.f32.gmra.mxu0 %v1217
      %v1344 = vpop.f32.mrf.mxu0
      %v1345 = vadd.f32 0.0, %v1344
      %1346 = vmatmul.f32.gmra.mxu0 %v1220
      %v1347 = vpop.f32.mrf.mxu0
      %v1348 = vadd.f32 0.0, %v1347
      %1349 = vmatmul.f32.gmra.mxu0 %v1223
      %v1350 = vpop.f32.mrf.mxu0
      %v1351 = vadd.f32 0.0, %v1350
      %1352 = vmatmul.f32.gmra.mxu0 %v1226
      %v1353 = vpop.f32.mrf.mxu0
      %v1354 = vadd.f32 0.0, %v1353
      %1355 = vmatmul.f32.gmra.mxu0 %v1229
      %v1356 = vpop.f32.mrf.mxu0
      %v1357 = vadd.f32 0.0, %v1356
      %1358 = vmatmul.f32.gmra.mxu0 %v1232
      %v1359 = vpop.f32.mrf.mxu0
      %v1360 = vadd.f32 0.0, %v1359
      %1361 = vmatmul.f32.gmra.mxu0 %v1235
      %v1362 = vpop.f32.mrf.mxu0
      %v1363 = vadd.f32 0.0, %v1362
      %1364 = vmatmul.f32.gmra.mxu0 %v1238
      %v1365 = vpop.f32.mrf.mxu0
      %v1366 = vadd.f32 0.0, %v1365
      %1367 = vmatmul.f32.gmra.mxu0 %v1241
      %v1368 = vpop.f32.mrf.mxu0
      %v1369 = vadd.f32 0.0, %v1368
      %1370 = vmatmul.f32.gmra.mxu0 %v1244
      %v1371 = vpop.f32.mrf.mxu0
      %v1372 = vadd.f32 0.0, %v1371
      %1373 = vmatmul.f32.gmra.mxu0 %v1247
      %v1374 = vpop.f32.mrf.mxu0
      %v1375 = vadd.f32 0.0, %v1374
      %1376 = vmatmul.f32.gmra.mxu0 %v1250
      %v1377 = vpop.f32.mrf.mxu0
      %v1378 = vadd.f32 0.0, %v1377
      %1379 = vmatmul.f32.gmra.mxu0 %v1253
      %v1380 = vpop.f32.mrf.mxu0
      %v1381 = vadd.f32 0.0, %v1380
      %1382 = vmatmul.f32.gmra.mxu0 %v1256
      %v1383 = vpop.f32.mrf.mxu0
      %v1384 = vadd.f32 0.0, %v1383
      %1385 = vmatmul.f32.gmra.mxu0 %v1259
      %v1386 = vpop.f32.mrf.mxu0
      %v1387 = vadd.f32 0.0, %v1386
      %1388 = vmatmul.f32.gmra.mxu0 %v1262
      %v1389 = vpop.f32.mrf.mxu0
      %v1390 = vadd.f32 0.0, %v1389
      %1391 = vmatmul.f32.gmra.mxu0 %v1265
      %v1392 = vpop.f32.mrf.mxu0
      %v1393 = vadd.f32 0.0, %v1392
      %1394 = vdwg.mxu0
      %v1396 = vsel %vm263, %v670, 0
      %v1399 = vsel %vm263, %v671, 0
      %v1402 = vsel %vm263, %v672, 0
      %v1405 = vsel %vm263, %v673, 0
      %v1408 = vsel %vm263, %v674, 0
      %v1411 = vsel %vm263, %v675, 0
      %v1414 = vsel %vm263, %v676, 0
      %v1417 = vsel %vm263, %v677, 0
      %v1420 = vsel %vm263, %v678, 0
      %v1423 = vsel %vm263, %v679, 0
      %v1426 = vsel %vm263, %v680, 0
      %v1429 = vsel %vm263, %v681, 0
      %v1432 = vsel %vm263, %v682, 0
      %v1435 = vsel %vm263, %v683, 0
      %v1438 = vsel %vm263, %v684, 0
      %v1441 = vsel %vm263, %v685, 0
      %v1444 = vsel %vm263, %v686, 0
      %v1447 = vsel %vm263, %v687, 0
      %v1450 = vsel %vm263, %v688, 0
      %v1453 = vsel %vm263, %v689, 0
      %v1456 = vsel %vm263, %v690, 0
      %v1459 = vsel %vm263, %v691, 0
      %v1462 = vsel %vm263, %v692, 0
      %v1465 = vsel %vm263, %v693, 0
      %v1468 = vsel %vm263, %v694, 0
      %v1471 = vsel %vm263, %v695, 0
      %v1474 = vsel %vm263, %v696, 0
      %v1477 = vsel %vm263, %v697, 0
      %v1480 = vsel %vm263, %v698, 0
      %v1483 = vsel %vm263, %v699, 0
      %v1486 = vsel %vm263, %v700, 0
      %v1489 = vsel %vm263, %v701, 0
      %v1492 = vsel %vm263, %v702, 0
      %v1495 = vsel %vm263, %v703, 0
      %v1498 = vsel %vm263, %v704, 0
      %v1501 = vsel %vm263, %v705, 0
      %v1504 = vsel %vm858, %v707, 0
      %1506 = vmatpush.msra.mxu0 0.0
      %1507 = vmatpush.msra.mxu0 0.0
      %1508 = vmatpush.msra.mxu0 0.0
      %1509 = vmatpush.msra.mxu0 0.0
      %1510 = vmatpush.msra.mxu0 0.0
      %1511 = vmatpush.msra.mxu0 0.0
      %1512 = vmatpush.msra.mxu0 0.0
      %1513 = vmatpush.msra.mxu0 0.0
      %1514 = vmatpush.msra.mxu0 0.0
      %1515 = vmatpush.msra.mxu0 0.0
      %1516 = vmatpush.msra.mxu0 0.0
      %1517 = vmatpush.msra.mxu0 0.0
      %1518 = vmatpush.msra.mxu0 0.0
      %1519 = vmatpush.msra.mxu0 0.0
      %1520 = vmatpush.msra.mxu0 0.0
      %1521 = vmatpush.msra.mxu0 %v1504
      %1522 = vmatmul.f32.gmra.mxu0 %v1396
      %v1523 = vpop.f32.mrf.mxu0
      %v1524 = vadd.f32 %v1288, %v1523
      %1525 = vmatmul.f32.gmra.mxu0 %v1399
      %v1526 = vpop.f32.mrf.mxu0
      %v1527 = vadd.f32 %v1291, %v1526
      %1528 = vmatmul.f32.gmra.mxu0 %v1402
      %v1529 = vpop.f32.mrf.mxu0
      %v1530 = vadd.f32 %v1294, %v1529
      %1531 = vmatmul.f32.gmra.mxu0 %v1405
      %v1532 = vpop.f32.mrf.mxu0
      %v1533 = vadd.f32 %v1297, %v1532
      %1534 = vmatmul.f32.gmra.mxu0 %v1408
      %v1535 = vpop.f32.mrf.mxu0
      %v1536 = vadd.f32 %v1300, %v1535
      %1537 = vmatmul.f32.gmra.mxu0 %v1411
      %v1538 = vpop.f32.mrf.mxu0
      %v1539 = vadd.f32 %v1303, %v1538
      %1540 = vmatmul.f32.gmra.mxu0 %v1414
      %v1541 = vpop.f32.mrf.mxu0
      %v1542 = vadd.f32 %v1306, %v1541
      %1543 = vmatmul.f32.gmra.mxu0 %v1417
      %v1544 = vpop.f32.mrf.mxu0
      %v1545 = vadd.f32 %v1309, %v1544
      %1546 = vmatmul.f32.gmra.mxu0 %v1420
      %v1547 = vpop.f32.mrf.mxu0
      %v1548 = vadd.f32 %v1312, %v1547
      %1549 = vmatmul.f32.gmra.mxu0 %v1423
      %v1550 = vpop.f32.mrf.mxu0
      %v1551 = vadd.f32 %v1315, %v1550
      %1552 = vmatmul.f32.gmra.mxu0 %v1426
      %v1553 = vpop.f32.mrf.mxu0
      %v1554 = vadd.f32 %v1318, %v1553
      %1555 = vmatmul.f32.gmra.mxu0 %v1429
      %v1556 = vpop.f32.mrf.mxu0
      %v1557 = vadd.f32 %v1321, %v1556
      %1558 = vmatmul.f32.gmra.mxu0 %v1432
      %v1559 = vpop.f32.mrf.mxu0
      %v1560 = vadd.f32 %v1324, %v1559
      %1561 = vmatmul.f32.gmra.mxu0 %v1435
      %v1562 = vpop.f32.mrf.mxu0
      %v1563 = vadd.f32 %v1327, %v1562
      %1564 = vmatmul.f32.gmra.mxu0 %v1438
      %v1565 = vpop.f32.mrf.mxu0
      %v1566 = vadd.f32 %v1330, %v1565
      %1567 = vmatmul.f32.gmra.mxu0 %v1441
      %v1568 = vpop.f32.mrf.mxu0
      %v1569 = vadd.f32 %v1333, %v1568
      %1570 = vmatmul.f32.gmra.mxu0 %v1444
      %v1571 = vpop.f32.mrf.mxu0
      %v1572 = vadd.f32 %v1336, %v1571
      %1573 = vmatmul.f32.gmra.mxu0 %v1447
      %v1574 = vpop.f32.mrf.mxu0
      %v1575 = vadd.f32 %v1339, %v1574
      %1576 = vmatmul.f32.gmra.mxu0 %v1450
      %v1577 = vpop.f32.mrf.mxu0
      %v1578 = vadd.f32 %v1342, %v1577
      %1579 = vmatmul.f32.gmra.mxu0 %v1453
      %v1580 = vpop.f32.mrf.mxu0
      %v1581 = vadd.f32 %v1345, %v1580
      %1582 = vmatmul.f32.gmra.mxu0 %v1456
      %v1583 = vpop.f32.mrf.mxu0
      %v1584 = vadd.f32 %v1348, %v1583
      %1585 = vmatmul.f32.gmra.mxu0 %v1459
      %v1586 = vpop.f32.mrf.mxu0
      %v1587 = vadd.f32 %v1351, %v1586
      %1588 = vmatmul.f32.gmra.mxu0 %v1462
      %v1589 = vpop.f32.mrf.mxu0
      %v1590 = vadd.f32 %v1354, %v1589
      %1591 = vmatmul.f32.gmra.mxu0 %v1465
      %v1592 = vpop.f32.mrf.mxu0
      %v1593 = vadd.f32 %v1357, %v1592
      %1594 = vmatmul.f32.gmra.mxu0 %v1468
      %v1595 = vpop.f32.mrf.mxu0
      %v1596 = vadd.f32 %v1360, %v1595
      %1597 = vmatmul.f32.gmra.mxu0 %v1471
      %v1598 = vpop.f32.mrf.mxu0
      %v1599 = vadd.f32 %v1363, %v1598
      %1600 = vmatmul.f32.gmra.mxu0 %v1474
      %v1601 = vpop.f32.mrf.mxu0
      %v1602 = vadd.f32 %v1366, %v1601
      %1603 = vmatmul.f32.gmra.mxu0 %v1477
      %v1604 = vpop.f32.mrf.mxu0
      %v1605 = vadd.f32 %v1369, %v1604
      %1606 = vmatmul.f32.gmra.mxu0 %v1480
      %v1607 = vpop.f32.mrf.mxu0
      %v1608 = vadd.f32 %v1372, %v1607
      %1609 = vmatmul.f32.gmra.mxu0 %v1483
      %v1610 = vpop.f32.mrf.mxu0
      %v1611 = vadd.f32 %v1375, %v1610
      %1612 = vmatmul.f32.gmra.mxu0 %v1486
      %v1613 = vpop.f32.mrf.mxu0
      %v1614 = vadd.f32 %v1378, %v1613
      %1615 = vmatmul.f32.gmra.mxu0 %v1489
      %v1616 = vpop.f32.mrf.mxu0
      %v1617 = vadd.f32 %v1381, %v1616
      %1618 = vmatmul.f32.gmra.mxu0 %v1492
      %v1619 = vpop.f32.mrf.mxu0
      %v1620 = vadd.f32 %v1384, %v1619
      %1621 = vmatmul.f32.gmra.mxu0 %v1495
      %v1622 = vpop.f32.mrf.mxu0
      %v1623 = vadd.f32 %v1387, %v1622
      %1624 = vmatmul.f32.gmra.mxu0 %v1498
      %v1625 = vpop.f32.mrf.mxu0
      %v1626 = vadd.f32 %v1390, %v1625
      %1627 = vmatmul.f32.gmra.mxu0 %v1501
      %v1628 = vpop.f32.mrf.mxu0
      %v1629 = vadd.f32 %v1393, %v1628
      %1630 = vdwg.mxu0
      %v1631 = vld [vmem:[#allocation2 + $0x21] sm:$0xff]
      %v1632 = vld [vmem:[#allocation2 + $0x29] sm:$0xff]
      %v1633 = vld [vmem:[#allocation2 + $0x31] sm:$0xff]
      %v1634 = vld [vmem:[#allocation2 + $0x39] sm:$0xff]
      %v1635 = vld [vmem:[#allocation2 + $0x41] sm:$0xff]
      %v1636 = vld [vmem:[#allocation2 + $0x49] sm:$0xff]
      %v1637 = vld [vmem:[#allocation2 + $0x51] sm:$0xff]
      %v1638 = vld [vmem:[#allocation2 + $0x59] sm:$0xff]
      %v1639 = vld [vmem:[#allocation2 + $0x61] sm:$0xff]
      %v1640 = vld [vmem:[#allocation2 + $0x69] sm:$0xff]
      %v1641 = vld [vmem:[#allocation2 + $0x71] sm:$0xff]
      %v1642 = vld [vmem:[#allocation2 + $0x79] sm:$0xff]
      %v1643 = vld [vmem:[#allocation2 + $0x81] sm:$0xff]
      %v1644 = vld [vmem:[#allocation2 + $0x89] sm:$0xff]
      %v1645 = vld [vmem:[#allocation2 + $0x91] sm:$0xff]
      %v1646 = vld [vmem:[#allocation2 + $0x99] sm:$0xff]
      %v1647 = vld [vmem:[#allocation2 + $0xa1] sm:$0xff]
      %v1648 = vld [vmem:[#allocation2 + $0xa9] sm:$0xff]
      %v1649 = vld [vmem:[#allocation2 + $0xb1] sm:$0xff]
      %v1650 = vld [vmem:[#allocation2 + $0xb9] sm:$0xff]
      %v1651 = vld [vmem:[#allocation2 + $0xc1] sm:$0xff]
      %v1652 = vld [vmem:[#allocation2 + $0xc9] sm:$0xff]
      %v1653 = vld [vmem:[#allocation2 + $0xd1] sm:$0xff]
      %v1654 = vld [vmem:[#allocation2 + $0xd9] sm:$0xff]
      %v1655 = vld [vmem:[#allocation2 + $0xe1] sm:$0xff]
      %v1656 = vld [vmem:[#allocation2 + $0xe9] sm:$0xff]
      %v1657 = vld [vmem:[#allocation2 + $0xf1] sm:$0xff]
      %v1658 = vld [vmem:[#allocation2 + $0xf9] sm:$0xff]
      %v1659 = vld [vmem:[#allocation2 + $0x101] sm:$0xff]
      %v1660 = vld [vmem:[#allocation2 + $0x109] sm:$0xff]
      %v1661 = vld [vmem:[#allocation2 + $0x111] sm:$0xff]
      %v1662 = vld [vmem:[#allocation2 + $0x119] sm:$0xff]
      %v1663 = vld [vmem:[#allocation2 + $0x121] sm:$0xff]
      %v1664 = vld [vmem:[#allocation2 + $0x129] sm:$0xff]
      %v1665 = vld [vmem:[#allocation2 + $0x131] sm:$0xff]
      %v1666 = vld [vmem:[#allocation2 + $0x139] sm:$0xff]
      %s1667 = scalar_lea.vmem %s3, 20
      %v1668 = vld [vmem:[%s1667] sm:$0xf]
      %v1670 = vsel %vm263, %v1631, 0
      %v1673 = vsel %vm263, %v1632, 0
      %v1676 = vsel %vm263, %v1633, 0
      %v1679 = vsel %vm263, %v1634, 0
      %v1682 = vsel %vm263, %v1635, 0
      %v1685 = vsel %vm263, %v1636, 0
      %v1688 = vsel %vm263, %v1637, 0
      %v1691 = vsel %vm263, %v1638, 0
      %v1694 = vsel %vm263, %v1639, 0
      %v1697 = vsel %vm263, %v1640, 0
      %v1700 = vsel %vm263, %v1641, 0
      %v1703 = vsel %vm263, %v1642, 0
      %v1706 = vsel %vm263, %v1643, 0
      %v1709 = vsel %vm263, %v1644, 0
      %v1712 = vsel %vm263, %v1645, 0
      %v1715 = vsel %vm263, %v1646, 0
      %v1718 = vsel %vm263, %v1647, 0
      %v1721 = vsel %vm263, %v1648, 0
      %v1724 = vsel %vm263, %v1649, 0
      %v1727 = vsel %vm263, %v1650, 0
      %v1730 = vsel %vm263, %v1651, 0
      %v1733 = vsel %vm263, %v1652, 0
      %v1736 = vsel %vm263, %v1653, 0
      %v1739 = vsel %vm263, %v1654, 0
      %v1742 = vsel %vm263, %v1655, 0
      %v1745 = vsel %vm263, %v1656, 0
      %v1748 = vsel %vm263, %v1657, 0
      %v1751 = vsel %vm263, %v1658, 0
      %v1754 = vsel %vm263, %v1659, 0
      %v1757 = vsel %vm263, %v1660, 0
      %v1760 = vsel %vm263, %v1661, 0
      %v1763 = vsel %vm263, %v1662, 0
      %v1766 = vsel %vm263, %v1663, 0
      %v1769 = vsel %vm263, %v1664, 0
      %v1772 = vsel %vm263, %v1665, 0
      %v1775 = vsel %vm263, %v1666, 0
      %v1778 = vsel %vm858, %v1668, 0
      %1780 = vmatpush.msra.mxu0 0.0
      %1781 = vmatpush.msra.mxu0 0.0
      %1782 = vmatpush.msra.mxu0 0.0
      %1783 = vmatpush.msra.mxu0 0.0
      %1784 = vmatpush.msra.mxu0 0.0
      %1785 = vmatpush.msra.mxu0 0.0
      %1786 = vmatpush.msra.mxu0 0.0
      %1787 = vmatpush.msra.mxu0 0.0
      %1788 = vmatpush.msra.mxu0 0.0
      %1789 = vmatpush.msra.mxu0 0.0
      %1790 = vmatpush.msra.mxu0 0.0
      %1791 = vmatpush.msra.mxu0 0.0
      %1792 = vmatpush.msra.mxu0 0.0
      %1793 = vmatpush.msra.mxu0 0.0
      %1794 = vmatpush.msra.mxu0 0.0
      %1795 = vmatpush.msra.mxu0 %v1778
      %1796 = vmatmul.f32.gmra.mxu0 %v1670
      %v1797 = vpop.f32.mrf.mxu0
      %v1798 = vadd.f32 0.0, %v1797
      %1799 = vmatmul.f32.gmra.mxu0 %v1673
      %v1800 = vpop.f32.mrf.mxu0
      %v1801 = vadd.f32 0.0, %v1800
      %1802 = vmatmul.f32.gmra.mxu0 %v1676
      %v1803 = vpop.f32.mrf.mxu0
      %v1804 = vadd.f32 0.0, %v1803
      %1805 = vmatmul.f32.gmra.mxu0 %v1679
      %v1806 = vpop.f32.mrf.mxu0
      %v1807 = vadd.f32 0.0, %v1806
      %1808 = vmatmul.f32.gmra.mxu0 %v1682
      %v1809 = vpop.f32.mrf.mxu0
      %v1810 = vadd.f32 0.0, %v1809
      %1811 = vmatmul.f32.gmra.mxu0 %v1685
      %v1812 = vpop.f32.mrf.mxu0
      %v1813 = vadd.f32 0.0, %v1812
      %1814 = vmatmul.f32.gmra.mxu0 %v1688
      %v1815 = vpop.f32.mrf.mxu0
      %v1816 = vadd.f32 0.0, %v1815
      %1817 = vmatmul.f32.gmra.mxu0 %v1691
      %v1818 = vpop.f32.mrf.mxu0
      %v1819 = vadd.f32 0.0, %v1818
      %1820 = vmatmul.f32.gmra.mxu0 %v1694
      %v1821 = vpop.f32.mrf.mxu0
      %v1822 = vadd.f32 0.0, %v1821
      %1823 = vmatmul.f32.gmra.mxu0 %v1697
      %v1824 = vpop.f32.mrf.mxu0
      %v1825 = vadd.f32 0.0, %v1824
      %1826 = vmatmul.f32.gmra.mxu0 %v1700
      %v1827 = vpop.f32.mrf.mxu0
      %v1828 = vadd.f32 0.0, %v1827
      %1829 = vmatmul.f32.gmra.mxu0 %v1703
      %v1830 = vpop.f32.mrf.mxu0
      %v1831 = vadd.f32 0.0, %v1830
      %1832 = vmatmul.f32.gmra.mxu0 %v1706
      %v1833 = vpop.f32.mrf.mxu0
      %v1834 = vadd.f32 0.0, %v1833
      %1835 = vmatmul.f32.gmra.mxu0 %v1709
      %v1836 = vpop.f32.mrf.mxu0
      %v1837 = vadd.f32 0.0, %v1836
      %1838 = vmatmul.f32.gmra.mxu0 %v1712
      %v1839 = vpop.f32.mrf.mxu0
      %v1840 = vadd.f32 0.0, %v1839
      %1841 = vmatmul.f32.gmra.mxu0 %v1715
      %v1842 = vpop.f32.mrf.mxu0
      %v1843 = vadd.f32 0.0, %v1842
      %1844 = vmatmul.f32.gmra.mxu0 %v1718
      %v1845 = vpop.f32.mrf.mxu0
      %v1846 = vadd.f32 0.0, %v1845
      %1847 = vmatmul.f32.gmra.mxu0 %v1721
      %v1848 = vpop.f32.mrf.mxu0
      %v1849 = vadd.f32 0.0, %v1848
      %1850 = vmatmul.f32.gmra.mxu0 %v1724
      %v1851 = vpop.f32.mrf.mxu0
      %v1852 = vadd.f32 0.0, %v1851
      %1853 = vmatmul.f32.gmra.mxu0 %v1727
      %v1854 = vpop.f32.mrf.mxu0
      %v1855 = vadd.f32 0.0, %v1854
      %1856 = vmatmul.f32.gmra.mxu0 %v1730
      %v1857 = vpop.f32.mrf.mxu0
      %v1858 = vadd.f32 0.0, %v1857
      %1859 = vmatmul.f32.gmra.mxu0 %v1733
      %v1860 = vpop.f32.mrf.mxu0
      %v1861 = vadd.f32 0.0, %v1860
      %1862 = vmatmul.f32.gmra.mxu0 %v1736
      %v1863 = vpop.f32.mrf.mxu0
      %v1864 = vadd.f32 0.0, %v1863
      %1865 = vmatmul.f32.gmra.mxu0 %v1739
      %v1866 = vpop.f32.mrf.mxu0
      %v1867 = vadd.f32 0.0, %v1866
      %1868 = vmatmul.f32.gmra.mxu0 %v1742
      %v1869 = vpop.f32.mrf.mxu0
      %v1870 = vadd.f32 0.0, %v1869
      %1871 = vmatmul.f32.gmra.mxu0 %v1745
      %v1872 = vpop.f32.mrf.mxu0
      %v1873 = vadd.f32 0.0, %v1872
      %1874 = vmatmul.f32.gmra.mxu0 %v1748
      %v1875 = vpop.f32.mrf.mxu0
      %v1876 = vadd.f32 0.0, %v1875
      %1877 = vmatmul.f32.gmra.mxu0 %v1751
      %v1878 = vpop.f32.mrf.mxu0
      %v1879 = vadd.f32 0.0, %v1878
      %1880 = vmatmul.f32.gmra.mxu0 %v1754
      %v1881 = vpop.f32.mrf.mxu0
      %v1882 = vadd.f32 0.0, %v1881
      %1883 = vmatmul.f32.gmra.mxu0 %v1757
      %v1884 = vpop.f32.mrf.mxu0
      %v1885 = vadd.f32 0.0, %v1884
      %1886 = vmatmul.f32.gmra.mxu0 %v1760
      %v1887 = vpop.f32.mrf.mxu0
      %v1888 = vadd.f32 0.0, %v1887
      %1889 = vmatmul.f32.gmra.mxu0 %v1763
      %v1890 = vpop.f32.mrf.mxu0
      %v1891 = vadd.f32 0.0, %v1890
      %1892 = vmatmul.f32.gmra.mxu0 %v1766
      %v1893 = vpop.f32.mrf.mxu0
      %v1894 = vadd.f32 0.0, %v1893
      %1895 = vmatmul.f32.gmra.mxu0 %v1769
      %v1896 = vpop.f32.mrf.mxu0
      %v1897 = vadd.f32 0.0, %v1896
      %1898 = vmatmul.f32.gmra.mxu0 %v1772
      %v1899 = vpop.f32.mrf.mxu0
      %v1900 = vadd.f32 0.0, %v1899
      %1901 = vmatmul.f32.gmra.mxu0 %v1775
      %v1902 = vpop.f32.mrf.mxu0
      %v1903 = vadd.f32 0.0, %v1902
      %1904 = vdwg.mxu0
      %v1906 = vsel %vm263, %v708, 0
      %v1909 = vsel %vm263, %v709, 0
      %v1912 = vsel %vm263, %v710, 0
      %v1915 = vsel %vm263, %v711, 0
      %v1918 = vsel %vm263, %v712, 0
      %v1921 = vsel %vm263, %v713, 0
      %v1924 = vsel %vm263, %v714, 0
      %v1927 = vsel %vm263, %v715, 0
      %v1930 = vsel %vm263, %v716, 0
      %v1933 = vsel %vm263, %v717, 0
      %v1936 = vsel %vm263, %v718, 0
      %v1939 = vsel %vm263, %v719, 0
      %v1942 = vsel %vm263, %v720, 0
      %v1945 = vsel %vm263, %v721, 0
      %v1948 = vsel %vm263, %v722, 0
      %v1951 = vsel %vm263, %v723, 0
      %v1954 = vsel %vm263, %v724, 0
      %v1957 = vsel %vm263, %v725, 0
      %v1960 = vsel %vm263, %v726, 0
      %v1963 = vsel %vm263, %v727, 0
      %v1966 = vsel %vm263, %v728, 0
      %v1969 = vsel %vm263, %v729, 0
      %v1972 = vsel %vm263, %v730, 0
      %v1975 = vsel %vm263, %v731, 0
      %v1978 = vsel %vm263, %v732, 0
      %v1981 = vsel %vm263, %v733, 0
      %v1984 = vsel %vm263, %v734, 0
      %v1987 = vsel %vm263, %v735, 0
      %v1990 = vsel %vm263, %v736, 0
      %v1993 = vsel %vm263, %v737, 0
      %v1996 = vsel %vm263, %v738, 0
      %v1999 = vsel %vm263, %v739, 0
      %v2002 = vsel %vm263, %v740, 0
      %v2005 = vsel %vm263, %v741, 0
      %v2008 = vsel %vm263, %v742, 0
      %v2011 = vsel %vm263, %v743, 0
      %v2014 = vsel %vm858, %v745, 0
      %2016 = vmatpush.msra.mxu0 0.0
      %2017 = vmatpush.msra.mxu0 0.0
      %2018 = vmatpush.msra.mxu0 0.0
      %2019 = vmatpush.msra.mxu0 0.0
      %2020 = vmatpush.msra.mxu0 0.0
      %2021 = vmatpush.msra.mxu0 0.0
      %2022 = vmatpush.msra.mxu0 0.0
      %2023 = vmatpush.msra.mxu0 0.0
      %2024 = vmatpush.msra.mxu0 0.0
      %2025 = vmatpush.msra.mxu0 0.0
      %2026 = vmatpush.msra.mxu0 0.0
      %2027 = vmatpush.msra.mxu0 0.0
      %2028 = vmatpush.msra.mxu0 0.0
      %2029 = vmatpush.msra.mxu0 0.0
      %2030 = vmatpush.msra.mxu0 0.0
      %2031 = vmatpush.msra.mxu0 %v2014
      %2032 = vmatmul.f32.gmra.mxu0 %v1906
      %v2033 = vpop.f32.mrf.mxu0
      %v2034 = vadd.f32 %v1798, %v2033
      %2035 = vmatmul.f32.gmra.mxu0 %v1909
      %v2036 = vpop.f32.mrf.mxu0
      %v2037 = vadd.f32 %v1801, %v2036
      %2038 = vmatmul.f32.gmra.mxu0 %v1912
      %v2039 = vpop.f32.mrf.mxu0
      %v2040 = vadd.f32 %v1804, %v2039
      %2041 = vmatmul.f32.gmra.mxu0 %v1915
      %v2042 = vpop.f32.mrf.mxu0
      %v2043 = vadd.f32 %v1807, %v2042
      %2044 = vmatmul.f32.gmra.mxu0 %v1918
      %v2045 = vpop.f32.mrf.mxu0
      %v2046 = vadd.f32 %v1810, %v2045
      %2047 = vmatmul.f32.gmra.mxu0 %v1921
      %v2048 = vpop.f32.mrf.mxu0
      %v2049 = vadd.f32 %v1813, %v2048
      %2050 = vmatmul.f32.gmra.mxu0 %v1924
      %v2051 = vpop.f32.mrf.mxu0
      %v2052 = vadd.f32 %v1816, %v2051
      %2053 = vmatmul.f32.gmra.mxu0 %v1927
      %v2054 = vpop.f32.mrf.mxu0
      %v2055 = vadd.f32 %v1819, %v2054
      %2056 = vmatmul.f32.gmra.mxu0 %v1930
      %v2057 = vpop.f32.mrf.mxu0
      %v2058 = vadd.f32 %v1822, %v2057
      %2059 = vmatmul.f32.gmra.mxu0 %v1933
      %v2060 = vpop.f32.mrf.mxu0
      %v2061 = vadd.f32 %v1825, %v2060
      %2062 = vmatmul.f32.gmra.mxu0 %v1936
      %v2063 = vpop.f32.mrf.mxu0
      %v2064 = vadd.f32 %v1828, %v2063
      %2065 = vmatmul.f32.gmra.mxu0 %v1939
      %v2066 = vpop.f32.mrf.mxu0
      %v2067 = vadd.f32 %v1831, %v2066
      %2068 = vmatmul.f32.gmra.mxu0 %v1942
      %v2069 = vpop.f32.mrf.mxu0
      %v2070 = vadd.f32 %v1834, %v2069
      %2071 = vmatmul.f32.gmra.mxu0 %v1945
      %v2072 = vpop.f32.mrf.mxu0
      %v2073 = vadd.f32 %v1837, %v2072
      %2074 = vmatmul.f32.gmra.mxu0 %v1948
      %v2075 = vpop.f32.mrf.mxu0
      %v2076 = vadd.f32 %v1840, %v2075
      %2077 = vmatmul.f32.gmra.mxu0 %v1951
      %v2078 = vpop.f32.mrf.mxu0
      %v2079 = vadd.f32 %v1843, %v2078
      %2080 = vmatmul.f32.gmra.mxu0 %v1954
      %v2081 = vpop.f32.mrf.mxu0
      %v2082 = vadd.f32 %v1846, %v2081
      %2083 = vmatmul.f32.gmra.mxu0 %v1957
      %v2084 = vpop.f32.mrf.mxu0
      %v2085 = vadd.f32 %v1849, %v2084
      %2086 = vmatmul.f32.gmra.mxu0 %v1960
      %v2087 = vpop.f32.mrf.mxu0
      %v2088 = vadd.f32 %v1852, %v2087
      %2089 = vmatmul.f32.gmra.mxu0 %v1963
      %v2090 = vpop.f32.mrf.mxu0
      %v2091 = vadd.f32 %v1855, %v2090
      %2092 = vmatmul.f32.gmra.mxu0 %v1966
      %v2093 = vpop.f32.mrf.mxu0
      %v2094 = vadd.f32 %v1858, %v2093
      %2095 = vmatmul.f32.gmra.mxu0 %v1969
      %v2096 = vpop.f32.mrf.mxu0
      %v2097 = vadd.f32 %v1861, %v2096
      %2098 = vmatmul.f32.gmra.mxu0 %v1972
      %v2099 = vpop.f32.mrf.mxu0
      %v2100 = vadd.f32 %v1864, %v2099
      %2101 = vmatmul.f32.gmra.mxu0 %v1975
      %v2102 = vpop.f32.mrf.mxu0
      %v2103 = vadd.f32 %v1867, %v2102
      %2104 = vmatmul.f32.gmra.mxu0 %v1978
      %v2105 = vpop.f32.mrf.mxu0
      %v2106 = vadd.f32 %v1870, %v2105
      %2107 = vmatmul.f32.gmra.mxu0 %v1981
      %v2108 = vpop.f32.mrf.mxu0
      %v2109 = vadd.f32 %v1873, %v2108
      %2110 = vmatmul.f32.gmra.mxu0 %v1984
      %v2111 = vpop.f32.mrf.mxu0
      %v2112 = vadd.f32 %v1876, %v2111
      %2113 = vmatmul.f32.gmra.mxu0 %v1987
      %v2114 = vpop.f32.mrf.mxu0
      %v2115 = vadd.f32 %v1879, %v2114
      %2116 = vmatmul.f32.gmra.mxu0 %v1990
      %v2117 = vpop.f32.mrf.mxu0
      %v2118 = vadd.f32 %v1882, %v2117
      %2119 = vmatmul.f32.gmra.mxu0 %v1993
      %v2120 = vpop.f32.mrf.mxu0
      %v2121 = vadd.f32 %v1885, %v2120
      %2122 = vmatmul.f32.gmra.mxu0 %v1996
      %v2123 = vpop.f32.mrf.mxu0
      %v2124 = vadd.f32 %v1888, %v2123
      %2125 = vmatmul.f32.gmra.mxu0 %v1999
      %v2126 = vpop.f32.mrf.mxu0
      %v2127 = vadd.f32 %v1891, %v2126
      %2128 = vmatmul.f32.gmra.mxu0 %v2002
      %v2129 = vpop.f32.mrf.mxu0
      %v2130 = vadd.f32 %v1894, %v2129
      %2131 = vmatmul.f32.gmra.mxu0 %v2005
      %v2132 = vpop.f32.mrf.mxu0
      %v2133 = vadd.f32 %v1897, %v2132
      %2134 = vmatmul.f32.gmra.mxu0 %v2008
      %v2135 = vpop.f32.mrf.mxu0
      %v2136 = vadd.f32 %v1900, %v2135
      %2137 = vmatmul.f32.gmra.mxu0 %v2011
      %v2138 = vpop.f32.mrf.mxu0
      %v2139 = vadd.f32 %v1903, %v2138
      %2140 = vdwg.mxu0
      %v2141 = vld [vmem:[#allocation2 + $0x2f] sm:$0xff]
      %v2142 = vld [vmem:[#allocation2 + $0x37] sm:$0xff]
      %v2143 = vld [vmem:[#allocation2 + $0x3f] sm:$0xff]
      %v2144 = vld [vmem:[#allocation2 + $0x47] sm:$0xff]
      %v2145 = vld [vmem:[#allocation2 + $0x4f] sm:$0xff]
      %v2146 = vld [vmem:[#allocation2 + $0x57] sm:$0xff]
      %v2147 = vld [vmem:[#allocation2 + $0x5f] sm:$0xff]
      %v2148 = vld [vmem:[#allocation2 + $0x67] sm:$0xff]
      %v2149 = vld [vmem:[#allocation2 + $0x6f] sm:$0xff]
      %v2150 = vld [vmem:[#allocation2 + $0x77] sm:$0xff]
      %v2151 = vld [vmem:[#allocation2 + $0x7f] sm:$0xff]
      %v2152 = vld [vmem:[#allocation2 + $0x87] sm:$0xff]
      %v2153 = vld [vmem:[#allocation2 + $0x8f] sm:$0xff]
      %v2154 = vld [vmem:[#allocation2 + $0x97] sm:$0xff]
      %v2155 = vld [vmem:[#allocation2 + $0x9f] sm:$0xff]
      %v2156 = vld [vmem:[#allocation2 + $0xa7] sm:$0xff]
      %v2157 = vld [vmem:[#allocation2 + $0xaf] sm:$0xff]
      %v2158 = vld [vmem:[#allocation2 + $0xb7] sm:$0xff]
      %v2159 = vld [vmem:[#allocation2 + $0xbf] sm:$0xff]
      %v2160 = vld [vmem:[#allocation2 + $0xc7] sm:$0xff]
      %v2161 = vld [vmem:[#allocation2 + $0xcf] sm:$0xff]
      %v2162 = vld [vmem:[#allocation2 + $0xd7] sm:$0xff]
      %v2163 = vld [vmem:[#allocation2 + $0xdf] sm:$0xff]
      %v2164 = vld [vmem:[#allocation2 + $0xe7] sm:$0xff]
      %v2165 = vld [vmem:[#allocation2 + $0xef] sm:$0xff]
      %v2166 = vld [vmem:[#allocation2 + $0xf7] sm:$0xff]
      %v2167 = vld [vmem:[#allocation2 + $0xff] sm:$0xff]
      %v2168 = vld [vmem:[#allocation2 + $0x107] sm:$0xff]
      %v2169 = vld [vmem:[#allocation2 + $0x10f] sm:$0xff]
      %v2170 = vld [vmem:[#allocation2 + $0x117] sm:$0xff]
      %v2171 = vld [vmem:[#allocation2 + $0x11f] sm:$0xff]
      %v2172 = vld [vmem:[#allocation2 + $0x127] sm:$0xff]
      %v2173 = vld [vmem:[#allocation2 + $0x12f] sm:$0xff]
      %v2174 = vld [vmem:[#allocation2 + $0x137] sm:$0xff]
      %v2175 = vld [vmem:[#allocation2 + $0x13f] sm:$0xff]
      %v2176 = vld [vmem:[#allocation2 + $0x147] sm:$0xff]
      %s2177 = scalar_lea.vmem %s3, 24
      %v2178 = vld [vmem:[%s2177] sm:$0xf]
      %v2180 = vsel %vm263, %v2141, 0
      %v2183 = vsel %vm263, %v2142, 0
      %v2186 = vsel %vm263, %v2143, 0
      %v2189 = vsel %vm263, %v2144, 0
      %v2192 = vsel %vm263, %v2145, 0
      %v2195 = vsel %vm263, %v2146, 0
      %v2198 = vsel %vm263, %v2147, 0
      %v2201 = vsel %vm263, %v2148, 0
      %v2204 = vsel %vm263, %v2149, 0
      %v2207 = vsel %vm263, %v2150, 0
      %v2210 = vsel %vm263, %v2151, 0
      %v2213 = vsel %vm263, %v2152, 0
      %v2216 = vsel %vm263, %v2153, 0
      %v2219 = vsel %vm263, %v2154, 0
      %v2222 = vsel %vm263, %v2155, 0
      %v2225 = vsel %vm263, %v2156, 0
      %v2228 = vsel %vm263, %v2157, 0
      %v2231 = vsel %vm263, %v2158, 0
      %v2234 = vsel %vm263, %v2159, 0
      %v2237 = vsel %vm263, %v2160, 0
      %v2240 = vsel %vm263, %v2161, 0
      %v2243 = vsel %vm263, %v2162, 0
      %v2246 = vsel %vm263, %v2163, 0
      %v2249 = vsel %vm263, %v2164, 0
      %v2252 = vsel %vm263, %v2165, 0
      %v2255 = vsel %vm263, %v2166, 0
      %v2258 = vsel %vm263, %v2167, 0
      %v2261 = vsel %vm263, %v2168, 0
      %v2264 = vsel %vm263, %v2169, 0
      %v2267 = vsel %vm263, %v2170, 0
      %v2270 = vsel %vm263, %v2171, 0
      %v2273 = vsel %vm263, %v2172, 0
      %v2276 = vsel %vm263, %v2173, 0
      %v2279 = vsel %vm263, %v2174, 0
      %v2282 = vsel %vm263, %v2175, 0
      %v2285 = vsel %vm263, %v2176, 0
      %v2288 = vsel %vm858, %v2178, 0
      %2290 = vmatpush.msra.mxu0 0.0
      %2291 = vmatpush.msra.mxu0 0.0
      %2292 = vmatpush.msra.mxu0 0.0
      %2293 = vmatpush.msra.mxu0 0.0
      %2294 = vmatpush.msra.mxu0 0.0
      %2295 = vmatpush.msra.mxu0 0.0
      %2296 = vmatpush.msra.mxu0 0.0
      %2297 = vmatpush.msra.mxu0 0.0
      %2298 = vmatpush.msra.mxu0 0.0
      %2299 = vmatpush.msra.mxu0 0.0
      %2300 = vmatpush.msra.mxu0 0.0
      %2301 = vmatpush.msra.mxu0 0.0
      %2302 = vmatpush.msra.mxu0 0.0
      %2303 = vmatpush.msra.mxu0 0.0
      %2304 = vmatpush.msra.mxu0 0.0
      %2305 = vmatpush.msra.mxu0 %v2288
      %2306 = vmatmul.f32.gmra.mxu0 %v2180
      %v2307 = vpop.f32.mrf.mxu0
      %v2308 = vadd.f32 0.0, %v2307
      %2309 = vmatmul.f32.gmra.mxu0 %v2183
      %v2310 = vpop.f32.mrf.mxu0
      %v2311 = vadd.f32 0.0, %v2310
      %2312 = vmatmul.f32.gmra.mxu0 %v2186
      %v2313 = vpop.f32.mrf.mxu0
      %v2314 = vadd.f32 0.0, %v2313
      %2315 = vmatmul.f32.gmra.mxu0 %v2189
      %v2316 = vpop.f32.mrf.mxu0
      %v2317 = vadd.f32 0.0, %v2316
      %2318 = vmatmul.f32.gmra.mxu0 %v2192
      %v2319 = vpop.f32.mrf.mxu0
      %v2320 = vadd.f32 0.0, %v2319
      %2321 = vmatmul.f32.gmra.mxu0 %v2195
      %v2322 = vpop.f32.mrf.mxu0
      %v2323 = vadd.f32 0.0, %v2322
      %2324 = vmatmul.f32.gmra.mxu0 %v2198
      %v2325 = vpop.f32.mrf.mxu0
      %v2326 = vadd.f32 0.0, %v2325
      %2327 = vmatmul.f32.gmra.mxu0 %v2201
      %v2328 = vpop.f32.mrf.mxu0
      %v2329 = vadd.f32 0.0, %v2328
      %2330 = vmatmul.f32.gmra.mxu0 %v2204
      %v2331 = vpop.f32.mrf.mxu0
      %v2332 = vadd.f32 0.0, %v2331
      %2333 = vmatmul.f32.gmra.mxu0 %v2207
      %v2334 = vpop.f32.mrf.mxu0
      %v2335 = vadd.f32 0.0, %v2334
      %2336 = vmatmul.f32.gmra.mxu0 %v2210
      %v2337 = vpop.f32.mrf.mxu0
      %v2338 = vadd.f32 0.0, %v2337
      %2339 = vmatmul.f32.gmra.mxu0 %v2213
      %v2340 = vpop.f32.mrf.mxu0
      %v2341 = vadd.f32 0.0, %v2340
      %2342 = vmatmul.f32.gmra.mxu0 %v2216
      %v2343 = vpop.f32.mrf.mxu0
      %v2344 = vadd.f32 0.0, %v2343
      %2345 = vmatmul.f32.gmra.mxu0 %v2219
      %v2346 = vpop.f32.mrf.mxu0
      %v2347 = vadd.f32 0.0, %v2346
      %2348 = vmatmul.f32.gmra.mxu0 %v2222
      %v2349 = vpop.f32.mrf.mxu0
      %v2350 = vadd.f32 0.0, %v2349
      %2351 = vmatmul.f32.gmra.mxu0 %v2225
      %v2352 = vpop.f32.mrf.mxu0
      %v2353 = vadd.f32 0.0, %v2352
      %2354 = vmatmul.f32.gmra.mxu0 %v2228
      %v2355 = vpop.f32.mrf.mxu0
      %v2356 = vadd.f32 0.0, %v2355
      %2357 = vmatmul.f32.gmra.mxu0 %v2231
      %v2358 = vpop.f32.mrf.mxu0
      %v2359 = vadd.f32 0.0, %v2358
      %2360 = vmatmul.f32.gmra.mxu0 %v2234
      %v2361 = vpop.f32.mrf.mxu0
      %v2362 = vadd.f32 0.0, %v2361
      %2363 = vmatmul.f32.gmra.mxu0 %v2237
      %v2364 = vpop.f32.mrf.mxu0
      %v2365 = vadd.f32 0.0, %v2364
      %2366 = vmatmul.f32.gmra.mxu0 %v2240
      %v2367 = vpop.f32.mrf.mxu0
      %v2368 = vadd.f32 0.0, %v2367
      %2369 = vmatmul.f32.gmra.mxu0 %v2243
      %v2370 = vpop.f32.mrf.mxu0
      %v2371 = vadd.f32 0.0, %v2370
      %2372 = vmatmul.f32.gmra.mxu0 %v2246
      %v2373 = vpop.f32.mrf.mxu0
      %v2374 = vadd.f32 0.0, %v2373
      %2375 = vmatmul.f32.gmra.mxu0 %v2249
      %v2376 = vpop.f32.mrf.mxu0
      %v2377 = vadd.f32 0.0, %v2376
      %2378 = vmatmul.f32.gmra.mxu0 %v2252
      %v2379 = vpop.f32.mrf.mxu0
      %v2380 = vadd.f32 0.0, %v2379
      %2381 = vmatmul.f32.gmra.mxu0 %v2255
      %v2382 = vpop.f32.mrf.mxu0
      %v2383 = vadd.f32 0.0, %v2382
      %2384 = vmatmul.f32.gmra.mxu0 %v2258
      %v2385 = vpop.f32.mrf.mxu0
      %v2386 = vadd.f32 0.0, %v2385
      %2387 = vmatmul.f32.gmra.mxu0 %v2261
      %v2388 = vpop.f32.mrf.mxu0
      %v2389 = vadd.f32 0.0, %v2388
      %2390 = vmatmul.f32.gmra.mxu0 %v2264
      %v2391 = vpop.f32.mrf.mxu0
      %v2392 = vadd.f32 0.0, %v2391
      %2393 = vmatmul.f32.gmra.mxu0 %v2267
      %v2394 = vpop.f32.mrf.mxu0
      %v2395 = vadd.f32 0.0, %v2394
      %2396 = vmatmul.f32.gmra.mxu0 %v2270
      %v2397 = vpop.f32.mrf.mxu0
      %v2398 = vadd.f32 0.0, %v2397
      %2399 = vmatmul.f32.gmra.mxu0 %v2273
      %v2400 = vpop.f32.mrf.mxu0
      %v2401 = vadd.f32 0.0, %v2400
      %2402 = vmatmul.f32.gmra.mxu0 %v2276
      %v2403 = vpop.f32.mrf.mxu0
      %v2404 = vadd.f32 0.0, %v2403
      %2405 = vmatmul.f32.gmra.mxu0 %v2279
      %v2406 = vpop.f32.mrf.mxu0
      %v2407 = vadd.f32 0.0, %v2406
      %2408 = vmatmul.f32.gmra.mxu0 %v2282
      %v2409 = vpop.f32.mrf.mxu0
      %v2410 = vadd.f32 0.0, %v2409
      %2411 = vmatmul.f32.gmra.mxu0 %v2285
      %v2412 = vpop.f32.mrf.mxu0
      %v2413 = vadd.f32 0.0, %v2412
      %2414 = vdwg.mxu0
      %v2415 = vadd.f32 %v1014, %v2308
      %v2416 = vadd.f32 %v1017, %v2311
      %v2417 = vadd.f32 %v1020, %v2314
      %v2418 = vadd.f32 %v1023, %v2317
      %v2419 = vadd.f32 %v1026, %v2320
      %v2420 = vadd.f32 %v1029, %v2323
      %v2421 = vadd.f32 %v1032, %v2326
      %v2422 = vadd.f32 %v1035, %v2329
      %v2423 = vadd.f32 %v1038, %v2332
      %v2424 = vadd.f32 %v1041, %v2335
      %v2425 = vadd.f32 %v1044, %v2338
      %v2426 = vadd.f32 %v1047, %v2341
      %v2427 = vadd.f32 %v1050, %v2344
      %v2428 = vadd.f32 %v1053, %v2347
      %v2429 = vadd.f32 %v1056, %v2350
      %v2430 = vadd.f32 %v1059, %v2353
      %v2431 = vadd.f32 %v1062, %v2356
      %v2432 = vadd.f32 %v1065, %v2359
      %v2433 = vadd.f32 %v1068, %v2362
      %v2434 = vadd.f32 %v1071, %v2365
      %v2435 = vadd.f32 %v1074, %v2368
      %v2436 = vadd.f32 %v1077, %v2371
      %v2437 = vadd.f32 %v1080, %v2374
      %v2438 = vadd.f32 %v1083, %v2377
      %v2439 = vadd.f32 %v1086, %v2380
      %v2440 = vadd.f32 %v1089, %v2383
      %v2441 = vadd.f32 %v1092, %v2386
      %v2442 = vadd.f32 %v1095, %v2389
      %v2443 = vadd.f32 %v1098, %v2392
      %v2444 = vadd.f32 %v1101, %v2395
      %v2445 = vadd.f32 %v1104, %v2398
      %v2446 = vadd.f32 %v1107, %v2401
      %v2447 = vadd.f32 %v1110, %v2404
      %v2448 = vadd.f32 %v1113, %v2407
      %v2449 = vadd.f32 %v1116, %v2410
      %v2450 = vadd.f32 %v1119, %v2413
      %v2451 = vld [vmem:[#allocation2 + $0x30] sm:$0xff]
      %v2452 = vld [vmem:[#allocation2 + $0x38] sm:$0xff]
      %v2453 = vld [vmem:[#allocation2 + $0x40] sm:$0xff]
      %v2454 = vld [vmem:[#allocation2 + $0x48] sm:$0xff]
      %v2455 = vld [vmem:[#allocation2 + $0x50] sm:$0xff]
      %v2456 = vld [vmem:[#allocation2 + $0x58] sm:$0xff]
      %v2457 = vld [vmem:[#allocation2 + $0x60] sm:$0xff]
      %v2458 = vld [vmem:[#allocation2 + $0x68] sm:$0xff]
      %v2459 = vld [vmem:[#allocation2 + $0x70] sm:$0xff]
      %v2460 = vld [vmem:[#allocation2 + $0x78] sm:$0xff]
      %v2461 = vld [vmem:[#allocation2 + $0x80] sm:$0xff]
      %v2462 = vld [vmem:[#allocation2 + $0x88] sm:$0xff]
      %v2463 = vld [vmem:[#allocation2 + $0x90] sm:$0xff]
      %v2464 = vld [vmem:[#allocation2 + $0x98] sm:$0xff]
      %v2465 = vld [vmem:[#allocation2 + $0xa0] sm:$0xff]
      %v2466 = vld [vmem:[#allocation2 + $0xa8] sm:$0xff]
      %v2467 = vld [vmem:[#allocation2 + $0xb0] sm:$0xff]
      %v2468 = vld [vmem:[#allocation2 + $0xb8] sm:$0xff]
      %v2469 = vld [vmem:[#allocation2 + $0xc0] sm:$0xff]
      %v2470 = vld [vmem:[#allocation2 + $0xc8] sm:$0xff]
      %v2471 = vld [vmem:[#allocation2 + $0xd0] sm:$0xff]
      %v2472 = vld [vmem:[#allocation2 + $0xd8] sm:$0xff]
      %v2473 = vld [vmem:[#allocation2 + $0xe0] sm:$0xff]
      %v2474 = vld [vmem:[#allocation2 + $0xe8] sm:$0xff]
      %v2475 = vld [vmem:[#allocation2 + $0xf0] sm:$0xff]
      %v2476 = vld [vmem:[#allocation2 + $0xf8] sm:$0xff]
      %v2477 = vld [vmem:[#allocation2 + $0x100] sm:$0xff]
      %v2478 = vld [vmem:[#allocation2 + $0x108] sm:$0xff]
      %v2479 = vld [vmem:[#allocation2 + $0x110] sm:$0xff]
      %v2480 = vld [vmem:[#allocation2 + $0x118] sm:$0xff]
      %v2481 = vld [vmem:[#allocation2 + $0x120] sm:$0xff]
      %v2482 = vld [vmem:[#allocation2 + $0x128] sm:$0xff]
      %v2483 = vld [vmem:[#allocation2 + $0x130] sm:$0xff]
      %v2484 = vld [vmem:[#allocation2 + $0x138] sm:$0xff]
      %v2485 = vld [vmem:[#allocation2 + $0x140] sm:$0xff]
      %v2486 = vld [vmem:[#allocation2 + $0x148] sm:$0xff]
      %s2487 = scalar_lea.vmem %s3, 28
      %v2488 = vld [vmem:[%s2487] sm:$0xf]
      %v2490 = vsel %vm263, %v2451, 0
      %v2493 = vsel %vm263, %v2452, 0
      %v2496 = vsel %vm263, %v2453, 0
      %v2499 = vsel %vm263, %v2454, 0
      %v2502 = vsel %vm263, %v2455, 0
      %v2505 = vsel %vm263, %v2456, 0
      %v2508 = vsel %vm263, %v2457, 0
      %v2511 = vsel %vm263, %v2458, 0
      %v2514 = vsel %vm263, %v2459, 0
      %v2517 = vsel %vm263, %v2460, 0
      %v2520 = vsel %vm263, %v2461, 0
      %v2523 = vsel %vm263, %v2462, 0
      %v2526 = vsel %vm263, %v2463, 0
      %v2529 = vsel %vm263, %v2464, 0
      %v2532 = vsel %vm263, %v2465, 0
      %v2535 = vsel %vm263, %v2466, 0
      %v2538 = vsel %vm263, %v2467, 0
      %v2541 = vsel %vm263, %v2468, 0
      %v2544 = vsel %vm263, %v2469, 0
      %v2547 = vsel %vm263, %v2470, 0
      %v2550 = vsel %vm263, %v2471, 0
      %v2553 = vsel %vm263, %v2472, 0
      %v2556 = vsel %vm263, %v2473, 0
      %v2559 = vsel %vm263, %v2474, 0
      %v2562 = vsel %vm263, %v2475, 0
      %v2565 = vsel %vm263, %v2476, 0
      %v2568 = vsel %vm263, %v2477, 0
      %v2571 = vsel %vm263, %v2478, 0
      %v2574 = vsel %vm263, %v2479, 0
      %v2577 = vsel %vm263, %v2480, 0
      %v2580 = vsel %vm263, %v2481, 0
      %v2583 = vsel %vm263, %v2482, 0
      %v2586 = vsel %vm263, %v2483, 0
      %v2589 = vsel %vm263, %v2484, 0
      %v2592 = vsel %vm263, %v2485, 0
      %v2595 = vsel %vm263, %v2486, 0
      %v2598 = vsel %vm858, %v2488, 0
      %2600 = vmatpush.msra.mxu0 0.0
      %2601 = vmatpush.msra.mxu0 0.0
      %2602 = vmatpush.msra.mxu0 0.0
      %2603 = vmatpush.msra.mxu0 0.0
      %2604 = vmatpush.msra.mxu0 0.0
      %2605 = vmatpush.msra.mxu0 0.0
      %2606 = vmatpush.msra.mxu0 0.0
      %2607 = vmatpush.msra.mxu0 0.0
      %2608 = vmatpush.msra.mxu0 0.0
      %2609 = vmatpush.msra.mxu0 0.0
      %2610 = vmatpush.msra.mxu0 0.0
      %2611 = vmatpush.msra.mxu0 0.0
      %2612 = vmatpush.msra.mxu0 0.0
      %2613 = vmatpush.msra.mxu0 0.0
      %2614 = vmatpush.msra.mxu0 0.0
      %2615 = vmatpush.msra.mxu0 %v2598
      %2616 = vmatmul.f32.gmra.mxu0 %v2490
      %v2617 = vpop.f32.mrf.mxu0
      %v2618 = vadd.f32 0.0, %v2617
      %2619 = vmatmul.f32.gmra.mxu0 %v2493
      %v2620 = vpop.f32.mrf.mxu0
      %v2621 = vadd.f32 0.0, %v2620
      %2622 = vmatmul.f32.gmra.mxu0 %v2496
      %v2623 = vpop.f32.mrf.mxu0
      %v2624 = vadd.f32 0.0, %v2623
      %2625 = vmatmul.f32.gmra.mxu0 %v2499
      %v2626 = vpop.f32.mrf.mxu0
      %v2627 = vadd.f32 0.0, %v2626
      %2628 = vmatmul.f32.gmra.mxu0 %v2502
      %v2629 = vpop.f32.mrf.mxu0
      %v2630 = vadd.f32 0.0, %v2629
      %2631 = vmatmul.f32.gmra.mxu0 %v2505
      %v2632 = vpop.f32.mrf.mxu0
      %v2633 = vadd.f32 0.0, %v2632
      %2634 = vmatmul.f32.gmra.mxu0 %v2508
      %v2635 = vpop.f32.mrf.mxu0
      %v2636 = vadd.f32 0.0, %v2635
      %2637 = vmatmul.f32.gmra.mxu0 %v2511
      %v2638 = vpop.f32.mrf.mxu0
      %v2639 = vadd.f32 0.0, %v2638
      %2640 = vmatmul.f32.gmra.mxu0 %v2514
      %v2641 = vpop.f32.mrf.mxu0
      %v2642 = vadd.f32 0.0, %v2641
      %2643 = vmatmul.f32.gmra.mxu0 %v2517
      %v2644 = vpop.f32.mrf.mxu0
      %v2645 = vadd.f32 0.0, %v2644
      %2646 = vmatmul.f32.gmra.mxu0 %v2520
      %v2647 = vpop.f32.mrf.mxu0
      %v2648 = vadd.f32 0.0, %v2647
      %2649 = vmatmul.f32.gmra.mxu0 %v2523
      %v2650 = vpop.f32.mrf.mxu0
      %v2651 = vadd.f32 0.0, %v2650
      %2652 = vmatmul.f32.gmra.mxu0 %v2526
      %v2653 = vpop.f32.mrf.mxu0
      %v2654 = vadd.f32 0.0, %v2653
      %2655 = vmatmul.f32.gmra.mxu0 %v2529
      %v2656 = vpop.f32.mrf.mxu0
      %v2657 = vadd.f32 0.0, %v2656
      %2658 = vmatmul.f32.gmra.mxu0 %v2532
      %v2659 = vpop.f32.mrf.mxu0
      %v2660 = vadd.f32 0.0, %v2659
      %2661 = vmatmul.f32.gmra.mxu0 %v2535
      %v2662 = vpop.f32.mrf.mxu0
      %v2663 = vadd.f32 0.0, %v2662
      %2664 = vmatmul.f32.gmra.mxu0 %v2538
      %v2665 = vpop.f32.mrf.mxu0
      %v2666 = vadd.f32 0.0, %v2665
      %2667 = vmatmul.f32.gmra.mxu0 %v2541
      %v2668 = vpop.f32.mrf.mxu0
      %v2669 = vadd.f32 0.0, %v2668
      %2670 = vmatmul.f32.gmra.mxu0 %v2544
      %v2671 = vpop.f32.mrf.mxu0
      %v2672 = vadd.f32 0.0, %v2671
      %2673 = vmatmul.f32.gmra.mxu0 %v2547
      %v2674 = vpop.f32.mrf.mxu0
      %v2675 = vadd.f32 0.0, %v2674
      %2676 = vmatmul.f32.gmra.mxu0 %v2550
      %v2677 = vpop.f32.mrf.mxu0
      %v2678 = vadd.f32 0.0, %v2677
      %2679 = vmatmul.f32.gmra.mxu0 %v2553
      %v2680 = vpop.f32.mrf.mxu0
      %v2681 = vadd.f32 0.0, %v2680
      %2682 = vmatmul.f32.gmra.mxu0 %v2556
      %v2683 = vpop.f32.mrf.mxu0
      %v2684 = vadd.f32 0.0, %v2683
      %2685 = vmatmul.f32.gmra.mxu0 %v2559
      %v2686 = vpop.f32.mrf.mxu0
      %v2687 = vadd.f32 0.0, %v2686
      %2688 = vmatmul.f32.gmra.mxu0 %v2562
      %v2689 = vpop.f32.mrf.mxu0
      %v2690 = vadd.f32 0.0, %v2689
      %2691 = vmatmul.f32.gmra.mxu0 %v2565
      %v2692 = vpop.f32.mrf.mxu0
      %v2693 = vadd.f32 0.0, %v2692
      %2694 = vmatmul.f32.gmra.mxu0 %v2568
      %v2695 = vpop.f32.mrf.mxu0
      %v2696 = vadd.f32 0.0, %v2695
      %2697 = vmatmul.f32.gmra.mxu0 %v2571
      %v2698 = vpop.f32.mrf.mxu0
      %v2699 = vadd.f32 0.0, %v2698
      %2700 = vmatmul.f32.gmra.mxu0 %v2574
      %v2701 = vpop.f32.mrf.mxu0
      %v2702 = vadd.f32 0.0, %v2701
      %2703 = vmatmul.f32.gmra.mxu0 %v2577
      %v2704 = vpop.f32.mrf.mxu0
      %v2705 = vadd.f32 0.0, %v2704
      %2706 = vmatmul.f32.gmra.mxu0 %v2580
      %v2707 = vpop.f32.mrf.mxu0
      %v2708 = vadd.f32 0.0, %v2707
      %2709 = vmatmul.f32.gmra.mxu0 %v2583
      %v2710 = vpop.f32.mrf.mxu0
      %v2711 = vadd.f32 0.0, %v2710
      %2712 = vmatmul.f32.gmra.mxu0 %v2586
      %v2713 = vpop.f32.mrf.mxu0
      %v2714 = vadd.f32 0.0, %v2713
      %2715 = vmatmul.f32.gmra.mxu0 %v2589
      %v2716 = vpop.f32.mrf.mxu0
      %v2717 = vadd.f32 0.0, %v2716
      %2718 = vmatmul.f32.gmra.mxu0 %v2592
      %v2719 = vpop.f32.mrf.mxu0
      %v2720 = vadd.f32 0.0, %v2719
      %2721 = vmatmul.f32.gmra.mxu0 %v2595
      %v2722 = vpop.f32.mrf.mxu0
      %v2723 = vadd.f32 0.0, %v2722
      %2724 = vdwg.mxu0
      %v2725 = vadd.f32 %v1524, %v2618
      %v2726 = vadd.f32 %v1527, %v2621
      %v2727 = vadd.f32 %v1530, %v2624
      %v2728 = vadd.f32 %v1533, %v2627
      %v2729 = vadd.f32 %v1536, %v2630
      %v2730 = vadd.f32 %v1539, %v2633
      %v2731 = vadd.f32 %v1542, %v2636
      %v2732 = vadd.f32 %v1545, %v2639
      %v2733 = vadd.f32 %v1548, %v2642
      %v2734 = vadd.f32 %v1551, %v2645
      %v2735 = vadd.f32 %v1554, %v2648
      %v2736 = vadd.f32 %v1557, %v2651
      %v2737 = vadd.f32 %v1560, %v2654
      %v2738 = vadd.f32 %v1563, %v2657
      %v2739 = vadd.f32 %v1566, %v2660
      %v2740 = vadd.f32 %v1569, %v2663
      %v2741 = vadd.f32 %v1572, %v2666
      %v2742 = vadd.f32 %v1575, %v2669
      %v2743 = vadd.f32 %v1578, %v2672
      %v2744 = vadd.f32 %v1581, %v2675
      %v2745 = vadd.f32 %v1584, %v2678
      %v2746 = vadd.f32 %v1587, %v2681
      %v2747 = vadd.f32 %v1590, %v2684
      %v2748 = vadd.f32 %v1593, %v2687
      %v2749 = vadd.f32 %v1596, %v2690
      %v2750 = vadd.f32 %v1599, %v2693
      %v2751 = vadd.f32 %v1602, %v2696
      %v2752 = vadd.f32 %v1605, %v2699
      %v2753 = vadd.f32 %v1608, %v2702
      %v2754 = vadd.f32 %v1611, %v2705
      %v2755 = vadd.f32 %v1614, %v2708
      %v2756 = vadd.f32 %v1617, %v2711
      %v2757 = vadd.f32 %v1620, %v2714
      %v2758 = vadd.f32 %v1623, %v2717
      %v2759 = vadd.f32 %v1626, %v2720
      %v2760 = vadd.f32 %v1629, %v2723
      %v2761 = vld [vmem:[#allocation2 + $0x31] sm:$0xff]
      %v2762 = vld [vmem:[#allocation2 + $0x39] sm:$0xff]
      %v2763 = vld [vmem:[#allocation2 + $0x41] sm:$0xff]
      %v2764 = vld [vmem:[#allocation2 + $0x49] sm:$0xff]
      %v2765 = vld [vmem:[#allocation2 + $0x51] sm:$0xff]
      %v2766 = vld [vmem:[#allocation2 + $0x59] sm:$0xff]
      %v2767 = vld [vmem:[#allocation2 + $0x61] sm:$0xff]
      %v2768 = vld [vmem:[#allocation2 + $0x69] sm:$0xff]
      %v2769 = vld [vmem:[#allocation2 + $0x71] sm:$0xff]
      %v2770 = vld [vmem:[#allocation2 + $0x79] sm:$0xff]
      %v2771 = vld [vmem:[#allocation2 + $0x81] sm:$0xff]
      %v2772 = vld [vmem:[#allocation2 + $0x89] sm:$0xff]
      %v2773 = vld [vmem:[#allocation2 + $0x91] sm:$0xff]
      %v2774 = vld [vmem:[#allocation2 + $0x99] sm:$0xff]
      %v2775 = vld [vmem:[#allocation2 + $0xa1] sm:$0xff]
      %v2776 = vld [vmem:[#allocation2 + $0xa9] sm:$0xff]
      %v2777 = vld [vmem:[#allocation2 + $0xb1] sm:$0xff]
      %v2778 = vld [vmem:[#allocation2 + $0xb9] sm:$0xff]
      %v2779 = vld [vmem:[#allocation2 + $0xc1] sm:$0xff]
      %v2780 = vld [vmem:[#allocation2 + $0xc9] sm:$0xff]
      %v2781 = vld [vmem:[#allocation2 + $0xd1] sm:$0xff]
      %v2782 = vld [vmem:[#allocation2 + $0xd9] sm:$0xff]
      %v2783 = vld [vmem:[#allocation2 + $0xe1] sm:$0xff]
      %v2784 = vld [vmem:[#allocation2 + $0xe9] sm:$0xff]
      %v2785 = vld [vmem:[#allocation2 + $0xf1] sm:$0xff]
      %v2786 = vld [vmem:[#allocation2 + $0xf9] sm:$0xff]
      %v2787 = vld [vmem:[#allocation2 + $0x101] sm:$0xff]
      %v2788 = vld [vmem:[#allocation2 + $0x109] sm:$0xff]
      %v2789 = vld [vmem:[#allocation2 + $0x111] sm:$0xff]
      %v2790 = vld [vmem:[#allocation2 + $0x119] sm:$0xff]
      %v2791 = vld [vmem:[#allocation2 + $0x121] sm:$0xff]
      %v2792 = vld [vmem:[#allocation2 + $0x129] sm:$0xff]
      %v2793 = vld [vmem:[#allocation2 + $0x131] sm:$0xff]
      %v2794 = vld [vmem:[#allocation2 + $0x139] sm:$0xff]
      %v2795 = vld [vmem:[#allocation2 + $0x141] sm:$0xff]
      %v2796 = vld [vmem:[#allocation2 + $0x149] sm:$0xff]
      %s2797 = scalar_lea.vmem %s3, 32
      %v2798 = vld [vmem:[%s2797] sm:$0xf]
      %v2800 = vsel %vm263, %v2761, 0
      %v2803 = vsel %vm263, %v2762, 0
      %v2806 = vsel %vm263, %v2763, 0
      %v2809 = vsel %vm263, %v2764, 0
      %v2812 = vsel %vm263, %v2765, 0
      %v2815 = vsel %vm263, %v2766, 0
      %v2818 = vsel %vm263, %v2767, 0
      %v2821 = vsel %vm263, %v2768, 0
      %v2824 = vsel %vm263, %v2769, 0
      %v2827 = vsel %vm263, %v2770, 0
      %v2830 = vsel %vm263, %v2771, 0
      %v2833 = vsel %vm263, %v2772, 0
      %v2836 = vsel %vm263, %v2773, 0
      %v2839 = vsel %vm263, %v2774, 0
      %v2842 = vsel %vm263, %v2775, 0
      %v2845 = vsel %vm263, %v2776, 0
      %v2848 = vsel %vm263, %v2777, 0
      %v2851 = vsel %vm263, %v2778, 0
      %v2854 = vsel %vm263, %v2779, 0
      %v2857 = vsel %vm263, %v2780, 0
      %v2860 = vsel %vm263, %v2781, 0
      %v2863 = vsel %vm263, %v2782, 0
      %v2866 = vsel %vm263, %v2783, 0
      %v2869 = vsel %vm263, %v2784, 0
      %v2872 = vsel %vm263, %v2785, 0
      %v2875 = vsel %vm263, %v2786, 0
      %v2878 = vsel %vm263, %v2787, 0
      %v2881 = vsel %vm263, %v2788, 0
      %v2884 = vsel %vm263, %v2789, 0
      %v2887 = vsel %vm263, %v2790, 0
      %v2890 = vsel %vm263, %v2791, 0
      %v2893 = vsel %vm263, %v2792, 0
      %v2896 = vsel %vm263, %v2793, 0
      %v2899 = vsel %vm263, %v2794, 0
      %v2902 = vsel %vm263, %v2795, 0
      %v2905 = vsel %vm263, %v2796, 0
      %v2908 = vsel %vm858, %v2798, 0
      %2910 = vmatpush.msra.mxu0 0.0
      %2911 = vmatpush.msra.mxu0 0.0
      %2912 = vmatpush.msra.mxu0 0.0
      %2913 = vmatpush.msra.mxu0 0.0
      %2914 = vmatpush.msra.mxu0 0.0
      %2915 = vmatpush.msra.mxu0 0.0
      %2916 = vmatpush.msra.mxu0 0.0
      %2917 = vmatpush.msra.mxu0 0.0
      %2918 = vmatpush.msra.mxu0 0.0
      %2919 = vmatpush.msra.mxu0 0.0
      %2920 = vmatpush.msra.mxu0 0.0
      %2921 = vmatpush.msra.mxu0 0.0
      %2922 = vmatpush.msra.mxu0 0.0
      %2923 = vmatpush.msra.mxu0 0.0
      %2924 = vmatpush.msra.mxu0 0.0
      %2925 = vmatpush.msra.mxu0 %v2908
      %2926 = vmatmul.f32.gmra.mxu0 %v2800
      %v2927 = vpop.f32.mrf.mxu0
      %v2928 = vadd.f32 0.0, %v2927
      %2929 = vmatmul.f32.gmra.mxu0 %v2803
      %v2930 = vpop.f32.mrf.mxu0
      %v2931 = vadd.f32 0.0, %v2930
      %2932 = vmatmul.f32.gmra.mxu0 %v2806
      %v2933 = vpop.f32.mrf.mxu0
      %v2934 = vadd.f32 0.0, %v2933
      %2935 = vmatmul.f32.gmra.mxu0 %v2809
      %v2936 = vpop.f32.mrf.mxu0
      %v2937 = vadd.f32 0.0, %v2936
      %2938 = vmatmul.f32.gmra.mxu0 %v2812
      %v2939 = vpop.f32.mrf.mxu0
      %v2940 = vadd.f32 0.0, %v2939
      %2941 = vmatmul.f32.gmra.mxu0 %v2815
      %v2942 = vpop.f32.mrf.mxu0
      %v2943 = vadd.f32 0.0, %v2942
      %2944 = vmatmul.f32.gmra.mxu0 %v2818
      %v2945 = vpop.f32.mrf.mxu0
      %v2946 = vadd.f32 0.0, %v2945
      %2947 = vmatmul.f32.gmra.mxu0 %v2821
      %v2948 = vpop.f32.mrf.mxu0
      %v2949 = vadd.f32 0.0, %v2948
      %2950 = vmatmul.f32.gmra.mxu0 %v2824
      %v2951 = vpop.f32.mrf.mxu0
      %v2952 = vadd.f32 0.0, %v2951
      %2953 = vmatmul.f32.gmra.mxu0 %v2827
      %v2954 = vpop.f32.mrf.mxu0
      %v2955 = vadd.f32 0.0, %v2954
      %2956 = vmatmul.f32.gmra.mxu0 %v2830
      %v2957 = vpop.f32.mrf.mxu0
      %v2958 = vadd.f32 0.0, %v2957
      %2959 = vmatmul.f32.gmra.mxu0 %v2833
      %v2960 = vpop.f32.mrf.mxu0
      %v2961 = vadd.f32 0.0, %v2960
      %2962 = vmatmul.f32.gmra.mxu0 %v2836
      %v2963 = vpop.f32.mrf.mxu0
      %v2964 = vadd.f32 0.0, %v2963
      %2965 = vmatmul.f32.gmra.mxu0 %v2839
      %v2966 = vpop.f32.mrf.mxu0
      %v2967 = vadd.f32 0.0, %v2966
      %2968 = vmatmul.f32.gmra.mxu0 %v2842
      %v2969 = vpop.f32.mrf.mxu0
      %v2970 = vadd.f32 0.0, %v2969
      %2971 = vmatmul.f32.gmra.mxu0 %v2845
      %v2972 = vpop.f32.mrf.mxu0
      %v2973 = vadd.f32 0.0, %v2972
      %2974 = vmatmul.f32.gmra.mxu0 %v2848
      %v2975 = vpop.f32.mrf.mxu0
      %v2976 = vadd.f32 0.0, %v2975
      %2977 = vmatmul.f32.gmra.mxu0 %v2851
      %v2978 = vpop.f32.mrf.mxu0
      %v2979 = vadd.f32 0.0, %v2978
      %2980 = vmatmul.f32.gmra.mxu0 %v2854
      %v2981 = vpop.f32.mrf.mxu0
      %v2982 = vadd.f32 0.0, %v2981
      %2983 = vmatmul.f32.gmra.mxu0 %v2857
      %v2984 = vpop.f32.mrf.mxu0
      %v2985 = vadd.f32 0.0, %v2984
      %2986 = vmatmul.f32.gmra.mxu0 %v2860
      %v2987 = vpop.f32.mrf.mxu0
      %v2988 = vadd.f32 0.0, %v2987
      %2989 = vmatmul.f32.gmra.mxu0 %v2863
      %v2990 = vpop.f32.mrf.mxu0
      %v2991 = vadd.f32 0.0, %v2990
      %2992 = vmatmul.f32.gmra.mxu0 %v2866
      %v2993 = vpop.f32.mrf.mxu0
      %v2994 = vadd.f32 0.0, %v2993
      %2995 = vmatmul.f32.gmra.mxu0 %v2869
      %v2996 = vpop.f32.mrf.mxu0
      %v2997 = vadd.f32 0.0, %v2996
      %2998 = vmatmul.f32.gmra.mxu0 %v2872
      %v2999 = vpop.f32.mrf.mxu0
      %v3000 = vadd.f32 0.0, %v2999
      %3001 = vmatmul.f32.gmra.mxu0 %v2875
      %v3002 = vpop.f32.mrf.mxu0
      %v3003 = vadd.f32 0.0, %v3002
      %3004 = vmatmul.f32.gmra.mxu0 %v2878
      %v3005 = vpop.f32.mrf.mxu0
      %v3006 = vadd.f32 0.0, %v3005
      %3007 = vmatmul.f32.gmra.mxu0 %v2881
      %v3008 = vpop.f32.mrf.mxu0
      %v3009 = vadd.f32 0.0, %v3008
      %3010 = vmatmul.f32.gmra.mxu0 %v2884
      %v3011 = vpop.f32.mrf.mxu0
      %v3012 = vadd.f32 0.0, %v3011
      %3013 = vmatmul.f32.gmra.mxu0 %v2887
      %v3014 = vpop.f32.mrf.mxu0
      %v3015 = vadd.f32 0.0, %v3014
      %3016 = vmatmul.f32.gmra.mxu0 %v2890
      %v3017 = vpop.f32.mrf.mxu0
      %v3018 = vadd.f32 0.0, %v3017
      %3019 = vmatmul.f32.gmra.mxu0 %v2893
      %v3020 = vpop.f32.mrf.mxu0
      %v3021 = vadd.f32 0.0, %v3020
      %3022 = vmatmul.f32.gmra.mxu0 %v2896
      %v3023 = vpop.f32.mrf.mxu0
      %v3024 = vadd.f32 0.0, %v3023
      %3025 = vmatmul.f32.gmra.mxu0 %v2899
      %v3026 = vpop.f32.mrf.mxu0
      %v3027 = vadd.f32 0.0, %v3026
      %3028 = vmatmul.f32.gmra.mxu0 %v2902
      %v3029 = vpop.f32.mrf.mxu0
      %v3030 = vadd.f32 0.0, %v3029
      %3031 = vmatmul.f32.gmra.mxu0 %v2905
      %v3032 = vpop.f32.mrf.mxu0
      %v3033 = vadd.f32 0.0, %v3032
      %3034 = vdwg.mxu0
      %v3035 = vadd.f32 %v2034, %v2928
      %v3036 = vadd.f32 %v2037, %v2931
      %v3037 = vadd.f32 %v2040, %v2934
      %v3038 = vadd.f32 %v2043, %v2937
      %v3039 = vadd.f32 %v2046, %v2940
      %v3040 = vadd.f32 %v2049, %v2943
      %v3041 = vadd.f32 %v2052, %v2946
      %v3042 = vadd.f32 %v2055, %v2949
      %v3043 = vadd.f32 %v2058, %v2952
      %v3044 = vadd.f32 %v2061, %v2955
      %v3045 = vadd.f32 %v2064, %v2958
      %v3046 = vadd.f32 %v2067, %v2961
      %v3047 = vadd.f32 %v2070, %v2964
      %v3048 = vadd.f32 %v2073, %v2967
      %v3049 = vadd.f32 %v2076, %v2970
      %v3050 = vadd.f32 %v2079, %v2973
      %v3051 = vadd.f32 %v2082, %v2976
      %v3052 = vadd.f32 %v2085, %v2979
      %v3053 = vadd.f32 %v2088, %v2982
      %v3054 = vadd.f32 %v2091, %v2985
      %v3055 = vadd.f32 %v2094, %v2988
      %v3056 = vadd.f32 %v2097, %v2991
      %v3057 = vadd.f32 %v2100, %v2994
      %v3058 = vadd.f32 %v2103, %v2997
      %v3059 = vadd.f32 %v2106, %v3000
      %v3060 = vadd.f32 %v2109, %v3003
      %v3061 = vadd.f32 %v2112, %v3006
      %v3062 = vadd.f32 %v2115, %v3009
      %v3063 = vadd.f32 %v2118, %v3012
      %v3064 = vadd.f32 %v2121, %v3015
      %v3065 = vadd.f32 %v2124, %v3018
      %v3066 = vadd.f32 %v2127, %v3021
      %v3067 = vadd.f32 %v2130, %v3024
      %v3068 = vadd.f32 %v2133, %v3027
      %v3069 = vadd.f32 %v2136, %v3030
      %v3070 = vadd.f32 %v2139, %v3033
      %3072 = vset.pattern.permute.xlu0 0
      %3073 = vperm.xlu0 %3072, %v596
      %v3074 = vpop.permute.xlu0 %3073
      %3077 = vset.pattern.permute.xlu0 0
      %3078 = vperm.xlu0 %3077, %v597
      %v3079 = vpop.permute.xlu0 %3078
      %3082 = vset.pattern.permute.xlu0 0
      %3083 = vperm.xlu0 %3082, %v598
      %v3084 = vpop.permute.xlu0 %3083
      %3087 = vset.pattern.permute.xlu0 0
      %3088 = vperm.xlu0 %3087, %v599
      %v3089 = vpop.permute.xlu0 %3088
      %3092 = vset.pattern.permute.xlu0 0
      %3093 = vperm.xlu0 %3092, %v600
      %v3094 = vpop.permute.xlu0 %3093
      %3097 = vset.pattern.permute.xlu0 0
      %3098 = vperm.xlu0 %3097, %v601
      %v3099 = vpop.permute.xlu0 %3098
      %3102 = vset.pattern.permute.xlu0 0
      %3103 = vperm.xlu0 %3102, %v602
      %v3104 = vpop.permute.xlu0 %3103
      %3107 = vset.pattern.permute.xlu0 0
      %3108 = vperm.xlu0 %3107, %v603
      %v3109 = vpop.permute.xlu0 %3108
      %3112 = vset.pattern.permute.xlu0 0
      %3113 = vperm.xlu0 %3112, %v604
      %v3114 = vpop.permute.xlu0 %3113
      %3117 = vset.pattern.permute.xlu0 0
      %3118 = vperm.xlu0 %3117, %v605
      %v3119 = vpop.permute.xlu0 %3118
      %3122 = vset.pattern.permute.xlu0 0
      %3123 = vperm.xlu0 %3122, %v606
      %v3124 = vpop.permute.xlu0 %3123
      %3127 = vset.pattern.permute.xlu0 0
      %3128 = vperm.xlu0 %3127, %v607
      %v3129 = vpop.permute.xlu0 %3128
      %3132 = vset.pattern.permute.xlu0 0
      %3133 = vperm.xlu0 %3132, %v608
      %v3134 = vpop.permute.xlu0 %3133
      %3137 = vset.pattern.permute.xlu0 0
      %3138 = vperm.xlu0 %3137, %v609
      %v3139 = vpop.permute.xlu0 %3138
      %3142 = vset.pattern.permute.xlu0 0
      %3143 = vperm.xlu0 %3142, %v610
      %v3144 = vpop.permute.xlu0 %3143
      %3147 = vset.pattern.permute.xlu0 0
      %3148 = vperm.xlu0 %3147, %v611
      %v3149 = vpop.permute.xlu0 %3148
      %3152 = vset.pattern.permute.xlu0 0
      %3153 = vperm.xlu0 %3152, %v612
      %v3154 = vpop.permute.xlu0 %3153
      %3157 = vset.pattern.permute.xlu0 0
      %3158 = vperm.xlu0 %3157, %v613
      %v3159 = vpop.permute.xlu0 %3158
      %3162 = vset.pattern.permute.xlu0 0
      %3163 = vperm.xlu0 %3162, %v614
      %v3164 = vpop.permute.xlu0 %3163
      %3167 = vset.pattern.permute.xlu0 0
      %3168 = vperm.xlu0 %3167, %v615
      %v3169 = vpop.permute.xlu0 %3168
      %3172 = vset.pattern.permute.xlu0 0
      %3173 = vperm.xlu0 %3172, %v616
      %v3174 = vpop.permute.xlu0 %3173
      %3177 = vset.pattern.permute.xlu0 0
      %3178 = vperm.xlu0 %3177, %v617
      %v3179 = vpop.permute.xlu0 %3178
      %3182 = vset.pattern.permute.xlu0 0
      %3183 = vperm.xlu0 %3182, %v618
      %v3184 = vpop.permute.xlu0 %3183
      %3187 = vset.pattern.permute.xlu0 0
      %3188 = vperm.xlu0 %3187, %v619
      %v3189 = vpop.permute.xlu0 %3188
      %3192 = vset.pattern.permute.xlu0 0
      %3193 = vperm.xlu0 %3192, %v620
      %v3194 = vpop.permute.xlu0 %3193
      %3197 = vset.pattern.permute.xlu0 0
      %3198 = vperm.xlu0 %3197, %v621
      %v3199 = vpop.permute.xlu0 %3198
      %3202 = vset.pattern.permute.xlu0 0
      %3203 = vperm.xlu0 %3202, %v622
      %v3204 = vpop.permute.xlu0 %3203
      %3207 = vset.pattern.permute.xlu0 0
      %3208 = vperm.xlu0 %3207, %v623
      %v3209 = vpop.permute.xlu0 %3208
      %3212 = vset.pattern.permute.xlu0 0
      %3213 = vperm.xlu0 %3212, %v624
      %v3214 = vpop.permute.xlu0 %3213
      %3217 = vset.pattern.permute.xlu0 0
      %3218 = vperm.xlu0 %3217, %v625
      %v3219 = vpop.permute.xlu0 %3218
      %3222 = vset.pattern.permute.xlu0 0
      %3223 = vperm.xlu0 %3222, %v626
      %v3224 = vpop.permute.xlu0 %3223
      %3227 = vset.pattern.permute.xlu0 0
      %3228 = vperm.xlu0 %3227, %v627
      %v3229 = vpop.permute.xlu0 %3228
      %3232 = vset.pattern.permute.xlu0 0
      %3233 = vperm.xlu0 %3232, %v628
      %v3234 = vpop.permute.xlu0 %3233
      %3237 = vset.pattern.permute.xlu0 0
      %3238 = vperm.xlu0 %3237, %v629
      %v3239 = vpop.permute.xlu0 %3238
      %3242 = vset.pattern.permute.xlu0 0
      %3243 = vperm.xlu0 %3242, %v630
      %v3244 = vpop.permute.xlu0 %3243
      %3247 = vset.pattern.permute.xlu0 0
      %3248 = vperm.xlu0 %3247, %v631
      %v3249 = vpop.permute.xlu0 %3248
      %v3251 = vmul.f32 %v3074, %v2415
      %v3252 = vmul.f32 %v3079, %v2416
      %v3253 = vmul.f32 %v3084, %v2417
      %v3254 = vmul.f32 %v3089, %v2418
      %v3255 = vmul.f32 %v3094, %v2419
      %v3256 = vmul.f32 %v3099, %v2420
      %v3257 = vmul.f32 %v3104, %v2421
      %v3258 = vmul.f32 %v3109, %v2422
      %v3259 = vmul.f32 %v3114, %v2423
      %v3260 = vmul.f32 %v3119, %v2424
      %v3261 = vmul.f32 %v3124, %v2425
      %v3262 = vmul.f32 %v3129, %v2426
      %v3263 = vmul.f32 %v3134, %v2427
      %v3264 = vmul.f32 %v3139, %v2428
      %v3265 = vmul.f32 %v3144, %v2429
      %v3266 = vmul.f32 %v3149, %v2430
      %v3267 = vmul.f32 %v3154, %v2431
      %v3268 = vmul.f32 %v3159, %v2432
      %v3269 = vmul.f32 %v3164, %v2433
      %v3270 = vmul.f32 %v3169, %v2434
      %v3271 = vmul.f32 %v3174, %v2435
      %v3272 = vmul.f32 %v3179, %v2436
      %v3273 = vmul.f32 %v3184, %v2437
      %v3274 = vmul.f32 %v3189, %v2438
      %v3275 = vmul.f32 %v3194, %v2439
      %v3276 = vmul.f32 %v3199, %v2440
      %v3277 = vmul.f32 %v3204, %v2441
      %v3278 = vmul.f32 %v3209, %v2442
      %v3279 = vmul.f32 %v3214, %v2443
      %v3280 = vmul.f32 %v3219, %v2444
      %v3281 = vmul.f32 %v3224, %v2445
      %v3282 = vmul.f32 %v3229, %v2446
      %v3283 = vmul.f32 %v3234, %v2447
      %v3284 = vmul.f32 %v3239, %v2448
      %v3285 = vmul.f32 %v3244, %v2449
      %v3286 = vmul.f32 %v3249, %v2450
      %v3287 = vadd.f32 %v2725, %v3251
      %v3288 = vadd.f32 %v2726, %v3252
      %v3289 = vadd.f32 %v2727, %v3253
      %v3290 = vadd.f32 %v2728, %v3254
      %v3291 = vadd.f32 %v2729, %v3255
      %v3292 = vadd.f32 %v2730, %v3256
      %v3293 = vadd.f32 %v2731, %v3257
      %v3294 = vadd.f32 %v2732, %v3258
      %v3295 = vadd.f32 %v2733, %v3259
      %v3296 = vadd.f32 %v2734, %v3260
      %v3297 = vadd.f32 %v2735, %v3261
      %v3298 = vadd.f32 %v2736, %v3262
      %v3299 = vadd.f32 %v2737, %v3263
      %v3300 = vadd.f32 %v2738, %v3264
      %v3301 = vadd.f32 %v2739, %v3265
      %v3302 = vadd.f32 %v2740, %v3266
      %v3303 = vadd.f32 %v2741, %v3267
      %v3304 = vadd.f32 %v2742, %v3268
      %v3305 = vadd.f32 %v2743, %v3269
      %v3306 = vadd.f32 %v2744, %v3270
      %v3307 = vadd.f32 %v2745, %v3271
      %v3308 = vadd.f32 %v2746, %v3272
      %v3309 = vadd.f32 %v2747, %v3273
      %v3310 = vadd.f32 %v2748, %v3274
      %v3311 = vadd.f32 %v2749, %v3275
      %v3312 = vadd.f32 %v2750, %v3276
      %v3313 = vadd.f32 %v2751, %v3277
      %v3314 = vadd.f32 %v2752, %v3278
      %v3315 = vadd.f32 %v2753, %v3279
      %v3316 = vadd.f32 %v2754, %v3280
      %v3317 = vadd.f32 %v2755, %v3281
      %v3318 = vadd.f32 %v2756, %v3282
      %v3319 = vadd.f32 %v2757, %v3283
      %v3320 = vadd.f32 %v2758, %v3284
      %v3321 = vadd.f32 %v2759, %v3285
      %v3322 = vadd.f32 %v2760, %v3286
      %3323 = vset.pattern.permute.xlu0 1
      %3324 = vperm.xlu0 %3323, %v596
      %v3325 = vpop.permute.xlu0 %3324
      %3327 = vset.pattern.permute.xlu0 1
      %3328 = vperm.xlu0 %3327, %v597
      %v3329 = vpop.permute.xlu0 %3328
      %3331 = vset.pattern.permute.xlu0 1
      %3332 = vperm.xlu0 %3331, %v598
      %v3333 = vpop.permute.xlu0 %3332
      %3335 = vset.pattern.permute.xlu0 1
      %3336 = vperm.xlu0 %3335, %v599
      %v3337 = vpop.permute.xlu0 %3336
      %3339 = vset.pattern.permute.xlu0 1
      %3340 = vperm.xlu0 %3339, %v600
      %v3341 = vpop.permute.xlu0 %3340
      %3343 = vset.pattern.permute.xlu0 1
      %3344 = vperm.xlu0 %3343, %v601
      %v3345 = vpop.permute.xlu0 %3344
      %3347 = vset.pattern.permute.xlu0 1
      %3348 = vperm.xlu0 %3347, %v602
      %v3349 = vpop.permute.xlu0 %3348
      %3351 = vset.pattern.permute.xlu0 1
      %3352 = vperm.xlu0 %3351, %v603
      %v3353 = vpop.permute.xlu0 %3352
      %3355 = vset.pattern.permute.xlu0 1
      %3356 = vperm.xlu0 %3355, %v604
      %v3357 = vpop.permute.xlu0 %3356
      %3359 = vset.pattern.permute.xlu0 1
      %3360 = vperm.xlu0 %3359, %v605
      %v3361 = vpop.permute.xlu0 %3360
      %3363 = vset.pattern.permute.xlu0 1
      %3364 = vperm.xlu0 %3363, %v606
      %v3365 = vpop.permute.xlu0 %3364
      %3367 = vset.pattern.permute.xlu0 1
      %3368 = vperm.xlu0 %3367, %v607
      %v3369 = vpop.permute.xlu0 %3368
      %3371 = vset.pattern.permute.xlu0 1
      %3372 = vperm.xlu0 %3371, %v608
      %v3373 = vpop.permute.xlu0 %3372
      %3375 = vset.pattern.permute.xlu0 1
      %3376 = vperm.xlu0 %3375, %v609
      %v3377 = vpop.permute.xlu0 %3376
      %3379 = vset.pattern.permute.xlu0 1
      %3380 = vperm.xlu0 %3379, %v610
      %v3381 = vpop.permute.xlu0 %3380
      %3383 = vset.pattern.permute.xlu0 1
      %3384 = vperm.xlu0 %3383, %v611
      %v3385 = vpop.permute.xlu0 %3384
      %3387 = vset.pattern.permute.xlu0 1
      %3388 = vperm.xlu0 %3387, %v612
      %v3389 = vpop.permute.xlu0 %3388
      %3391 = vset.pattern.permute.xlu0 1
      %3392 = vperm.xlu0 %3391, %v613
      %v3393 = vpop.permute.xlu0 %3392
      %3395 = vset.pattern.permute.xlu0 1
      %3396 = vperm.xlu0 %3395, %v614
      %v3397 = vpop.permute.xlu0 %3396
      %3399 = vset.pattern.permute.xlu0 1
      %3400 = vperm.xlu0 %3399, %v615
      %v3401 = vpop.permute.xlu0 %3400
      %3403 = vset.pattern.permute.xlu0 1
      %3404 = vperm.xlu0 %3403, %v616
      %v3405 = vpop.permute.xlu0 %3404
      %3407 = vset.pattern.permute.xlu0 1
      %3408 = vperm.xlu0 %3407, %v617
      %v3409 = vpop.permute.xlu0 %3408
      %3411 = vset.pattern.permute.xlu0 1
      %3412 = vperm.xlu0 %3411, %v618
      %v3413 = vpop.permute.xlu0 %3412
      %3415 = vset.pattern.permute.xlu0 1
      %3416 = vperm.xlu0 %3415, %v619
      %v3417 = vpop.permute.xlu0 %3416
      %3419 = vset.pattern.permute.xlu0 1
      %3420 = vperm.xlu0 %3419, %v620
      %v3421 = vpop.permute.xlu0 %3420
      %3423 = vset.pattern.permute.xlu0 1
      %3424 = vperm.xlu0 %3423, %v621
      %v3425 = vpop.permute.xlu0 %3424
      %3427 = vset.pattern.permute.xlu0 1
      %3428 = vperm.xlu0 %3427, %v622
      %v3429 = vpop.permute.xlu0 %3428
      %3431 = vset.pattern.permute.xlu0 1
      %3432 = vperm.xlu0 %3431, %v623
      %v3433 = vpop.permute.xlu0 %3432
      %3435 = vset.pattern.permute.xlu0 1
      %3436 = vperm.xlu0 %3435, %v624
      %v3437 = vpop.permute.xlu0 %3436
      %3439 = vset.pattern.permute.xlu0 1
      %3440 = vperm.xlu0 %3439, %v625
      %v3441 = vpop.permute.xlu0 %3440
      %3443 = vset.pattern.permute.xlu0 1
      %3444 = vperm.xlu0 %3443, %v626
      %v3445 = vpop.permute.xlu0 %3444
      %3447 = vset.pattern.permute.xlu0 1
      %3448 = vperm.xlu0 %3447, %v627
      %v3449 = vpop.permute.xlu0 %3448
      %3451 = vset.pattern.permute.xlu0 1
      %3452 = vperm.xlu0 %3451, %v628
      %v3453 = vpop.permute.xlu0 %3452
      %3455 = vset.pattern.permute.xlu0 1
      %3456 = vperm.xlu0 %3455, %v629
      %v3457 = vpop.permute.xlu0 %3456
      %3459 = vset.pattern.permute.xlu0 1
      %3460 = vperm.xlu0 %3459, %v630
      %v3461 = vpop.permute.xlu0 %3460
      %3463 = vset.pattern.permute.xlu0 1
      %3464 = vperm.xlu0 %3463, %v631
      %v3465 = vpop.permute.xlu0 %3464
      %v3467 = vmul.f32 %v3325, %v3035
      %v3468 = vmul.f32 %v3329, %v3036
      %v3469 = vmul.f32 %v3333, %v3037
      %v3470 = vmul.f32 %v3337, %v3038
      %v3471 = vmul.f32 %v3341, %v3039
      %v3472 = vmul.f32 %v3345, %v3040
      %v3473 = vmul.f32 %v3349, %v3041
      %v3474 = vmul.f32 %v3353, %v3042
      %v3475 = vmul.f32 %v3357, %v3043
      %v3476 = vmul.f32 %v3361, %v3044
      %v3477 = vmul.f32 %v3365, %v3045
      %v3478 = vmul.f32 %v3369, %v3046
      %v3479 = vmul.f32 %v3373, %v3047
      %v3480 = vmul.f32 %v3377, %v3048
      %v3481 = vmul.f32 %v3381, %v3049
      %v3482 = vmul.f32 %v3385, %v3050
      %v3483 = vmul.f32 %v3389, %v3051
      %v3484 = vmul.f32 %v3393, %v3052
      %v3485 = vmul.f32 %v3397, %v3053
      %v3486 = vmul.f32 %v3401, %v3054
      %v3487 = vmul.f32 %v3405, %v3055
      %v3488 = vmul.f32 %v3409, %v3056
      %v3489 = vmul.f32 %v3413, %v3057
      %v3490 = vmul.f32 %v3417, %v3058
      %v3491 = vmul.f32 %v3421, %v3059
      %v3492 = vmul.f32 %v3425, %v3060
      %v3493 = vmul.f32 %v3429, %v3061
      %v3494 = vmul.f32 %v3433, %v3062
      %v3495 = vmul.f32 %v3437, %v3063
      %v3496 = vmul.f32 %v3441, %v3064
      %v3497 = vmul.f32 %v3445, %v3065
      %v3498 = vmul.f32 %v3449, %v3066
      %v3499 = vmul.f32 %v3453, %v3067
      %v3500 = vmul.f32 %v3457, %v3068
      %v3501 = vmul.f32 %v3461, %v3069
      %v3502 = vmul.f32 %v3465, %v3070
      %v3503 = vadd.f32 %v3287, %v3467
      %v3504 = vadd.f32 %v3288, %v3468
      %v3505 = vadd.f32 %v3289, %v3469
      %v3506 = vadd.f32 %v3290, %v3470
      %v3507 = vadd.f32 %v3291, %v3471
      %v3508 = vadd.f32 %v3292, %v3472
      %v3509 = vadd.f32 %v3293, %v3473
      %v3510 = vadd.f32 %v3294, %v3474
      %v3511 = vadd.f32 %v3295, %v3475
      %v3512 = vadd.f32 %v3296, %v3476
      %v3513 = vadd.f32 %v3297, %v3477
      %v3514 = vadd.f32 %v3298, %v3478
      %v3515 = vadd.f32 %v3299, %v3479
      %v3516 = vadd.f32 %v3300, %v3480
      %v3517 = vadd.f32 %v3301, %v3481
      %v3518 = vadd.f32 %v3302, %v3482
      %v3519 = vadd.f32 %v3303, %v3483
      %v3520 = vadd.f32 %v3304, %v3484
      %v3521 = vadd.f32 %v3305, %v3485
      %v3522 = vadd.f32 %v3306, %v3486
      %v3523 = vadd.f32 %v3307, %v3487
      %v3524 = vadd.f32 %v3308, %v3488
      %v3525 = vadd.f32 %v3309, %v3489
      %v3526 = vadd.f32 %v3310, %v3490
      %v3527 = vadd.f32 %v3311, %v3491
      %v3528 = vadd.f32 %v3312, %v3492
      %v3529 = vadd.f32 %v3313, %v3493
      %v3530 = vadd.f32 %v3314, %v3494
      %v3531 = vadd.f32 %v3315, %v3495
      %v3532 = vadd.f32 %v3316, %v3496
      %v3533 = vadd.f32 %v3317, %v3497
      %v3534 = vadd.f32 %v3318, %v3498
      %v3535 = vadd.f32 %v3319, %v3499
      %v3536 = vadd.f32 %v3320, %v3500
      %v3537 = vadd.f32 %v3321, %v3501
      %v3538 = vadd.f32 %v3322, %v3502
      %v3539 = vperm.slane %v632, 0
      %v3540 = vadd.f32 %v3503, %v3539
      %v3541 = vadd.f32 %v3504, %v3539
      %v3542 = vadd.f32 %v3505, %v3539
      %v3543 = vadd.f32 %v3506, %v3539
      %v3544 = vadd.f32 %v3507, %v3539
      %v3545 = vadd.f32 %v3508, %v3539
      %v3546 = vadd.f32 %v3509, %v3539
      %v3547 = vadd.f32 %v3510, %v3539
      %v3548 = vadd.f32 %v3511, %v3539
      %v3549 = vadd.f32 %v3512, %v3539
      %v3550 = vadd.f32 %v3513, %v3539
      %v3551 = vadd.f32 %v3514, %v3539
      %v3552 = vadd.f32 %v3515, %v3539
      %v3553 = vadd.f32 %v3516, %v3539
      %v3554 = vadd.f32 %v3517, %v3539
      %v3555 = vadd.f32 %v3518, %v3539
      %v3556 = vadd.f32 %v3519, %v3539
      %v3557 = vadd.f32 %v3520, %v3539
      %v3558 = vadd.f32 %v3521, %v3539
      %v3559 = vadd.f32 %v3522, %v3539
      %v3560 = vadd.f32 %v3523, %v3539
      %v3561 = vadd.f32 %v3524, %v3539
      %v3562 = vadd.f32 %v3525, %v3539
      %v3563 = vadd.f32 %v3526, %v3539
      %v3564 = vadd.f32 %v3527, %v3539
      %v3565 = vadd.f32 %v3528, %v3539
      %v3566 = vadd.f32 %v3529, %v3539
      %v3567 = vadd.f32 %v3530, %v3539
      %v3568 = vadd.f32 %v3531, %v3539
      %v3569 = vadd.f32 %v3532, %v3539
      %v3570 = vadd.f32 %v3533, %v3539
      %v3571 = vadd.f32 %v3534, %v3539
      %v3572 = vadd.f32 %v3535, %v3539
      %v3573 = vadd.f32 %v3536, %v3539
      %v3574 = vadd.f32 %v3537, %v3539
      %v3575 = vadd.f32 %v3538, %v3539
      %v3576 = vmax.f32 %v3540, 0.0
      %v3577 = vmax.f32 %v3541, 0.0
      %v3578 = vmax.f32 %v3542, 0.0
      %v3579 = vmax.f32 %v3543, 0.0
      %v3580 = vmax.f32 %v3544, 0.0
      %v3581 = vmax.f32 %v3545, 0.0
      %v3582 = vmax.f32 %v3546, 0.0
      %v3583 = vmax.f32 %v3547, 0.0
      %v3584 = vmax.f32 %v3548, 0.0
      %v3585 = vmax.f32 %v3549, 0.0
      %v3586 = vmax.f32 %v3550, 0.0
      %v3587 = vmax.f32 %v3551, 0.0
      %v3588 = vmax.f32 %v3552, 0.0
      %v3589 = vmax.f32 %v3553, 0.0
      %v3590 = vmax.f32 %v3554, 0.0
      %v3591 = vmax.f32 %v3555, 0.0
      %v3592 = vmax.f32 %v3556, 0.0
      %v3593 = vmax.f32 %v3557, 0.0
      %v3594 = vmax.f32 %v3558, 0.0
      %v3595 = vmax.f32 %v3559, 0.0
      %v3596 = vmax.f32 %v3560, 0.0
      %v3597 = vmax.f32 %v3561, 0.0
      %v3598 = vmax.f32 %v3562, 0.0
      %v3599 = vmax.f32 %v3563, 0.0
      %v3600 = vmax.f32 %v3564, 0.0
      %v3601 = vmax.f32 %v3565, 0.0
      %v3602 = vmax.f32 %v3566, 0.0
      %v3603 = vmax.f32 %v3567, 0.0
      %v3604 = vmax.f32 %v3568, 0.0
      %v3605 = vmax.f32 %v3569, 0.0
      %v3606 = vmax.f32 %v3570, 0.0
      %v3607 = vmax.f32 %v3571, 0.0
      %v3608 = vmax.f32 %v3572, 0.0
      %v3609 = vmax.f32 %v3573, 0.0
      %v3610 = vmax.f32 %v3574, 0.0
      %v3611 = vmax.f32 %v3575, 0.0
      %3612 = vset.pattern.permute.xlu0 2
      %3613 = vperm.xlu0 %3612, %v596
      %v3614 = vpop.permute.xlu0 %3613
      %3616 = vset.pattern.permute.xlu0 2
      %3617 = vperm.xlu0 %3616, %v597
      %v3618 = vpop.permute.xlu0 %3617
      %3620 = vset.pattern.permute.xlu0 2
      %3621 = vperm.xlu0 %3620, %v598
      %v3622 = vpop.permute.xlu0 %3621
      %3624 = vset.pattern.permute.xlu0 2
      %3625 = vperm.xlu0 %3624, %v599
      %v3626 = vpop.permute.xlu0 %3625
      %3628 = vset.pattern.permute.xlu0 2
      %3629 = vperm.xlu0 %3628, %v600
      %v3630 = vpop.permute.xlu0 %3629
      %3632 = vset.pattern.permute.xlu0 2
      %3633 = vperm.xlu0 %3632, %v601
      %v3634 = vpop.permute.xlu0 %3633
      %3636 = vset.pattern.permute.xlu0 2
      %3637 = vperm.xlu0 %3636, %v602
      %v3638 = vpop.permute.xlu0 %3637
      %3640 = vset.pattern.permute.xlu0 2
      %3641 = vperm.xlu0 %3640, %v603
      %v3642 = vpop.permute.xlu0 %3641
      %3644 = vset.pattern.permute.xlu0 2
      %3645 = vperm.xlu0 %3644, %v604
      %v3646 = vpop.permute.xlu0 %3645
      %3648 = vset.pattern.permute.xlu0 2
      %3649 = vperm.xlu0 %3648, %v605
      %v3650 = vpop.permute.xlu0 %3649
      %3652 = vset.pattern.permute.xlu0 2
      %3653 = vperm.xlu0 %3652, %v606
      %v3654 = vpop.permute.xlu0 %3653
      %3656 = vset.pattern.permute.xlu0 2
      %3657 = vperm.xlu0 %3656, %v607
      %v3658 = vpop.permute.xlu0 %3657
      %3660 = vset.pattern.permute.xlu0 2
      %3661 = vperm.xlu0 %3660, %v608
      %v3662 = vpop.permute.xlu0 %3661
      %3664 = vset.pattern.permute.xlu0 2
      %3665 = vperm.xlu0 %3664, %v609
      %v3666 = vpop.permute.xlu0 %3665
      %3668 = vset.pattern.permute.xlu0 2
      %3669 = vperm.xlu0 %3668, %v610
      %v3670 = vpop.permute.xlu0 %3669
      %3672 = vset.pattern.permute.xlu0 2
      %3673 = vperm.xlu0 %3672, %v611
      %v3674 = vpop.permute.xlu0 %3673
      %3676 = vset.pattern.permute.xlu0 2
      %3677 = vperm.xlu0 %3676, %v612
      %v3678 = vpop.permute.xlu0 %3677
      %3680 = vset.pattern.permute.xlu0 2
      %3681 = vperm.xlu0 %3680, %v613
      %v3682 = vpop.permute.xlu0 %3681
      %3684 = vset.pattern.permute.xlu0 2
      %3685 = vperm.xlu0 %3684, %v614
      %v3686 = vpop.permute.xlu0 %3685
      %3688 = vset.pattern.permute.xlu0 2
      %3689 = vperm.xlu0 %3688, %v615
      %v3690 = vpop.permute.xlu0 %3689
      %3692 = vset.pattern.permute.xlu0 2
      %3693 = vperm.xlu0 %3692, %v616
      %v3694 = vpop.permute.xlu0 %3693
      %3696 = vset.pattern.permute.xlu0 2
      %3697 = vperm.xlu0 %3696, %v617
      %v3698 = vpop.permute.xlu0 %3697
      %3700 = vset.pattern.permute.xlu0 2
      %3701 = vperm.xlu0 %3700, %v618
      %v3702 = vpop.permute.xlu0 %3701
      %3704 = vset.pattern.permute.xlu0 2
      %3705 = vperm.xlu0 %3704, %v619
      %v3706 = vpop.permute.xlu0 %3705
      %3708 = vset.pattern.permute.xlu0 2
      %3709 = vperm.xlu0 %3708, %v620
      %v3710 = vpop.permute.xlu0 %3709
      %3712 = vset.pattern.permute.xlu0 2
      %3713 = vperm.xlu0 %3712, %v621
      %v3714 = vpop.permute.xlu0 %3713
      %3716 = vset.pattern.permute.xlu0 2
      %3717 = vperm.xlu0 %3716, %v622
      %v3718 = vpop.permute.xlu0 %3717
      %3720 = vset.pattern.permute.xlu0 2
      %3721 = vperm.xlu0 %3720, %v623
      %v3722 = vpop.permute.xlu0 %3721
      %3724 = vset.pattern.permute.xlu0 2
      %3725 = vperm.xlu0 %3724, %v624
      %v3726 = vpop.permute.xlu0 %3725
      %3728 = vset.pattern.permute.xlu0 2
      %3729 = vperm.xlu0 %3728, %v625
      %v3730 = vpop.permute.xlu0 %3729
      %3732 = vset.pattern.permute.xlu0 2
      %3733 = vperm.xlu0 %3732, %v626
      %v3734 = vpop.permute.xlu0 %3733
      %3736 = vset.pattern.permute.xlu0 2
      %3737 = vperm.xlu0 %3736, %v627
      %v3738 = vpop.permute.xlu0 %3737
      %3740 = vset.pattern.permute.xlu0 2
      %3741 = vperm.xlu0 %3740, %v628
      %v3742 = vpop.permute.xlu0 %3741
      %3744 = vset.pattern.permute.xlu0 2
      %3745 = vperm.xlu0 %3744, %v629
      %v3746 = vpop.permute.xlu0 %3745
      %3748 = vset.pattern.permute.xlu0 2
      %3749 = vperm.xlu0 %3748, %v630
      %v3750 = vpop.permute.xlu0 %3749
      %3752 = vset.pattern.permute.xlu0 2
      %3753 = vperm.xlu0 %3752, %v631
      %v3754 = vpop.permute.xlu0 %3753
      %v3756 = vmul.f32 %v3576, %v3614
      %v3757 = vmul.f32 %v3577, %v3618
      %v3758 = vmul.f32 %v3578, %v3622
      %v3759 = vmul.f32 %v3579, %v3626
      %v3760 = vmul.f32 %v3580, %v3630
      %v3761 = vmul.f32 %v3581, %v3634
      %v3762 = vmul.f32 %v3582, %v3638
      %v3763 = vmul.f32 %v3583, %v3642
      %v3764 = vmul.f32 %v3584, %v3646
      %v3765 = vmul.f32 %v3585, %v3650
      %v3766 = vmul.f32 %v3586, %v3654
      %v3767 = vmul.f32 %v3587, %v3658
      %v3768 = vmul.f32 %v3588, %v3662
      %v3769 = vmul.f32 %v3589, %v3666
      %v3770 = vmul.f32 %v3590, %v3670
      %v3771 = vmul.f32 %v3591, %v3674
      %v3772 = vmul.f32 %v3592, %v3678
      %v3773 = vmul.f32 %v3593, %v3682
      %v3774 = vmul.f32 %v3594, %v3686
      %v3775 = vmul.f32 %v3595, %v3690
      %v3776 = vmul.f32 %v3596, %v3694
      %v3777 = vmul.f32 %v3597, %v3698
      %v3778 = vmul.f32 %v3598, %v3702
      %v3779 = vmul.f32 %v3599, %v3706
      %v3780 = vmul.f32 %v3600, %v3710
      %v3781 = vmul.f32 %v3601, %v3714
      %v3782 = vmul.f32 %v3602, %v3718
      %v3783 = vmul.f32 %v3603, %v3722
      %v3784 = vmul.f32 %v3604, %v3726
      %v3785 = vmul.f32 %v3605, %v3730
      %v3786 = vmul.f32 %v3606, %v3734
      %v3787 = vmul.f32 %v3607, %v3738
      %v3788 = vmul.f32 %v3608, %v3742
      %v3789 = vmul.f32 %v3609, %v3746
      %v3790 = vmul.f32 %v3610, %v3750
      %v3791 = vmul.f32 %v3611, %v3754
      %3792 = vst.msk [vmem:[#allocation3 + $0x20] sm:$0xff] %vm272, %v3756
      %3793 = vst.msk [vmem:[#allocation3 + $0x28] sm:$0xff] %vm272, %v3757
      %3794 = vst.msk [vmem:[#allocation3 + $0x30] sm:$0xff] %vm272, %v3758
      %3795 = vst.msk [vmem:[#allocation3 + $0x38] sm:$0xff] %vm272, %v3759
      %3796 = vst.msk [vmem:[#allocation3 + $0x40] sm:$0xff] %vm272, %v3760
      %3797 = vst.msk [vmem:[#allocation3 + $0x48] sm:$0xff] %vm272, %v3761
      %3798 = vst.msk [vmem:[#allocation3 + $0x50] sm:$0xff] %vm272, %v3762
      %3799 = vst.msk [vmem:[#allocation3 + $0x58] sm:$0xff] %vm272, %v3763
      %3800 = vst.msk [vmem:[#allocation3 + $0x60] sm:$0xff] %vm272, %v3764
      %3801 = vst.msk [vmem:[#allocation3 + $0x68] sm:$0xff] %vm272, %v3765
      %3802 = vst.msk [vmem:[#allocation3 + $0x70] sm:$0xff] %vm272, %v3766
      %3803 = vst.msk [vmem:[#allocation3 + $0x78] sm:$0xff] %vm272, %v3767
      %3804 = vst.msk [vmem:[#allocation3 + $0x80] sm:$0xff] %vm272, %v3768
      %3805 = vst.msk [vmem:[#allocation3 + $0x88] sm:$0xff] %vm272, %v3769
      %3806 = vst.msk [vmem:[#allocation3 + $0x90] sm:$0xff] %vm272, %v3770
      %3807 = vst.msk [vmem:[#allocation3 + $0x98] sm:$0xff] %vm272, %v3771
      %3808 = vst.msk [vmem:[#allocation3 + $0xa0] sm:$0xff] %vm272, %v3772
      %3809 = vst.msk [vmem:[#allocation3 + $0xa8] sm:$0xff] %vm272, %v3773
      %3810 = vst.msk [vmem:[#allocation3 + $0xb0] sm:$0xff] %vm272, %v3774
      %3811 = vst.msk [vmem:[#allocation3 + $0xb8] sm:$0xff] %vm272, %v3775
      %3812 = vst.msk [vmem:[#allocation3 + $0xc0] sm:$0xff] %vm272, %v3776
      %3813 = vst.msk [vmem:[#allocation3 + $0xc8] sm:$0xff] %vm272, %v3777
      %3814 = vst.msk [vmem:[#allocation3 + $0xd0] sm:$0xff] %vm272, %v3778
      %3815 = vst.msk [vmem:[#allocation3 + $0xd8] sm:$0xff] %vm272, %v3779
      %3816 = vst.msk [vmem:[#allocation3 + $0xe0] sm:$0xff] %vm272, %v3780
      %3817 = vst.msk [vmem:[#allocation3 + $0xe8] sm:$0xff] %vm272, %v3781
      %3818 = vst.msk [vmem:[#allocation3 + $0xf0] sm:$0xff] %vm272, %v3782
      %3819 = vst.msk [vmem:[#allocation3 + $0xf8] sm:$0xff] %vm272, %v3783
      %3820 = vst.msk [vmem:[#allocation3 + $0x100] sm:$0xff] %vm272, %v3784
      %3821 = vst.msk [vmem:[#allocation3 + $0x108] sm:$0xff] %vm272, %v3785
      %3822 = vst.msk [vmem:[#allocation3 + $0x110] sm:$0xff] %vm272, %v3786
      %3823 = vst.msk [vmem:[#allocation3 + $0x118] sm:$0xff] %vm272, %v3787
      %3824 = vst.msk [vmem:[#allocation3 + $0x120] sm:$0xff] %vm272, %v3788
      %3825 = vst.msk [vmem:[#allocation3 + $0x128] sm:$0xff] %vm272, %v3789
      %3826 = vst.msk [vmem:[#allocation3 + $0x130] sm:$0xff] %vm272, %v3790
      %3827 = vst.msk [vmem:[#allocation3 + $0x138] sm:$0xff] %vm272, %v3791
      %v3828 = vld [vmem:[%s5 + $0x1] sm:$0x1]
      %v3829 = vld [vmem:[#allocation3 + $0xf] sm:$0xff]
      %v3830 = vld [vmem:[#allocation3 + $0x17] sm:$0xff]
      %v3831 = vld [vmem:[#allocation3 + $0x1f] sm:$0xff]
      %v3832 = vld [vmem:[#allocation3 + $0x27] sm:$0xff]
      %v3833 = vld [vmem:[#allocation3 + $0x2f] sm:$0xff]
      %v3834 = vld [vmem:[#allocation3 + $0x37] sm:$0xff]
      %v3835 = vld [vmem:[#allocation3 + $0x3f] sm:$0xff]
      %v3836 = vld [vmem:[#allocation3 + $0x47] sm:$0xff]
      %v3837 = vld [vmem:[#allocation3 + $0x4f] sm:$0xff]
      %v3838 = vld [vmem:[#allocation3 + $0x57] sm:$0xff]
      %v3839 = vld [vmem:[#allocation3 + $0x5f] sm:$0xff]
      %v3840 = vld [vmem:[#allocation3 + $0x67] sm:$0xff]
      %v3841 = vld [vmem:[#allocation3 + $0x6f] sm:$0xff]
      %v3842 = vld [vmem:[#allocation3 + $0x77] sm:$0xff]
      %v3843 = vld [vmem:[#allocation3 + $0x7f] sm:$0xff]
      %v3844 = vld [vmem:[#allocation3 + $0x87] sm:$0xff]
      %v3845 = vld [vmem:[#allocation3 + $0x8f] sm:$0xff]
      %v3846 = vld [vmem:[#allocation3 + $0x97] sm:$0xff]
      %v3847 = vld [vmem:[#allocation3 + $0x9f] sm:$0xff]
      %v3848 = vld [vmem:[#allocation3 + $0xa7] sm:$0xff]
      %v3849 = vld [vmem:[#allocation3 + $0xaf] sm:$0xff]
      %v3850 = vld [vmem:[#allocation3 + $0xb7] sm:$0xff]
      %v3851 = vld [vmem:[#allocation3 + $0xbf] sm:$0xff]
      %v3852 = vld [vmem:[#allocation3 + $0xc7] sm:$0xff]
      %v3853 = vld [vmem:[#allocation3 + $0xcf] sm:$0xff]
      %v3854 = vld [vmem:[#allocation3 + $0xd7] sm:$0xff]
      %v3855 = vld [vmem:[#allocation3 + $0xdf] sm:$0xff]
      %v3856 = vld [vmem:[#allocation3 + $0xe7] sm:$0xff]
      %v3857 = vld [vmem:[#allocation3 + $0xef] sm:$0xff]
      %v3858 = vld [vmem:[#allocation3 + $0xf7] sm:$0xff]
      %v3859 = vld [vmem:[#allocation3 + $0xff] sm:$0xff]
      %v3860 = vld [vmem:[#allocation3 + $0x107] sm:$0xff]
      %v3861 = vld [vmem:[#allocation3 + $0x10f] sm:$0xff]
      %v3862 = vld [vmem:[#allocation3 + $0x117] sm:$0xff]
      %v3863 = vld [vmem:[#allocation3 + $0x11f] sm:$0xff]
      %v3864 = vld [vmem:[#allocation3 + $0x127] sm:$0xff]
      %v3865 = vld [vmem:[%s4] sm:$0xff]
      %v3866 = vld [vmem:[%s4 + $0x8] sm:$0xff]
      %v3867 = vld [vmem:[%s4 + $0x10] sm:$0xff]
      %v3868 = vld [vmem:[%s4 + $0x18] sm:$0xff]
      %v3869 = vld [vmem:[#allocation3 + $0x10] sm:$0xff]
      %v3870 = vld [vmem:[#allocation3 + $0x18] sm:$0xff]
      %v3871 = vld [vmem:[#allocation3 + $0x20] sm:$0xff]
      %v3872 = vld [vmem:[#allocation3 + $0x28] sm:$0xff]
      %v3873 = vld [vmem:[#allocation3 + $0x30] sm:$0xff]
      %v3874 = vld [vmem:[#allocation3 + $0x38] sm:$0xff]
      %v3875 = vld [vmem:[#allocation3 + $0x40] sm:$0xff]
      %v3876 = vld [vmem:[#allocation3 + $0x48] sm:$0xff]
      %v3877 = vld [vmem:[#allocation3 + $0x50] sm:$0xff]
      %v3878 = vld [vmem:[#allocation3 + $0x58] sm:$0xff]
      %v3879 = vld [vmem:[#allocation3 + $0x60] sm:$0xff]
      %v3880 = vld [vmem:[#allocation3 + $0x68] sm:$0xff]
      %v3881 = vld [vmem:[#allocation3 + $0x70] sm:$0xff]
      %v3882 = vld [vmem:[#allocation3 + $0x78] sm:$0xff]
      %v3883 = vld [vmem:[#allocation3 + $0x80] sm:$0xff]
      %v3884 = vld [vmem:[#allocation3 + $0x88] sm:$0xff]
      %v3885 = vld [vmem:[#allocation3 + $0x90] sm:$0xff]
      %v3886 = vld [vmem:[#allocation3 + $0x98] sm:$0xff]
      %v3887 = vld [vmem:[#allocation3 + $0xa0] sm:$0xff]
      %v3888 = vld [vmem:[#allocation3 + $0xa8] sm:$0xff]
      %v3889 = vld [vmem:[#allocation3 + $0xb0] sm:$0xff]
      %v3890 = vld [vmem:[#allocation3 + $0xb8] sm:$0xff]
      %v3891 = vld [vmem:[#allocation3 + $0xc0] sm:$0xff]
      %v3892 = vld [vmem:[#allocation3 + $0xc8] sm:$0xff]
      %v3893 = vld [vmem:[#allocation3 + $0xd0] sm:$0xff]
      %v3894 = vld [vmem:[#allocation3 + $0xd8] sm:$0xff]
      %v3895 = vld [vmem:[#allocation3 + $0xe0] sm:$0xff]
      %v3896 = vld [vmem:[#allocation3 + $0xe8] sm:$0xff]
      %v3897 = vld [vmem:[#allocation3 + $0xf0] sm:$0xff]
      %v3898 = vld [vmem:[#allocation3 + $0xf8] sm:$0xff]
      %v3899 = vld [vmem:[#allocation3 + $0x100] sm:$0xff]
      %v3900 = vld [vmem:[#allocation3 + $0x108] sm:$0xff]
      %v3901 = vld [vmem:[#allocation3 + $0x110] sm:$0xff]
      %v3902 = vld [vmem:[#allocation3 + $0x118] sm:$0xff]
      %v3903 = vld [vmem:[#allocation3 + $0x120] sm:$0xff]
      %v3904 = vld [vmem:[#allocation3 + $0x128] sm:$0xff]
      %s3905 = scalar_lea.vmem %s4, 32
      %v3906 = vld [vmem:[%s3905] sm:$0xff]
      %v3907 = vld [vmem:[%s3905 + $0x8] sm:$0xff]
      %v3908 = vld [vmem:[%s3905 + $0x10] sm:$0xff]
      %v3909 = vld [vmem:[%s3905 + $0x18] sm:$0xff]
      %v3910 = vld [vmem:[#allocation3 + $0x11] sm:$0xff]
      %v3911 = vld [vmem:[#allocation3 + $0x19] sm:$0xff]
      %v3912 = vld [vmem:[#allocation3 + $0x21] sm:$0xff]
      %v3913 = vld [vmem:[#allocation3 + $0x29] sm:$0xff]
      %v3914 = vld [vmem:[#allocation3 + $0x31] sm:$0xff]
      %v3915 = vld [vmem:[#allocation3 + $0x39] sm:$0xff]
      %v3916 = vld [vmem:[#allocation3 + $0x41] sm:$0xff]
      %v3917 = vld [vmem:[#allocation3 + $0x49] sm:$0xff]
      %v3918 = vld [vmem:[#allocation3 + $0x51] sm:$0xff]
      %v3919 = vld [vmem:[#allocation3 + $0x59] sm:$0xff]
      %v3920 = vld [vmem:[#allocation3 + $0x61] sm:$0xff]
      %v3921 = vld [vmem:[#allocation3 + $0x69] sm:$0xff]
      %v3922 = vld [vmem:[#allocation3 + $0x71] sm:$0xff]
      %v3923 = vld [vmem:[#allocation3 + $0x79] sm:$0xff]
      %v3924 = vld [vmem:[#allocation3 + $0x81] sm:$0xff]
      %v3925 = vld [vmem:[#allocation3 + $0x89] sm:$0xff]
      %v3926 = vld [vmem:[#allocation3 + $0x91] sm:$0xff]
      %v3927 = vld [vmem:[#allocation3 + $0x99] sm:$0xff]
      %v3928 = vld [vmem:[#allocation3 + $0xa1] sm:$0xff]
      %v3929 = vld [vmem:[#allocation3 + $0xa9] sm:$0xff]
      %v3930 = vld [vmem:[#allocation3 + $0xb1] sm:$0xff]
      %v3931 = vld [vmem:[#allocation3 + $0xb9] sm:$0xff]
      %v3932 = vld [vmem:[#allocation3 + $0xc1] sm:$0xff]
      %v3933 = vld [vmem:[#allocation3 + $0xc9] sm:$0xff]
      %v3934 = vld [vmem:[#allocation3 + $0xd1] sm:$0xff]
      %v3935 = vld [vmem:[#allocation3 + $0xd9] sm:$0xff]
      %v3936 = vld [vmem:[#allocation3 + $0xe1] sm:$0xff]
      %v3937 = vld [vmem:[#allocation3 + $0xe9] sm:$0xff]
      %v3938 = vld [vmem:[#allocation3 + $0xf1] sm:$0xff]
      %v3939 = vld [vmem:[#allocation3 + $0xf9] sm:$0xff]
      %v3940 = vld [vmem:[#allocation3 + $0x101] sm:$0xff]
      %v3941 = vld [vmem:[#allocation3 + $0x109] sm:$0xff]
      %v3942 = vld [vmem:[#allocation3 + $0x111] sm:$0xff]
      %v3943 = vld [vmem:[#allocation3 + $0x119] sm:$0xff]
      %v3944 = vld [vmem:[#allocation3 + $0x121] sm:$0xff]
      %v3945 = vld [vmem:[#allocation3 + $0x129] sm:$0xff]
      %s3946 = scalar_lea.vmem %s4, 64
      %v3947 = vld [vmem:[%s3946] sm:$0xff]
      %v3948 = vld [vmem:[%s3946 + $0x8] sm:$0xff]
      %v3949 = vld [vmem:[%s3946 + $0x10] sm:$0xff]
      %v3950 = vld [vmem:[%s3946 + $0x18] sm:$0xff]
      %v3951 = vld [vmem:[#allocation3 + $0x12f] sm:$0xff]
      %v3952 = vld [vmem:[#allocation3 + $0x137] sm:$0xff]
      %s3953 = scalar_lea.vmem %s4, 96
      %v3954 = vld [vmem:[%s3953] sm:$0xff]
      %v3955 = vld [vmem:[%s3953 + $0x8] sm:$0xff]
      %v3956 = vld [vmem:[%s3953 + $0x10] sm:$0xff]
      %v3957 = vld [vmem:[%s3953 + $0x18] sm:$0xff]
      %v3959 = vsel %vm272, %v3831, 0
      %v3962 = vsel %vm272, %v3832, 0
      %v3965 = vsel %vm272, %v3833, 0
      %v3968 = vsel %vm272, %v3834, 0
      %v3971 = vsel %vm272, %v3835, 0
      %v3974 = vsel %vm272, %v3836, 0
      %v3977 = vsel %vm272, %v3837, 0
      %v3980 = vsel %vm272, %v3838, 0
      %v3983 = vsel %vm272, %v3839, 0
      %v3986 = vsel %vm272, %v3840, 0
      %v3989 = vsel %vm272, %v3841, 0
      %v3992 = vsel %vm272, %v3842, 0
      %v3995 = vsel %vm272, %v3843, 0
      %v3998 = vsel %vm272, %v3844, 0
      %v4001 = vsel %vm272, %v3845, 0
      %v4004 = vsel %vm272, %v3846, 0
      %v4007 = vsel %vm272, %v3847, 0
      %v4010 = vsel %vm272, %v3848, 0
      %v4013 = vsel %vm272, %v3849, 0
      %v4016 = vsel %vm272, %v3850, 0
      %v4019 = vsel %vm272, %v3851, 0
      %v4022 = vsel %vm272, %v3852, 0
      %v4025 = vsel %vm272, %v3853, 0
      %v4028 = vsel %vm272, %v3854, 0
      %v4031 = vsel %vm272, %v3855, 0
      %v4034 = vsel %vm272, %v3856, 0
      %v4037 = vsel %vm272, %v3857, 0
      %v4040 = vsel %vm272, %v3858, 0
      %v4043 = vsel %vm272, %v3859, 0
      %v4046 = vsel %vm272, %v3860, 0
      %v4049 = vsel %vm272, %v3861, 0
      %v4052 = vsel %vm272, %v3862, 0
      %v4055 = vsel %vm272, %v3863, 0
      %v4058 = vsel %vm272, %v3864, 0
      %v4061 = vsel %vm272, %v3951, 0
      %v4064 = vsel %vm272, %v3952, 0
      %4066 = vmatpush.msra.mxu0 0.0
      %4067 = vmatpush.msra.mxu0 0.0
      %4068 = vmatpush.msra.mxu0 0.0
      %4069 = vmatpush.msra.mxu0 0.0
      %4070 = vmatpush.msra.mxu0 0.0
      %4071 = vmatpush.msra.mxu0 0.0
      %4072 = vmatpush.msra.mxu0 0.0
      %4073 = vmatpush.msra.mxu0 0.0
      %4074 = vmatpush.msra.mxu0 0.0
      %4075 = vmatpush.msra.mxu0 0.0
      %4076 = vmatpush.msra.mxu0 0.0
      %4077 = vmatpush.msra.mxu0 0.0
      %4078 = vmatpush.msra.mxu0 %v3957
      %4079 = vmatpush.msra.mxu0 %v3956
      %4080 = vmatpush.msra.mxu0 %v3955
      %4081 = vmatpush.msra.mxu0 %v3954
      %4082 = vmatmul.f32.gmra.mxu0 %v3959
      %v4083 = vpop.f32.mrf.mxu0
      %v4084 = vadd.f32 0.0, %v4083
      %4085 = vmatmul.f32.gmra.mxu0 %v3962
      %v4086 = vpop.f32.mrf.mxu0
      %v4087 = vadd.f32 0.0, %v4086
      %4088 = vmatmul.f32.gmra.mxu0 %v3965
      %v4089 = vpop.f32.mrf.mxu0
      %v4090 = vadd.f32 0.0, %v4089
      %4091 = vmatmul.f32.gmra.mxu0 %v3968
      %v4092 = vpop.f32.mrf.mxu0
      %v4093 = vadd.f32 0.0, %v4092
      %4094 = vmatmul.f32.gmra.mxu0 %v3971
      %v4095 = vpop.f32.mrf.mxu0
      %v4096 = vadd.f32 0.0, %v4095
      %4097 = vmatmul.f32.gmra.mxu0 %v3974
      %v4098 = vpop.f32.mrf.mxu0
      %v4099 = vadd.f32 0.0, %v4098
      %4100 = vmatmul.f32.gmra.mxu0 %v3977
      %v4101 = vpop.f32.mrf.mxu0
      %v4102 = vadd.f32 0.0, %v4101
      %4103 = vmatmul.f32.gmra.mxu0 %v3980
      %v4104 = vpop.f32.mrf.mxu0
      %v4105 = vadd.f32 0.0, %v4104
      %4106 = vmatmul.f32.gmra.mxu0 %v3983
      %v4107 = vpop.f32.mrf.mxu0
      %v4108 = vadd.f32 0.0, %v4107
      %4109 = vmatmul.f32.gmra.mxu0 %v3986
      %v4110 = vpop.f32.mrf.mxu0
      %v4111 = vadd.f32 0.0, %v4110
      %4112 = vmatmul.f32.gmra.mxu0 %v3989
      %v4113 = vpop.f32.mrf.mxu0
      %v4114 = vadd.f32 0.0, %v4113
      %4115 = vmatmul.f32.gmra.mxu0 %v3992
      %v4116 = vpop.f32.mrf.mxu0
      %v4117 = vadd.f32 0.0, %v4116
      %4118 = vmatmul.f32.gmra.mxu0 %v3995
      %v4119 = vpop.f32.mrf.mxu0
      %v4120 = vadd.f32 0.0, %v4119
      %4121 = vmatmul.f32.gmra.mxu0 %v3998
      %v4122 = vpop.f32.mrf.mxu0
      %v4123 = vadd.f32 0.0, %v4122
      %4124 = vmatmul.f32.gmra.mxu0 %v4001
      %v4125 = vpop.f32.mrf.mxu0
      %v4126 = vadd.f32 0.0, %v4125
      %4127 = vmatmul.f32.gmra.mxu0 %v4004
      %v4128 = vpop.f32.mrf.mxu0
      %v4129 = vadd.f32 0.0, %v4128
      %4130 = vmatmul.f32.gmra.mxu0 %v4007
      %v4131 = vpop.f32.mrf.mxu0
      %v4132 = vadd.f32 0.0, %v4131
      %4133 = vmatmul.f32.gmra.mxu0 %v4010
      %v4134 = vpop.f32.mrf.mxu0
      %v4135 = vadd.f32 0.0, %v4134
      %4136 = vmatmul.f32.gmra.mxu0 %v4013
      %v4137 = vpop.f32.mrf.mxu0
      %v4138 = vadd.f32 0.0, %v4137
      %4139 = vmatmul.f32.gmra.mxu0 %v4016
      %v4140 = vpop.f32.mrf.mxu0
      %v4141 = vadd.f32 0.0, %v4140
      %4142 = vmatmul.f32.gmra.mxu0 %v4019
      %v4143 = vpop.f32.mrf.mxu0
      %v4144 = vadd.f32 0.0, %v4143
      %4145 = vmatmul.f32.gmra.mxu0 %v4022
      %v4146 = vpop.f32.mrf.mxu0
      %v4147 = vadd.f32 0.0, %v4146
      %4148 = vmatmul.f32.gmra.mxu0 %v4025
      %v4149 = vpop.f32.mrf.mxu0
      %v4150 = vadd.f32 0.0, %v4149
      %4151 = vmatmul.f32.gmra.mxu0 %v4028
      %v4152 = vpop.f32.mrf.mxu0
      %v4153 = vadd.f32 0.0, %v4152
      %4154 = vmatmul.f32.gmra.mxu0 %v4031
      %v4155 = vpop.f32.mrf.mxu0
      %v4156 = vadd.f32 0.0, %v4155
      %4157 = vmatmul.f32.gmra.mxu0 %v4034
      %v4158 = vpop.f32.mrf.mxu0
      %v4159 = vadd.f32 0.0, %v4158
      %4160 = vmatmul.f32.gmra.mxu0 %v4037
      %v4161 = vpop.f32.mrf.mxu0
      %v4162 = vadd.f32 0.0, %v4161
      %4163 = vmatmul.f32.gmra.mxu0 %v4040
      %v4164 = vpop.f32.mrf.mxu0
      %v4165 = vadd.f32 0.0, %v4164
      %4166 = vmatmul.f32.gmra.mxu0 %v4043
      %v4167 = vpop.f32.mrf.mxu0
      %v4168 = vadd.f32 0.0, %v4167
      %4169 = vmatmul.f32.gmra.mxu0 %v4046
      %v4170 = vpop.f32.mrf.mxu0
      %v4171 = vadd.f32 0.0, %v4170
      %4172 = vmatmul.f32.gmra.mxu0 %v4049
      %v4173 = vpop.f32.mrf.mxu0
      %v4174 = vadd.f32 0.0, %v4173
      %4175 = vmatmul.f32.gmra.mxu0 %v4052
      %v4176 = vpop.f32.mrf.mxu0
      %v4177 = vadd.f32 0.0, %v4176
      %4178 = vmatmul.f32.gmra.mxu0 %v4055
      %v4179 = vpop.f32.mrf.mxu0
      %v4180 = vadd.f32 0.0, %v4179
      %4181 = vmatmul.f32.gmra.mxu0 %v4058
      %v4182 = vpop.f32.mrf.mxu0
      %v4183 = vadd.f32 0.0, %v4182
      %4184 = vmatmul.f32.gmra.mxu0 %v4061
      %v4185 = vpop.f32.mrf.mxu0
      %v4186 = vadd.f32 0.0, %v4185
      %4187 = vmatmul.f32.gmra.mxu0 %v4064
      %v4188 = vpop.f32.mrf.mxu0
      %v4189 = vadd.f32 0.0, %v4188
      %4190 = vdwg.mxu0
      %v4192 = vsel %vm272, %v3829, 0
      %v4195 = vsel %vm272, %v3830, 0
      %4197 = vmatpush.msra.mxu0 0.0
      %4198 = vmatpush.msra.mxu0 0.0
      %4199 = vmatpush.msra.mxu0 0.0
      %4200 = vmatpush.msra.mxu0 0.0
      %4201 = vmatpush.msra.mxu0 0.0
      %4202 = vmatpush.msra.mxu0 0.0
      %4203 = vmatpush.msra.mxu0 0.0
      %4204 = vmatpush.msra.mxu0 0.0
      %4205 = vmatpush.msra.mxu0 0.0
      %4206 = vmatpush.msra.mxu0 0.0
      %4207 = vmatpush.msra.mxu0 0.0
      %4208 = vmatpush.msra.mxu0 0.0
      %4209 = vmatpush.msra.mxu0 %v3868
      %4210 = vmatpush.msra.mxu0 %v3867
      %4211 = vmatpush.msra.mxu0 %v3866
      %4212 = vmatpush.msra.mxu0 %v3865
      %4213 = vmatmul.f32.gmra.mxu0 %v4192
      %v4214 = vpop.f32.mrf.mxu0
      %v4215 = vadd.f32 %v4084, %v4214
      %4216 = vmatmul.f32.gmra.mxu0 %v4195
      %v4217 = vpop.f32.mrf.mxu0
      %v4218 = vadd.f32 %v4087, %v4217
      %4219 = vmatmul.f32.gmra.mxu0 %v3959
      %v4220 = vpop.f32.mrf.mxu0
      %v4221 = vadd.f32 %v4090, %v4220
      %4222 = vmatmul.f32.gmra.mxu0 %v3962
      %v4223 = vpop.f32.mrf.mxu0
      %v4224 = vadd.f32 %v4093, %v4223
      %4225 = vmatmul.f32.gmra.mxu0 %v3965
      %v4226 = vpop.f32.mrf.mxu0
      %v4227 = vadd.f32 %v4096, %v4226
      %4228 = vmatmul.f32.gmra.mxu0 %v3968
      %v4229 = vpop.f32.mrf.mxu0
      %v4230 = vadd.f32 %v4099, %v4229
      %4231 = vmatmul.f32.gmra.mxu0 %v3971
      %v4232 = vpop.f32.mrf.mxu0
      %v4233 = vadd.f32 %v4102, %v4232
      %4234 = vmatmul.f32.gmra.mxu0 %v3974
      %v4235 = vpop.f32.mrf.mxu0
      %v4236 = vadd.f32 %v4105, %v4235
      %4237 = vmatmul.f32.gmra.mxu0 %v3977
      %v4238 = vpop.f32.mrf.mxu0
      %v4239 = vadd.f32 %v4108, %v4238
      %4240 = vmatmul.f32.gmra.mxu0 %v3980
      %v4241 = vpop.f32.mrf.mxu0
      %v4242 = vadd.f32 %v4111, %v4241
      %4243 = vmatmul.f32.gmra.mxu0 %v3983
      %v4244 = vpop.f32.mrf.mxu0
      %v4245 = vadd.f32 %v4114, %v4244
      %4246 = vmatmul.f32.gmra.mxu0 %v3986
      %v4247 = vpop.f32.mrf.mxu0
      %v4248 = vadd.f32 %v4117, %v4247
      %4249 = vmatmul.f32.gmra.mxu0 %v3989
      %v4250 = vpop.f32.mrf.mxu0
      %v4251 = vadd.f32 %v4120, %v4250
      %4252 = vmatmul.f32.gmra.mxu0 %v3992
      %v4253 = vpop.f32.mrf.mxu0
      %v4254 = vadd.f32 %v4123, %v4253
      %4255 = vmatmul.f32.gmra.mxu0 %v3995
      %v4256 = vpop.f32.mrf.mxu0
      %v4257 = vadd.f32 %v4126, %v4256
      %4258 = vmatmul.f32.gmra.mxu0 %v3998
      %v4259 = vpop.f32.mrf.mxu0
      %v4260 = vadd.f32 %v4129, %v4259
      %4261 = vmatmul.f32.gmra.mxu0 %v4001
      %v4262 = vpop.f32.mrf.mxu0
      %v4263 = vadd.f32 %v4132, %v4262
      %4264 = vmatmul.f32.gmra.mxu0 %v4004
      %v4265 = vpop.f32.mrf.mxu0
      %v4266 = vadd.f32 %v4135, %v4265
      %4267 = vmatmul.f32.gmra.mxu0 %v4007
      %v4268 = vpop.f32.mrf.mxu0
      %v4269 = vadd.f32 %v4138, %v4268
      %4270 = vmatmul.f32.gmra.mxu0 %v4010
      %v4271 = vpop.f32.mrf.mxu0
      %v4272 = vadd.f32 %v4141, %v4271
      %4273 = vmatmul.f32.gmra.mxu0 %v4013
      %v4274 = vpop.f32.mrf.mxu0
      %v4275 = vadd.f32 %v4144, %v4274
      %4276 = vmatmul.f32.gmra.mxu0 %v4016
      %v4277 = vpop.f32.mrf.mxu0
      %v4278 = vadd.f32 %v4147, %v4277
      %4279 = vmatmul.f32.gmra.mxu0 %v4019
      %v4280 = vpop.f32.mrf.mxu0
      %v4281 = vadd.f32 %v4150, %v4280
      %4282 = vmatmul.f32.gmra.mxu0 %v4022
      %v4283 = vpop.f32.mrf.mxu0
      %v4284 = vadd.f32 %v4153, %v4283
      %4285 = vmatmul.f32.gmra.mxu0 %v4025
      %v4286 = vpop.f32.mrf.mxu0
      %v4287 = vadd.f32 %v4156, %v4286
      %4288 = vmatmul.f32.gmra.mxu0 %v4028
      %v4289 = vpop.f32.mrf.mxu0
      %v4290 = vadd.f32 %v4159, %v4289
      %4291 = vmatmul.f32.gmra.mxu0 %v4031
      %v4292 = vpop.f32.mrf.mxu0
      %v4293 = vadd.f32 %v4162, %v4292
      %4294 = vmatmul.f32.gmra.mxu0 %v4034
      %v4295 = vpop.f32.mrf.mxu0
      %v4296 = vadd.f32 %v4165, %v4295
      %4297 = vmatmul.f32.gmra.mxu0 %v4037
      %v4298 = vpop.f32.mrf.mxu0
      %v4299 = vadd.f32 %v4168, %v4298
      %4300 = vmatmul.f32.gmra.mxu0 %v4040
      %v4301 = vpop.f32.mrf.mxu0
      %v4302 = vadd.f32 %v4171, %v4301
      %4303 = vmatmul.f32.gmra.mxu0 %v4043
      %v4304 = vpop.f32.mrf.mxu0
      %v4305 = vadd.f32 %v4174, %v4304
      %4306 = vmatmul.f32.gmra.mxu0 %v4046
      %v4307 = vpop.f32.mrf.mxu0
      %v4308 = vadd.f32 %v4177, %v4307
      %4309 = vmatmul.f32.gmra.mxu0 %v4049
      %v4310 = vpop.f32.mrf.mxu0
      %v4311 = vadd.f32 %v4180, %v4310
      %4312 = vmatmul.f32.gmra.mxu0 %v4052
      %v4313 = vpop.f32.mrf.mxu0
      %v4314 = vadd.f32 %v4183, %v4313
      %4315 = vmatmul.f32.gmra.mxu0 %v4055
      %v4316 = vpop.f32.mrf.mxu0
      %v4317 = vadd.f32 %v4186, %v4316
      %4318 = vmatmul.f32.gmra.mxu0 %v4058
      %v4319 = vpop.f32.mrf.mxu0
      %v4320 = vadd.f32 %v4189, %v4319
      %4321 = vdwg.mxu0
      %v4322 = vld [vmem:[#allocation3 + $0x20] sm:$0xff]
      %v4323 = vld [vmem:[#allocation3 + $0x28] sm:$0xff]
      %v4324 = vld [vmem:[#allocation3 + $0x30] sm:$0xff]
      %v4325 = vld [vmem:[#allocation3 + $0x38] sm:$0xff]
      %v4326 = vld [vmem:[#allocation3 + $0x40] sm:$0xff]
      %v4327 = vld [vmem:[#allocation3 + $0x48] sm:$0xff]
      %v4328 = vld [vmem:[#allocation3 + $0x50] sm:$0xff]
      %v4329 = vld [vmem:[#allocation3 + $0x58] sm:$0xff]
      %v4330 = vld [vmem:[#allocation3 + $0x60] sm:$0xff]
      %v4331 = vld [vmem:[#allocation3 + $0x68] sm:$0xff]
      %v4332 = vld [vmem:[#allocation3 + $0x70] sm:$0xff]
      %v4333 = vld [vmem:[#allocation3 + $0x78] sm:$0xff]
      %v4334 = vld [vmem:[#allocation3 + $0x80] sm:$0xff]
      %v4335 = vld [vmem:[#allocation3 + $0x88] sm:$0xff]
      %v4336 = vld [vmem:[#allocation3 + $0x90] sm:$0xff]
      %v4337 = vld [vmem:[#allocation3 + $0x98] sm:$0xff]
      %v4338 = vld [vmem:[#allocation3 + $0xa0] sm:$0xff]
      %v4339 = vld [vmem:[#allocation3 + $0xa8] sm:$0xff]
      %v4340 = vld [vmem:[#allocation3 + $0xb0] sm:$0xff]
      %v4341 = vld [vmem:[#allocation3 + $0xb8] sm:$0xff]
      %v4342 = vld [vmem:[#allocation3 + $0xc0] sm:$0xff]
      %v4343 = vld [vmem:[#allocation3 + $0xc8] sm:$0xff]
      %v4344 = vld [vmem:[#allocation3 + $0xd0] sm:$0xff]
      %v4345 = vld [vmem:[#allocation3 + $0xd8] sm:$0xff]
      %v4346 = vld [vmem:[#allocation3 + $0xe0] sm:$0xff]
      %v4347 = vld [vmem:[#allocation3 + $0xe8] sm:$0xff]
      %v4348 = vld [vmem:[#allocation3 + $0xf0] sm:$0xff]
      %v4349 = vld [vmem:[#allocation3 + $0xf8] sm:$0xff]
      %v4350 = vld [vmem:[#allocation3 + $0x100] sm:$0xff]
      %v4351 = vld [vmem:[#allocation3 + $0x108] sm:$0xff]
      %v4352 = vld [vmem:[#allocation3 + $0x110] sm:$0xff]
      %v4353 = vld [vmem:[#allocation3 + $0x118] sm:$0xff]
      %v4354 = vld [vmem:[#allocation3 + $0x120] sm:$0xff]
      %v4355 = vld [vmem:[#allocation3 + $0x128] sm:$0xff]
      %v4356 = vld [vmem:[#allocation3 + $0x130] sm:$0xff]
      %v4357 = vld [vmem:[#allocation3 + $0x138] sm:$0xff]
      %s4358 = scalar_lea.vmem %s4, 128
      %v4359 = vld [vmem:[%s4358] sm:$0xff]
      %v4360 = vld [vmem:[%s4358 + $0x8] sm:$0xff]
      %v4361 = vld [vmem:[%s4358 + $0x10] sm:$0xff]
      %v4362 = vld [vmem:[%s4358 + $0x18] sm:$0xff]
      %v4364 = vsel %vm272, %v4322, 0
      %v4367 = vsel %vm272, %v4323, 0
      %v4370 = vsel %vm272, %v4324, 0
      %v4373 = vsel %vm272, %v4325, 0
      %v4376 = vsel %vm272, %v4326, 0
      %v4379 = vsel %vm272, %v4327, 0
      %v4382 = vsel %vm272, %v4328, 0
      %v4385 = vsel %vm272, %v4329, 0
      %v4388 = vsel %vm272, %v4330, 0
      %v4391 = vsel %vm272, %v4331, 0
      %v4394 = vsel %vm272, %v4332, 0
      %v4397 = vsel %vm272, %v4333, 0
      %v4400 = vsel %vm272, %v4334, 0
      %v4403 = vsel %vm272, %v4335, 0
      %v4406 = vsel %vm272, %v4336, 0
      %v4409 = vsel %vm272, %v4337, 0
      %v4412 = vsel %vm272, %v4338, 0
      %v4415 = vsel %vm272, %v4339, 0
      %v4418 = vsel %vm272, %v4340, 0
      %v4421 = vsel %vm272, %v4341, 0
      %v4424 = vsel %vm272, %v4342, 0
      %v4427 = vsel %vm272, %v4343, 0
      %v4430 = vsel %vm272, %v4344, 0
      %v4433 = vsel %vm272, %v4345, 0
      %v4436 = vsel %vm272, %v4346, 0
      %v4439 = vsel %vm272, %v4347, 0
      %v4442 = vsel %vm272, %v4348, 0
      %v4445 = vsel %vm272, %v4349, 0
      %v4448 = vsel %vm272, %v4350, 0
      %v4451 = vsel %vm272, %v4351, 0
      %v4454 = vsel %vm272, %v4352, 0
      %v4457 = vsel %vm272, %v4353, 0
      %v4460 = vsel %vm272, %v4354, 0
      %v4463 = vsel %vm272, %v4355, 0
      %v4466 = vsel %vm272, %v4356, 0
      %v4469 = vsel %vm272, %v4357, 0
      %4471 = vmatpush.msra.mxu0 0.0
      %4472 = vmatpush.msra.mxu0 0.0
      %4473 = vmatpush.msra.mxu0 0.0
      %4474 = vmatpush.msra.mxu0 0.0
      %4475 = vmatpush.msra.mxu0 0.0
      %4476 = vmatpush.msra.mxu0 0.0
      %4477 = vmatpush.msra.mxu0 0.0
      %4478 = vmatpush.msra.mxu0 0.0
      %4479 = vmatpush.msra.mxu0 0.0
      %4480 = vmatpush.msra.mxu0 0.0
      %4481 = vmatpush.msra.mxu0 0.0
      %4482 = vmatpush.msra.mxu0 0.0
      %4483 = vmatpush.msra.mxu0 %v4362
      %4484 = vmatpush.msra.mxu0 %v4361
      %4485 = vmatpush.msra.mxu0 %v4360
      %4486 = vmatpush.msra.mxu0 %v4359
      %4487 = vmatmul.f32.gmra.mxu0 %v4364
      %v4488 = vpop.f32.mrf.mxu0
      %v4489 = vadd.f32 0.0, %v4488
      %4490 = vmatmul.f32.gmra.mxu0 %v4367
      %v4491 = vpop.f32.mrf.mxu0
      %v4492 = vadd.f32 0.0, %v4491
      %4493 = vmatmul.f32.gmra.mxu0 %v4370
      %v4494 = vpop.f32.mrf.mxu0
      %v4495 = vadd.f32 0.0, %v4494
      %4496 = vmatmul.f32.gmra.mxu0 %v4373
      %v4497 = vpop.f32.mrf.mxu0
      %v4498 = vadd.f32 0.0, %v4497
      %4499 = vmatmul.f32.gmra.mxu0 %v4376
      %v4500 = vpop.f32.mrf.mxu0
      %v4501 = vadd.f32 0.0, %v4500
      %4502 = vmatmul.f32.gmra.mxu0 %v4379
      %v4503 = vpop.f32.mrf.mxu0
      %v4504 = vadd.f32 0.0, %v4503
      %4505 = vmatmul.f32.gmra.mxu0 %v4382
      %v4506 = vpop.f32.mrf.mxu0
      %v4507 = vadd.f32 0.0, %v4506
      %4508 = vmatmul.f32.gmra.mxu0 %v4385
      %v4509 = vpop.f32.mrf.mxu0
      %v4510 = vadd.f32 0.0, %v4509
      %4511 = vmatmul.f32.gmra.mxu0 %v4388
      %v4512 = vpop.f32.mrf.mxu0
      %v4513 = vadd.f32 0.0, %v4512
      %4514 = vmatmul.f32.gmra.mxu0 %v4391
      %v4515 = vpop.f32.mrf.mxu0
      %v4516 = vadd.f32 0.0, %v4515
      %4517 = vmatmul.f32.gmra.mxu0 %v4394
      %v4518 = vpop.f32.mrf.mxu0
      %v4519 = vadd.f32 0.0, %v4518
      %4520 = vmatmul.f32.gmra.mxu0 %v4397
      %v4521 = vpop.f32.mrf.mxu0
      %v4522 = vadd.f32 0.0, %v4521
      %4523 = vmatmul.f32.gmra.mxu0 %v4400
      %v4524 = vpop.f32.mrf.mxu0
      %v4525 = vadd.f32 0.0, %v4524
      %4526 = vmatmul.f32.gmra.mxu0 %v4403
      %v4527 = vpop.f32.mrf.mxu0
      %v4528 = vadd.f32 0.0, %v4527
      %4529 = vmatmul.f32.gmra.mxu0 %v4406
      %v4530 = vpop.f32.mrf.mxu0
      %v4531 = vadd.f32 0.0, %v4530
      %4532 = vmatmul.f32.gmra.mxu0 %v4409
      %v4533 = vpop.f32.mrf.mxu0
      %v4534 = vadd.f32 0.0, %v4533
      %4535 = vmatmul.f32.gmra.mxu0 %v4412
      %v4536 = vpop.f32.mrf.mxu0
      %v4537 = vadd.f32 0.0, %v4536
      %4538 = vmatmul.f32.gmra.mxu0 %v4415
      %v4539 = vpop.f32.mrf.mxu0
      %v4540 = vadd.f32 0.0, %v4539
      %4541 = vmatmul.f32.gmra.mxu0 %v4418
      %v4542 = vpop.f32.mrf.mxu0
      %v4543 = vadd.f32 0.0, %v4542
      %4544 = vmatmul.f32.gmra.mxu0 %v4421
      %v4545 = vpop.f32.mrf.mxu0
      %v4546 = vadd.f32 0.0, %v4545
      %4547 = vmatmul.f32.gmra.mxu0 %v4424
      %v4548 = vpop.f32.mrf.mxu0
      %v4549 = vadd.f32 0.0, %v4548
      %4550 = vmatmul.f32.gmra.mxu0 %v4427
      %v4551 = vpop.f32.mrf.mxu0
      %v4552 = vadd.f32 0.0, %v4551
      %4553 = vmatmul.f32.gmra.mxu0 %v4430
      %v4554 = vpop.f32.mrf.mxu0
      %v4555 = vadd.f32 0.0, %v4554
      %4556 = vmatmul.f32.gmra.mxu0 %v4433
      %v4557 = vpop.f32.mrf.mxu0
      %v4558 = vadd.f32 0.0, %v4557
      %4559 = vmatmul.f32.gmra.mxu0 %v4436
      %v4560 = vpop.f32.mrf.mxu0
      %v4561 = vadd.f32 0.0, %v4560
      %4562 = vmatmul.f32.gmra.mxu0 %v4439
      %v4563 = vpop.f32.mrf.mxu0
      %v4564 = vadd.f32 0.0, %v4563
      %4565 = vmatmul.f32.gmra.mxu0 %v4442
      %v4566 = vpop.f32.mrf.mxu0
      %v4567 = vadd.f32 0.0, %v4566
      %4568 = vmatmul.f32.gmra.mxu0 %v4445
      %v4569 = vpop.f32.mrf.mxu0
      %v4570 = vadd.f32 0.0, %v4569
      %4571 = vmatmul.f32.gmra.mxu0 %v4448
      %v4572 = vpop.f32.mrf.mxu0
      %v4573 = vadd.f32 0.0, %v4572
      %4574 = vmatmul.f32.gmra.mxu0 %v4451
      %v4575 = vpop.f32.mrf.mxu0
      %v4576 = vadd.f32 0.0, %v4575
      %4577 = vmatmul.f32.gmra.mxu0 %v4454
      %v4578 = vpop.f32.mrf.mxu0
      %v4579 = vadd.f32 0.0, %v4578
      %4580 = vmatmul.f32.gmra.mxu0 %v4457
      %v4581 = vpop.f32.mrf.mxu0
      %v4582 = vadd.f32 0.0, %v4581
      %4583 = vmatmul.f32.gmra.mxu0 %v4460
      %v4584 = vpop.f32.mrf.mxu0
      %v4585 = vadd.f32 0.0, %v4584
      %4586 = vmatmul.f32.gmra.mxu0 %v4463
      %v4587 = vpop.f32.mrf.mxu0
      %v4588 = vadd.f32 0.0, %v4587
      %4589 = vmatmul.f32.gmra.mxu0 %v4466
      %v4590 = vpop.f32.mrf.mxu0
      %v4591 = vadd.f32 0.0, %v4590
      %4592 = vmatmul.f32.gmra.mxu0 %v4469
      %v4593 = vpop.f32.mrf.mxu0
      %v4594 = vadd.f32 0.0, %v4593
      %4595 = vdwg.mxu0
      %v4597 = vsel %vm272, %v3869, 0
      %v4600 = vsel %vm272, %v3870, 0
      %v4603 = vsel %vm272, %v3871, 0
      %v4606 = vsel %vm272, %v3872, 0
      %v4609 = vsel %vm272, %v3873, 0
      %v4612 = vsel %vm272, %v3874, 0
      %v4615 = vsel %vm272, %v3875, 0
      %v4618 = vsel %vm272, %v3876, 0
      %v4621 = vsel %vm272, %v3877, 0
      %v4624 = vsel %vm272, %v3878, 0
      %v4627 = vsel %vm272, %v3879, 0
      %v4630 = vsel %vm272, %v3880, 0
      %v4633 = vsel %vm272, %v3881, 0
      %v4636 = vsel %vm272, %v3882, 0
      %v4639 = vsel %vm272, %v3883, 0
      %v4642 = vsel %vm272, %v3884, 0
      %v4645 = vsel %vm272, %v3885, 0
      %v4648 = vsel %vm272, %v3886, 0
      %v4651 = vsel %vm272, %v3887, 0
      %v4654 = vsel %vm272, %v3888, 0
      %v4657 = vsel %vm272, %v3889, 0
      %v4660 = vsel %vm272, %v3890, 0
      %v4663 = vsel %vm272, %v3891, 0
      %v4666 = vsel %vm272, %v3892, 0
      %v4669 = vsel %vm272, %v3893, 0
      %v4672 = vsel %vm272, %v3894, 0
      %v4675 = vsel %vm272, %v3895, 0
      %v4678 = vsel %vm272, %v3896, 0
      %v4681 = vsel %vm272, %v3897, 0
      %v4684 = vsel %vm272, %v3898, 0
      %v4687 = vsel %vm272, %v3899, 0
      %v4690 = vsel %vm272, %v3900, 0
      %v4693 = vsel %vm272, %v3901, 0
      %v4696 = vsel %vm272, %v3902, 0
      %v4699 = vsel %vm272, %v3903, 0
      %v4702 = vsel %vm272, %v3904, 0
      %4704 = vmatpush.msra.mxu0 0.0
      %4705 = vmatpush.msra.mxu0 0.0
      %4706 = vmatpush.msra.mxu0 0.0
      %4707 = vmatpush.msra.mxu0 0.0
      %4708 = vmatpush.msra.mxu0 0.0
      %4709 = vmatpush.msra.mxu0 0.0
      %4710 = vmatpush.msra.mxu0 0.0
      %4711 = vmatpush.msra.mxu0 0.0
      %4712 = vmatpush.msra.mxu0 0.0
      %4713 = vmatpush.msra.mxu0 0.0
      %4714 = vmatpush.msra.mxu0 0.0
      %4715 = vmatpush.msra.mxu0 0.0
      %4716 = vmatpush.msra.mxu0 %v3909
      %4717 = vmatpush.msra.mxu0 %v3908
      %4718 = vmatpush.msra.mxu0 %v3907
      %4719 = vmatpush.msra.mxu0 %v3906
      %4720 = vmatmul.f32.gmra.mxu0 %v4597
      %v4721 = vpop.f32.mrf.mxu0
      %v4722 = vadd.f32 %v4489, %v4721
      %4723 = vmatmul.f32.gmra.mxu0 %v4600
      %v4724 = vpop.f32.mrf.mxu0
      %v4725 = vadd.f32 %v4492, %v4724
      %4726 = vmatmul.f32.gmra.mxu0 %v4603
      %v4727 = vpop.f32.mrf.mxu0
      %v4728 = vadd.f32 %v4495, %v4727
      %4729 = vmatmul.f32.gmra.mxu0 %v4606
      %v4730 = vpop.f32.mrf.mxu0
      %v4731 = vadd.f32 %v4498, %v4730
      %4732 = vmatmul.f32.gmra.mxu0 %v4609
      %v4733 = vpop.f32.mrf.mxu0
      %v4734 = vadd.f32 %v4501, %v4733
      %4735 = vmatmul.f32.gmra.mxu0 %v4612
      %v4736 = vpop.f32.mrf.mxu0
      %v4737 = vadd.f32 %v4504, %v4736
      %4738 = vmatmul.f32.gmra.mxu0 %v4615
      %v4739 = vpop.f32.mrf.mxu0
      %v4740 = vadd.f32 %v4507, %v4739
      %4741 = vmatmul.f32.gmra.mxu0 %v4618
      %v4742 = vpop.f32.mrf.mxu0
      %v4743 = vadd.f32 %v4510, %v4742
      %4744 = vmatmul.f32.gmra.mxu0 %v4621
      %v4745 = vpop.f32.mrf.mxu0
      %v4746 = vadd.f32 %v4513, %v4745
      %4747 = vmatmul.f32.gmra.mxu0 %v4624
      %v4748 = vpop.f32.mrf.mxu0
      %v4749 = vadd.f32 %v4516, %v4748
      %4750 = vmatmul.f32.gmra.mxu0 %v4627
      %v4751 = vpop.f32.mrf.mxu0
      %v4752 = vadd.f32 %v4519, %v4751
      %4753 = vmatmul.f32.gmra.mxu0 %v4630
      %v4754 = vpop.f32.mrf.mxu0
      %v4755 = vadd.f32 %v4522, %v4754
      %4756 = vmatmul.f32.gmra.mxu0 %v4633
      %v4757 = vpop.f32.mrf.mxu0
      %v4758 = vadd.f32 %v4525, %v4757
      %4759 = vmatmul.f32.gmra.mxu0 %v4636
      %v4760 = vpop.f32.mrf.mxu0
      %v4761 = vadd.f32 %v4528, %v4760
      %4762 = vmatmul.f32.gmra.mxu0 %v4639
      %v4763 = vpop.f32.mrf.mxu0
      %v4764 = vadd.f32 %v4531, %v4763
      %4765 = vmatmul.f32.gmra.mxu0 %v4642
      %v4766 = vpop.f32.mrf.mxu0
      %v4767 = vadd.f32 %v4534, %v4766
      %4768 = vmatmul.f32.gmra.mxu0 %v4645
      %v4769 = vpop.f32.mrf.mxu0
      %v4770 = vadd.f32 %v4537, %v4769
      %4771 = vmatmul.f32.gmra.mxu0 %v4648
      %v4772 = vpop.f32.mrf.mxu0
      %v4773 = vadd.f32 %v4540, %v4772
      %4774 = vmatmul.f32.gmra.mxu0 %v4651
      %v4775 = vpop.f32.mrf.mxu0
      %v4776 = vadd.f32 %v4543, %v4775
      %4777 = vmatmul.f32.gmra.mxu0 %v4654
      %v4778 = vpop.f32.mrf.mxu0
      %v4779 = vadd.f32 %v4546, %v4778
      %4780 = vmatmul.f32.gmra.mxu0 %v4657
      %v4781 = vpop.f32.mrf.mxu0
      %v4782 = vadd.f32 %v4549, %v4781
      %4783 = vmatmul.f32.gmra.mxu0 %v4660
      %v4784 = vpop.f32.mrf.mxu0
      %v4785 = vadd.f32 %v4552, %v4784
      %4786 = vmatmul.f32.gmra.mxu0 %v4663
      %v4787 = vpop.f32.mrf.mxu0
      %v4788 = vadd.f32 %v4555, %v4787
      %4789 = vmatmul.f32.gmra.mxu0 %v4666
      %v4790 = vpop.f32.mrf.mxu0
      %v4791 = vadd.f32 %v4558, %v4790
      %4792 = vmatmul.f32.gmra.mxu0 %v4669
      %v4793 = vpop.f32.mrf.mxu0
      %v4794 = vadd.f32 %v4561, %v4793
      %4795 = vmatmul.f32.gmra.mxu0 %v4672
      %v4796 = vpop.f32.mrf.mxu0
      %v4797 = vadd.f32 %v4564, %v4796
      %4798 = vmatmul.f32.gmra.mxu0 %v4675
      %v4799 = vpop.f32.mrf.mxu0
      %v4800 = vadd.f32 %v4567, %v4799
      %4801 = vmatmul.f32.gmra.mxu0 %v4678
      %v4802 = vpop.f32.mrf.mxu0
      %v4803 = vadd.f32 %v4570, %v4802
      %4804 = vmatmul.f32.gmra.mxu0 %v4681
      %v4805 = vpop.f32.mrf.mxu0
      %v4806 = vadd.f32 %v4573, %v4805
      %4807 = vmatmul.f32.gmra.mxu0 %v4684
      %v4808 = vpop.f32.mrf.mxu0
      %v4809 = vadd.f32 %v4576, %v4808
      %4810 = vmatmul.f32.gmra.mxu0 %v4687
      %v4811 = vpop.f32.mrf.mxu0
      %v4812 = vadd.f32 %v4579, %v4811
      %4813 = vmatmul.f32.gmra.mxu0 %v4690
      %v4814 = vpop.f32.mrf.mxu0
      %v4815 = vadd.f32 %v4582, %v4814
      %4816 = vmatmul.f32.gmra.mxu0 %v4693
      %v4817 = vpop.f32.mrf.mxu0
      %v4818 = vadd.f32 %v4585, %v4817
      %4819 = vmatmul.f32.gmra.mxu0 %v4696
      %v4820 = vpop.f32.mrf.mxu0
      %v4821 = vadd.f32 %v4588, %v4820
      %4822 = vmatmul.f32.gmra.mxu0 %v4699
      %v4823 = vpop.f32.mrf.mxu0
      %v4824 = vadd.f32 %v4591, %v4823
      %4825 = vmatmul.f32.gmra.mxu0 %v4702
      %v4826 = vpop.f32.mrf.mxu0
      %v4827 = vadd.f32 %v4594, %v4826
      %4828 = vdwg.mxu0
      %v4829 = vld [vmem:[#allocation3 + $0x21] sm:$0xff]
      %v4830 = vld [vmem:[#allocation3 + $0x29] sm:$0xff]
      %v4831 = vld [vmem:[#allocation3 + $0x31] sm:$0xff]
      %v4832 = vld [vmem:[#allocation3 + $0x39] sm:$0xff]
      %v4833 = vld [vmem:[#allocation3 + $0x41] sm:$0xff]
      %v4834 = vld [vmem:[#allocation3 + $0x49] sm:$0xff]
      %v4835 = vld [vmem:[#allocation3 + $0x51] sm:$0xff]
      %v4836 = vld [vmem:[#allocation3 + $0x59] sm:$0xff]
      %v4837 = vld [vmem:[#allocation3 + $0x61] sm:$0xff]
      %v4838 = vld [vmem:[#allocation3 + $0x69] sm:$0xff]
      %v4839 = vld [vmem:[#allocation3 + $0x71] sm:$0xff]
      %v4840 = vld [vmem:[#allocation3 + $0x79] sm:$0xff]
      %v4841 = vld [vmem:[#allocation3 + $0x81] sm:$0xff]
      %v4842 = vld [vmem:[#allocation3 + $0x89] sm:$0xff]
      %v4843 = vld [vmem:[#allocation3 + $0x91] sm:$0xff]
      %v4844 = vld [vmem:[#allocation3 + $0x99] sm:$0xff]
      %v4845 = vld [vmem:[#allocation3 + $0xa1] sm:$0xff]
      %v4846 = vld [vmem:[#allocation3 + $0xa9] sm:$0xff]
      %v4847 = vld [vmem:[#allocation3 + $0xb1] sm:$0xff]
      %v4848 = vld [vmem:[#allocation3 + $0xb9] sm:$0xff]
      %v4849 = vld [vmem:[#allocation3 + $0xc1] sm:$0xff]
      %v4850 = vld [vmem:[#allocation3 + $0xc9] sm:$0xff]
      %v4851 = vld [vmem:[#allocation3 + $0xd1] sm:$0xff]
      %v4852 = vld [vmem:[#allocation3 + $0xd9] sm:$0xff]
      %v4853 = vld [vmem:[#allocation3 + $0xe1] sm:$0xff]
      %v4854 = vld [vmem:[#allocation3 + $0xe9] sm:$0xff]
      %v4855 = vld [vmem:[#allocation3 + $0xf1] sm:$0xff]
      %v4856 = vld [vmem:[#allocation3 + $0xf9] sm:$0xff]
      %v4857 = vld [vmem:[#allocation3 + $0x101] sm:$0xff]
      %v4858 = vld [vmem:[#allocation3 + $0x109] sm:$0xff]
      %v4859 = vld [vmem:[#allocation3 + $0x111] sm:$0xff]
      %v4860 = vld [vmem:[#allocation3 + $0x119] sm:$0xff]
      %v4861 = vld [vmem:[#allocation3 + $0x121] sm:$0xff]
      %v4862 = vld [vmem:[#allocation3 + $0x129] sm:$0xff]
      %v4863 = vld [vmem:[#allocation3 + $0x131] sm:$0xff]
      %v4864 = vld [vmem:[#allocation3 + $0x139] sm:$0xff]
      %s4865 = scalar_lea.vmem %s4, 160
      %v4866 = vld [vmem:[%s4865] sm:$0xff]
      %v4867 = vld [vmem:[%s4865 + $0x8] sm:$0xff]
      %v4868 = vld [vmem:[%s4865 + $0x10] sm:$0xff]
      %v4869 = vld [vmem:[%s4865 + $0x18] sm:$0xff]
      %v4871 = vsel %vm272, %v4829, 0
      %v4874 = vsel %vm272, %v4830, 0
      %v4877 = vsel %vm272, %v4831, 0
      %v4880 = vsel %vm272, %v4832, 0
      %v4883 = vsel %vm272, %v4833, 0
      %v4886 = vsel %vm272, %v4834, 0
      %v4889 = vsel %vm272, %v4835, 0
      %v4892 = vsel %vm272, %v4836, 0
      %v4895 = vsel %vm272, %v4837, 0
      %v4898 = vsel %vm272, %v4838, 0
      %v4901 = vsel %vm272, %v4839, 0
      %v4904 = vsel %vm272, %v4840, 0
      %v4907 = vsel %vm272, %v4841, 0
      %v4910 = vsel %vm272, %v4842, 0
      %v4913 = vsel %vm272, %v4843, 0
      %v4916 = vsel %vm272, %v4844, 0
      %v4919 = vsel %vm272, %v4845, 0
      %v4922 = vsel %vm272, %v4846, 0
      %v4925 = vsel %vm272, %v4847, 0
      %v4928 = vsel %vm272, %v4848, 0
      %v4931 = vsel %vm272, %v4849, 0
      %v4934 = vsel %vm272, %v4850, 0
      %v4937 = vsel %vm272, %v4851, 0
      %v4940 = vsel %vm272, %v4852, 0
      %v4943 = vsel %vm272, %v4853, 0
      %v4946 = vsel %vm272, %v4854, 0
      %v4949 = vsel %vm272, %v4855, 0
      %v4952 = vsel %vm272, %v4856, 0
      %v4955 = vsel %vm272, %v4857, 0
      %v4958 = vsel %vm272, %v4858, 0
      %v4961 = vsel %vm272, %v4859, 0
      %v4964 = vsel %vm272, %v4860, 0
      %v4967 = vsel %vm272, %v4861, 0
      %v4970 = vsel %vm272, %v4862, 0
      %v4973 = vsel %vm272, %v4863, 0
      %v4976 = vsel %vm272, %v4864, 0
      %4978 = vmatpush.msra.mxu0 0.0
      %4979 = vmatpush.msra.mxu0 0.0
      %4980 = vmatpush.msra.mxu0 0.0
      %4981 = vmatpush.msra.mxu0 0.0
      %4982 = vmatpush.msra.mxu0 0.0
      %4983 = vmatpush.msra.mxu0 0.0
      %4984 = vmatpush.msra.mxu0 0.0
      %4985 = vmatpush.msra.mxu0 0.0
      %4986 = vmatpush.msra.mxu0 0.0
      %4987 = vmatpush.msra.mxu0 0.0
      %4988 = vmatpush.msra.mxu0 0.0
      %4989 = vmatpush.msra.mxu0 0.0
      %4990 = vmatpush.msra.mxu0 %v4869
      %4991 = vmatpush.msra.mxu0 %v4868
      %4992 = vmatpush.msra.mxu0 %v4867
      %4993 = vmatpush.msra.mxu0 %v4866
      %4994 = vmatmul.f32.gmra.mxu0 %v4871
      %v4995 = vpop.f32.mrf.mxu0
      %v4996 = vadd.f32 0.0, %v4995
      %4997 = vmatmul.f32.gmra.mxu0 %v4874
      %v4998 = vpop.f32.mrf.mxu0
      %v4999 = vadd.f32 0.0, %v4998
      %5000 = vmatmul.f32.gmra.mxu0 %v4877
      %v5001 = vpop.f32.mrf.mxu0
      %v5002 = vadd.f32 0.0, %v5001
      %5003 = vmatmul.f32.gmra.mxu0 %v4880
      %v5004 = vpop.f32.mrf.mxu0
      %v5005 = vadd.f32 0.0, %v5004
      %5006 = vmatmul.f32.gmra.mxu0 %v4883
      %v5007 = vpop.f32.mrf.mxu0
      %v5008 = vadd.f32 0.0, %v5007
      %5009 = vmatmul.f32.gmra.mxu0 %v4886
      %v5010 = vpop.f32.mrf.mxu0
      %v5011 = vadd.f32 0.0, %v5010
      %5012 = vmatmul.f32.gmra.mxu0 %v4889
      %v5013 = vpop.f32.mrf.mxu0
      %v5014 = vadd.f32 0.0, %v5013
      %5015 = vmatmul.f32.gmra.mxu0 %v4892
      %v5016 = vpop.f32.mrf.mxu0
      %v5017 = vadd.f32 0.0, %v5016
      %5018 = vmatmul.f32.gmra.mxu0 %v4895
      %v5019 = vpop.f32.mrf.mxu0
      %v5020 = vadd.f32 0.0, %v5019
      %5021 = vmatmul.f32.gmra.mxu0 %v4898
      %v5022 = vpop.f32.mrf.mxu0
      %v5023 = vadd.f32 0.0, %v5022
      %5024 = vmatmul.f32.gmra.mxu0 %v4901
      %v5025 = vpop.f32.mrf.mxu0
      %v5026 = vadd.f32 0.0, %v5025
      %5027 = vmatmul.f32.gmra.mxu0 %v4904
      %v5028 = vpop.f32.mrf.mxu0
      %v5029 = vadd.f32 0.0, %v5028
      %5030 = vmatmul.f32.gmra.mxu0 %v4907
      %v5031 = vpop.f32.mrf.mxu0
      %v5032 = vadd.f32 0.0, %v5031
      %5033 = vmatmul.f32.gmra.mxu0 %v4910
      %v5034 = vpop.f32.mrf.mxu0
      %v5035 = vadd.f32 0.0, %v5034
      %5036 = vmatmul.f32.gmra.mxu0 %v4913
      %v5037 = vpop.f32.mrf.mxu0
      %v5038 = vadd.f32 0.0, %v5037
      %5039 = vmatmul.f32.gmra.mxu0 %v4916
      %v5040 = vpop.f32.mrf.mxu0
      %v5041 = vadd.f32 0.0, %v5040
      %5042 = vmatmul.f32.gmra.mxu0 %v4919
      %v5043 = vpop.f32.mrf.mxu0
      %v5044 = vadd.f32 0.0, %v5043
      %5045 = vmatmul.f32.gmra.mxu0 %v4922
      %v5046 = vpop.f32.mrf.mxu0
      %v5047 = vadd.f32 0.0, %v5046
      %5048 = vmatmul.f32.gmra.mxu0 %v4925
      %v5049 = vpop.f32.mrf.mxu0
      %v5050 = vadd.f32 0.0, %v5049
      %5051 = vmatmul.f32.gmra.mxu0 %v4928
      %v5052 = vpop.f32.mrf.mxu0
      %v5053 = vadd.f32 0.0, %v5052
      %5054 = vmatmul.f32.gmra.mxu0 %v4931
      %v5055 = vpop.f32.mrf.mxu0
      %v5056 = vadd.f32 0.0, %v5055
      %5057 = vmatmul.f32.gmra.mxu0 %v4934
      %v5058 = vpop.f32.mrf.mxu0
      %v5059 = vadd.f32 0.0, %v5058
      %5060 = vmatmul.f32.gmra.mxu0 %v4937
      %v5061 = vpop.f32.mrf.mxu0
      %v5062 = vadd.f32 0.0, %v5061
      %5063 = vmatmul.f32.gmra.mxu0 %v4940
      %v5064 = vpop.f32.mrf.mxu0
      %v5065 = vadd.f32 0.0, %v5064
      %5066 = vmatmul.f32.gmra.mxu0 %v4943
      %v5067 = vpop.f32.mrf.mxu0
      %v5068 = vadd.f32 0.0, %v5067
      %5069 = vmatmul.f32.gmra.mxu0 %v4946
      %v5070 = vpop.f32.mrf.mxu0
      %v5071 = vadd.f32 0.0, %v5070
      %5072 = vmatmul.f32.gmra.mxu0 %v4949
      %v5073 = vpop.f32.mrf.mxu0
      %v5074 = vadd.f32 0.0, %v5073
      %5075 = vmatmul.f32.gmra.mxu0 %v4952
      %v5076 = vpop.f32.mrf.mxu0
      %v5077 = vadd.f32 0.0, %v5076
      %5078 = vmatmul.f32.gmra.mxu0 %v4955
      %v5079 = vpop.f32.mrf.mxu0
      %v5080 = vadd.f32 0.0, %v5079
      %5081 = vmatmul.f32.gmra.mxu0 %v4958
      %v5082 = vpop.f32.mrf.mxu0
      %v5083 = vadd.f32 0.0, %v5082
      %5084 = vmatmul.f32.gmra.mxu0 %v4961
      %v5085 = vpop.f32.mrf.mxu0
      %v5086 = vadd.f32 0.0, %v5085
      %5087 = vmatmul.f32.gmra.mxu0 %v4964
      %v5088 = vpop.f32.mrf.mxu0
      %v5089 = vadd.f32 0.0, %v5088
      %5090 = vmatmul.f32.gmra.mxu0 %v4967
      %v5091 = vpop.f32.mrf.mxu0
      %v5092 = vadd.f32 0.0, %v5091
      %5093 = vmatmul.f32.gmra.mxu0 %v4970
      %v5094 = vpop.f32.mrf.mxu0
      %v5095 = vadd.f32 0.0, %v5094
      %5096 = vmatmul.f32.gmra.mxu0 %v4973
      %v5097 = vpop.f32.mrf.mxu0
      %v5098 = vadd.f32 0.0, %v5097
      %5099 = vmatmul.f32.gmra.mxu0 %v4976
      %v5100 = vpop.f32.mrf.mxu0
      %v5101 = vadd.f32 0.0, %v5100
      %5102 = vdwg.mxu0
      %v5104 = vsel %vm272, %v3910, 0
      %v5107 = vsel %vm272, %v3911, 0
      %v5110 = vsel %vm272, %v3912, 0
      %v5113 = vsel %vm272, %v3913, 0
      %v5116 = vsel %vm272, %v3914, 0
      %v5119 = vsel %vm272, %v3915, 0
      %v5122 = vsel %vm272, %v3916, 0
      %v5125 = vsel %vm272, %v3917, 0
      %v5128 = vsel %vm272, %v3918, 0
      %v5131 = vsel %vm272, %v3919, 0
      %v5134 = vsel %vm272, %v3920, 0
      %v5137 = vsel %vm272, %v3921, 0
      %v5140 = vsel %vm272, %v3922, 0
      %v5143 = vsel %vm272, %v3923, 0
      %v5146 = vsel %vm272, %v3924, 0
      %v5149 = vsel %vm272, %v3925, 0
      %v5152 = vsel %vm272, %v3926, 0
      %v5155 = vsel %vm272, %v3927, 0
      %v5158 = vsel %vm272, %v3928, 0
      %v5161 = vsel %vm272, %v3929, 0
      %v5164 = vsel %vm272, %v3930, 0
      %v5167 = vsel %vm272, %v3931, 0
      %v5170 = vsel %vm272, %v3932, 0
      %v5173 = vsel %vm272, %v3933, 0
      %v5176 = vsel %vm272, %v3934, 0
      %v5179 = vsel %vm272, %v3935, 0
      %v5182 = vsel %vm272, %v3936, 0
      %v5185 = vsel %vm272, %v3937, 0
      %v5188 = vsel %vm272, %v3938, 0
      %v5191 = vsel %vm272, %v3939, 0
      %v5194 = vsel %vm272, %v3940, 0
      %v5197 = vsel %vm272, %v3941, 0
      %v5200 = vsel %vm272, %v3942, 0
      %v5203 = vsel %vm272, %v3943, 0
      %v5206 = vsel %vm272, %v3944, 0
      %v5209 = vsel %vm272, %v3945, 0
      %5211 = vmatpush.msra.mxu0 0.0
      %5212 = vmatpush.msra.mxu0 0.0
      %5213 = vmatpush.msra.mxu0 0.0
      %5214 = vmatpush.msra.mxu0 0.0
      %5215 = vmatpush.msra.mxu0 0.0
      %5216 = vmatpush.msra.mxu0 0.0
      %5217 = vmatpush.msra.mxu0 0.0
      %5218 = vmatpush.msra.mxu0 0.0
      %5219 = vmatpush.msra.mxu0 0.0
      %5220 = vmatpush.msra.mxu0 0.0
      %5221 = vmatpush.msra.mxu0 0.0
      %5222 = vmatpush.msra.mxu0 0.0
      %5223 = vmatpush.msra.mxu0 %v3950
      %5224 = vmatpush.msra.mxu0 %v3949
      %5225 = vmatpush.msra.mxu0 %v3948
      %5226 = vmatpush.msra.mxu0 %v3947
      %5227 = vmatmul.f32.gmra.mxu0 %v5104
      %v5228 = vpop.f32.mrf.mxu0
      %v5229 = vadd.f32 %v4996, %v5228
      %5230 = vmatmul.f32.gmra.mxu0 %v5107
      %v5231 = vpop.f32.mrf.mxu0
      %v5232 = vadd.f32 %v4999, %v5231
      %5233 = vmatmul.f32.gmra.mxu0 %v5110
      %v5234 = vpop.f32.mrf.mxu0
      %v5235 = vadd.f32 %v5002, %v5234
      %5236 = vmatmul.f32.gmra.mxu0 %v5113
      %v5237 = vpop.f32.mrf.mxu0
      %v5238 = vadd.f32 %v5005, %v5237
      %5239 = vmatmul.f32.gmra.mxu0 %v5116
      %v5240 = vpop.f32.mrf.mxu0
      %v5241 = vadd.f32 %v5008, %v5240
      %5242 = vmatmul.f32.gmra.mxu0 %v5119
      %v5243 = vpop.f32.mrf.mxu0
      %v5244 = vadd.f32 %v5011, %v5243
      %5245 = vmatmul.f32.gmra.mxu0 %v5122
      %v5246 = vpop.f32.mrf.mxu0
      %v5247 = vadd.f32 %v5014, %v5246
      %5248 = vmatmul.f32.gmra.mxu0 %v5125
      %v5249 = vpop.f32.mrf.mxu0
      %v5250 = vadd.f32 %v5017, %v5249
      %5251 = vmatmul.f32.gmra.mxu0 %v5128
      %v5252 = vpop.f32.mrf.mxu0
      %v5253 = vadd.f32 %v5020, %v5252
      %5254 = vmatmul.f32.gmra.mxu0 %v5131
      %v5255 = vpop.f32.mrf.mxu0
      %v5256 = vadd.f32 %v5023, %v5255
      %5257 = vmatmul.f32.gmra.mxu0 %v5134
      %v5258 = vpop.f32.mrf.mxu0
      %v5259 = vadd.f32 %v5026, %v5258
      %5260 = vmatmul.f32.gmra.mxu0 %v5137
      %v5261 = vpop.f32.mrf.mxu0
      %v5262 = vadd.f32 %v5029, %v5261
      %5263 = vmatmul.f32.gmra.mxu0 %v5140
      %v5264 = vpop.f32.mrf.mxu0
      %v5265 = vadd.f32 %v5032, %v5264
      %5266 = vmatmul.f32.gmra.mxu0 %v5143
      %v5267 = vpop.f32.mrf.mxu0
      %v5268 = vadd.f32 %v5035, %v5267
      %5269 = vmatmul.f32.gmra.mxu0 %v5146
      %v5270 = vpop.f32.mrf.mxu0
      %v5271 = vadd.f32 %v5038, %v5270
      %5272 = vmatmul.f32.gmra.mxu0 %v5149
      %v5273 = vpop.f32.mrf.mxu0
      %v5274 = vadd.f32 %v5041, %v5273
      %5275 = vmatmul.f32.gmra.mxu0 %v5152
      %v5276 = vpop.f32.mrf.mxu0
      %v5277 = vadd.f32 %v5044, %v5276
      %5278 = vmatmul.f32.gmra.mxu0 %v5155
      %v5279 = vpop.f32.mrf.mxu0
      %v5280 = vadd.f32 %v5047, %v5279
      %5281 = vmatmul.f32.gmra.mxu0 %v5158
      %v5282 = vpop.f32.mrf.mxu0
      %v5283 = vadd.f32 %v5050, %v5282
      %5284 = vmatmul.f32.gmra.mxu0 %v5161
      %v5285 = vpop.f32.mrf.mxu0
      %v5286 = vadd.f32 %v5053, %v5285
      %5287 = vmatmul.f32.gmra.mxu0 %v5164
      %v5288 = vpop.f32.mrf.mxu0
      %v5289 = vadd.f32 %v5056, %v5288
      %5290 = vmatmul.f32.gmra.mxu0 %v5167
      %v5291 = vpop.f32.mrf.mxu0
      %v5292 = vadd.f32 %v5059, %v5291
      %5293 = vmatmul.f32.gmra.mxu0 %v5170
      %v5294 = vpop.f32.mrf.mxu0
      %v5295 = vadd.f32 %v5062, %v5294
      %5296 = vmatmul.f32.gmra.mxu0 %v5173
      %v5297 = vpop.f32.mrf.mxu0
      %v5298 = vadd.f32 %v5065, %v5297
      %5299 = vmatmul.f32.gmra.mxu0 %v5176
      %v5300 = vpop.f32.mrf.mxu0
      %v5301 = vadd.f32 %v5068, %v5300
      %5302 = vmatmul.f32.gmra.mxu0 %v5179
      %v5303 = vpop.f32.mrf.mxu0
      %v5304 = vadd.f32 %v5071, %v5303
      %5305 = vmatmul.f32.gmra.mxu0 %v5182
      %v5306 = vpop.f32.mrf.mxu0
      %v5307 = vadd.f32 %v5074, %v5306
      %5308 = vmatmul.f32.gmra.mxu0 %v5185
      %v5309 = vpop.f32.mrf.mxu0
      %v5310 = vadd.f32 %v5077, %v5309
      %5311 = vmatmul.f32.gmra.mxu0 %v5188
      %v5312 = vpop.f32.mrf.mxu0
      %v5313 = vadd.f32 %v5080, %v5312
      %5314 = vmatmul.f32.gmra.mxu0 %v5191
      %v5315 = vpop.f32.mrf.mxu0
      %v5316 = vadd.f32 %v5083, %v5315
      %5317 = vmatmul.f32.gmra.mxu0 %v5194
      %v5318 = vpop.f32.mrf.mxu0
      %v5319 = vadd.f32 %v5086, %v5318
      %5320 = vmatmul.f32.gmra.mxu0 %v5197
      %v5321 = vpop.f32.mrf.mxu0
      %v5322 = vadd.f32 %v5089, %v5321
      %5323 = vmatmul.f32.gmra.mxu0 %v5200
      %v5324 = vpop.f32.mrf.mxu0
      %v5325 = vadd.f32 %v5092, %v5324
      %5326 = vmatmul.f32.gmra.mxu0 %v5203
      %v5327 = vpop.f32.mrf.mxu0
      %v5328 = vadd.f32 %v5095, %v5327
      %5329 = vmatmul.f32.gmra.mxu0 %v5206
      %v5330 = vpop.f32.mrf.mxu0
      %v5331 = vadd.f32 %v5098, %v5330
      %5332 = vmatmul.f32.gmra.mxu0 %v5209
      %v5333 = vpop.f32.mrf.mxu0
      %v5334 = vadd.f32 %v5101, %v5333
      %5335 = vdwg.mxu0
      %v5336 = vld [vmem:[#allocation3 + $0x2f] sm:$0xff]
      %v5337 = vld [vmem:[#allocation3 + $0x37] sm:$0xff]
      %v5338 = vld [vmem:[#allocation3 + $0x3f] sm:$0xff]
      %v5339 = vld [vmem:[#allocation3 + $0x47] sm:$0xff]
      %v5340 = vld [vmem:[#allocation3 + $0x4f] sm:$0xff]
      %v5341 = vld [vmem:[#allocation3 + $0x57] sm:$0xff]
      %v5342 = vld [vmem:[#allocation3 + $0x5f] sm:$0xff]
      %v5343 = vld [vmem:[#allocation3 + $0x67] sm:$0xff]
      %v5344 = vld [vmem:[#allocation3 + $0x6f] sm:$0xff]
      %v5345 = vld [vmem:[#allocation3 + $0x77] sm:$0xff]
      %v5346 = vld [vmem:[#allocation3 + $0x7f] sm:$0xff]
      %v5347 = vld [vmem:[#allocation3 + $0x87] sm:$0xff]
      %v5348 = vld [vmem:[#allocation3 + $0x8f] sm:$0xff]
      %v5349 = vld [vmem:[#allocation3 + $0x97] sm:$0xff]
      %v5350 = vld [vmem:[#allocation3 + $0x9f] sm:$0xff]
      %v5351 = vld [vmem:[#allocation3 + $0xa7] sm:$0xff]
      %v5352 = vld [vmem:[#allocation3 + $0xaf] sm:$0xff]
      %v5353 = vld [vmem:[#allocation3 + $0xb7] sm:$0xff]
      %v5354 = vld [vmem:[#allocation3 + $0xbf] sm:$0xff]
      %v5355 = vld [vmem:[#allocation3 + $0xc7] sm:$0xff]
      %v5356 = vld [vmem:[#allocation3 + $0xcf] sm:$0xff]
      %v5357 = vld [vmem:[#allocation3 + $0xd7] sm:$0xff]
      %v5358 = vld [vmem:[#allocation3 + $0xdf] sm:$0xff]
      %v5359 = vld [vmem:[#allocation3 + $0xe7] sm:$0xff]
      %v5360 = vld [vmem:[#allocation3 + $0xef] sm:$0xff]
      %v5361 = vld [vmem:[#allocation3 + $0xf7] sm:$0xff]
      %v5362 = vld [vmem:[#allocation3 + $0xff] sm:$0xff]
      %v5363 = vld [vmem:[#allocation3 + $0x107] sm:$0xff]
      %v5364 = vld [vmem:[#allocation3 + $0x10f] sm:$0xff]
      %v5365 = vld [vmem:[#allocation3 + $0x117] sm:$0xff]
      %v5366 = vld [vmem:[#allocation3 + $0x11f] sm:$0xff]
      %v5367 = vld [vmem:[#allocation3 + $0x127] sm:$0xff]
      %v5368 = vld [vmem:[#allocation3 + $0x12f] sm:$0xff]
      %v5369 = vld [vmem:[#allocation3 + $0x137] sm:$0xff]
      %v5370 = vld [vmem:[#allocation3 + $0x13f] sm:$0xff]
      %v5371 = vld [vmem:[#allocation3 + $0x147] sm:$0xff]
      %s5372 = scalar_lea.vmem %s4, 192
      %v5373 = vld [vmem:[%s5372] sm:$0xff]
      %v5374 = vld [vmem:[%s5372 + $0x8] sm:$0xff]
      %v5375 = vld [vmem:[%s5372 + $0x10] sm:$0xff]
      %v5376 = vld [vmem:[%s5372 + $0x18] sm:$0xff]
      %v5378 = vsel %vm272, %v5336, 0
      %v5381 = vsel %vm272, %v5337, 0
      %v5384 = vsel %vm272, %v5338, 0
      %v5387 = vsel %vm272, %v5339, 0
      %v5390 = vsel %vm272, %v5340, 0
      %v5393 = vsel %vm272, %v5341, 0
      %v5396 = vsel %vm272, %v5342, 0
      %v5399 = vsel %vm272, %v5343, 0
      %v5402 = vsel %vm272, %v5344, 0
      %v5405 = vsel %vm272, %v5345, 0
      %v5408 = vsel %vm272, %v5346, 0
      %v5411 = vsel %vm272, %v5347, 0
      %v5414 = vsel %vm272, %v5348, 0
      %v5417 = vsel %vm272, %v5349, 0
      %v5420 = vsel %vm272, %v5350, 0
      %v5423 = vsel %vm272, %v5351, 0
      %v5426 = vsel %vm272, %v5352, 0
      %v5429 = vsel %vm272, %v5353, 0
      %v5432 = vsel %vm272, %v5354, 0
      %v5435 = vsel %vm272, %v5355, 0
      %v5438 = vsel %vm272, %v5356, 0
      %v5441 = vsel %vm272, %v5357, 0
      %v5444 = vsel %vm272, %v5358, 0
      %v5447 = vsel %vm272, %v5359, 0
      %v5450 = vsel %vm272, %v5360, 0
      %v5453 = vsel %vm272, %v5361, 0
      %v5456 = vsel %vm272, %v5362, 0
      %v5459 = vsel %vm272, %v5363, 0
      %v5462 = vsel %vm272, %v5364, 0
      %v5465 = vsel %vm272, %v5365, 0
      %v5468 = vsel %vm272, %v5366, 0
      %v5471 = vsel %vm272, %v5367, 0
      %v5474 = vsel %vm272, %v5368, 0
      %v5477 = vsel %vm272, %v5369, 0
      %v5480 = vsel %vm272, %v5370, 0
      %v5483 = vsel %vm272, %v5371, 0
      %5485 = vmatpush.msra.mxu0 0.0
      %5486 = vmatpush.msra.mxu0 0.0
      %5487 = vmatpush.msra.mxu0 0.0
      %5488 = vmatpush.msra.mxu0 0.0
      %5489 = vmatpush.msra.mxu0 0.0
      %5490 = vmatpush.msra.mxu0 0.0
      %5491 = vmatpush.msra.mxu0 0.0
      %5492 = vmatpush.msra.mxu0 0.0
      %5493 = vmatpush.msra.mxu0 0.0
      %5494 = vmatpush.msra.mxu0 0.0
      %5495 = vmatpush.msra.mxu0 0.0
      %5496 = vmatpush.msra.mxu0 0.0
      %5497 = vmatpush.msra.mxu0 %v5376
      %5498 = vmatpush.msra.mxu0 %v5375
      %5499 = vmatpush.msra.mxu0 %v5374
      %5500 = vmatpush.msra.mxu0 %v5373
      %5501 = vmatmul.f32.gmra.mxu0 %v5378
      %v5502 = vpop.f32.mrf.mxu0
      %v5503 = vadd.f32 0.0, %v5502
      %5504 = vmatmul.f32.gmra.mxu0 %v5381
      %v5505 = vpop.f32.mrf.mxu0
      %v5506 = vadd.f32 0.0, %v5505
      %5507 = vmatmul.f32.gmra.mxu0 %v5384
      %v5508 = vpop.f32.mrf.mxu0
      %v5509 = vadd.f32 0.0, %v5508
      %5510 = vmatmul.f32.gmra.mxu0 %v5387
      %v5511 = vpop.f32.mrf.mxu0
      %v5512 = vadd.f32 0.0, %v5511
      %5513 = vmatmul.f32.gmra.mxu0 %v5390
      %v5514 = vpop.f32.mrf.mxu0
      %v5515 = vadd.f32 0.0, %v5514
      %5516 = vmatmul.f32.gmra.mxu0 %v5393
      %v5517 = vpop.f32.mrf.mxu0
      %v5518 = vadd.f32 0.0, %v5517
      %5519 = vmatmul.f32.gmra.mxu0 %v5396
      %v5520 = vpop.f32.mrf.mxu0
      %v5521 = vadd.f32 0.0, %v5520
      %5522 = vmatmul.f32.gmra.mxu0 %v5399
      %v5523 = vpop.f32.mrf.mxu0
      %v5524 = vadd.f32 0.0, %v5523
      %5525 = vmatmul.f32.gmra.mxu0 %v5402
      %v5526 = vpop.f32.mrf.mxu0
      %v5527 = vadd.f32 0.0, %v5526
      %5528 = vmatmul.f32.gmra.mxu0 %v5405
      %v5529 = vpop.f32.mrf.mxu0
      %v5530 = vadd.f32 0.0, %v5529
      %5531 = vmatmul.f32.gmra.mxu0 %v5408
      %v5532 = vpop.f32.mrf.mxu0
      %v5533 = vadd.f32 0.0, %v5532
      %5534 = vmatmul.f32.gmra.mxu0 %v5411
      %v5535 = vpop.f32.mrf.mxu0
      %v5536 = vadd.f32 0.0, %v5535
      %5537 = vmatmul.f32.gmra.mxu0 %v5414
      %v5538 = vpop.f32.mrf.mxu0
      %v5539 = vadd.f32 0.0, %v5538
      %5540 = vmatmul.f32.gmra.mxu0 %v5417
      %v5541 = vpop.f32.mrf.mxu0
      %v5542 = vadd.f32 0.0, %v5541
      %5543 = vmatmul.f32.gmra.mxu0 %v5420
      %v5544 = vpop.f32.mrf.mxu0
      %v5545 = vadd.f32 0.0, %v5544
      %5546 = vmatmul.f32.gmra.mxu0 %v5423
      %v5547 = vpop.f32.mrf.mxu0
      %v5548 = vadd.f32 0.0, %v5547
      %5549 = vmatmul.f32.gmra.mxu0 %v5426
      %v5550 = vpop.f32.mrf.mxu0
      %v5551 = vadd.f32 0.0, %v5550
      %5552 = vmatmul.f32.gmra.mxu0 %v5429
      %v5553 = vpop.f32.mrf.mxu0
      %v5554 = vadd.f32 0.0, %v5553
      %5555 = vmatmul.f32.gmra.mxu0 %v5432
      %v5556 = vpop.f32.mrf.mxu0
      %v5557 = vadd.f32 0.0, %v5556
      %5558 = vmatmul.f32.gmra.mxu0 %v5435
      %v5559 = vpop.f32.mrf.mxu0
      %v5560 = vadd.f32 0.0, %v5559
      %5561 = vmatmul.f32.gmra.mxu0 %v5438
      %v5562 = vpop.f32.mrf.mxu0
      %v5563 = vadd.f32 0.0, %v5562
      %5564 = vmatmul.f32.gmra.mxu0 %v5441
      %v5565 = vpop.f32.mrf.mxu0
      %v5566 = vadd.f32 0.0, %v5565
      %5567 = vmatmul.f32.gmra.mxu0 %v5444
      %v5568 = vpop.f32.mrf.mxu0
      %v5569 = vadd.f32 0.0, %v5568
      %5570 = vmatmul.f32.gmra.mxu0 %v5447
      %v5571 = vpop.f32.mrf.mxu0
      %v5572 = vadd.f32 0.0, %v5571
      %5573 = vmatmul.f32.gmra.mxu0 %v5450
      %v5574 = vpop.f32.mrf.mxu0
      %v5575 = vadd.f32 0.0, %v5574
      %5576 = vmatmul.f32.gmra.mxu0 %v5453
      %v5577 = vpop.f32.mrf.mxu0
      %v5578 = vadd.f32 0.0, %v5577
      %5579 = vmatmul.f32.gmra.mxu0 %v5456
      %v5580 = vpop.f32.mrf.mxu0
      %v5581 = vadd.f32 0.0, %v5580
      %5582 = vmatmul.f32.gmra.mxu0 %v5459
      %v5583 = vpop.f32.mrf.mxu0
      %v5584 = vadd.f32 0.0, %v5583
      %5585 = vmatmul.f32.gmra.mxu0 %v5462
      %v5586 = vpop.f32.mrf.mxu0
      %v5587 = vadd.f32 0.0, %v5586
      %5588 = vmatmul.f32.gmra.mxu0 %v5465
      %v5589 = vpop.f32.mrf.mxu0
      %v5590 = vadd.f32 0.0, %v5589
      %5591 = vmatmul.f32.gmra.mxu0 %v5468
      %v5592 = vpop.f32.mrf.mxu0
      %v5593 = vadd.f32 0.0, %v5592
      %5594 = vmatmul.f32.gmra.mxu0 %v5471
      %v5595 = vpop.f32.mrf.mxu0
      %v5596 = vadd.f32 0.0, %v5595
      %5597 = vmatmul.f32.gmra.mxu0 %v5474
      %v5598 = vpop.f32.mrf.mxu0
      %v5599 = vadd.f32 0.0, %v5598
      %5600 = vmatmul.f32.gmra.mxu0 %v5477
      %v5601 = vpop.f32.mrf.mxu0
      %v5602 = vadd.f32 0.0, %v5601
      %5603 = vmatmul.f32.gmra.mxu0 %v5480
      %v5604 = vpop.f32.mrf.mxu0
      %v5605 = vadd.f32 0.0, %v5604
      %5606 = vmatmul.f32.gmra.mxu0 %v5483
      %v5607 = vpop.f32.mrf.mxu0
      %v5608 = vadd.f32 0.0, %v5607
      %5609 = vdwg.mxu0
      %v5610 = vadd.f32 %v4215, %v5503
      %v5611 = vadd.f32 %v4218, %v5506
      %v5612 = vadd.f32 %v4221, %v5509
      %v5613 = vadd.f32 %v4224, %v5512
      %v5614 = vadd.f32 %v4227, %v5515
      %v5615 = vadd.f32 %v4230, %v5518
      %v5616 = vadd.f32 %v4233, %v5521
      %v5617 = vadd.f32 %v4236, %v5524
      %v5618 = vadd.f32 %v4239, %v5527
      %v5619 = vadd.f32 %v4242, %v5530
      %v5620 = vadd.f32 %v4245, %v5533
      %v5621 = vadd.f32 %v4248, %v5536
      %v5622 = vadd.f32 %v4251, %v5539
      %v5623 = vadd.f32 %v4254, %v5542
      %v5624 = vadd.f32 %v4257, %v5545
      %v5625 = vadd.f32 %v4260, %v5548
      %v5626 = vadd.f32 %v4263, %v5551
      %v5627 = vadd.f32 %v4266, %v5554
      %v5628 = vadd.f32 %v4269, %v5557
      %v5629 = vadd.f32 %v4272, %v5560
      %v5630 = vadd.f32 %v4275, %v5563
      %v5631 = vadd.f32 %v4278, %v5566
      %v5632 = vadd.f32 %v4281, %v5569
      %v5633 = vadd.f32 %v4284, %v5572
      %v5634 = vadd.f32 %v4287, %v5575
      %v5635 = vadd.f32 %v4290, %v5578
      %v5636 = vadd.f32 %v4293, %v5581
      %v5637 = vadd.f32 %v4296, %v5584
      %v5638 = vadd.f32 %v4299, %v5587
      %v5639 = vadd.f32 %v4302, %v5590
      %v5640 = vadd.f32 %v4305, %v5593
      %v5641 = vadd.f32 %v4308, %v5596
      %v5642 = vadd.f32 %v4311, %v5599
      %v5643 = vadd.f32 %v4314, %v5602
      %v5644 = vadd.f32 %v4317, %v5605
      %v5645 = vadd.f32 %v4320, %v5608
      %v5646 = vld [vmem:[#allocation3 + $0x30] sm:$0xff]
      %v5647 = vld [vmem:[#allocation3 + $0x38] sm:$0xff]
      %v5648 = vld [vmem:[#allocation3 + $0x40] sm:$0xff]
      %v5649 = vld [vmem:[#allocation3 + $0x48] sm:$0xff]
      %v5650 = vld [vmem:[#allocation3 + $0x50] sm:$0xff]
      %v5651 = vld [vmem:[#allocation3 + $0x58] sm:$0xff]
      %v5652 = vld [vmem:[#allocation3 + $0x60] sm:$0xff]
      %v5653 = vld [vmem:[#allocation3 + $0x68] sm:$0xff]
      %v5654 = vld [vmem:[#allocation3 + $0x70] sm:$0xff]
      %v5655 = vld [vmem:[#allocation3 + $0x78] sm:$0xff]
      %v5656 = vld [vmem:[#allocation3 + $0x80] sm:$0xff]
      %v5657 = vld [vmem:[#allocation3 + $0x88] sm:$0xff]
      %v5658 = vld [vmem:[#allocation3 + $0x90] sm:$0xff]
      %v5659 = vld [vmem:[#allocation3 + $0x98] sm:$0xff]
      %v5660 = vld [vmem:[#allocation3 + $0xa0] sm:$0xff]
      %v5661 = vld [vmem:[#allocation3 + $0xa8] sm:$0xff]
      %v5662 = vld [vmem:[#allocation3 + $0xb0] sm:$0xff]
      %v5663 = vld [vmem:[#allocation3 + $0xb8] sm:$0xff]
      %v5664 = vld [vmem:[#allocation3 + $0xc0] sm:$0xff]
      %v5665 = vld [vmem:[#allocation3 + $0xc8] sm:$0xff]
      %v5666 = vld [vmem:[#allocation3 + $0xd0] sm:$0xff]
      %v5667 = vld [vmem:[#allocation3 + $0xd8] sm:$0xff]
      %v5668 = vld [vmem:[#allocation3 + $0xe0] sm:$0xff]
      %v5669 = vld [vmem:[#allocation3 + $0xe8] sm:$0xff]
      %v5670 = vld [vmem:[#allocation3 + $0xf0] sm:$0xff]
      %v5671 = vld [vmem:[#allocation3 + $0xf8] sm:$0xff]
      %v5672 = vld [vmem:[#allocation3 + $0x100] sm:$0xff]
      %v5673 = vld [vmem:[#allocation3 + $0x108] sm:$0xff]
      %v5674 = vld [vmem:[#allocation3 + $0x110] sm:$0xff]
      %v5675 = vld [vmem:[#allocation3 + $0x118] sm:$0xff]
      %v5676 = vld [vmem:[#allocation3 + $0x120] sm:$0xff]
      %v5677 = vld [vmem:[#allocation3 + $0x128] sm:$0xff]
      %v5678 = vld [vmem:[#allocation3 + $0x130] sm:$0xff]
      %v5679 = vld [vmem:[#allocation3 + $0x138] sm:$0xff]
      %v5680 = vld [vmem:[#allocation3 + $0x140] sm:$0xff]
      %v5681 = vld [vmem:[#allocation3 + $0x148] sm:$0xff]
      %s5682 = scalar_lea.vmem %s4, 224
      %v5683 = vld [vmem:[%s5682] sm:$0xff]
      %v5684 = vld [vmem:[%s5682 + $0x8] sm:$0xff]
      %v5685 = vld [vmem:[%s5682 + $0x10] sm:$0xff]
      %v5686 = vld [vmem:[%s5682 + $0x18] sm:$0xff]
      %v5688 = vsel %vm272, %v5646, 0
      %v5691 = vsel %vm272, %v5647, 0
      %v5694 = vsel %vm272, %v5648, 0
      %v5697 = vsel %vm272, %v5649, 0
      %v5700 = vsel %vm272, %v5650, 0
      %v5703 = vsel %vm272, %v5651, 0
      %v5706 = vsel %vm272, %v5652, 0
      %v5709 = vsel %vm272, %v5653, 0
      %v5712 = vsel %vm272, %v5654, 0
      %v5715 = vsel %vm272, %v5655, 0
      %v5718 = vsel %vm272, %v5656, 0
      %v5721 = vsel %vm272, %v5657, 0
      %v5724 = vsel %vm272, %v5658, 0
      %v5727 = vsel %vm272, %v5659, 0
      %v5730 = vsel %vm272, %v5660, 0
      %v5733 = vsel %vm272, %v5661, 0
      %v5736 = vsel %vm272, %v5662, 0
      %v5739 = vsel %vm272, %v5663, 0
      %v5742 = vsel %vm272, %v5664, 0
      %v5745 = vsel %vm272, %v5665, 0
      %v5748 = vsel %vm272, %v5666, 0
      %v5751 = vsel %vm272, %v5667, 0
      %v5754 = vsel %vm272, %v5668, 0
      %v5757 = vsel %vm272, %v5669, 0
      %v5760 = vsel %vm272, %v5670, 0
      %v5763 = vsel %vm272, %v5671, 0
      %v5766 = vsel %vm272, %v5672, 0
      %v5769 = vsel %vm272, %v5673, 0
      %v5772 = vsel %vm272, %v5674, 0
      %v5775 = vsel %vm272, %v5675, 0
      %v5778 = vsel %vm272, %v5676, 0
      %v5781 = vsel %vm272, %v5677, 0
      %v5784 = vsel %vm272, %v5678, 0
      %v5787 = vsel %vm272, %v5679, 0
      %v5790 = vsel %vm272, %v5680, 0
      %v5793 = vsel %vm272, %v5681, 0
      %5795 = vmatpush.msra.mxu0 0.0
      %5796 = vmatpush.msra.mxu0 0.0
      %5797 = vmatpush.msra.mxu0 0.0
      %5798 = vmatpush.msra.mxu0 0.0
      %5799 = vmatpush.msra.mxu0 0.0
      %5800 = vmatpush.msra.mxu0 0.0
      %5801 = vmatpush.msra.mxu0 0.0
      %5802 = vmatpush.msra.mxu0 0.0
      %5803 = vmatpush.msra.mxu0 0.0
      %5804 = vmatpush.msra.mxu0 0.0
      %5805 = vmatpush.msra.mxu0 0.0
      %5806 = vmatpush.msra.mxu0 0.0
      %5807 = vmatpush.msra.mxu0 %v5686
      %5808 = vmatpush.msra.mxu0 %v5685
      %5809 = vmatpush.msra.mxu0 %v5684
      %5810 = vmatpush.msra.mxu0 %v5683
      %5811 = vmatmul.f32.gmra.mxu0 %v5688
      %v5812 = vpop.f32.mrf.mxu0
      %v5813 = vadd.f32 0.0, %v5812
      %5814 = vmatmul.f32.gmra.mxu0 %v5691
      %v5815 = vpop.f32.mrf.mxu0
      %v5816 = vadd.f32 0.0, %v5815
      %5817 = vmatmul.f32.gmra.mxu0 %v5694
      %v5818 = vpop.f32.mrf.mxu0
      %v5819 = vadd.f32 0.0, %v5818
      %5820 = vmatmul.f32.gmra.mxu0 %v5697
      %v5821 = vpop.f32.mrf.mxu0
      %v5822 = vadd.f32 0.0, %v5821
      %5823 = vmatmul.f32.gmra.mxu0 %v5700
      %v5824 = vpop.f32.mrf.mxu0
      %v5825 = vadd.f32 0.0, %v5824
      %5826 = vmatmul.f32.gmra.mxu0 %v5703
      %v5827 = vpop.f32.mrf.mxu0
      %v5828 = vadd.f32 0.0, %v5827
      %5829 = vmatmul.f32.gmra.mxu0 %v5706
      %v5830 = vpop.f32.mrf.mxu0
      %v5831 = vadd.f32 0.0, %v5830
      %5832 = vmatmul.f32.gmra.mxu0 %v5709
      %v5833 = vpop.f32.mrf.mxu0
      %v5834 = vadd.f32 0.0, %v5833
      %5835 = vmatmul.f32.gmra.mxu0 %v5712
      %v5836 = vpop.f32.mrf.mxu0
      %v5837 = vadd.f32 0.0, %v5836
      %5838 = vmatmul.f32.gmra.mxu0 %v5715
      %v5839 = vpop.f32.mrf.mxu0
      %v5840 = vadd.f32 0.0, %v5839
      %5841 = vmatmul.f32.gmra.mxu0 %v5718
      %v5842 = vpop.f32.mrf.mxu0
      %v5843 = vadd.f32 0.0, %v5842
      %5844 = vmatmul.f32.gmra.mxu0 %v5721
      %v5845 = vpop.f32.mrf.mxu0
      %v5846 = vadd.f32 0.0, %v5845
      %5847 = vmatmul.f32.gmra.mxu0 %v5724
      %v5848 = vpop.f32.mrf.mxu0
      %v5849 = vadd.f32 0.0, %v5848
      %5850 = vmatmul.f32.gmra.mxu0 %v5727
      %v5851 = vpop.f32.mrf.mxu0
      %v5852 = vadd.f32 0.0, %v5851
      %5853 = vmatmul.f32.gmra.mxu0 %v5730
      %v5854 = vpop.f32.mrf.mxu0
      %v5855 = vadd.f32 0.0, %v5854
      %5856 = vmatmul.f32.gmra.mxu0 %v5733
      %v5857 = vpop.f32.mrf.mxu0
      %v5858 = vadd.f32 0.0, %v5857
      %5859 = vmatmul.f32.gmra.mxu0 %v5736
      %v5860 = vpop.f32.mrf.mxu0
      %v5861 = vadd.f32 0.0, %v5860
      %5862 = vmatmul.f32.gmra.mxu0 %v5739
      %v5863 = vpop.f32.mrf.mxu0
      %v5864 = vadd.f32 0.0, %v5863
      %5865 = vmatmul.f32.gmra.mxu0 %v5742
      %v5866 = vpop.f32.mrf.mxu0
      %v5867 = vadd.f32 0.0, %v5866
      %5868 = vmatmul.f32.gmra.mxu0 %v5745
      %v5869 = vpop.f32.mrf.mxu0
      %v5870 = vadd.f32 0.0, %v5869
      %5871 = vmatmul.f32.gmra.mxu0 %v5748
      %v5872 = vpop.f32.mrf.mxu0
      %v5873 = vadd.f32 0.0, %v5872
      %5874 = vmatmul.f32.gmra.mxu0 %v5751
      %v5875 = vpop.f32.mrf.mxu0
      %v5876 = vadd.f32 0.0, %v5875
      %5877 = vmatmul.f32.gmra.mxu0 %v5754
      %v5878 = vpop.f32.mrf.mxu0
      %v5879 = vadd.f32 0.0, %v5878
      %5880 = vmatmul.f32.gmra.mxu0 %v5757
      %v5881 = vpop.f32.mrf.mxu0
      %v5882 = vadd.f32 0.0, %v5881
      %5883 = vmatmul.f32.gmra.mxu0 %v5760
      %v5884 = vpop.f32.mrf.mxu0
      %v5885 = vadd.f32 0.0, %v5884
      %5886 = vmatmul.f32.gmra.mxu0 %v5763
      %v5887 = vpop.f32.mrf.mxu0
      %v5888 = vadd.f32 0.0, %v5887
      %5889 = vmatmul.f32.gmra.mxu0 %v5766
      %v5890 = vpop.f32.mrf.mxu0
      %v5891 = vadd.f32 0.0, %v5890
      %5892 = vmatmul.f32.gmra.mxu0 %v5769
      %v5893 = vpop.f32.mrf.mxu0
      %v5894 = vadd.f32 0.0, %v5893
      %5895 = vmatmul.f32.gmra.mxu0 %v5772
      %v5896 = vpop.f32.mrf.mxu0
      %v5897 = vadd.f32 0.0, %v5896
      %5898 = vmatmul.f32.gmra.mxu0 %v5775
      %v5899 = vpop.f32.mrf.mxu0
      %v5900 = vadd.f32 0.0, %v5899
      %5901 = vmatmul.f32.gmra.mxu0 %v5778
      %v5902 = vpop.f32.mrf.mxu0
      %v5903 = vadd.f32 0.0, %v5902
      %5904 = vmatmul.f32.gmra.mxu0 %v5781
      %v5905 = vpop.f32.mrf.mxu0
      %v5906 = vadd.f32 0.0, %v5905
      %5907 = vmatmul.f32.gmra.mxu0 %v5784
      %v5908 = vpop.f32.mrf.mxu0
      %v5909 = vadd.f32 0.0, %v5908
      %5910 = vmatmul.f32.gmra.mxu0 %v5787
      %v5911 = vpop.f32.mrf.mxu0
      %v5912 = vadd.f32 0.0, %v5911
      %5913 = vmatmul.f32.gmra.mxu0 %v5790
      %v5914 = vpop.f32.mrf.mxu0
      %v5915 = vadd.f32 0.0, %v5914
      %5916 = vmatmul.f32.gmra.mxu0 %v5793
      %v5917 = vpop.f32.mrf.mxu0
      %v5918 = vadd.f32 0.0, %v5917
      %5919 = vdwg.mxu0
      %v5920 = vadd.f32 %v4722, %v5813
      %v5921 = vadd.f32 %v4725, %v5816
      %v5922 = vadd.f32 %v4728, %v5819
      %v5923 = vadd.f32 %v4731, %v5822
      %v5924 = vadd.f32 %v4734, %v5825
      %v5925 = vadd.f32 %v4737, %v5828
      %v5926 = vadd.f32 %v4740, %v5831
      %v5927 = vadd.f32 %v4743, %v5834
      %v5928 = vadd.f32 %v4746, %v5837
      %v5929 = vadd.f32 %v4749, %v5840
      %v5930 = vadd.f32 %v4752, %v5843
      %v5931 = vadd.f32 %v4755, %v5846
      %v5932 = vadd.f32 %v4758, %v5849
      %v5933 = vadd.f32 %v4761, %v5852
      %v5934 = vadd.f32 %v4764, %v5855
      %v5935 = vadd.f32 %v4767, %v5858
      %v5936 = vadd.f32 %v4770, %v5861
      %v5937 = vadd.f32 %v4773, %v5864
      %v5938 = vadd.f32 %v4776, %v5867
      %v5939 = vadd.f32 %v4779, %v5870
      %v5940 = vadd.f32 %v4782, %v5873
      %v5941 = vadd.f32 %v4785, %v5876
      %v5942 = vadd.f32 %v4788, %v5879
      %v5943 = vadd.f32 %v4791, %v5882
      %v5944 = vadd.f32 %v4794, %v5885
      %v5945 = vadd.f32 %v4797, %v5888
      %v5946 = vadd.f32 %v4800, %v5891
      %v5947 = vadd.f32 %v4803, %v5894
      %v5948 = vadd.f32 %v4806, %v5897
      %v5949 = vadd.f32 %v4809, %v5900
      %v5950 = vadd.f32 %v4812, %v5903
      %v5951 = vadd.f32 %v4815, %v5906
      %v5952 = vadd.f32 %v4818, %v5909
      %v5953 = vadd.f32 %v4821, %v5912
      %v5954 = vadd.f32 %v4824, %v5915
      %v5955 = vadd.f32 %v4827, %v5918
      %v5956 = vld [vmem:[#allocation3 + $0x31] sm:$0xff]
      %v5957 = vld [vmem:[#allocation3 + $0x39] sm:$0xff]
      %v5958 = vld [vmem:[#allocation3 + $0x41] sm:$0xff]
      %v5959 = vld [vmem:[#allocation3 + $0x49] sm:$0xff]
      %v5960 = vld [vmem:[#allocation3 + $0x51] sm:$0xff]
      %v5961 = vld [vmem:[#allocation3 + $0x59] sm:$0xff]
      %v5962 = vld [vmem:[#allocation3 + $0x61] sm:$0xff]
      %v5963 = vld [vmem:[#allocation3 + $0x69] sm:$0xff]
      %v5964 = vld [vmem:[#allocation3 + $0x71] sm:$0xff]
      %v5965 = vld [vmem:[#allocation3 + $0x79] sm:$0xff]
      %v5966 = vld [vmem:[#allocation3 + $0x81] sm:$0xff]
      %v5967 = vld [vmem:[#allocation3 + $0x89] sm:$0xff]
      %v5968 = vld [vmem:[#allocation3 + $0x91] sm:$0xff]
      %v5969 = vld [vmem:[#allocation3 + $0x99] sm:$0xff]
      %v5970 = vld [vmem:[#allocation3 + $0xa1] sm:$0xff]
      %v5971 = vld [vmem:[#allocation3 + $0xa9] sm:$0xff]
      %v5972 = vld [vmem:[#allocation3 + $0xb1] sm:$0xff]
      %v5973 = vld [vmem:[#allocation3 + $0xb9] sm:$0xff]
      %v5974 = vld [vmem:[#allocation3 + $0xc1] sm:$0xff]
      %v5975 = vld [vmem:[#allocation3 + $0xc9] sm:$0xff]
      %v5976 = vld [vmem:[#allocation3 + $0xd1] sm:$0xff]
      %v5977 = vld [vmem:[#allocation3 + $0xd9] sm:$0xff]
      %v5978 = vld [vmem:[#allocation3 + $0xe1] sm:$0xff]
      %v5979 = vld [vmem:[#allocation3 + $0xe9] sm:$0xff]
      %v5980 = vld [vmem:[#allocation3 + $0xf1] sm:$0xff]
      %v5981 = vld [vmem:[#allocation3 + $0xf9] sm:$0xff]
      %v5982 = vld [vmem:[#allocation3 + $0x101] sm:$0xff]
      %v5983 = vld [vmem:[#allocation3 + $0x109] sm:$0xff]
      %v5984 = vld [vmem:[#allocation3 + $0x111] sm:$0xff]
      %v5985 = vld [vmem:[#allocation3 + $0x119] sm:$0xff]
      %v5986 = vld [vmem:[#allocation3 + $0x121] sm:$0xff]
      %v5987 = vld [vmem:[#allocation3 + $0x129] sm:$0xff]
      %v5988 = vld [vmem:[#allocation3 + $0x131] sm:$0xff]
      %v5989 = vld [vmem:[#allocation3 + $0x139] sm:$0xff]
      %v5990 = vld [vmem:[#allocation3 + $0x141] sm:$0xff]
      %v5991 = vld [vmem:[#allocation3 + $0x149] sm:$0xff]
      %s5992 = scalar_lea.vmem %s4, 256
      %v5993 = vld [vmem:[%s5992] sm:$0xff]
      %v5994 = vld [vmem:[%s5992 + $0x8] sm:$0xff]
      %v5995 = vld [vmem:[%s5992 + $0x10] sm:$0xff]
      %v5996 = vld [vmem:[%s5992 + $0x18] sm:$0xff]
      %v5998 = vsel %vm272, %v5956, 0
      %v6001 = vsel %vm272, %v5957, 0
      %v6004 = vsel %vm272, %v5958, 0
      %v6007 = vsel %vm272, %v5959, 0
      %v6010 = vsel %vm272, %v5960, 0
      %v6013 = vsel %vm272, %v5961, 0
      %v6016 = vsel %vm272, %v5962, 0
      %v6019 = vsel %vm272, %v5963, 0
      %v6022 = vsel %vm272, %v5964, 0
      %v6025 = vsel %vm272, %v5965, 0
      %v6028 = vsel %vm272, %v5966, 0
      %v6031 = vsel %vm272, %v5967, 0
      %v6034 = vsel %vm272, %v5968, 0
      %v6037 = vsel %vm272, %v5969, 0
      %v6040 = vsel %vm272, %v5970, 0
      %v6043 = vsel %vm272, %v5971, 0
      %v6046 = vsel %vm272, %v5972, 0
      %v6049 = vsel %vm272, %v5973, 0
      %v6052 = vsel %vm272, %v5974, 0
      %v6055 = vsel %vm272, %v5975, 0
      %v6058 = vsel %vm272, %v5976, 0
      %v6061 = vsel %vm272, %v5977, 0
      %v6064 = vsel %vm272, %v5978, 0
      %v6067 = vsel %vm272, %v5979, 0
      %v6070 = vsel %vm272, %v5980, 0
      %v6073 = vsel %vm272, %v5981, 0
      %v6076 = vsel %vm272, %v5982, 0
      %v6079 = vsel %vm272, %v5983, 0
      %v6082 = vsel %vm272, %v5984, 0
      %v6085 = vsel %vm272, %v5985, 0
      %v6088 = vsel %vm272, %v5986, 0
      %v6091 = vsel %vm272, %v5987, 0
      %v6094 = vsel %vm272, %v5988, 0
      %v6097 = vsel %vm272, %v5989, 0
      %v6100 = vsel %vm272, %v5990, 0
      %v6103 = vsel %vm272, %v5991, 0
      %6105 = vmatpush.msra.mxu0 0.0
      %6106 = vmatpush.msra.mxu0 0.0
      %6107 = vmatpush.msra.mxu0 0.0
      %6108 = vmatpush.msra.mxu0 0.0
      %6109 = vmatpush.msra.mxu0 0.0
      %6110 = vmatpush.msra.mxu0 0.0
      %6111 = vmatpush.msra.mxu0 0.0
      %6112 = vmatpush.msra.mxu0 0.0
      %6113 = vmatpush.msra.mxu0 0.0
      %6114 = vmatpush.msra.mxu0 0.0
      %6115 = vmatpush.msra.mxu0 0.0
      %6116 = vmatpush.msra.mxu0 0.0
      %6117 = vmatpush.msra.mxu0 %v5996
      %6118 = vmatpush.msra.mxu0 %v5995
      %6119 = vmatpush.msra.mxu0 %v5994
      %6120 = vmatpush.msra.mxu0 %v5993
      %6121 = vmatmul.f32.gmra.mxu0 %v5998
      %v6122 = vpop.f32.mrf.mxu0
      %v6123 = vadd.f32 0.0, %v6122
      %6124 = vmatmul.f32.gmra.mxu0 %v6001
      %v6125 = vpop.f32.mrf.mxu0
      %v6126 = vadd.f32 0.0, %v6125
      %6127 = vmatmul.f32.gmra.mxu0 %v6004
      %v6128 = vpop.f32.mrf.mxu0
      %v6129 = vadd.f32 0.0, %v6128
      %6130 = vmatmul.f32.gmra.mxu0 %v6007
      %v6131 = vpop.f32.mrf.mxu0
      %v6132 = vadd.f32 0.0, %v6131
      %6133 = vmatmul.f32.gmra.mxu0 %v6010
      %v6134 = vpop.f32.mrf.mxu0
      %v6135 = vadd.f32 0.0, %v6134
      %6136 = vmatmul.f32.gmra.mxu0 %v6013
      %v6137 = vpop.f32.mrf.mxu0
      %v6138 = vadd.f32 0.0, %v6137
      %6139 = vmatmul.f32.gmra.mxu0 %v6016
      %v6140 = vpop.f32.mrf.mxu0
      %v6141 = vadd.f32 0.0, %v6140
      %6142 = vmatmul.f32.gmra.mxu0 %v6019
      %v6143 = vpop.f32.mrf.mxu0
      %v6144 = vadd.f32 0.0, %v6143
      %6145 = vmatmul.f32.gmra.mxu0 %v6022
      %v6146 = vpop.f32.mrf.mxu0
      %v6147 = vadd.f32 0.0, %v6146
      %6148 = vmatmul.f32.gmra.mxu0 %v6025
      %v6149 = vpop.f32.mrf.mxu0
      %v6150 = vadd.f32 0.0, %v6149
      %6151 = vmatmul.f32.gmra.mxu0 %v6028
      %v6152 = vpop.f32.mrf.mxu0
      %v6153 = vadd.f32 0.0, %v6152
      %6154 = vmatmul.f32.gmra.mxu0 %v6031
      %v6155 = vpop.f32.mrf.mxu0
      %v6156 = vadd.f32 0.0, %v6155
      %6157 = vmatmul.f32.gmra.mxu0 %v6034
      %v6158 = vpop.f32.mrf.mxu0
      %v6159 = vadd.f32 0.0, %v6158
      %6160 = vmatmul.f32.gmra.mxu0 %v6037
      %v6161 = vpop.f32.mrf.mxu0
      %v6162 = vadd.f32 0.0, %v6161
      %6163 = vmatmul.f32.gmra.mxu0 %v6040
      %v6164 = vpop.f32.mrf.mxu0
      %v6165 = vadd.f32 0.0, %v6164
      %6166 = vmatmul.f32.gmra.mxu0 %v6043
      %v6167 = vpop.f32.mrf.mxu0
      %v6168 = vadd.f32 0.0, %v6167
      %6169 = vmatmul.f32.gmra.mxu0 %v6046
      %v6170 = vpop.f32.mrf.mxu0
      %v6171 = vadd.f32 0.0, %v6170
      %6172 = vmatmul.f32.gmra.mxu0 %v6049
      %v6173 = vpop.f32.mrf.mxu0
      %v6174 = vadd.f32 0.0, %v6173
      %6175 = vmatmul.f32.gmra.mxu0 %v6052
      %v6176 = vpop.f32.mrf.mxu0
      %v6177 = vadd.f32 0.0, %v6176
      %6178 = vmatmul.f32.gmra.mxu0 %v6055
      %v6179 = vpop.f32.mrf.mxu0
      %v6180 = vadd.f32 0.0, %v6179
      %6181 = vmatmul.f32.gmra.mxu0 %v6058
      %v6182 = vpop.f32.mrf.mxu0
      %v6183 = vadd.f32 0.0, %v6182
      %6184 = vmatmul.f32.gmra.mxu0 %v6061
      %v6185 = vpop.f32.mrf.mxu0
      %v6186 = vadd.f32 0.0, %v6185
      %6187 = vmatmul.f32.gmra.mxu0 %v6064
      %v6188 = vpop.f32.mrf.mxu0
      %v6189 = vadd.f32 0.0, %v6188
      %6190 = vmatmul.f32.gmra.mxu0 %v6067
      %v6191 = vpop.f32.mrf.mxu0
      %v6192 = vadd.f32 0.0, %v6191
      %6193 = vmatmul.f32.gmra.mxu0 %v6070
      %v6194 = vpop.f32.mrf.mxu0
      %v6195 = vadd.f32 0.0, %v6194
      %6196 = vmatmul.f32.gmra.mxu0 %v6073
      %v6197 = vpop.f32.mrf.mxu0
      %v6198 = vadd.f32 0.0, %v6197
      %6199 = vmatmul.f32.gmra.mxu0 %v6076
      %v6200 = vpop.f32.mrf.mxu0
      %v6201 = vadd.f32 0.0, %v6200
      %6202 = vmatmul.f32.gmra.mxu0 %v6079
      %v6203 = vpop.f32.mrf.mxu0
      %v6204 = vadd.f32 0.0, %v6203
      %6205 = vmatmul.f32.gmra.mxu0 %v6082
      %v6206 = vpop.f32.mrf.mxu0
      %v6207 = vadd.f32 0.0, %v6206
      %6208 = vmatmul.f32.gmra.mxu0 %v6085
      %v6209 = vpop.f32.mrf.mxu0
      %v6210 = vadd.f32 0.0, %v6209
      %6211 = vmatmul.f32.gmra.mxu0 %v6088
      %v6212 = vpop.f32.mrf.mxu0
      %v6213 = vadd.f32 0.0, %v6212
      %6214 = vmatmul.f32.gmra.mxu0 %v6091
      %v6215 = vpop.f32.mrf.mxu0
      %v6216 = vadd.f32 0.0, %v6215
      %6217 = vmatmul.f32.gmra.mxu0 %v6094
      %v6218 = vpop.f32.mrf.mxu0
      %v6219 = vadd.f32 0.0, %v6218
      %6220 = vmatmul.f32.gmra.mxu0 %v6097
      %v6221 = vpop.f32.mrf.mxu0
      %v6222 = vadd.f32 0.0, %v6221
      %6223 = vmatmul.f32.gmra.mxu0 %v6100
      %v6224 = vpop.f32.mrf.mxu0
      %v6225 = vadd.f32 0.0, %v6224
      %6226 = vmatmul.f32.gmra.mxu0 %v6103
      %v6227 = vpop.f32.mrf.mxu0
      %v6228 = vadd.f32 0.0, %v6227
      %6229 = vdwg.mxu0
      %v6230 = vadd.f32 %v5229, %v6123
      %v6231 = vadd.f32 %v5232, %v6126
      %v6232 = vadd.f32 %v5235, %v6129
      %v6233 = vadd.f32 %v5238, %v6132
      %v6234 = vadd.f32 %v5241, %v6135
      %v6235 = vadd.f32 %v5244, %v6138
      %v6236 = vadd.f32 %v5247, %v6141
      %v6237 = vadd.f32 %v5250, %v6144
      %v6238 = vadd.f32 %v5253, %v6147
      %v6239 = vadd.f32 %v5256, %v6150
      %v6240 = vadd.f32 %v5259, %v6153
      %v6241 = vadd.f32 %v5262, %v6156
      %v6242 = vadd.f32 %v5265, %v6159
      %v6243 = vadd.f32 %v5268, %v6162
      %v6244 = vadd.f32 %v5271, %v6165
      %v6245 = vadd.f32 %v5274, %v6168
      %v6246 = vadd.f32 %v5277, %v6171
      %v6247 = vadd.f32 %v5280, %v6174
      %v6248 = vadd.f32 %v5283, %v6177
      %v6249 = vadd.f32 %v5286, %v6180
      %v6250 = vadd.f32 %v5289, %v6183
      %v6251 = vadd.f32 %v5292, %v6186
      %v6252 = vadd.f32 %v5295, %v6189
      %v6253 = vadd.f32 %v5298, %v6192
      %v6254 = vadd.f32 %v5301, %v6195
      %v6255 = vadd.f32 %v5304, %v6198
      %v6256 = vadd.f32 %v5307, %v6201
      %v6257 = vadd.f32 %v5310, %v6204
      %v6258 = vadd.f32 %v5313, %v6207
      %v6259 = vadd.f32 %v5316, %v6210
      %v6260 = vadd.f32 %v5319, %v6213
      %v6261 = vadd.f32 %v5322, %v6216
      %v6262 = vadd.f32 %v5325, %v6219
      %v6263 = vadd.f32 %v5328, %v6222
      %v6264 = vadd.f32 %v5331, %v6225
      %v6265 = vadd.f32 %v5334, %v6228
      %v6266 = vmul.f32 %v3074, %v5610
      %v6267 = vmul.f32 %v3079, %v5611
      %v6268 = vmul.f32 %v3084, %v5612
      %v6269 = vmul.f32 %v3089, %v5613
      %v6270 = vmul.f32 %v3094, %v5614
      %v6271 = vmul.f32 %v3099, %v5615
      %v6272 = vmul.f32 %v3104, %v5616
      %v6273 = vmul.f32 %v3109, %v5617
      %v6274 = vmul.f32 %v3114, %v5618
      %v6275 = vmul.f32 %v3119, %v5619
      %v6276 = vmul.f32 %v3124, %v5620
      %v6277 = vmul.f32 %v3129, %v5621
      %v6278 = vmul.f32 %v3134, %v5622
      %v6279 = vmul.f32 %v3139, %v5623
      %v6280 = vmul.f32 %v3144, %v5624
      %v6281 = vmul.f32 %v3149, %v5625
      %v6282 = vmul.f32 %v3154, %v5626
      %v6283 = vmul.f32 %v3159, %v5627
      %v6284 = vmul.f32 %v3164, %v5628
      %v6285 = vmul.f32 %v3169, %v5629
      %v6286 = vmul.f32 %v3174, %v5630
      %v6287 = vmul.f32 %v3179, %v5631
      %v6288 = vmul.f32 %v3184, %v5632
      %v6289 = vmul.f32 %v3189, %v5633
      %v6290 = vmul.f32 %v3194, %v5634
      %v6291 = vmul.f32 %v3199, %v5635
      %v6292 = vmul.f32 %v3204, %v5636
      %v6293 = vmul.f32 %v3209, %v5637
      %v6294 = vmul.f32 %v3214, %v5638
      %v6295 = vmul.f32 %v3219, %v5639
      %v6296 = vmul.f32 %v3224, %v5640
      %v6297 = vmul.f32 %v3229, %v5641
      %v6298 = vmul.f32 %v3234, %v5642
      %v6299 = vmul.f32 %v3239, %v5643
      %v6300 = vmul.f32 %v3244, %v5644
      %v6301 = vmul.f32 %v3249, %v5645
      %v6302 = vadd.f32 %v5920, %v6266
      %v6303 = vadd.f32 %v5921, %v6267
      %v6304 = vadd.f32 %v5922, %v6268
      %v6305 = vadd.f32 %v5923, %v6269
      %v6306 = vadd.f32 %v5924, %v6270
      %v6307 = vadd.f32 %v5925, %v6271
      %v6308 = vadd.f32 %v5926, %v6272
      %v6309 = vadd.f32 %v5927, %v6273
      %v6310 = vadd.f32 %v5928, %v6274
      %v6311 = vadd.f32 %v5929, %v6275
      %v6312 = vadd.f32 %v5930, %v6276
      %v6313 = vadd.f32 %v5931, %v6277
      %v6314 = vadd.f32 %v5932, %v6278
      %v6315 = vadd.f32 %v5933, %v6279
      %v6316 = vadd.f32 %v5934, %v6280
      %v6317 = vadd.f32 %v5935, %v6281
      %v6318 = vadd.f32 %v5936, %v6282
      %v6319 = vadd.f32 %v5937, %v6283
      %v6320 = vadd.f32 %v5938, %v6284
      %v6321 = vadd.f32 %v5939, %v6285
      %v6322 = vadd.f32 %v5940, %v6286
      %v6323 = vadd.f32 %v5941, %v6287
      %v6324 = vadd.f32 %v5942, %v6288
      %v6325 = vadd.f32 %v5943, %v6289
      %v6326 = vadd.f32 %v5944, %v6290
      %v6327 = vadd.f32 %v5945, %v6291
      %v6328 = vadd.f32 %v5946, %v6292
      %v6329 = vadd.f32 %v5947, %v6293
      %v6330 = vadd.f32 %v5948, %v6294
      %v6331 = vadd.f32 %v5949, %v6295
      %v6332 = vadd.f32 %v5950, %v6296
      %v6333 = vadd.f32 %v5951, %v6297
      %v6334 = vadd.f32 %v5952, %v6298
      %v6335 = vadd.f32 %v5953, %v6299
      %v6336 = vadd.f32 %v5954, %v6300
      %v6337 = vadd.f32 %v5955, %v6301
      %v6338 = vmul.f32 %v3325, %v6230
      %v6339 = vmul.f32 %v3329, %v6231
      %v6340 = vmul.f32 %v3333, %v6232
      %v6341 = vmul.f32 %v3337, %v6233
      %v6342 = vmul.f32 %v3341, %v6234
      %v6343 = vmul.f32 %v3345, %v6235
      %v6344 = vmul.f32 %v3349, %v6236
      %v6345 = vmul.f32 %v3353, %v6237
      %v6346 = vmul.f32 %v3357, %v6238
      %v6347 = vmul.f32 %v3361, %v6239
      %v6348 = vmul.f32 %v3365, %v6240
      %v6349 = vmul.f32 %v3369, %v6241
      %v6350 = vmul.f32 %v3373, %v6242
      %v6351 = vmul.f32 %v3377, %v6243
      %v6352 = vmul.f32 %v3381, %v6244
      %v6353 = vmul.f32 %v3385, %v6245
      %v6354 = vmul.f32 %v3389, %v6246
      %v6355 = vmul.f32 %v3393, %v6247
      %v6356 = vmul.f32 %v3397, %v6248
      %v6357 = vmul.f32 %v3401, %v6249
      %v6358 = vmul.f32 %v3405, %v6250
      %v6359 = vmul.f32 %v3409, %v6251
      %v6360 = vmul.f32 %v3413, %v6252
      %v6361 = vmul.f32 %v3417, %v6253
      %v6362 = vmul.f32 %v3421, %v6254
      %v6363 = vmul.f32 %v3425, %v6255
      %v6364 = vmul.f32 %v3429, %v6256
      %v6365 = vmul.f32 %v3433, %v6257
      %v6366 = vmul.f32 %v3437, %v6258
      %v6367 = vmul.f32 %v3441, %v6259
      %v6368 = vmul.f32 %v3445, %v6260
      %v6369 = vmul.f32 %v3449, %v6261
      %v6370 = vmul.f32 %v3453, %v6262
      %v6371 = vmul.f32 %v3457, %v6263
      %v6372 = vmul.f32 %v3461, %v6264
      %v6373 = vmul.f32 %v3465, %v6265
      %v6374 = vadd.f32 %v6302, %v6338
      %v6375 = vadd.f32 %v6303, %v6339
      %v6376 = vadd.f32 %v6304, %v6340
      %v6377 = vadd.f32 %v6305, %v6341
      %v6378 = vadd.f32 %v6306, %v6342
      %v6379 = vadd.f32 %v6307, %v6343
      %v6380 = vadd.f32 %v6308, %v6344
      %v6381 = vadd.f32 %v6309, %v6345
      %v6382 = vadd.f32 %v6310, %v6346
      %v6383 = vadd.f32 %v6311, %v6347
      %v6384 = vadd.f32 %v6312, %v6348
      %v6385 = vadd.f32 %v6313, %v6349
      %v6386 = vadd.f32 %v6314, %v6350
      %v6387 = vadd.f32 %v6315, %v6351
      %v6388 = vadd.f32 %v6316, %v6352
      %v6389 = vadd.f32 %v6317, %v6353
      %v6390 = vadd.f32 %v6318, %v6354
      %v6391 = vadd.f32 %v6319, %v6355
      %v6392 = vadd.f32 %v6320, %v6356
      %v6393 = vadd.f32 %v6321, %v6357
      %v6394 = vadd.f32 %v6322, %v6358
      %v6395 = vadd.f32 %v6323, %v6359
      %v6396 = vadd.f32 %v6324, %v6360
      %v6397 = vadd.f32 %v6325, %v6361
      %v6398 = vadd.f32 %v6326, %v6362
      %v6399 = vadd.f32 %v6327, %v6363
      %v6400 = vadd.f32 %v6328, %v6364
      %v6401 = vadd.f32 %v6329, %v6365
      %v6402 = vadd.f32 %v6330, %v6366
      %v6403 = vadd.f32 %v6331, %v6367
      %v6404 = vadd.f32 %v6332, %v6368
      %v6405 = vadd.f32 %v6333, %v6369
      %v6406 = vadd.f32 %v6334, %v6370
      %v6407 = vadd.f32 %v6335, %v6371
      %v6408 = vadd.f32 %v6336, %v6372
      %v6409 = vadd.f32 %v6337, %v6373
      %v6410 = vperm.slane %v3828, 0
      %v6411 = vadd.f32 %v6374, %v6410
      %v6412 = vadd.f32 %v6375, %v6410
      %v6413 = vadd.f32 %v6376, %v6410
      %v6414 = vadd.f32 %v6377, %v6410
      %v6415 = vadd.f32 %v6378, %v6410
      %v6416 = vadd.f32 %v6379, %v6410
      %v6417 = vadd.f32 %v6380, %v6410
      %v6418 = vadd.f32 %v6381, %v6410
      %v6419 = vadd.f32 %v6382, %v6410
      %v6420 = vadd.f32 %v6383, %v6410
      %v6421 = vadd.f32 %v6384, %v6410
      %v6422 = vadd.f32 %v6385, %v6410
      %v6423 = vadd.f32 %v6386, %v6410
      %v6424 = vadd.f32 %v6387, %v6410
      %v6425 = vadd.f32 %v6388, %v6410
      %v6426 = vadd.f32 %v6389, %v6410
      %v6427 = vadd.f32 %v6390, %v6410
      %v6428 = vadd.f32 %v6391, %v6410
      %v6429 = vadd.f32 %v6392, %v6410
      %v6430 = vadd.f32 %v6393, %v6410
      %v6431 = vadd.f32 %v6394, %v6410
      %v6432 = vadd.f32 %v6395, %v6410
      %v6433 = vadd.f32 %v6396, %v6410
      %v6434 = vadd.f32 %v6397, %v6410
      %v6435 = vadd.f32 %v6398, %v6410
      %v6436 = vadd.f32 %v6399, %v6410
      %v6437 = vadd.f32 %v6400, %v6410
      %v6438 = vadd.f32 %v6401, %v6410
      %v6439 = vadd.f32 %v6402, %v6410
      %v6440 = vadd.f32 %v6403, %v6410
      %v6441 = vadd.f32 %v6404, %v6410
      %v6442 = vadd.f32 %v6405, %v6410
      %v6443 = vadd.f32 %v6406, %v6410
      %v6444 = vadd.f32 %v6407, %v6410
      %v6445 = vadd.f32 %v6408, %v6410
      %v6446 = vadd.f32 %v6409, %v6410
      %v6447 = vmax.f32 %v6411, 0.0
      %v6448 = vmax.f32 %v6412, 0.0
      %v6449 = vmax.f32 %v6413, 0.0
      %v6450 = vmax.f32 %v6414, 0.0
      %v6451 = vmax.f32 %v6415, 0.0
      %v6452 = vmax.f32 %v6416, 0.0
      %v6453 = vmax.f32 %v6417, 0.0
      %v6454 = vmax.f32 %v6418, 0.0
      %v6455 = vmax.f32 %v6419, 0.0
      %v6456 = vmax.f32 %v6420, 0.0
      %v6457 = vmax.f32 %v6421, 0.0
      %v6458 = vmax.f32 %v6422, 0.0
      %v6459 = vmax.f32 %v6423, 0.0
      %v6460 = vmax.f32 %v6424, 0.0
      %v6461 = vmax.f32 %v6425, 0.0
      %v6462 = vmax.f32 %v6426, 0.0
      %v6463 = vmax.f32 %v6427, 0.0
      %v6464 = vmax.f32 %v6428, 0.0
      %v6465 = vmax.f32 %v6429, 0.0
      %v6466 = vmax.f32 %v6430, 0.0
      %v6467 = vmax.f32 %v6431, 0.0
      %v6468 = vmax.f32 %v6432, 0.0
      %v6469 = vmax.f32 %v6433, 0.0
      %v6470 = vmax.f32 %v6434, 0.0
      %v6471 = vmax.f32 %v6435, 0.0
      %v6472 = vmax.f32 %v6436, 0.0
      %v6473 = vmax.f32 %v6437, 0.0
      %v6474 = vmax.f32 %v6438, 0.0
      %v6475 = vmax.f32 %v6439, 0.0
      %v6476 = vmax.f32 %v6440, 0.0
      %v6477 = vmax.f32 %v6441, 0.0
      %v6478 = vmax.f32 %v6442, 0.0
      %v6479 = vmax.f32 %v6443, 0.0
      %v6480 = vmax.f32 %v6444, 0.0
      %v6481 = vmax.f32 %v6445, 0.0
      %v6482 = vmax.f32 %v6446, 0.0
      %v6483 = vmul.f32 %v6447, %v3614
      %v6484 = vmul.f32 %v6448, %v3618
      %v6485 = vmul.f32 %v6449, %v3622
      %v6486 = vmul.f32 %v6450, %v3626
      %v6487 = vmul.f32 %v6451, %v3630
      %v6488 = vmul.f32 %v6452, %v3634
      %v6489 = vmul.f32 %v6453, %v3638
      %v6490 = vmul.f32 %v6454, %v3642
      %v6491 = vmul.f32 %v6455, %v3646
      %v6492 = vmul.f32 %v6456, %v3650
      %v6493 = vmul.f32 %v6457, %v3654
      %v6494 = vmul.f32 %v6458, %v3658
      %v6495 = vmul.f32 %v6459, %v3662
      %v6496 = vmul.f32 %v6460, %v3666
      %v6497 = vmul.f32 %v6461, %v3670
      %v6498 = vmul.f32 %v6462, %v3674
      %v6499 = vmul.f32 %v6463, %v3678
      %v6500 = vmul.f32 %v6464, %v3682
      %v6501 = vmul.f32 %v6465, %v3686
      %v6502 = vmul.f32 %v6466, %v3690
      %v6503 = vmul.f32 %v6467, %v3694
      %v6504 = vmul.f32 %v6468, %v3698
      %v6505 = vmul.f32 %v6469, %v3702
      %v6506 = vmul.f32 %v6470, %v3706
      %v6507 = vmul.f32 %v6471, %v3710
      %v6508 = vmul.f32 %v6472, %v3714
      %v6509 = vmul.f32 %v6473, %v3718
      %v6510 = vmul.f32 %v6474, %v3722
      %v6511 = vmul.f32 %v6475, %v3726
      %v6512 = vmul.f32 %v6476, %v3730
      %v6513 = vmul.f32 %v6477, %v3734
      %v6514 = vmul.f32 %v6478, %v3738
      %v6515 = vmul.f32 %v6479, %v3742
      %v6516 = vmul.f32 %v6480, %v3746
      %v6517 = vmul.f32 %v6481, %v3750
      %v6518 = vmul.f32 %v6482, %v3754
      %6519 = vst.msk [vmem:[#allocation4 + $0x20] sm:$0xff] %vm272, %v6483
      %6520 = vst.msk [vmem:[#allocation4 + $0x28] sm:$0xff] %vm272, %v6484
      %6521 = vst.msk [vmem:[#allocation4 + $0x30] sm:$0xff] %vm272, %v6485
      %6522 = vst.msk [vmem:[#allocation4 + $0x38] sm:$0xff] %vm272, %v6486
      %6523 = vst.msk [vmem:[#allocation4 + $0x40] sm:$0xff] %vm272, %v6487
      %6524 = vst.msk [vmem:[#allocation4 + $0x48] sm:$0xff] %vm272, %v6488
      %6525 = vst.msk [vmem:[#allocation4 + $0x50] sm:$0xff] %vm272, %v6489
      %6526 = vst.msk [vmem:[#allocation4 + $0x58] sm:$0xff] %vm272, %v6490
      %6527 = vst.msk [vmem:[#allocation4 + $0x60] sm:$0xff] %vm272, %v6491
      %6528 = vst.msk [vmem:[#allocation4 + $0x68] sm:$0xff] %vm272, %v6492
      %6529 = vst.msk [vmem:[#allocation4 + $0x70] sm:$0xff] %vm272, %v6493
      %6530 = vst.msk [vmem:[#allocation4 + $0x78] sm:$0xff] %vm272, %v6494
      %6531 = vst.msk [vmem:[#allocation4 + $0x80] sm:$0xff] %vm272, %v6495
      %6532 = vst.msk [vmem:[#allocation4 + $0x88] sm:$0xff] %vm272, %v6496
      %6533 = vst.msk [vmem:[#allocation4 + $0x90] sm:$0xff] %vm272, %v6497
      %6534 = vst.msk [vmem:[#allocation4 + $0x98] sm:$0xff] %vm272, %v6498
      %6535 = vst.msk [vmem:[#allocation4 + $0xa0] sm:$0xff] %vm272, %v6499
      %6536 = vst.msk [vmem:[#allocation4 + $0xa8] sm:$0xff] %vm272, %v6500
      %6537 = vst.msk [vmem:[#allocation4 + $0xb0] sm:$0xff] %vm272, %v6501
      %6538 = vst.msk [vmem:[#allocation4 + $0xb8] sm:$0xff] %vm272, %v6502
      %6539 = vst.msk [vmem:[#allocation4 + $0xc0] sm:$0xff] %vm272, %v6503
      %6540 = vst.msk [vmem:[#allocation4 + $0xc8] sm:$0xff] %vm272, %v6504
      %6541 = vst.msk [vmem:[#allocation4 + $0xd0] sm:$0xff] %vm272, %v6505
      %6542 = vst.msk [vmem:[#allocation4 + $0xd8] sm:$0xff] %vm272, %v6506
      %6543 = vst.msk [vmem:[#allocation4 + $0xe0] sm:$0xff] %vm272, %v6507
      %6544 = vst.msk [vmem:[#allocation4 + $0xe8] sm:$0xff] %vm272, %v6508
      %6545 = vst.msk [vmem:[#allocation4 + $0xf0] sm:$0xff] %vm272, %v6509
      %6546 = vst.msk [vmem:[#allocation4 + $0xf8] sm:$0xff] %vm272, %v6510
      %6547 = vst.msk [vmem:[#allocation4 + $0x100] sm:$0xff] %vm272, %v6511
      %6548 = vst.msk [vmem:[#allocation4 + $0x108] sm:$0xff] %vm272, %v6512
      %6549 = vst.msk [vmem:[#allocation4 + $0x110] sm:$0xff] %vm272, %v6513
      %6550 = vst.msk [vmem:[#allocation4 + $0x118] sm:$0xff] %vm272, %v6514
      %6551 = vst.msk [vmem:[#allocation4 + $0x120] sm:$0xff] %vm272, %v6515
      %6552 = vst.msk [vmem:[#allocation4 + $0x128] sm:$0xff] %vm272, %v6516
      %6553 = vst.msk [vmem:[#allocation4 + $0x130] sm:$0xff] %vm272, %v6517
      %6554 = vst.msk [vmem:[#allocation4 + $0x138] sm:$0xff] %vm272, %v6518
      %v6555 = vld [vmem:[%s5 + $0x2] sm:$0x1]
      %v6556 = vld [vmem:[#allocation4 + $0xf] sm:$0xff]
      %v6557 = vld [vmem:[#allocation4 + $0x17] sm:$0xff]
      %v6558 = vld [vmem:[#allocation4 + $0x1f] sm:$0xff]
      %v6559 = vld [vmem:[#allocation4 + $0x27] sm:$0xff]
      %v6560 = vld [vmem:[#allocation4 + $0x2f] sm:$0xff]
      %v6561 = vld [vmem:[#allocation4 + $0x37] sm:$0xff]
      %v6562 = vld [vmem:[#allocation4 + $0x3f] sm:$0xff]
      %v6563 = vld [vmem:[#allocation4 + $0x47] sm:$0xff]
      %v6564 = vld [vmem:[#allocation4 + $0x4f] sm:$0xff]
      %v6565 = vld [vmem:[#allocation4 + $0x57] sm:$0xff]
      %v6566 = vld [vmem:[#allocation4 + $0x5f] sm:$0xff]
      %v6567 = vld [vmem:[#allocation4 + $0x67] sm:$0xff]
      %v6568 = vld [vmem:[#allocation4 + $0x6f] sm:$0xff]
      %v6569 = vld [vmem:[#allocation4 + $0x77] sm:$0xff]
      %v6570 = vld [vmem:[#allocation4 + $0x7f] sm:$0xff]
      %v6571 = vld [vmem:[#allocation4 + $0x87] sm:$0xff]
      %v6572 = vld [vmem:[#allocation4 + $0x8f] sm:$0xff]
      %v6573 = vld [vmem:[#allocation4 + $0x97] sm:$0xff]
      %v6574 = vld [vmem:[#allocation4 + $0x9f] sm:$0xff]
      %v6575 = vld [vmem:[#allocation4 + $0xa7] sm:$0xff]
      %v6576 = vld [vmem:[#allocation4 + $0xaf] sm:$0xff]
      %v6577 = vld [vmem:[#allocation4 + $0xb7] sm:$0xff]
      %v6578 = vld [vmem:[#allocation4 + $0xbf] sm:$0xff]
      %v6579 = vld [vmem:[#allocation4 + $0xc7] sm:$0xff]
      %v6580 = vld [vmem:[#allocation4 + $0xcf] sm:$0xff]
      %v6581 = vld [vmem:[#allocation4 + $0xd7] sm:$0xff]
      %v6582 = vld [vmem:[#allocation4 + $0xdf] sm:$0xff]
      %v6583 = vld [vmem:[#allocation4 + $0xe7] sm:$0xff]
      %v6584 = vld [vmem:[#allocation4 + $0xef] sm:$0xff]
      %v6585 = vld [vmem:[#allocation4 + $0xf7] sm:$0xff]
      %v6586 = vld [vmem:[#allocation4 + $0xff] sm:$0xff]
      %v6587 = vld [vmem:[#allocation4 + $0x107] sm:$0xff]
      %v6588 = vld [vmem:[#allocation4 + $0x10f] sm:$0xff]
      %v6589 = vld [vmem:[#allocation4 + $0x117] sm:$0xff]
      %v6590 = vld [vmem:[#allocation4 + $0x11f] sm:$0xff]
      %v6591 = vld [vmem:[#allocation4 + $0x127] sm:$0xff]
      %s6592 = scalar_lea.vmem %s4, 288
      %v6593 = vld [vmem:[%s6592] sm:$0xff]
      %v6594 = vld [vmem:[%s6592 + $0x8] sm:$0xff]
      %v6595 = vld [vmem:[%s6592 + $0x10] sm:$0xff]
      %v6596 = vld [vmem:[%s6592 + $0x18] sm:$0xff]
      %v6597 = vld [vmem:[#allocation4 + $0x10] sm:$0xff]
      %v6598 = vld [vmem:[#allocation4 + $0x18] sm:$0xff]
      %v6599 = vld [vmem:[#allocation4 + $0x20] sm:$0xff]
      %v6600 = vld [vmem:[#allocation4 + $0x28] sm:$0xff]
      %v6601 = vld [vmem:[#allocation4 + $0x30] sm:$0xff]
      %v6602 = vld [vmem:[#allocation4 + $0x38] sm:$0xff]
      %v6603 = vld [vmem:[#allocation4 + $0x40] sm:$0xff]
      %v6604 = vld [vmem:[#allocation4 + $0x48] sm:$0xff]
      %v6605 = vld [vmem:[#allocation4 + $0x50] sm:$0xff]
      %v6606 = vld [vmem:[#allocation4 + $0x58] sm:$0xff]
      %v6607 = vld [vmem:[#allocation4 + $0x60] sm:$0xff]
      %v6608 = vld [vmem:[#allocation4 + $0x68] sm:$0xff]
      %v6609 = vld [vmem:[#allocation4 + $0x70] sm:$0xff]
      %v6610 = vld [vmem:[#allocation4 + $0x78] sm:$0xff]
      %v6611 = vld [vmem:[#allocation4 + $0x80] sm:$0xff]
      %v6612 = vld [vmem:[#allocation4 + $0x88] sm:$0xff]
      %v6613 = vld [vmem:[#allocation4 + $0x90] sm:$0xff]
      %v6614 = vld [vmem:[#allocation4 + $0x98] sm:$0xff]
      %v6615 = vld [vmem:[#allocation4 + $0xa0] sm:$0xff]
      %v6616 = vld [vmem:[#allocation4 + $0xa8] sm:$0xff]
      %v6617 = vld [vmem:[#allocation4 + $0xb0] sm:$0xff]
      %v6618 = vld [vmem:[#allocation4 + $0xb8] sm:$0xff]
      %v6619 = vld [vmem:[#allocation4 + $0xc0] sm:$0xff]
      %v6620 = vld [vmem:[#allocation4 + $0xc8] sm:$0xff]
      %v6621 = vld [vmem:[#allocation4 + $0xd0] sm:$0xff]
      %v6622 = vld [vmem:[#allocation4 + $0xd8] sm:$0xff]
      %v6623 = vld [vmem:[#allocation4 + $0xe0] sm:$0xff]
      %v6624 = vld [vmem:[#allocation4 + $0xe8] sm:$0xff]
      %v6625 = vld [vmem:[#allocation4 + $0xf0] sm:$0xff]
      %v6626 = vld [vmem:[#allocation4 + $0xf8] sm:$0xff]
      %v6627 = vld [vmem:[#allocation4 + $0x100] sm:$0xff]
      %v6628 = vld [vmem:[#allocation4 + $0x108] sm:$0xff]
      %v6629 = vld [vmem:[#allocation4 + $0x110] sm:$0xff]
      %v6630 = vld [vmem:[#allocation4 + $0x118] sm:$0xff]
      %v6631 = vld [vmem:[#allocation4 + $0x120] sm:$0xff]
      %v6632 = vld [vmem:[#allocation4 + $0x128] sm:$0xff]
      %s6633 = scalar_lea.vmem %s4, 320
      %v6634 = vld [vmem:[%s6633] sm:$0xff]
      %v6635 = vld [vmem:[%s6633 + $0x8] sm:$0xff]
      %v6636 = vld [vmem:[%s6633 + $0x10] sm:$0xff]
      %v6637 = vld [vmem:[%s6633 + $0x18] sm:$0xff]
      %v6638 = vld [vmem:[#allocation4 + $0x11] sm:$0xff]
      %v6639 = vld [vmem:[#allocation4 + $0x19] sm:$0xff]
      %v6640 = vld [vmem:[#allocation4 + $0x21] sm:$0xff]
      %v6641 = vld [vmem:[#allocation4 + $0x29] sm:$0xff]
      %v6642 = vld [vmem:[#allocation4 + $0x31] sm:$0xff]
      %v6643 = vld [vmem:[#allocation4 + $0x39] sm:$0xff]
      %v6644 = vld [vmem:[#allocation4 + $0x41] sm:$0xff]
      %v6645 = vld [vmem:[#allocation4 + $0x49] sm:$0xff]
      %v6646 = vld [vmem:[#allocation4 + $0x51] sm:$0xff]
      %v6647 = vld [vmem:[#allocation4 + $0x59] sm:$0xff]
      %v6648 = vld [vmem:[#allocation4 + $0x61] sm:$0xff]
      %v6649 = vld [vmem:[#allocation4 + $0x69] sm:$0xff]
      %v6650 = vld [vmem:[#allocation4 + $0x71] sm:$0xff]
      %v6651 = vld [vmem:[#allocation4 + $0x79] sm:$0xff]
      %v6652 = vld [vmem:[#allocation4 + $0x81] sm:$0xff]
      %v6653 = vld [vmem:[#allocation4 + $0x89] sm:$0xff]
      %v6654 = vld [vmem:[#allocation4 + $0x91] sm:$0xff]
      %v6655 = vld [vmem:[#allocation4 + $0x99] sm:$0xff]
      %v6656 = vld [vmem:[#allocation4 + $0xa1] sm:$0xff]
      %v6657 = vld [vmem:[#allocation4 + $0xa9] sm:$0xff]
      %v6658 = vld [vmem:[#allocation4 + $0xb1] sm:$0xff]
      %v6659 = vld [vmem:[#allocation4 + $0xb9] sm:$0xff]
      %v6660 = vld [vmem:[#allocation4 + $0xc1] sm:$0xff]
      %v6661 = vld [vmem:[#allocation4 + $0xc9] sm:$0xff]
      %v6662 = vld [vmem:[#allocation4 + $0xd1] sm:$0xff]
      %v6663 = vld [vmem:[#allocation4 + $0xd9] sm:$0xff]
      %v6664 = vld [vmem:[#allocation4 + $0xe1] sm:$0xff]
      %v6665 = vld [vmem:[#allocation4 + $0xe9] sm:$0xff]
      %v6666 = vld [vmem:[#allocation4 + $0xf1] sm:$0xff]
      %v6667 = vld [vmem:[#allocation4 + $0xf9] sm:$0xff]
      %v6668 = vld [vmem:[#allocation4 + $0x101] sm:$0xff]
      %v6669 = vld [vmem:[#allocation4 + $0x109] sm:$0xff]
      %v6670 = vld [vmem:[#allocation4 + $0x111] sm:$0xff]
      %v6671 = vld [vmem:[#allocation4 + $0x119] sm:$0xff]
      %v6672 = vld [vmem:[#allocation4 + $0x121] sm:$0xff]
      %v6673 = vld [vmem:[#allocation4 + $0x129] sm:$0xff]
      %s6674 = scalar_lea.vmem %s4, 352
      %v6675 = vld [vmem:[%s6674] sm:$0xff]
      %v6676 = vld [vmem:[%s6674 + $0x8] sm:$0xff]
      %v6677 = vld [vmem:[%s6674 + $0x10] sm:$0xff]
      %v6678 = vld [vmem:[%s6674 + $0x18] sm:$0xff]
      %v6679 = vld [vmem:[#allocation4 + $0x12f] sm:$0xff]
      %v6680 = vld [vmem:[#allocation4 + $0x137] sm:$0xff]
      %s6681 = scalar_lea.vmem %s4, 384
      %v6682 = vld [vmem:[%s6681] sm:$0xff]
      %v6683 = vld [vmem:[%s6681 + $0x8] sm:$0xff]
      %v6684 = vld [vmem:[%s6681 + $0x10] sm:$0xff]
      %v6685 = vld [vmem:[%s6681 + $0x18] sm:$0xff]
      %v6687 = vsel %vm272, %v6558, 0
      %v6690 = vsel %vm272, %v6559, 0
      %v6693 = vsel %vm272, %v6560, 0
      %v6696 = vsel %vm272, %v6561, 0
      %v6699 = vsel %vm272, %v6562, 0
      %v6702 = vsel %vm272, %v6563, 0
      %v6705 = vsel %vm272, %v6564, 0
      %v6708 = vsel %vm272, %v6565, 0
      %v6711 = vsel %vm272, %v6566, 0
      %v6714 = vsel %vm272, %v6567, 0
      %v6717 = vsel %vm272, %v6568, 0
      %v6720 = vsel %vm272, %v6569, 0
      %v6723 = vsel %vm272, %v6570, 0
      %v6726 = vsel %vm272, %v6571, 0
      %v6729 = vsel %vm272, %v6572, 0
      %v6732 = vsel %vm272, %v6573, 0
      %v6735 = vsel %vm272, %v6574, 0
      %v6738 = vsel %vm272, %v6575, 0
      %v6741 = vsel %vm272, %v6576, 0
      %v6744 = vsel %vm272, %v6577, 0
      %v6747 = vsel %vm272, %v6578, 0
      %v6750 = vsel %vm272, %v6579, 0
      %v6753 = vsel %vm272, %v6580, 0
      %v6756 = vsel %vm272, %v6581, 0
      %v6759 = vsel %vm272, %v6582, 0
      %v6762 = vsel %vm272, %v6583, 0
      %v6765 = vsel %vm272, %v6584, 0
      %v6768 = vsel %vm272, %v6585, 0
      %v6771 = vsel %vm272, %v6586, 0
      %v6774 = vsel %vm272, %v6587, 0
      %v6777 = vsel %vm272, %v6588, 0
      %v6780 = vsel %vm272, %v6589, 0
      %v6783 = vsel %vm272, %v6590, 0
      %v6786 = vsel %vm272, %v6591, 0
      %v6789 = vsel %vm272, %v6679, 0
      %v6792 = vsel %vm272, %v6680, 0
      %6794 = vmatpush.msra.mxu0 0.0
      %6795 = vmatpush.msra.mxu0 0.0
      %6796 = vmatpush.msra.mxu0 0.0
      %6797 = vmatpush.msra.mxu0 0.0
      %6798 = vmatpush.msra.mxu0 0.0
      %6799 = vmatpush.msra.mxu0 0.0
      %6800 = vmatpush.msra.mxu0 0.0
      %6801 = vmatpush.msra.mxu0 0.0
      %6802 = vmatpush.msra.mxu0 0.0
      %6803 = vmatpush.msra.mxu0 0.0
      %6804 = vmatpush.msra.mxu0 0.0
      %6805 = vmatpush.msra.mxu0 0.0
      %6806 = vmatpush.msra.mxu0 %v6685
      %6807 = vmatpush.msra.mxu0 %v6684
      %6808 = vmatpush.msra.mxu0 %v6683
      %6809 = vmatpush.msra.mxu0 %v6682
      %6810 = vmatmul.f32.gmra.mxu0 %v6687
      %v6811 = vpop.f32.mrf.mxu0
      %v6812 = vadd.f32 0.0, %v6811
      %6813 = vmatmul.f32.gmra.mxu0 %v6690
      %v6814 = vpop.f32.mrf.mxu0
      %v6815 = vadd.f32 0.0, %v6814
      %6816 = vmatmul.f32.gmra.mxu0 %v6693
      %v6817 = vpop.f32.mrf.mxu0
      %v6818 = vadd.f32 0.0, %v6817
      %6819 = vmatmul.f32.gmra.mxu0 %v6696
      %v6820 = vpop.f32.mrf.mxu0
      %v6821 = vadd.f32 0.0, %v6820
      %6822 = vmatmul.f32.gmra.mxu0 %v6699
      %v6823 = vpop.f32.mrf.mxu0
      %v6824 = vadd.f32 0.0, %v6823
      %6825 = vmatmul.f32.gmra.mxu0 %v6702
      %v6826 = vpop.f32.mrf.mxu0
      %v6827 = vadd.f32 0.0, %v6826
      %6828 = vmatmul.f32.gmra.mxu0 %v6705
      %v6829 = vpop.f32.mrf.mxu0
      %v6830 = vadd.f32 0.0, %v6829
      %6831 = vmatmul.f32.gmra.mxu0 %v6708
      %v6832 = vpop.f32.mrf.mxu0
      %v6833 = vadd.f32 0.0, %v6832
      %6834 = vmatmul.f32.gmra.mxu0 %v6711
      %v6835 = vpop.f32.mrf.mxu0
      %v6836 = vadd.f32 0.0, %v6835
      %6837 = vmatmul.f32.gmra.mxu0 %v6714
      %v6838 = vpop.f32.mrf.mxu0
      %v6839 = vadd.f32 0.0, %v6838
      %6840 = vmatmul.f32.gmra.mxu0 %v6717
      %v6841 = vpop.f32.mrf.mxu0
      %v6842 = vadd.f32 0.0, %v6841
      %6843 = vmatmul.f32.gmra.mxu0 %v6720
      %v6844 = vpop.f32.mrf.mxu0
      %v6845 = vadd.f32 0.0, %v6844
      %6846 = vmatmul.f32.gmra.mxu0 %v6723
      %v6847 = vpop.f32.mrf.mxu0
      %v6848 = vadd.f32 0.0, %v6847
      %6849 = vmatmul.f32.gmra.mxu0 %v6726
      %v6850 = vpop.f32.mrf.mxu0
      %v6851 = vadd.f32 0.0, %v6850
      %6852 = vmatmul.f32.gmra.mxu0 %v6729
      %v6853 = vpop.f32.mrf.mxu0
      %v6854 = vadd.f32 0.0, %v6853
      %6855 = vmatmul.f32.gmra.mxu0 %v6732
      %v6856 = vpop.f32.mrf.mxu0
      %v6857 = vadd.f32 0.0, %v6856
      %6858 = vmatmul.f32.gmra.mxu0 %v6735
      %v6859 = vpop.f32.mrf.mxu0
      %v6860 = vadd.f32 0.0, %v6859
      %6861 = vmatmul.f32.gmra.mxu0 %v6738
      %v6862 = vpop.f32.mrf.mxu0
      %v6863 = vadd.f32 0.0, %v6862
      %6864 = vmatmul.f32.gmra.mxu0 %v6741
      %v6865 = vpop.f32.mrf.mxu0
      %v6866 = vadd.f32 0.0, %v6865
      %6867 = vmatmul.f32.gmra.mxu0 %v6744
      %v6868 = vpop.f32.mrf.mxu0
      %v6869 = vadd.f32 0.0, %v6868
      %6870 = vmatmul.f32.gmra.mxu0 %v6747
      %v6871 = vpop.f32.mrf.mxu0
      %v6872 = vadd.f32 0.0, %v6871
      %6873 = vmatmul.f32.gmra.mxu0 %v6750
      %v6874 = vpop.f32.mrf.mxu0
      %v6875 = vadd.f32 0.0, %v6874
      %6876 = vmatmul.f32.gmra.mxu0 %v6753
      %v6877 = vpop.f32.mrf.mxu0
      %v6878 = vadd.f32 0.0, %v6877
      %6879 = vmatmul.f32.gmra.mxu0 %v6756
      %v6880 = vpop.f32.mrf.mxu0
      %v6881 = vadd.f32 0.0, %v6880
      %6882 = vmatmul.f32.gmra.mxu0 %v6759
      %v6883 = vpop.f32.mrf.mxu0
      %v6884 = vadd.f32 0.0, %v6883
      %6885 = vmatmul.f32.gmra.mxu0 %v6762
      %v6886 = vpop.f32.mrf.mxu0
      %v6887 = vadd.f32 0.0, %v6886
      %6888 = vmatmul.f32.gmra.mxu0 %v6765
      %v6889 = vpop.f32.mrf.mxu0
      %v6890 = vadd.f32 0.0, %v6889
      %6891 = vmatmul.f32.gmra.mxu0 %v6768
      %v6892 = vpop.f32.mrf.mxu0
      %v6893 = vadd.f32 0.0, %v6892
      %6894 = vmatmul.f32.gmra.mxu0 %v6771
      %v6895 = vpop.f32.mrf.mxu0
      %v6896 = vadd.f32 0.0, %v6895
      %6897 = vmatmul.f32.gmra.mxu0 %v6774
      %v6898 = vpop.f32.mrf.mxu0
      %v6899 = vadd.f32 0.0, %v6898
      %6900 = vmatmul.f32.gmra.mxu0 %v6777
      %v6901 = vpop.f32.mrf.mxu0
      %v6902 = vadd.f32 0.0, %v6901
      %6903 = vmatmul.f32.gmra.mxu0 %v6780
      %v6904 = vpop.f32.mrf.mxu0
      %v6905 = vadd.f32 0.0, %v6904
      %6906 = vmatmul.f32.gmra.mxu0 %v6783
      %v6907 = vpop.f32.mrf.mxu0
      %v6908 = vadd.f32 0.0, %v6907
      %6909 = vmatmul.f32.gmra.mxu0 %v6786
      %v6910 = vpop.f32.mrf.mxu0
      %v6911 = vadd.f32 0.0, %v6910
      %6912 = vmatmul.f32.gmra.mxu0 %v6789
      %v6913 = vpop.f32.mrf.mxu0
      %v6914 = vadd.f32 0.0, %v6913
      %6915 = vmatmul.f32.gmra.mxu0 %v6792
      %v6916 = vpop.f32.mrf.mxu0
      %v6917 = vadd.f32 0.0, %v6916
      %6918 = vdwg.mxu0
      %v6920 = vsel %vm272, %v6556, 0
      %v6923 = vsel %vm272, %v6557, 0
      %6925 = vmatpush.msra.mxu0 0.0
      %6926 = vmatpush.msra.mxu0 0.0
      %6927 = vmatpush.msra.mxu0 0.0
      %6928 = vmatpush.msra.mxu0 0.0
      %6929 = vmatpush.msra.mxu0 0.0
      %6930 = vmatpush.msra.mxu0 0.0
      %6931 = vmatpush.msra.mxu0 0.0
      %6932 = vmatpush.msra.mxu0 0.0
      %6933 = vmatpush.msra.mxu0 0.0
      %6934 = vmatpush.msra.mxu0 0.0
      %6935 = vmatpush.msra.mxu0 0.0
      %6936 = vmatpush.msra.mxu0 0.0
      %6937 = vmatpush.msra.mxu0 %v6596
      %6938 = vmatpush.msra.mxu0 %v6595
      %6939 = vmatpush.msra.mxu0 %v6594
      %6940 = vmatpush.msra.mxu0 %v6593
      %6941 = vmatmul.f32.gmra.mxu0 %v6920
      %v6942 = vpop.f32.mrf.mxu0
      %v6943 = vadd.f32 %v6812, %v6942
      %6944 = vmatmul.f32.gmra.mxu0 %v6923
      %v6945 = vpop.f32.mrf.mxu0
      %v6946 = vadd.f32 %v6815, %v6945
      %6947 = vmatmul.f32.gmra.mxu0 %v6687
      %v6948 = vpop.f32.mrf.mxu0
      %v6949 = vadd.f32 %v6818, %v6948
      %6950 = vmatmul.f32.gmra.mxu0 %v6690
      %v6951 = vpop.f32.mrf.mxu0
      %v6952 = vadd.f32 %v6821, %v6951
      %6953 = vmatmul.f32.gmra.mxu0 %v6693
      %v6954 = vpop.f32.mrf.mxu0
      %v6955 = vadd.f32 %v6824, %v6954
      %6956 = vmatmul.f32.gmra.mxu0 %v6696
      %v6957 = vpop.f32.mrf.mxu0
      %v6958 = vadd.f32 %v6827, %v6957
      %6959 = vmatmul.f32.gmra.mxu0 %v6699
      %v6960 = vpop.f32.mrf.mxu0
      %v6961 = vadd.f32 %v6830, %v6960
      %6962 = vmatmul.f32.gmra.mxu0 %v6702
      %v6963 = vpop.f32.mrf.mxu0
      %v6964 = vadd.f32 %v6833, %v6963
      %6965 = vmatmul.f32.gmra.mxu0 %v6705
      %v6966 = vpop.f32.mrf.mxu0
      %v6967 = vadd.f32 %v6836, %v6966
      %6968 = vmatmul.f32.gmra.mxu0 %v6708
      %v6969 = vpop.f32.mrf.mxu0
      %v6970 = vadd.f32 %v6839, %v6969
      %6971 = vmatmul.f32.gmra.mxu0 %v6711
      %v6972 = vpop.f32.mrf.mxu0
      %v6973 = vadd.f32 %v6842, %v6972
      %6974 = vmatmul.f32.gmra.mxu0 %v6714
      %v6975 = vpop.f32.mrf.mxu0
      %v6976 = vadd.f32 %v6845, %v6975
      %6977 = vmatmul.f32.gmra.mxu0 %v6717
      %v6978 = vpop.f32.mrf.mxu0
      %v6979 = vadd.f32 %v6848, %v6978
      %6980 = vmatmul.f32.gmra.mxu0 %v6720
      %v6981 = vpop.f32.mrf.mxu0
      %v6982 = vadd.f32 %v6851, %v6981
      %6983 = vmatmul.f32.gmra.mxu0 %v6723
      %v6984 = vpop.f32.mrf.mxu0
      %v6985 = vadd.f32 %v6854, %v6984
      %6986 = vmatmul.f32.gmra.mxu0 %v6726
      %v6987 = vpop.f32.mrf.mxu0
      %v6988 = vadd.f32 %v6857, %v6987
      %6989 = vmatmul.f32.gmra.mxu0 %v6729
      %v6990 = vpop.f32.mrf.mxu0
      %v6991 = vadd.f32 %v6860, %v6990
      %6992 = vmatmul.f32.gmra.mxu0 %v6732
      %v6993 = vpop.f32.mrf.mxu0
      %v6994 = vadd.f32 %v6863, %v6993
      %6995 = vmatmul.f32.gmra.mxu0 %v6735
      %v6996 = vpop.f32.mrf.mxu0
      %v6997 = vadd.f32 %v6866, %v6996
      %6998 = vmatmul.f32.gmra.mxu0 %v6738
      %v6999 = vpop.f32.mrf.mxu0
      %v7000 = vadd.f32 %v6869, %v6999
      %7001 = vmatmul.f32.gmra.mxu0 %v6741
      %v7002 = vpop.f32.mrf.mxu0
      %v7003 = vadd.f32 %v6872, %v7002
      %7004 = vmatmul.f32.gmra.mxu0 %v6744
      %v7005 = vpop.f32.mrf.mxu0
      %v7006 = vadd.f32 %v6875, %v7005
      %7007 = vmatmul.f32.gmra.mxu0 %v6747
      %v7008 = vpop.f32.mrf.mxu0
      %v7009 = vadd.f32 %v6878, %v7008
      %7010 = vmatmul.f32.gmra.mxu0 %v6750
      %v7011 = vpop.f32.mrf.mxu0
      %v7012 = vadd.f32 %v6881, %v7011
      %7013 = vmatmul.f32.gmra.mxu0 %v6753
      %v7014 = vpop.f32.mrf.mxu0
      %v7015 = vadd.f32 %v6884, %v7014
      %7016 = vmatmul.f32.gmra.mxu0 %v6756
      %v7017 = vpop.f32.mrf.mxu0
      %v7018 = vadd.f32 %v6887, %v7017
      %7019 = vmatmul.f32.gmra.mxu0 %v6759
      %v7020 = vpop.f32.mrf.mxu0
      %v7021 = vadd.f32 %v6890, %v7020
      %7022 = vmatmul.f32.gmra.mxu0 %v6762
      %v7023 = vpop.f32.mrf.mxu0
      %v7024 = vadd.f32 %v6893, %v7023
      %7025 = vmatmul.f32.gmra.mxu0 %v6765
      %v7026 = vpop.f32.mrf.mxu0
      %v7027 = vadd.f32 %v6896, %v7026
      %7028 = vmatmul.f32.gmra.mxu0 %v6768
      %v7029 = vpop.f32.mrf.mxu0
      %v7030 = vadd.f32 %v6899, %v7029
      %7031 = vmatmul.f32.gmra.mxu0 %v6771
      %v7032 = vpop.f32.mrf.mxu0
      %v7033 = vadd.f32 %v6902, %v7032
      %7034 = vmatmul.f32.gmra.mxu0 %v6774
      %v7035 = vpop.f32.mrf.mxu0
      %v7036 = vadd.f32 %v6905, %v7035
      %7037 = vmatmul.f32.gmra.mxu0 %v6777
      %v7038 = vpop.f32.mrf.mxu0
      %v7039 = vadd.f32 %v6908, %v7038
      %7040 = vmatmul.f32.gmra.mxu0 %v6780
      %v7041 = vpop.f32.mrf.mxu0
      %v7042 = vadd.f32 %v6911, %v7041
      %7043 = vmatmul.f32.gmra.mxu0 %v6783
      %v7044 = vpop.f32.mrf.mxu0
      %v7045 = vadd.f32 %v6914, %v7044
      %7046 = vmatmul.f32.gmra.mxu0 %v6786
      %v7047 = vpop.f32.mrf.mxu0
      %v7048 = vadd.f32 %v6917, %v7047
      %7049 = vdwg.mxu0
      %v7050 = vld [vmem:[#allocation4 + $0x20] sm:$0xff]
      %v7051 = vld [vmem:[#allocation4 + $0x28] sm:$0xff]
      %v7052 = vld [vmem:[#allocation4 + $0x30] sm:$0xff]
      %v7053 = vld [vmem:[#allocation4 + $0x38] sm:$0xff]
      %v7054 = vld [vmem:[#allocation4 + $0x40] sm:$0xff]
      %v7055 = vld [vmem:[#allocation4 + $0x48] sm:$0xff]
      %v7056 = vld [vmem:[#allocation4 + $0x50] sm:$0xff]
      %v7057 = vld [vmem:[#allocation4 + $0x58] sm:$0xff]
      %v7058 = vld [vmem:[#allocation4 + $0x60] sm:$0xff]
      %v7059 = vld [vmem:[#allocation4 + $0x68] sm:$0xff]
      %v7060 = vld [vmem:[#allocation4 + $0x70] sm:$0xff]
      %v7061 = vld [vmem:[#allocation4 + $0x78] sm:$0xff]
      %v7062 = vld [vmem:[#allocation4 + $0x80] sm:$0xff]
      %v7063 = vld [vmem:[#allocation4 + $0x88] sm:$0xff]
      %v7064 = vld [vmem:[#allocation4 + $0x90] sm:$0xff]
      %v7065 = vld [vmem:[#allocation4 + $0x98] sm:$0xff]
      %v7066 = vld [vmem:[#allocation4 + $0xa0] sm:$0xff]
      %v7067 = vld [vmem:[#allocation4 + $0xa8] sm:$0xff]
      %v7068 = vld [vmem:[#allocation4 + $0xb0] sm:$0xff]
      %v7069 = vld [vmem:[#allocation4 + $0xb8] sm:$0xff]
      %v7070 = vld [vmem:[#allocation4 + $0xc0] sm:$0xff]
      %v7071 = vld [vmem:[#allocation4 + $0xc8] sm:$0xff]
      %v7072 = vld [vmem:[#allocation4 + $0xd0] sm:$0xff]
      %v7073 = vld [vmem:[#allocation4 + $0xd8] sm:$0xff]
      %v7074 = vld [vmem:[#allocation4 + $0xe0] sm:$0xff]
      %v7075 = vld [vmem:[#allocation4 + $0xe8] sm:$0xff]
      %v7076 = vld [vmem:[#allocation4 + $0xf0] sm:$0xff]
      %v7077 = vld [vmem:[#allocation4 + $0xf8] sm:$0xff]
      %v7078 = vld [vmem:[#allocation4 + $0x100] sm:$0xff]
      %v7079 = vld [vmem:[#allocation4 + $0x108] sm:$0xff]
      %v7080 = vld [vmem:[#allocation4 + $0x110] sm:$0xff]
      %v7081 = vld [vmem:[#allocation4 + $0x118] sm:$0xff]
      %v7082 = vld [vmem:[#allocation4 + $0x120] sm:$0xff]
      %v7083 = vld [vmem:[#allocation4 + $0x128] sm:$0xff]
      %v7084 = vld [vmem:[#allocation4 + $0x130] sm:$0xff]
      %v7085 = vld [vmem:[#allocation4 + $0x138] sm:$0xff]
      %s7086 = scalar_lea.vmem %s4, 416
      %v7087 = vld [vmem:[%s7086] sm:$0xff]
      %v7088 = vld [vmem:[%s7086 + $0x8] sm:$0xff]
      %v7089 = vld [vmem:[%s7086 + $0x10] sm:$0xff]
      %v7090 = vld [vmem:[%s7086 + $0x18] sm:$0xff]
      %v7092 = vsel %vm272, %v7050, 0
      %v7095 = vsel %vm272, %v7051, 0
      %v7098 = vsel %vm272, %v7052, 0
      %v7101 = vsel %vm272, %v7053, 0
      %v7104 = vsel %vm272, %v7054, 0
      %v7107 = vsel %vm272, %v7055, 0
      %v7110 = vsel %vm272, %v7056, 0
      %v7113 = vsel %vm272, %v7057, 0
      %v7116 = vsel %vm272, %v7058, 0
      %v7119 = vsel %vm272, %v7059, 0
      %v7122 = vsel %vm272, %v7060, 0
      %v7125 = vsel %vm272, %v7061, 0
      %v7128 = vsel %vm272, %v7062, 0
      %v7131 = vsel %vm272, %v7063, 0
      %v7134 = vsel %vm272, %v7064, 0
      %v7137 = vsel %vm272, %v7065, 0
      %v7140 = vsel %vm272, %v7066, 0
      %v7143 = vsel %vm272, %v7067, 0
      %v7146 = vsel %vm272, %v7068, 0
      %v7149 = vsel %vm272, %v7069, 0
      %v7152 = vsel %vm272, %v7070, 0
      %v7155 = vsel %vm272, %v7071, 0
      %v7158 = vsel %vm272, %v7072, 0
      %v7161 = vsel %vm272, %v7073, 0
      %v7164 = vsel %vm272, %v7074, 0
      %v7167 = vsel %vm272, %v7075, 0
      %v7170 = vsel %vm272, %v7076, 0
      %v7173 = vsel %vm272, %v7077, 0
      %v7176 = vsel %vm272, %v7078, 0
      %v7179 = vsel %vm272, %v7079, 0
      %v7182 = vsel %vm272, %v7080, 0
      %v7185 = vsel %vm272, %v7081, 0
      %v7188 = vsel %vm272, %v7082, 0
      %v7191 = vsel %vm272, %v7083, 0
      %v7194 = vsel %vm272, %v7084, 0
      %v7197 = vsel %vm272, %v7085, 0
      %7199 = vmatpush.msra.mxu0 0.0
      %7200 = vmatpush.msra.mxu0 0.0
      %7201 = vmatpush.msra.mxu0 0.0
      %7202 = vmatpush.msra.mxu0 0.0
      %7203 = vmatpush.msra.mxu0 0.0
      %7204 = vmatpush.msra.mxu0 0.0
      %7205 = vmatpush.msra.mxu0 0.0
      %7206 = vmatpush.msra.mxu0 0.0
      %7207 = vmatpush.msra.mxu0 0.0
      %7208 = vmatpush.msra.mxu0 0.0
      %7209 = vmatpush.msra.mxu0 0.0
      %7210 = vmatpush.msra.mxu0 0.0
      %7211 = vmatpush.msra.mxu0 %v7090
      %7212 = vmatpush.msra.mxu0 %v7089
      %7213 = vmatpush.msra.mxu0 %v7088
      %7214 = vmatpush.msra.mxu0 %v7087
      %7215 = vmatmul.f32.gmra.mxu0 %v7092
      %v7216 = vpop.f32.mrf.mxu0
      %v7217 = vadd.f32 0.0, %v7216
      %7218 = vmatmul.f32.gmra.mxu0 %v7095
      %v7219 = vpop.f32.mrf.mxu0
      %v7220 = vadd.f32 0.0, %v7219
      %7221 = vmatmul.f32.gmra.mxu0 %v7098
      %v7222 = vpop.f32.mrf.mxu0
      %v7223 = vadd.f32 0.0, %v7222
      %7224 = vmatmul.f32.gmra.mxu0 %v7101
      %v7225 = vpop.f32.mrf.mxu0
      %v7226 = vadd.f32 0.0, %v7225
      %7227 = vmatmul.f32.gmra.mxu0 %v7104
      %v7228 = vpop.f32.mrf.mxu0
      %v7229 = vadd.f32 0.0, %v7228
      %7230 = vmatmul.f32.gmra.mxu0 %v7107
      %v7231 = vpop.f32.mrf.mxu0
      %v7232 = vadd.f32 0.0, %v7231
      %7233 = vmatmul.f32.gmra.mxu0 %v7110
      %v7234 = vpop.f32.mrf.mxu0
      %v7235 = vadd.f32 0.0, %v7234
      %7236 = vmatmul.f32.gmra.mxu0 %v7113
      %v7237 = vpop.f32.mrf.mxu0
      %v7238 = vadd.f32 0.0, %v7237
      %7239 = vmatmul.f32.gmra.mxu0 %v7116
      %v7240 = vpop.f32.mrf.mxu0
      %v7241 = vadd.f32 0.0, %v7240
      %7242 = vmatmul.f32.gmra.mxu0 %v7119
      %v7243 = vpop.f32.mrf.mxu0
      %v7244 = vadd.f32 0.0, %v7243
      %7245 = vmatmul.f32.gmra.mxu0 %v7122
      %v7246 = vpop.f32.mrf.mxu0
      %v7247 = vadd.f32 0.0, %v7246
      %7248 = vmatmul.f32.gmra.mxu0 %v7125
      %v7249 = vpop.f32.mrf.mxu0
      %v7250 = vadd.f32 0.0, %v7249
      %7251 = vmatmul.f32.gmra.mxu0 %v7128
      %v7252 = vpop.f32.mrf.mxu0
      %v7253 = vadd.f32 0.0, %v7252
      %7254 = vmatmul.f32.gmra.mxu0 %v7131
      %v7255 = vpop.f32.mrf.mxu0
      %v7256 = vadd.f32 0.0, %v7255
      %7257 = vmatmul.f32.gmra.mxu0 %v7134
      %v7258 = vpop.f32.mrf.mxu0
      %v7259 = vadd.f32 0.0, %v7258
      %7260 = vmatmul.f32.gmra.mxu0 %v7137
      %v7261 = vpop.f32.mrf.mxu0
      %v7262 = vadd.f32 0.0, %v7261
      %7263 = vmatmul.f32.gmra.mxu0 %v7140
      %v7264 = vpop.f32.mrf.mxu0
      %v7265 = vadd.f32 0.0, %v7264
      %7266 = vmatmul.f32.gmra.mxu0 %v7143
      %v7267 = vpop.f32.mrf.mxu0
      %v7268 = vadd.f32 0.0, %v7267
      %7269 = vmatmul.f32.gmra.mxu0 %v7146
      %v7270 = vpop.f32.mrf.mxu0
      %v7271 = vadd.f32 0.0, %v7270
      %7272 = vmatmul.f32.gmra.mxu0 %v7149
      %v7273 = vpop.f32.mrf.mxu0
      %v7274 = vadd.f32 0.0, %v7273
      %7275 = vmatmul.f32.gmra.mxu0 %v7152
      %v7276 = vpop.f32.mrf.mxu0
      %v7277 = vadd.f32 0.0, %v7276
      %7278 = vmatmul.f32.gmra.mxu0 %v7155
      %v7279 = vpop.f32.mrf.mxu0
      %v7280 = vadd.f32 0.0, %v7279
      %7281 = vmatmul.f32.gmra.mxu0 %v7158
      %v7282 = vpop.f32.mrf.mxu0
      %v7283 = vadd.f32 0.0, %v7282
      %7284 = vmatmul.f32.gmra.mxu0 %v7161
      %v7285 = vpop.f32.mrf.mxu0
      %v7286 = vadd.f32 0.0, %v7285
      %7287 = vmatmul.f32.gmra.mxu0 %v7164
      %v7288 = vpop.f32.mrf.mxu0
      %v7289 = vadd.f32 0.0, %v7288
      %7290 = vmatmul.f32.gmra.mxu0 %v7167
      %v7291 = vpop.f32.mrf.mxu0
      %v7292 = vadd.f32 0.0, %v7291
      %7293 = vmatmul.f32.gmra.mxu0 %v7170
      %v7294 = vpop.f32.mrf.mxu0
      %v7295 = vadd.f32 0.0, %v7294
      %7296 = vmatmul.f32.gmra.mxu0 %v7173
      %v7297 = vpop.f32.mrf.mxu0
      %v7298 = vadd.f32 0.0, %v7297
      %7299 = vmatmul.f32.gmra.mxu0 %v7176
      %v7300 = vpop.f32.mrf.mxu0
      %v7301 = vadd.f32 0.0, %v7300
      %7302 = vmatmul.f32.gmra.mxu0 %v7179
      %v7303 = vpop.f32.mrf.mxu0
      %v7304 = vadd.f32 0.0, %v7303
      %7305 = vmatmul.f32.gmra.mxu0 %v7182
      %v7306 = vpop.f32.mrf.mxu0
      %v7307 = vadd.f32 0.0, %v7306
      %7308 = vmatmul.f32.gmra.mxu0 %v7185
      %v7309 = vpop.f32.mrf.mxu0
      %v7310 = vadd.f32 0.0, %v7309
      %7311 = vmatmul.f32.gmra.mxu0 %v7188
      %v7312 = vpop.f32.mrf.mxu0
      %v7313 = vadd.f32 0.0, %v7312
      %7314 = vmatmul.f32.gmra.mxu0 %v7191
      %v7315 = vpop.f32.mrf.mxu0
      %v7316 = vadd.f32 0.0, %v7315
      %7317 = vmatmul.f32.gmra.mxu0 %v7194
      %v7318 = vpop.f32.mrf.mxu0
      %v7319 = vadd.f32 0.0, %v7318
      %7320 = vmatmul.f32.gmra.mxu0 %v7197
      %v7321 = vpop.f32.mrf.mxu0
      %v7322 = vadd.f32 0.0, %v7321
      %7323 = vdwg.mxu0
      %v7325 = vsel %vm272, %v6597, 0
      %v7328 = vsel %vm272, %v6598, 0
      %v7331 = vsel %vm272, %v6599, 0
      %v7334 = vsel %vm272, %v6600, 0
      %v7337 = vsel %vm272, %v6601, 0
      %v7340 = vsel %vm272, %v6602, 0
      %v7343 = vsel %vm272, %v6603, 0
      %v7346 = vsel %vm272, %v6604, 0
      %v7349 = vsel %vm272, %v6605, 0
      %v7352 = vsel %vm272, %v6606, 0
      %v7355 = vsel %vm272, %v6607, 0
      %v7358 = vsel %vm272, %v6608, 0
      %v7361 = vsel %vm272, %v6609, 0
      %v7364 = vsel %vm272, %v6610, 0
      %v7367 = vsel %vm272, %v6611, 0
      %v7370 = vsel %vm272, %v6612, 0
      %v7373 = vsel %vm272, %v6613, 0
      %v7376 = vsel %vm272, %v6614, 0
      %v7379 = vsel %vm272, %v6615, 0
      %v7382 = vsel %vm272, %v6616, 0
      %v7385 = vsel %vm272, %v6617, 0
      %v7388 = vsel %vm272, %v6618, 0
      %v7391 = vsel %vm272, %v6619, 0
      %v7394 = vsel %vm272, %v6620, 0
      %v7397 = vsel %vm272, %v6621, 0
      %v7400 = vsel %vm272, %v6622, 0
      %v7403 = vsel %vm272, %v6623, 0
      %v7406 = vsel %vm272, %v6624, 0
      %v7409 = vsel %vm272, %v6625, 0
      %v7412 = vsel %vm272, %v6626, 0
      %v7415 = vsel %vm272, %v6627, 0
      %v7418 = vsel %vm272, %v6628, 0
      %v7421 = vsel %vm272, %v6629, 0
      %v7424 = vsel %vm272, %v6630, 0
      %v7427 = vsel %vm272, %v6631, 0
      %v7430 = vsel %vm272, %v6632, 0
      %7432 = vmatpush.msra.mxu0 0.0
      %7433 = vmatpush.msra.mxu0 0.0
      %7434 = vmatpush.msra.mxu0 0.0
      %7435 = vmatpush.msra.mxu0 0.0
      %7436 = vmatpush.msra.mxu0 0.0
      %7437 = vmatpush.msra.mxu0 0.0
      %7438 = vmatpush.msra.mxu0 0.0
      %7439 = vmatpush.msra.mxu0 0.0
      %7440 = vmatpush.msra.mxu0 0.0
      %7441 = vmatpush.msra.mxu0 0.0
      %7442 = vmatpush.msra.mxu0 0.0
      %7443 = vmatpush.msra.mxu0 0.0
      %7444 = vmatpush.msra.mxu0 %v6637
      %7445 = vmatpush.msra.mxu0 %v6636
      %7446 = vmatpush.msra.mxu0 %v6635
      %7447 = vmatpush.msra.mxu0 %v6634
      %7448 = vmatmul.f32.gmra.mxu0 %v7325
      %v7449 = vpop.f32.mrf.mxu0
      %v7450 = vadd.f32 %v7217, %v7449
      %7451 = vmatmul.f32.gmra.mxu0 %v7328
      %v7452 = vpop.f32.mrf.mxu0
      %v7453 = vadd.f32 %v7220, %v7452
      %7454 = vmatmul.f32.gmra.mxu0 %v7331
      %v7455 = vpop.f32.mrf.mxu0
      %v7456 = vadd.f32 %v7223, %v7455
      %7457 = vmatmul.f32.gmra.mxu0 %v7334
      %v7458 = vpop.f32.mrf.mxu0
      %v7459 = vadd.f32 %v7226, %v7458
      %7460 = vmatmul.f32.gmra.mxu0 %v7337
      %v7461 = vpop.f32.mrf.mxu0
      %v7462 = vadd.f32 %v7229, %v7461
      %7463 = vmatmul.f32.gmra.mxu0 %v7340
      %v7464 = vpop.f32.mrf.mxu0
      %v7465 = vadd.f32 %v7232, %v7464
      %7466 = vmatmul.f32.gmra.mxu0 %v7343
      %v7467 = vpop.f32.mrf.mxu0
      %v7468 = vadd.f32 %v7235, %v7467
      %7469 = vmatmul.f32.gmra.mxu0 %v7346
      %v7470 = vpop.f32.mrf.mxu0
      %v7471 = vadd.f32 %v7238, %v7470
      %7472 = vmatmul.f32.gmra.mxu0 %v7349
      %v7473 = vpop.f32.mrf.mxu0
      %v7474 = vadd.f32 %v7241, %v7473
      %7475 = vmatmul.f32.gmra.mxu0 %v7352
      %v7476 = vpop.f32.mrf.mxu0
      %v7477 = vadd.f32 %v7244, %v7476
      %7478 = vmatmul.f32.gmra.mxu0 %v7355
      %v7479 = vpop.f32.mrf.mxu0
      %v7480 = vadd.f32 %v7247, %v7479
      %7481 = vmatmul.f32.gmra.mxu0 %v7358
      %v7482 = vpop.f32.mrf.mxu0
      %v7483 = vadd.f32 %v7250, %v7482
      %7484 = vmatmul.f32.gmra.mxu0 %v7361
      %v7485 = vpop.f32.mrf.mxu0
      %v7486 = vadd.f32 %v7253, %v7485
      %7487 = vmatmul.f32.gmra.mxu0 %v7364
      %v7488 = vpop.f32.mrf.mxu0
      %v7489 = vadd.f32 %v7256, %v7488
      %7490 = vmatmul.f32.gmra.mxu0 %v7367
      %v7491 = vpop.f32.mrf.mxu0
      %v7492 = vadd.f32 %v7259, %v7491
      %7493 = vmatmul.f32.gmra.mxu0 %v7370
      %v7494 = vpop.f32.mrf.mxu0
      %v7495 = vadd.f32 %v7262, %v7494
      %7496 = vmatmul.f32.gmra.mxu0 %v7373
      %v7497 = vpop.f32.mrf.mxu0
      %v7498 = vadd.f32 %v7265, %v7497
      %7499 = vmatmul.f32.gmra.mxu0 %v7376
      %v7500 = vpop.f32.mrf.mxu0
      %v7501 = vadd.f32 %v7268, %v7500
      %7502 = vmatmul.f32.gmra.mxu0 %v7379
      %v7503 = vpop.f32.mrf.mxu0
      %v7504 = vadd.f32 %v7271, %v7503
      %7505 = vmatmul.f32.gmra.mxu0 %v7382
      %v7506 = vpop.f32.mrf.mxu0
      %v7507 = vadd.f32 %v7274, %v7506
      %7508 = vmatmul.f32.gmra.mxu0 %v7385
      %v7509 = vpop.f32.mrf.mxu0
      %v7510 = vadd.f32 %v7277, %v7509
      %7511 = vmatmul.f32.gmra.mxu0 %v7388
      %v7512 = vpop.f32.mrf.mxu0
      %v7513 = vadd.f32 %v7280, %v7512
      %7514 = vmatmul.f32.gmra.mxu0 %v7391
      %v7515 = vpop.f32.mrf.mxu0
      %v7516 = vadd.f32 %v7283, %v7515
      %7517 = vmatmul.f32.gmra.mxu0 %v7394
      %v7518 = vpop.f32.mrf.mxu0
      %v7519 = vadd.f32 %v7286, %v7518
      %7520 = vmatmul.f32.gmra.mxu0 %v7397
      %v7521 = vpop.f32.mrf.mxu0
      %v7522 = vadd.f32 %v7289, %v7521
      %7523 = vmatmul.f32.gmra.mxu0 %v7400
      %v7524 = vpop.f32.mrf.mxu0
      %v7525 = vadd.f32 %v7292, %v7524
      %7526 = vmatmul.f32.gmra.mxu0 %v7403
      %v7527 = vpop.f32.mrf.mxu0
      %v7528 = vadd.f32 %v7295, %v7527
      %7529 = vmatmul.f32.gmra.mxu0 %v7406
      %v7530 = vpop.f32.mrf.mxu0
      %v7531 = vadd.f32 %v7298, %v7530
      %7532 = vmatmul.f32.gmra.mxu0 %v7409
      %v7533 = vpop.f32.mrf.mxu0
      %v7534 = vadd.f32 %v7301, %v7533
      %7535 = vmatmul.f32.gmra.mxu0 %v7412
      %v7536 = vpop.f32.mrf.mxu0
      %v7537 = vadd.f32 %v7304, %v7536
      %7538 = vmatmul.f32.gmra.mxu0 %v7415
      %v7539 = vpop.f32.mrf.mxu0
      %v7540 = vadd.f32 %v7307, %v7539
      %7541 = vmatmul.f32.gmra.mxu0 %v7418
      %v7542 = vpop.f32.mrf.mxu0
      %v7543 = vadd.f32 %v7310, %v7542
      %7544 = vmatmul.f32.gmra.mxu0 %v7421
      %v7545 = vpop.f32.mrf.mxu0
      %v7546 = vadd.f32 %v7313, %v7545
      %7547 = vmatmul.f32.gmra.mxu0 %v7424
      %v7548 = vpop.f32.mrf.mxu0
      %v7549 = vadd.f32 %v7316, %v7548
      %7550 = vmatmul.f32.gmra.mxu0 %v7427
      %v7551 = vpop.f32.mrf.mxu0
      %v7552 = vadd.f32 %v7319, %v7551
      %7553 = vmatmul.f32.gmra.mxu0 %v7430
      %v7554 = vpop.f32.mrf.mxu0
      %v7555 = vadd.f32 %v7322, %v7554
      %7556 = vdwg.mxu0
      %v7557 = vld [vmem:[#allocation4 + $0x21] sm:$0xff]
      %v7558 = vld [vmem:[#allocation4 + $0x29] sm:$0xff]
      %v7559 = vld [vmem:[#allocation4 + $0x31] sm:$0xff]
      %v7560 = vld [vmem:[#allocation4 + $0x39] sm:$0xff]
      %v7561 = vld [vmem:[#allocation4 + $0x41] sm:$0xff]
      %v7562 = vld [vmem:[#allocation4 + $0x49] sm:$0xff]
      %v7563 = vld [vmem:[#allocation4 + $0x51] sm:$0xff]
      %v7564 = vld [vmem:[#allocation4 + $0x59] sm:$0xff]
      %v7565 = vld [vmem:[#allocation4 + $0x61] sm:$0xff]
      %v7566 = vld [vmem:[#allocation4 + $0x69] sm:$0xff]
      %v7567 = vld [vmem:[#allocation4 + $0x71] sm:$0xff]
      %v7568 = vld [vmem:[#allocation4 + $0x79] sm:$0xff]
      %v7569 = vld [vmem:[#allocation4 + $0x81] sm:$0xff]
      %v7570 = vld [vmem:[#allocation4 + $0x89] sm:$0xff]
      %v7571 = vld [vmem:[#allocation4 + $0x91] sm:$0xff]
      %v7572 = vld [vmem:[#allocation4 + $0x99] sm:$0xff]
      %v7573 = vld [vmem:[#allocation4 + $0xa1] sm:$0xff]
      %v7574 = vld [vmem:[#allocation4 + $0xa9] sm:$0xff]
      %v7575 = vld [vmem:[#allocation4 + $0xb1] sm:$0xff]
      %v7576 = vld [vmem:[#allocation4 + $0xb9] sm:$0xff]
      %v7577 = vld [vmem:[#allocation4 + $0xc1] sm:$0xff]
      %v7578 = vld [vmem:[#allocation4 + $0xc9] sm:$0xff]
      %v7579 = vld [vmem:[#allocation4 + $0xd1] sm:$0xff]
      %v7580 = vld [vmem:[#allocation4 + $0xd9] sm:$0xff]
      %v7581 = vld [vmem:[#allocation4 + $0xe1] sm:$0xff]
      %v7582 = vld [vmem:[#allocation4 + $0xe9] sm:$0xff]
      %v7583 = vld [vmem:[#allocation4 + $0xf1] sm:$0xff]
      %v7584 = vld [vmem:[#allocation4 + $0xf9] sm:$0xff]
      %v7585 = vld [vmem:[#allocation4 + $0x101] sm:$0xff]
      %v7586 = vld [vmem:[#allocation4 + $0x109] sm:$0xff]
      %v7587 = vld [vmem:[#allocation4 + $0x111] sm:$0xff]
      %v7588 = vld [vmem:[#allocation4 + $0x119] sm:$0xff]
      %v7589 = vld [vmem:[#allocation4 + $0x121] sm:$0xff]
      %v7590 = vld [vmem:[#allocation4 + $0x129] sm:$0xff]
      %v7591 = vld [vmem:[#allocation4 + $0x131] sm:$0xff]
      %v7592 = vld [vmem:[#allocation4 + $0x139] sm:$0xff]
      %s7593 = scalar_lea.vmem %s4, 448
      %v7594 = vld [vmem:[%s7593] sm:$0xff]
      %v7595 = vld [vmem:[%s7593 + $0x8] sm:$0xff]
      %v7596 = vld [vmem:[%s7593 + $0x10] sm:$0xff]
      %v7597 = vld [vmem:[%s7593 + $0x18] sm:$0xff]
      %v7599 = vsel %vm272, %v7557, 0
      %v7602 = vsel %vm272, %v7558, 0
      %v7605 = vsel %vm272, %v7559, 0
      %v7608 = vsel %vm272, %v7560, 0
      %v7611 = vsel %vm272, %v7561, 0
      %v7614 = vsel %vm272, %v7562, 0
      %v7617 = vsel %vm272, %v7563, 0
      %v7620 = vsel %vm272, %v7564, 0
      %v7623 = vsel %vm272, %v7565, 0
      %v7626 = vsel %vm272, %v7566, 0
      %v7629 = vsel %vm272, %v7567, 0
      %v7632 = vsel %vm272, %v7568, 0
      %v7635 = vsel %vm272, %v7569, 0
      %v7638 = vsel %vm272, %v7570, 0
      %v7641 = vsel %vm272, %v7571, 0
      %v7644 = vsel %vm272, %v7572, 0
      %v7647 = vsel %vm272, %v7573, 0
      %v7650 = vsel %vm272, %v7574, 0
      %v7653 = vsel %vm272, %v7575, 0
      %v7656 = vsel %vm272, %v7576, 0
      %v7659 = vsel %vm272, %v7577, 0
      %v7662 = vsel %vm272, %v7578, 0
      %v7665 = vsel %vm272, %v7579, 0
      %v7668 = vsel %vm272, %v7580, 0
      %v7671 = vsel %vm272, %v7581, 0
      %v7674 = vsel %vm272, %v7582, 0
      %v7677 = vsel %vm272, %v7583, 0
      %v7680 = vsel %vm272, %v7584, 0
      %v7683 = vsel %vm272, %v7585, 0
      %v7686 = vsel %vm272, %v7586, 0
      %v7689 = vsel %vm272, %v7587, 0
      %v7692 = vsel %vm272, %v7588, 0
      %v7695 = vsel %vm272, %v7589, 0
      %v7698 = vsel %vm272, %v7590, 0
      %v7701 = vsel %vm272, %v7591, 0
      %v7704 = vsel %vm272, %v7592, 0
      %7706 = vmatpush.msra.mxu0 0.0
      %7707 = vmatpush.msra.mxu0 0.0
      %7708 = vmatpush.msra.mxu0 0.0
      %7709 = vmatpush.msra.mxu0 0.0
      %7710 = vmatpush.msra.mxu0 0.0
      %7711 = vmatpush.msra.mxu0 0.0
      %7712 = vmatpush.msra.mxu0 0.0
      %7713 = vmatpush.msra.mxu0 0.0
      %7714 = vmatpush.msra.mxu0 0.0
      %7715 = vmatpush.msra.mxu0 0.0
      %7716 = vmatpush.msra.mxu0 0.0
      %7717 = vmatpush.msra.mxu0 0.0
      %7718 = vmatpush.msra.mxu0 %v7597
      %7719 = vmatpush.msra.mxu0 %v7596
      %7720 = vmatpush.msra.mxu0 %v7595
      %7721 = vmatpush.msra.mxu0 %v7594
      %7722 = vmatmul.f32.gmra.mxu0 %v7599
      %v7723 = vpop.f32.mrf.mxu0
      %v7724 = vadd.f32 0.0, %v7723
      %7725 = vmatmul.f32.gmra.mxu0 %v7602
      %v7726 = vpop.f32.mrf.mxu0
      %v7727 = vadd.f32 0.0, %v7726
      %7728 = vmatmul.f32.gmra.mxu0 %v7605
      %v7729 = vpop.f32.mrf.mxu0
      %v7730 = vadd.f32 0.0, %v7729
      %7731 = vmatmul.f32.gmra.mxu0 %v7608
      %v7732 = vpop.f32.mrf.mxu0
      %v7733 = vadd.f32 0.0, %v7732
      %7734 = vmatmul.f32.gmra.mxu0 %v7611
      %v7735 = vpop.f32.mrf.mxu0
      %v7736 = vadd.f32 0.0, %v7735
      %7737 = vmatmul.f32.gmra.mxu0 %v7614
      %v7738 = vpop.f32.mrf.mxu0
      %v7739 = vadd.f32 0.0, %v7738
      %7740 = vmatmul.f32.gmra.mxu0 %v7617
      %v7741 = vpop.f32.mrf.mxu0
      %v7742 = vadd.f32 0.0, %v7741
      %7743 = vmatmul.f32.gmra.mxu0 %v7620
      %v7744 = vpop.f32.mrf.mxu0
      %v7745 = vadd.f32 0.0, %v7744
      %7746 = vmatmul.f32.gmra.mxu0 %v7623
      %v7747 = vpop.f32.mrf.mxu0
      %v7748 = vadd.f32 0.0, %v7747
      %7749 = vmatmul.f32.gmra.mxu0 %v7626
      %v7750 = vpop.f32.mrf.mxu0
      %v7751 = vadd.f32 0.0, %v7750
      %7752 = vmatmul.f32.gmra.mxu0 %v7629
      %v7753 = vpop.f32.mrf.mxu0
      %v7754 = vadd.f32 0.0, %v7753
      %7755 = vmatmul.f32.gmra.mxu0 %v7632
      %v7756 = vpop.f32.mrf.mxu0
      %v7757 = vadd.f32 0.0, %v7756
      %7758 = vmatmul.f32.gmra.mxu0 %v7635
      %v7759 = vpop.f32.mrf.mxu0
      %v7760 = vadd.f32 0.0, %v7759
      %7761 = vmatmul.f32.gmra.mxu0 %v7638
      %v7762 = vpop.f32.mrf.mxu0
      %v7763 = vadd.f32 0.0, %v7762
      %7764 = vmatmul.f32.gmra.mxu0 %v7641
      %v7765 = vpop.f32.mrf.mxu0
      %v7766 = vadd.f32 0.0, %v7765
      %7767 = vmatmul.f32.gmra.mxu0 %v7644
      %v7768 = vpop.f32.mrf.mxu0
      %v7769 = vadd.f32 0.0, %v7768
      %7770 = vmatmul.f32.gmra.mxu0 %v7647
      %v7771 = vpop.f32.mrf.mxu0
      %v7772 = vadd.f32 0.0, %v7771
      %7773 = vmatmul.f32.gmra.mxu0 %v7650
      %v7774 = vpop.f32.mrf.mxu0
      %v7775 = vadd.f32 0.0, %v7774
      %7776 = vmatmul.f32.gmra.mxu0 %v7653
      %v7777 = vpop.f32.mrf.mxu0
      %v7778 = vadd.f32 0.0, %v7777
      %7779 = vmatmul.f32.gmra.mxu0 %v7656
      %v7780 = vpop.f32.mrf.mxu0
      %v7781 = vadd.f32 0.0, %v7780
      %7782 = vmatmul.f32.gmra.mxu0 %v7659
      %v7783 = vpop.f32.mrf.mxu0
      %v7784 = vadd.f32 0.0, %v7783
      %7785 = vmatmul.f32.gmra.mxu0 %v7662
      %v7786 = vpop.f32.mrf.mxu0
      %v7787 = vadd.f32 0.0, %v7786
      %7788 = vmatmul.f32.gmra.mxu0 %v7665
      %v7789 = vpop.f32.mrf.mxu0
      %v7790 = vadd.f32 0.0, %v7789
      %7791 = vmatmul.f32.gmra.mxu0 %v7668
      %v7792 = vpop.f32.mrf.mxu0
      %v7793 = vadd.f32 0.0, %v7792
      %7794 = vmatmul.f32.gmra.mxu0 %v7671
      %v7795 = vpop.f32.mrf.mxu0
      %v7796 = vadd.f32 0.0, %v7795
      %7797 = vmatmul.f32.gmra.mxu0 %v7674
      %v7798 = vpop.f32.mrf.mxu0
      %v7799 = vadd.f32 0.0, %v7798
      %7800 = vmatmul.f32.gmra.mxu0 %v7677
      %v7801 = vpop.f32.mrf.mxu0
      %v7802 = vadd.f32 0.0, %v7801
      %7803 = vmatmul.f32.gmra.mxu0 %v7680
      %v7804 = vpop.f32.mrf.mxu0
      %v7805 = vadd.f32 0.0, %v7804
      %7806 = vmatmul.f32.gmra.mxu0 %v7683
      %v7807 = vpop.f32.mrf.mxu0
      %v7808 = vadd.f32 0.0, %v7807
      %7809 = vmatmul.f32.gmra.mxu0 %v7686
      %v7810 = vpop.f32.mrf.mxu0
      %v7811 = vadd.f32 0.0, %v7810
      %7812 = vmatmul.f32.gmra.mxu0 %v7689
      %v7813 = vpop.f32.mrf.mxu0
      %v7814 = vadd.f32 0.0, %v7813
      %7815 = vmatmul.f32.gmra.mxu0 %v7692
      %v7816 = vpop.f32.mrf.mxu0
      %v7817 = vadd.f32 0.0, %v7816
      %7818 = vmatmul.f32.gmra.mxu0 %v7695
      %v7819 = vpop.f32.mrf.mxu0
      %v7820 = vadd.f32 0.0, %v7819
      %7821 = vmatmul.f32.gmra.mxu0 %v7698
      %v7822 = vpop.f32.mrf.mxu0
      %v7823 = vadd.f32 0.0, %v7822
      %7824 = vmatmul.f32.gmra.mxu0 %v7701
      %v7825 = vpop.f32.mrf.mxu0
      %v7826 = vadd.f32 0.0, %v7825
      %7827 = vmatmul.f32.gmra.mxu0 %v7704
      %v7828 = vpop.f32.mrf.mxu0
      %v7829 = vadd.f32 0.0, %v7828
      %7830 = vdwg.mxu0
      %v7832 = vsel %vm272, %v6638, 0
      %v7835 = vsel %vm272, %v6639, 0
      %v7838 = vsel %vm272, %v6640, 0
      %v7841 = vsel %vm272, %v6641, 0
      %v7844 = vsel %vm272, %v6642, 0
      %v7847 = vsel %vm272, %v6643, 0
      %v7850 = vsel %vm272, %v6644, 0
      %v7853 = vsel %vm272, %v6645, 0
      %v7856 = vsel %vm272, %v6646, 0
      %v7859 = vsel %vm272, %v6647, 0
      %v7862 = vsel %vm272, %v6648, 0
      %v7865 = vsel %vm272, %v6649, 0
      %v7868 = vsel %vm272, %v6650, 0
      %v7871 = vsel %vm272, %v6651, 0
      %v7874 = vsel %vm272, %v6652, 0
      %v7877 = vsel %vm272, %v6653, 0
      %v7880 = vsel %vm272, %v6654, 0
      %v7883 = vsel %vm272, %v6655, 0
      %v7886 = vsel %vm272, %v6656, 0
      %v7889 = vsel %vm272, %v6657, 0
      %v7892 = vsel %vm272, %v6658, 0
      %v7895 = vsel %vm272, %v6659, 0
      %v7898 = vsel %vm272, %v6660, 0
      %v7901 = vsel %vm272, %v6661, 0
      %v7904 = vsel %vm272, %v6662, 0
      %v7907 = vsel %vm272, %v6663, 0
      %v7910 = vsel %vm272, %v6664, 0
      %v7913 = vsel %vm272, %v6665, 0
      %v7916 = vsel %vm272, %v6666, 0
      %v7919 = vsel %vm272, %v6667, 0
      %v7922 = vsel %vm272, %v6668, 0
      %v7925 = vsel %vm272, %v6669, 0
      %v7928 = vsel %vm272, %v6670, 0
      %v7931 = vsel %vm272, %v6671, 0
      %v7934 = vsel %vm272, %v6672, 0
      %v7937 = vsel %vm272, %v6673, 0
      %7939 = vmatpush.msra.mxu0 0.0
      %7940 = vmatpush.msra.mxu0 0.0
      %7941 = vmatpush.msra.mxu0 0.0
      %7942 = vmatpush.msra.mxu0 0.0
      %7943 = vmatpush.msra.mxu0 0.0
      %7944 = vmatpush.msra.mxu0 0.0
      %7945 = vmatpush.msra.mxu0 0.0
      %7946 = vmatpush.msra.mxu0 0.0
      %7947 = vmatpush.msra.mxu0 0.0
      %7948 = vmatpush.msra.mxu0 0.0
      %7949 = vmatpush.msra.mxu0 0.0
      %7950 = vmatpush.msra.mxu0 0.0
      %7951 = vmatpush.msra.mxu0 %v6678
      %7952 = vmatpush.msra.mxu0 %v6677
      %7953 = vmatpush.msra.mxu0 %v6676
      %7954 = vmatpush.msra.mxu0 %v6675
      %7955 = vmatmul.f32.gmra.mxu0 %v7832
      %v7956 = vpop.f32.mrf.mxu0
      %v7957 = vadd.f32 %v7724, %v7956
      %7958 = vmatmul.f32.gmra.mxu0 %v7835
      %v7959 = vpop.f32.mrf.mxu0
      %v7960 = vadd.f32 %v7727, %v7959
      %7961 = vmatmul.f32.gmra.mxu0 %v7838
      %v7962 = vpop.f32.mrf.mxu0
      %v7963 = vadd.f32 %v7730, %v7962
      %7964 = vmatmul.f32.gmra.mxu0 %v7841
      %v7965 = vpop.f32.mrf.mxu0
      %v7966 = vadd.f32 %v7733, %v7965
      %7967 = vmatmul.f32.gmra.mxu0 %v7844
      %v7968 = vpop.f32.mrf.mxu0
      %v7969 = vadd.f32 %v7736, %v7968
      %7970 = vmatmul.f32.gmra.mxu0 %v7847
      %v7971 = vpop.f32.mrf.mxu0
      %v7972 = vadd.f32 %v7739, %v7971
      %7973 = vmatmul.f32.gmra.mxu0 %v7850
      %v7974 = vpop.f32.mrf.mxu0
      %v7975 = vadd.f32 %v7742, %v7974
      %7976 = vmatmul.f32.gmra.mxu0 %v7853
      %v7977 = vpop.f32.mrf.mxu0
      %v7978 = vadd.f32 %v7745, %v7977
      %7979 = vmatmul.f32.gmra.mxu0 %v7856
      %v7980 = vpop.f32.mrf.mxu0
      %v7981 = vadd.f32 %v7748, %v7980
      %7982 = vmatmul.f32.gmra.mxu0 %v7859
      %v7983 = vpop.f32.mrf.mxu0
      %v7984 = vadd.f32 %v7751, %v7983
      %7985 = vmatmul.f32.gmra.mxu0 %v7862
      %v7986 = vpop.f32.mrf.mxu0
      %v7987 = vadd.f32 %v7754, %v7986
      %7988 = vmatmul.f32.gmra.mxu0 %v7865
      %v7989 = vpop.f32.mrf.mxu0
      %v7990 = vadd.f32 %v7757, %v7989
      %7991 = vmatmul.f32.gmra.mxu0 %v7868
      %v7992 = vpop.f32.mrf.mxu0
      %v7993 = vadd.f32 %v7760, %v7992
      %7994 = vmatmul.f32.gmra.mxu0 %v7871
      %v7995 = vpop.f32.mrf.mxu0
      %v7996 = vadd.f32 %v7763, %v7995
      %7997 = vmatmul.f32.gmra.mxu0 %v7874
      %v7998 = vpop.f32.mrf.mxu0
      %v7999 = vadd.f32 %v7766, %v7998
      %8000 = vmatmul.f32.gmra.mxu0 %v7877
      %v8001 = vpop.f32.mrf.mxu0
      %v8002 = vadd.f32 %v7769, %v8001
      %8003 = vmatmul.f32.gmra.mxu0 %v7880
      %v8004 = vpop.f32.mrf.mxu0
      %v8005 = vadd.f32 %v7772, %v8004
      %8006 = vmatmul.f32.gmra.mxu0 %v7883
      %v8007 = vpop.f32.mrf.mxu0
      %v8008 = vadd.f32 %v7775, %v8007
      %8009 = vmatmul.f32.gmra.mxu0 %v7886
      %v8010 = vpop.f32.mrf.mxu0
      %v8011 = vadd.f32 %v7778, %v8010
      %8012 = vmatmul.f32.gmra.mxu0 %v7889
      %v8013 = vpop.f32.mrf.mxu0
      %v8014 = vadd.f32 %v7781, %v8013
      %8015 = vmatmul.f32.gmra.mxu0 %v7892
      %v8016 = vpop.f32.mrf.mxu0
      %v8017 = vadd.f32 %v7784, %v8016
      %8018 = vmatmul.f32.gmra.mxu0 %v7895
      %v8019 = vpop.f32.mrf.mxu0
      %v8020 = vadd.f32 %v7787, %v8019
      %8021 = vmatmul.f32.gmra.mxu0 %v7898
      %v8022 = vpop.f32.mrf.mxu0
      %v8023 = vadd.f32 %v7790, %v8022
      %8024 = vmatmul.f32.gmra.mxu0 %v7901
      %v8025 = vpop.f32.mrf.mxu0
      %v8026 = vadd.f32 %v7793, %v8025
      %8027 = vmatmul.f32.gmra.mxu0 %v7904
      %v8028 = vpop.f32.mrf.mxu0
      %v8029 = vadd.f32 %v7796, %v8028
      %8030 = vmatmul.f32.gmra.mxu0 %v7907
      %v8031 = vpop.f32.mrf.mxu0
      %v8032 = vadd.f32 %v7799, %v8031
      %8033 = vmatmul.f32.gmra.mxu0 %v7910
      %v8034 = vpop.f32.mrf.mxu0
      %v8035 = vadd.f32 %v7802, %v8034
      %8036 = vmatmul.f32.gmra.mxu0 %v7913
      %v8037 = vpop.f32.mrf.mxu0
      %v8038 = vadd.f32 %v7805, %v8037
      %8039 = vmatmul.f32.gmra.mxu0 %v7916
      %v8040 = vpop.f32.mrf.mxu0
      %v8041 = vadd.f32 %v7808, %v8040
      %8042 = vmatmul.f32.gmra.mxu0 %v7919
      %v8043 = vpop.f32.mrf.mxu0
      %v8044 = vadd.f32 %v7811, %v8043
      %8045 = vmatmul.f32.gmra.mxu0 %v7922
      %v8046 = vpop.f32.mrf.mxu0
      %v8047 = vadd.f32 %v7814, %v8046
      %8048 = vmatmul.f32.gmra.mxu0 %v7925
      %v8049 = vpop.f32.mrf.mxu0
      %v8050 = vadd.f32 %v7817, %v8049
      %8051 = vmatmul.f32.gmra.mxu0 %v7928
      %v8052 = vpop.f32.mrf.mxu0
      %v8053 = vadd.f32 %v7820, %v8052
      %8054 = vmatmul.f32.gmra.mxu0 %v7931
      %v8055 = vpop.f32.mrf.mxu0
      %v8056 = vadd.f32 %v7823, %v8055
      %8057 = vmatmul.f32.gmra.mxu0 %v7934
      %v8058 = vpop.f32.mrf.mxu0
      %v8059 = vadd.f32 %v7826, %v8058
      %8060 = vmatmul.f32.gmra.mxu0 %v7937
      %v8061 = vpop.f32.mrf.mxu0
      %v8062 = vadd.f32 %v7829, %v8061
      %8063 = vdwg.mxu0
      %v8064 = vld [vmem:[#allocation4 + $0x2f] sm:$0xff]
      %v8065 = vld [vmem:[#allocation4 + $0x37] sm:$0xff]
      %v8066 = vld [vmem:[#allocation4 + $0x3f] sm:$0xff]
      %v8067 = vld [vmem:[#allocation4 + $0x47] sm:$0xff]
      %v8068 = vld [vmem:[#allocation4 + $0x4f] sm:$0xff]
      %v8069 = vld [vmem:[#allocation4 + $0x57] sm:$0xff]
      %v8070 = vld [vmem:[#allocation4 + $0x5f] sm:$0xff]
      %v8071 = vld [vmem:[#allocation4 + $0x67] sm:$0xff]
      %v8072 = vld [vmem:[#allocation4 + $0x6f] sm:$0xff]
      %v8073 = vld [vmem:[#allocation4 + $0x77] sm:$0xff]
      %v8074 = vld [vmem:[#allocation4 + $0x7f] sm:$0xff]
      %v8075 = vld [vmem:[#allocation4 + $0x87] sm:$0xff]
      %v8076 = vld [vmem:[#allocation4 + $0x8f] sm:$0xff]
      %v8077 = vld [vmem:[#allocation4 + $0x97] sm:$0xff]
      %v8078 = vld [vmem:[#allocation4 + $0x9f] sm:$0xff]
      %v8079 = vld [vmem:[#allocation4 + $0xa7] sm:$0xff]
      %v8080 = vld [vmem:[#allocation4 + $0xaf] sm:$0xff]
      %v8081 = vld [vmem:[#allocation4 + $0xb7] sm:$0xff]
      %v8082 = vld [vmem:[#allocation4 + $0xbf] sm:$0xff]
      %v8083 = vld [vmem:[#allocation4 + $0xc7] sm:$0xff]
      %v8084 = vld [vmem:[#allocation4 + $0xcf] sm:$0xff]
      %v8085 = vld [vmem:[#allocation4 + $0xd7] sm:$0xff]
      %v8086 = vld [vmem:[#allocation4 + $0xdf] sm:$0xff]
      %v8087 = vld [vmem:[#allocation4 + $0xe7] sm:$0xff]
      %v8088 = vld [vmem:[#allocation4 + $0xef] sm:$0xff]
      %v8089 = vld [vmem:[#allocation4 + $0xf7] sm:$0xff]
      %v8090 = vld [vmem:[#allocation4 + $0xff] sm:$0xff]
      %v8091 = vld [vmem:[#allocation4 + $0x107] sm:$0xff]
      %v8092 = vld [vmem:[#allocation4 + $0x10f] sm:$0xff]
      %v8093 = vld [vmem:[#allocation4 + $0x117] sm:$0xff]
      %v8094 = vld [vmem:[#allocation4 + $0x11f] sm:$0xff]
      %v8095 = vld [vmem:[#allocation4 + $0x127] sm:$0xff]
      %v8096 = vld [vmem:[#allocation4 + $0x12f] sm:$0xff]
      %v8097 = vld [vmem:[#allocation4 + $0x137] sm:$0xff]
      %v8098 = vld [vmem:[#allocation4 + $0x13f] sm:$0xff]
      %v8099 = vld [vmem:[#allocation4 + $0x147] sm:$0xff]
      %s8100 = scalar_lea.vmem %s4, 480
      %v8101 = vld [vmem:[%s8100] sm:$0xff]
      %v8102 = vld [vmem:[%s8100 + $0x8] sm:$0xff]
      %v8103 = vld [vmem:[%s8100 + $0x10] sm:$0xff]
      %v8104 = vld [vmem:[%s8100 + $0x18] sm:$0xff]
      %v8106 = vsel %vm272, %v8064, 0
      %v8109 = vsel %vm272, %v8065, 0
      %v8112 = vsel %vm272, %v8066, 0
      %v8115 = vsel %vm272, %v8067, 0
      %v8118 = vsel %vm272, %v8068, 0
      %v8121 = vsel %vm272, %v8069, 0
      %v8124 = vsel %vm272, %v8070, 0
      %v8127 = vsel %vm272, %v8071, 0
      %v8130 = vsel %vm272, %v8072, 0
      %v8133 = vsel %vm272, %v8073, 0
      %v8136 = vsel %vm272, %v8074, 0
      %v8139 = vsel %vm272, %v8075, 0
      %v8142 = vsel %vm272, %v8076, 0
      %v8145 = vsel %vm272, %v8077, 0
      %v8148 = vsel %vm272, %v8078, 0
      %v8151 = vsel %vm272, %v8079, 0
      %v8154 = vsel %vm272, %v8080, 0
      %v8157 = vsel %vm272, %v8081, 0
      %v8160 = vsel %vm272, %v8082, 0
      %v8163 = vsel %vm272, %v8083, 0
      %v8166 = vsel %vm272, %v8084, 0
      %v8169 = vsel %vm272, %v8085, 0
      %v8172 = vsel %vm272, %v8086, 0
      %v8175 = vsel %vm272, %v8087, 0
      %v8178 = vsel %vm272, %v8088, 0
      %v8181 = vsel %vm272, %v8089, 0
      %v8184 = vsel %vm272, %v8090, 0
      %v8187 = vsel %vm272, %v8091, 0
      %v8190 = vsel %vm272, %v8092, 0
      %v8193 = vsel %vm272, %v8093, 0
      %v8196 = vsel %vm272, %v8094, 0
      %v8199 = vsel %vm272, %v8095, 0
      %v8202 = vsel %vm272, %v8096, 0
      %v8205 = vsel %vm272, %v8097, 0
      %v8208 = vsel %vm272, %v8098, 0
      %v8211 = vsel %vm272, %v8099, 0
      %8213 = vmatpush.msra.mxu0 0.0
      %8214 = vmatpush.msra.mxu0 0.0
      %8215 = vmatpush.msra.mxu0 0.0
      %8216 = vmatpush.msra.mxu0 0.0
      %8217 = vmatpush.msra.mxu0 0.0
      %8218 = vmatpush.msra.mxu0 0.0
      %8219 = vmatpush.msra.mxu0 0.0
      %8220 = vmatpush.msra.mxu0 0.0
      %8221 = vmatpush.msra.mxu0 0.0
      %8222 = vmatpush.msra.mxu0 0.0
      %8223 = vmatpush.msra.mxu0 0.0
      %8224 = vmatpush.msra.mxu0 0.0
      %8225 = vmatpush.msra.mxu0 %v8104
      %8226 = vmatpush.msra.mxu0 %v8103
      %8227 = vmatpush.msra.mxu0 %v8102
      %8228 = vmatpush.msra.mxu0 %v8101
      %8229 = vmatmul.f32.gmra.mxu0 %v8106
      %v8230 = vpop.f32.mrf.mxu0
      %v8231 = vadd.f32 0.0, %v8230
      %8232 = vmatmul.f32.gmra.mxu0 %v8109
      %v8233 = vpop.f32.mrf.mxu0
      %v8234 = vadd.f32 0.0, %v8233
      %8235 = vmatmul.f32.gmra.mxu0 %v8112
      %v8236 = vpop.f32.mrf.mxu0
      %v8237 = vadd.f32 0.0, %v8236
      %8238 = vmatmul.f32.gmra.mxu0 %v8115
      %v8239 = vpop.f32.mrf.mxu0
      %v8240 = vadd.f32 0.0, %v8239
      %8241 = vmatmul.f32.gmra.mxu0 %v8118
      %v8242 = vpop.f32.mrf.mxu0
      %v8243 = vadd.f32 0.0, %v8242
      %8244 = vmatmul.f32.gmra.mxu0 %v8121
      %v8245 = vpop.f32.mrf.mxu0
      %v8246 = vadd.f32 0.0, %v8245
      %8247 = vmatmul.f32.gmra.mxu0 %v8124
      %v8248 = vpop.f32.mrf.mxu0
      %v8249 = vadd.f32 0.0, %v8248
      %8250 = vmatmul.f32.gmra.mxu0 %v8127
      %v8251 = vpop.f32.mrf.mxu0
      %v8252 = vadd.f32 0.0, %v8251
      %8253 = vmatmul.f32.gmra.mxu0 %v8130
      %v8254 = vpop.f32.mrf.mxu0
      %v8255 = vadd.f32 0.0, %v8254
      %8256 = vmatmul.f32.gmra.mxu0 %v8133
      %v8257 = vpop.f32.mrf.mxu0
      %v8258 = vadd.f32 0.0, %v8257
      %8259 = vmatmul.f32.gmra.mxu0 %v8136
      %v8260 = vpop.f32.mrf.mxu0
      %v8261 = vadd.f32 0.0, %v8260
      %8262 = vmatmul.f32.gmra.mxu0 %v8139
      %v8263 = vpop.f32.mrf.mxu0
      %v8264 = vadd.f32 0.0, %v8263
      %8265 = vmatmul.f32.gmra.mxu0 %v8142
      %v8266 = vpop.f32.mrf.mxu0
      %v8267 = vadd.f32 0.0, %v8266
      %8268 = vmatmul.f32.gmra.mxu0 %v8145
      %v8269 = vpop.f32.mrf.mxu0
      %v8270 = vadd.f32 0.0, %v8269
      %8271 = vmatmul.f32.gmra.mxu0 %v8148
      %v8272 = vpop.f32.mrf.mxu0
      %v8273 = vadd.f32 0.0, %v8272
      %8274 = vmatmul.f32.gmra.mxu0 %v8151
      %v8275 = vpop.f32.mrf.mxu0
      %v8276 = vadd.f32 0.0, %v8275
      %8277 = vmatmul.f32.gmra.mxu0 %v8154
      %v8278 = vpop.f32.mrf.mxu0
      %v8279 = vadd.f32 0.0, %v8278
      %8280 = vmatmul.f32.gmra.mxu0 %v8157
      %v8281 = vpop.f32.mrf.mxu0
      %v8282 = vadd.f32 0.0, %v8281
      %8283 = vmatmul.f32.gmra.mxu0 %v8160
      %v8284 = vpop.f32.mrf.mxu0
      %v8285 = vadd.f32 0.0, %v8284
      %8286 = vmatmul.f32.gmra.mxu0 %v8163
      %v8287 = vpop.f32.mrf.mxu0
      %v8288 = vadd.f32 0.0, %v8287
      %8289 = vmatmul.f32.gmra.mxu0 %v8166
      %v8290 = vpop.f32.mrf.mxu0
      %v8291 = vadd.f32 0.0, %v8290
      %8292 = vmatmul.f32.gmra.mxu0 %v8169
      %v8293 = vpop.f32.mrf.mxu0
      %v8294 = vadd.f32 0.0, %v8293
      %8295 = vmatmul.f32.gmra.mxu0 %v8172
      %v8296 = vpop.f32.mrf.mxu0
      %v8297 = vadd.f32 0.0, %v8296
      %8298 = vmatmul.f32.gmra.mxu0 %v8175
      %v8299 = vpop.f32.mrf.mxu0
      %v8300 = vadd.f32 0.0, %v8299
      %8301 = vmatmul.f32.gmra.mxu0 %v8178
      %v8302 = vpop.f32.mrf.mxu0
      %v8303 = vadd.f32 0.0, %v8302
      %8304 = vmatmul.f32.gmra.mxu0 %v8181
      %v8305 = vpop.f32.mrf.mxu0
      %v8306 = vadd.f32 0.0, %v8305
      %8307 = vmatmul.f32.gmra.mxu0 %v8184
      %v8308 = vpop.f32.mrf.mxu0
      %v8309 = vadd.f32 0.0, %v8308
      %8310 = vmatmul.f32.gmra.mxu0 %v8187
      %v8311 = vpop.f32.mrf.mxu0
      %v8312 = vadd.f32 0.0, %v8311
      %8313 = vmatmul.f32.gmra.mxu0 %v8190
      %v8314 = vpop.f32.mrf.mxu0
      %v8315 = vadd.f32 0.0, %v8314
      %8316 = vmatmul.f32.gmra.mxu0 %v8193
      %v8317 = vpop.f32.mrf.mxu0
      %v8318 = vadd.f32 0.0, %v8317
      %8319 = vmatmul.f32.gmra.mxu0 %v8196
      %v8320 = vpop.f32.mrf.mxu0
      %v8321 = vadd.f32 0.0, %v8320
      %8322 = vmatmul.f32.gmra.mxu0 %v8199
      %v8323 = vpop.f32.mrf.mxu0
      %v8324 = vadd.f32 0.0, %v8323
      %8325 = vmatmul.f32.gmra.mxu0 %v8202
      %v8326 = vpop.f32.mrf.mxu0
      %v8327 = vadd.f32 0.0, %v8326
      %8328 = vmatmul.f32.gmra.mxu0 %v8205
      %v8329 = vpop.f32.mrf.mxu0
      %v8330 = vadd.f32 0.0, %v8329
      %8331 = vmatmul.f32.gmra.mxu0 %v8208
      %v8332 = vpop.f32.mrf.mxu0
      %v8333 = vadd.f32 0.0, %v8332
      %8334 = vmatmul.f32.gmra.mxu0 %v8211
      %v8335 = vpop.f32.mrf.mxu0
      %v8336 = vadd.f32 0.0, %v8335
      %8337 = vdwg.mxu0
      %v8338 = vadd.f32 %v6943, %v8231
      %v8339 = vadd.f32 %v6946, %v8234
      %v8340 = vadd.f32 %v6949, %v8237
      %v8341 = vadd.f32 %v6952, %v8240
      %v8342 = vadd.f32 %v6955, %v8243
      %v8343 = vadd.f32 %v6958, %v8246
      %v8344 = vadd.f32 %v6961, %v8249
      %v8345 = vadd.f32 %v6964, %v8252
      %v8346 = vadd.f32 %v6967, %v8255
      %v8347 = vadd.f32 %v6970, %v8258
      %v8348 = vadd.f32 %v6973, %v8261
      %v8349 = vadd.f32 %v6976, %v8264
      %v8350 = vadd.f32 %v6979, %v8267
      %v8351 = vadd.f32 %v6982, %v8270
      %v8352 = vadd.f32 %v6985, %v8273
      %v8353 = vadd.f32 %v6988, %v8276
      %v8354 = vadd.f32 %v6991, %v8279
      %v8355 = vadd.f32 %v6994, %v8282
      %v8356 = vadd.f32 %v6997, %v8285
      %v8357 = vadd.f32 %v7000, %v8288
      %v8358 = vadd.f32 %v7003, %v8291
      %v8359 = vadd.f32 %v7006, %v8294
      %v8360 = vadd.f32 %v7009, %v8297
      %v8361 = vadd.f32 %v7012, %v8300
      %v8362 = vadd.f32 %v7015, %v8303
      %v8363 = vadd.f32 %v7018, %v8306
      %v8364 = vadd.f32 %v7021, %v8309
      %v8365 = vadd.f32 %v7024, %v8312
      %v8366 = vadd.f32 %v7027, %v8315
      %v8367 = vadd.f32 %v7030, %v8318
      %v8368 = vadd.f32 %v7033, %v8321
      %v8369 = vadd.f32 %v7036, %v8324
      %v8370 = vadd.f32 %v7039, %v8327
      %v8371 = vadd.f32 %v7042, %v8330
      %v8372 = vadd.f32 %v7045, %v8333
      %v8373 = vadd.f32 %v7048, %v8336
      %v8374 = vld [vmem:[#allocation4 + $0x30] sm:$0xff]
      %v8375 = vld [vmem:[#allocation4 + $0x38] sm:$0xff]
      %v8376 = vld [vmem:[#allocation4 + $0x40] sm:$0xff]
      %v8377 = vld [vmem:[#allocation4 + $0x48] sm:$0xff]
      %v8378 = vld [vmem:[#allocation4 + $0x50] sm:$0xff]
      %v8379 = vld [vmem:[#allocation4 + $0x58] sm:$0xff]
      %v8380 = vld [vmem:[#allocation4 + $0x60] sm:$0xff]
      %v8381 = vld [vmem:[#allocation4 + $0x68] sm:$0xff]
      %v8382 = vld [vmem:[#allocation4 + $0x70] sm:$0xff]
      %v8383 = vld [vmem:[#allocation4 + $0x78] sm:$0xff]
      %v8384 = vld [vmem:[#allocation4 + $0x80] sm:$0xff]
      %v8385 = vld [vmem:[#allocation4 + $0x88] sm:$0xff]
      %v8386 = vld [vmem:[#allocation4 + $0x90] sm:$0xff]
      %v8387 = vld [vmem:[#allocation4 + $0x98] sm:$0xff]
      %v8388 = vld [vmem:[#allocation4 + $0xa0] sm:$0xff]
      %v8389 = vld [vmem:[#allocation4 + $0xa8] sm:$0xff]
      %v8390 = vld [vmem:[#allocation4 + $0xb0] sm:$0xff]
      %v8391 = vld [vmem:[#allocation4 + $0xb8] sm:$0xff]
      %v8392 = vld [vmem:[#allocation4 + $0xc0] sm:$0xff]
      %v8393 = vld [vmem:[#allocation4 + $0xc8] sm:$0xff]
      %v8394 = vld [vmem:[#allocation4 + $0xd0] sm:$0xff]
      %v8395 = vld [vmem:[#allocation4 + $0xd8] sm:$0xff]
      %v8396 = vld [vmem:[#allocation4 + $0xe0] sm:$0xff]
      %v8397 = vld [vmem:[#allocation4 + $0xe8] sm:$0xff]
      %v8398 = vld [vmem:[#allocation4 + $0xf0] sm:$0xff]
      %v8399 = vld [vmem:[#allocation4 + $0xf8] sm:$0xff]
      %v8400 = vld [vmem:[#allocation4 + $0x100] sm:$0xff]
      %v8401 = vld [vmem:[#allocation4 + $0x108] sm:$0xff]
      %v8402 = vld [vmem:[#allocation4 + $0x110] sm:$0xff]
      %v8403 = vld [vmem:[#allocation4 + $0x118] sm:$0xff]
      %v8404 = vld [vmem:[#allocation4 + $0x120] sm:$0xff]
      %v8405 = vld [vmem:[#allocation4 + $0x128] sm:$0xff]
      %v8406 = vld [vmem:[#allocation4 + $0x130] sm:$0xff]
      %v8407 = vld [vmem:[#allocation4 + $0x138] sm:$0xff]
      %v8408 = vld [vmem:[#allocation4 + $0x140] sm:$0xff]
      %v8409 = vld [vmem:[#allocation4 + $0x148] sm:$0xff]
      %s8410 = scalar_lea.vmem %s4, 512
      %v8411 = vld [vmem:[%s8410] sm:$0xff]
      %v8412 = vld [vmem:[%s8410 + $0x8] sm:$0xff]
      %v8413 = vld [vmem:[%s8410 + $0x10] sm:$0xff]
      %v8414 = vld [vmem:[%s8410 + $0x18] sm:$0xff]
      %v8416 = vsel %vm272, %v8374, 0
      %v8419 = vsel %vm272, %v8375, 0
      %v8422 = vsel %vm272, %v8376, 0
      %v8425 = vsel %vm272, %v8377, 0
      %v8428 = vsel %vm272, %v8378, 0
      %v8431 = vsel %vm272, %v8379, 0
      %v8434 = vsel %vm272, %v8380, 0
      %v8437 = vsel %vm272, %v8381, 0
      %v8440 = vsel %vm272, %v8382, 0
      %v8443 = vsel %vm272, %v8383, 0
      %v8446 = vsel %vm272, %v8384, 0
      %v8449 = vsel %vm272, %v8385, 0
      %v8452 = vsel %vm272, %v8386, 0
      %v8455 = vsel %vm272, %v8387, 0
      %v8458 = vsel %vm272, %v8388, 0
      %v8461 = vsel %vm272, %v8389, 0
      %v8464 = vsel %vm272, %v8390, 0
      %v8467 = vsel %vm272, %v8391, 0
      %v8470 = vsel %vm272, %v8392, 0
      %v8473 = vsel %vm272, %v8393, 0
      %v8476 = vsel %vm272, %v8394, 0
      %v8479 = vsel %vm272, %v8395, 0
      %v8482 = vsel %vm272, %v8396, 0
      %v8485 = vsel %vm272, %v8397, 0
      %v8488 = vsel %vm272, %v8398, 0
      %v8491 = vsel %vm272, %v8399, 0
      %v8494 = vsel %vm272, %v8400, 0
      %v8497 = vsel %vm272, %v8401, 0
      %v8500 = vsel %vm272, %v8402, 0
      %v8503 = vsel %vm272, %v8403, 0
      %v8506 = vsel %vm272, %v8404, 0
      %v8509 = vsel %vm272, %v8405, 0
      %v8512 = vsel %vm272, %v8406, 0
      %v8515 = vsel %vm272, %v8407, 0
      %v8518 = vsel %vm272, %v8408, 0
      %v8521 = vsel %vm272, %v8409, 0
      %8523 = vmatpush.msra.mxu0 0.0
      %8524 = vmatpush.msra.mxu0 0.0
      %8525 = vmatpush.msra.mxu0 0.0
      %8526 = vmatpush.msra.mxu0 0.0
      %8527 = vmatpush.msra.mxu0 0.0
      %8528 = vmatpush.msra.mxu0 0.0
      %8529 = vmatpush.msra.mxu0 0.0
      %8530 = vmatpush.msra.mxu0 0.0
      %8531 = vmatpush.msra.mxu0 0.0
      %8532 = vmatpush.msra.mxu0 0.0
      %8533 = vmatpush.msra.mxu0 0.0
      %8534 = vmatpush.msra.mxu0 0.0
      %8535 = vmatpush.msra.mxu0 %v8414
      %8536 = vmatpush.msra.mxu0 %v8413
      %8537 = vmatpush.msra.mxu0 %v8412
      %8538 = vmatpush.msra.mxu0 %v8411
      %8539 = vmatmul.f32.gmra.mxu0 %v8416
      %v8540 = vpop.f32.mrf.mxu0
      %v8541 = vadd.f32 0.0, %v8540
      %8542 = vmatmul.f32.gmra.mxu0 %v8419
      %v8543 = vpop.f32.mrf.mxu0
      %v8544 = vadd.f32 0.0, %v8543
      %8545 = vmatmul.f32.gmra.mxu0 %v8422
      %v8546 = vpop.f32.mrf.mxu0
      %v8547 = vadd.f32 0.0, %v8546
      %8548 = vmatmul.f32.gmra.mxu0 %v8425
      %v8549 = vpop.f32.mrf.mxu0
      %v8550 = vadd.f32 0.0, %v8549
      %8551 = vmatmul.f32.gmra.mxu0 %v8428
      %v8552 = vpop.f32.mrf.mxu0
      %v8553 = vadd.f32 0.0, %v8552
      %8554 = vmatmul.f32.gmra.mxu0 %v8431
      %v8555 = vpop.f32.mrf.mxu0
      %v8556 = vadd.f32 0.0, %v8555
      %8557 = vmatmul.f32.gmra.mxu0 %v8434
      %v8558 = vpop.f32.mrf.mxu0
      %v8559 = vadd.f32 0.0, %v8558
      %8560 = vmatmul.f32.gmra.mxu0 %v8437
      %v8561 = vpop.f32.mrf.mxu0
      %v8562 = vadd.f32 0.0, %v8561
      %8563 = vmatmul.f32.gmra.mxu0 %v8440
      %v8564 = vpop.f32.mrf.mxu0
      %v8565 = vadd.f32 0.0, %v8564
      %8566 = vmatmul.f32.gmra.mxu0 %v8443
      %v8567 = vpop.f32.mrf.mxu0
      %v8568 = vadd.f32 0.0, %v8567
      %8569 = vmatmul.f32.gmra.mxu0 %v8446
      %v8570 = vpop.f32.mrf.mxu0
      %v8571 = vadd.f32 0.0, %v8570
      %8572 = vmatmul.f32.gmra.mxu0 %v8449
      %v8573 = vpop.f32.mrf.mxu0
      %v8574 = vadd.f32 0.0, %v8573
      %8575 = vmatmul.f32.gmra.mxu0 %v8452
      %v8576 = vpop.f32.mrf.mxu0
      %v8577 = vadd.f32 0.0, %v8576
      %8578 = vmatmul.f32.gmra.mxu0 %v8455
      %v8579 = vpop.f32.mrf.mxu0
      %v8580 = vadd.f32 0.0, %v8579
      %8581 = vmatmul.f32.gmra.mxu0 %v8458
      %v8582 = vpop.f32.mrf.mxu0
      %v8583 = vadd.f32 0.0, %v8582
      %8584 = vmatmul.f32.gmra.mxu0 %v8461
      %v8585 = vpop.f32.mrf.mxu0
      %v8586 = vadd.f32 0.0, %v8585
      %8587 = vmatmul.f32.gmra.mxu0 %v8464
      %v8588 = vpop.f32.mrf.mxu0
      %v8589 = vadd.f32 0.0, %v8588
      %8590 = vmatmul.f32.gmra.mxu0 %v8467
      %v8591 = vpop.f32.mrf.mxu0
      %v8592 = vadd.f32 0.0, %v8591
      %8593 = vmatmul.f32.gmra.mxu0 %v8470
      %v8594 = vpop.f32.mrf.mxu0
      %v8595 = vadd.f32 0.0, %v8594
      %8596 = vmatmul.f32.gmra.mxu0 %v8473
      %v8597 = vpop.f32.mrf.mxu0
      %v8598 = vadd.f32 0.0, %v8597
      %8599 = vmatmul.f32.gmra.mxu0 %v8476
      %v8600 = vpop.f32.mrf.mxu0
      %v8601 = vadd.f32 0.0, %v8600
      %8602 = vmatmul.f32.gmra.mxu0 %v8479
      %v8603 = vpop.f32.mrf.mxu0
      %v8604 = vadd.f32 0.0, %v8603
      %8605 = vmatmul.f32.gmra.mxu0 %v8482
      %v8606 = vpop.f32.mrf.mxu0
      %v8607 = vadd.f32 0.0, %v8606
      %8608 = vmatmul.f32.gmra.mxu0 %v8485
      %v8609 = vpop.f32.mrf.mxu0
      %v8610 = vadd.f32 0.0, %v8609
      %8611 = vmatmul.f32.gmra.mxu0 %v8488
      %v8612 = vpop.f32.mrf.mxu0
      %v8613 = vadd.f32 0.0, %v8612
      %8614 = vmatmul.f32.gmra.mxu0 %v8491
      %v8615 = vpop.f32.mrf.mxu0
      %v8616 = vadd.f32 0.0, %v8615
      %8617 = vmatmul.f32.gmra.mxu0 %v8494
      %v8618 = vpop.f32.mrf.mxu0
      %v8619 = vadd.f32 0.0, %v8618
      %8620 = vmatmul.f32.gmra.mxu0 %v8497
      %v8621 = vpop.f32.mrf.mxu0
      %v8622 = vadd.f32 0.0, %v8621
      %8623 = vmatmul.f32.gmra.mxu0 %v8500
      %v8624 = vpop.f32.mrf.mxu0
      %v8625 = vadd.f32 0.0, %v8624
      %8626 = vmatmul.f32.gmra.mxu0 %v8503
      %v8627 = vpop.f32.mrf.mxu0
      %v8628 = vadd.f32 0.0, %v8627
      %8629 = vmatmul.f32.gmra.mxu0 %v8506
      %v8630 = vpop.f32.mrf.mxu0
      %v8631 = vadd.f32 0.0, %v8630
      %8632 = vmatmul.f32.gmra.mxu0 %v8509
      %v8633 = vpop.f32.mrf.mxu0
      %v8634 = vadd.f32 0.0, %v8633
      %8635 = vmatmul.f32.gmra.mxu0 %v8512
      %v8636 = vpop.f32.mrf.mxu0
      %v8637 = vadd.f32 0.0, %v8636
      %8638 = vmatmul.f32.gmra.mxu0 %v8515
      %v8639 = vpop.f32.mrf.mxu0
      %v8640 = vadd.f32 0.0, %v8639
      %8641 = vmatmul.f32.gmra.mxu0 %v8518
      %v8642 = vpop.f32.mrf.mxu0
      %v8643 = vadd.f32 0.0, %v8642
      %8644 = vmatmul.f32.gmra.mxu0 %v8521
      %v8645 = vpop.f32.mrf.mxu0
      %v8646 = vadd.f32 0.0, %v8645
      %8647 = vdwg.mxu0
      %v8648 = vadd.f32 %v7450, %v8541
      %v8649 = vadd.f32 %v7453, %v8544
      %v8650 = vadd.f32 %v7456, %v8547
      %v8651 = vadd.f32 %v7459, %v8550
      %v8652 = vadd.f32 %v7462, %v8553
      %v8653 = vadd.f32 %v7465, %v8556
      %v8654 = vadd.f32 %v7468, %v8559
      %v8655 = vadd.f32 %v7471, %v8562
      %v8656 = vadd.f32 %v7474, %v8565
      %v8657 = vadd.f32 %v7477, %v8568
      %v8658 = vadd.f32 %v7480, %v8571
      %v8659 = vadd.f32 %v7483, %v8574
      %v8660 = vadd.f32 %v7486, %v8577
      %v8661 = vadd.f32 %v7489, %v8580
      %v8662 = vadd.f32 %v7492, %v8583
      %v8663 = vadd.f32 %v7495, %v8586
      %v8664 = vadd.f32 %v7498, %v8589
      %v8665 = vadd.f32 %v7501, %v8592
      %v8666 = vadd.f32 %v7504, %v8595
      %v8667 = vadd.f32 %v7507, %v8598
      %v8668 = vadd.f32 %v7510, %v8601
      %v8669 = vadd.f32 %v7513, %v8604
      %v8670 = vadd.f32 %v7516, %v8607
      %v8671 = vadd.f32 %v7519, %v8610
      %v8672 = vadd.f32 %v7522, %v8613
      %v8673 = vadd.f32 %v7525, %v8616
      %v8674 = vadd.f32 %v7528, %v8619
      %v8675 = vadd.f32 %v7531, %v8622
      %v8676 = vadd.f32 %v7534, %v8625
      %v8677 = vadd.f32 %v7537, %v8628
      %v8678 = vadd.f32 %v7540, %v8631
      %v8679 = vadd.f32 %v7543, %v8634
      %v8680 = vadd.f32 %v7546, %v8637
      %v8681 = vadd.f32 %v7549, %v8640
      %v8682 = vadd.f32 %v7552, %v8643
      %v8683 = vadd.f32 %v7555, %v8646
      %v8684 = vld [vmem:[#allocation4 + $0x31] sm:$0xff]
      %v8685 = vld [vmem:[#allocation4 + $0x39] sm:$0xff]
      %v8686 = vld [vmem:[#allocation4 + $0x41] sm:$0xff]
      %v8687 = vld [vmem:[#allocation4 + $0x49] sm:$0xff]
      %v8688 = vld [vmem:[#allocation4 + $0x51] sm:$0xff]
      %v8689 = vld [vmem:[#allocation4 + $0x59] sm:$0xff]
      %v8690 = vld [vmem:[#allocation4 + $0x61] sm:$0xff]
      %v8691 = vld [vmem:[#allocation4 + $0x69] sm:$0xff]
      %v8692 = vld [vmem:[#allocation4 + $0x71] sm:$0xff]
      %v8693 = vld [vmem:[#allocation4 + $0x79] sm:$0xff]
      %v8694 = vld [vmem:[#allocation4 + $0x81] sm:$0xff]
      %v8695 = vld [vmem:[#allocation4 + $0x89] sm:$0xff]
      %v8696 = vld [vmem:[#allocation4 + $0x91] sm:$0xff]
      %v8697 = vld [vmem:[#allocation4 + $0x99] sm:$0xff]
      %v8698 = vld [vmem:[#allocation4 + $0xa1] sm:$0xff]
      %v8699 = vld [vmem:[#allocation4 + $0xa9] sm:$0xff]
      %v8700 = vld [vmem:[#allocation4 + $0xb1] sm:$0xff]
      %v8701 = vld [vmem:[#allocation4 + $0xb9] sm:$0xff]
      %v8702 = vld [vmem:[#allocation4 + $0xc1] sm:$0xff]
      %v8703 = vld [vmem:[#allocation4 + $0xc9] sm:$0xff]
      %v8704 = vld [vmem:[#allocation4 + $0xd1] sm:$0xff]
      %v8705 = vld [vmem:[#allocation4 + $0xd9] sm:$0xff]
      %v8706 = vld [vmem:[#allocation4 + $0xe1] sm:$0xff]
      %v8707 = vld [vmem:[#allocation4 + $0xe9] sm:$0xff]
      %v8708 = vld [vmem:[#allocation4 + $0xf1] sm:$0xff]
      %v8709 = vld [vmem:[#allocation4 + $0xf9] sm:$0xff]
      %v8710 = vld [vmem:[#allocation4 + $0x101] sm:$0xff]
      %v8711 = vld [vmem:[#allocation4 + $0x109] sm:$0xff]
      %v8712 = vld [vmem:[#allocation4 + $0x111] sm:$0xff]
      %v8713 = vld [vmem:[#allocation4 + $0x119] sm:$0xff]
      %v8714 = vld [vmem:[#allocation4 + $0x121] sm:$0xff]
      %v8715 = vld [vmem:[#allocation4 + $0x129] sm:$0xff]
      %v8716 = vld [vmem:[#allocation4 + $0x131] sm:$0xff]
      %v8717 = vld [vmem:[#allocation4 + $0x139] sm:$0xff]
      %v8718 = vld [vmem:[#allocation4 + $0x141] sm:$0xff]
      %v8719 = vld [vmem:[#allocation4 + $0x149] sm:$0xff]
      %s8720 = scalar_lea.vmem %s4, 544
      %v8721 = vld [vmem:[%s8720] sm:$0xff]
      %v8722 = vld [vmem:[%s8720 + $0x8] sm:$0xff]
      %v8723 = vld [vmem:[%s8720 + $0x10] sm:$0xff]
      %v8724 = vld [vmem:[%s8720 + $0x18] sm:$0xff]
      %v8726 = vsel %vm272, %v8684, 0
      %v8729 = vsel %vm272, %v8685, 0
      %v8732 = vsel %vm272, %v8686, 0
      %v8735 = vsel %vm272, %v8687, 0
      %v8738 = vsel %vm272, %v8688, 0
      %v8741 = vsel %vm272, %v8689, 0
      %v8744 = vsel %vm272, %v8690, 0
      %v8747 = vsel %vm272, %v8691, 0
      %v8750 = vsel %vm272, %v8692, 0
      %v8753 = vsel %vm272, %v8693, 0
      %v8756 = vsel %vm272, %v8694, 0
      %v8759 = vsel %vm272, %v8695, 0
      %v8762 = vsel %vm272, %v8696, 0
      %v8765 = vsel %vm272, %v8697, 0
      %v8768 = vsel %vm272, %v8698, 0
      %v8771 = vsel %vm272, %v8699, 0
      %v8774 = vsel %vm272, %v8700, 0
      %v8777 = vsel %vm272, %v8701, 0
      %v8780 = vsel %vm272, %v8702, 0
      %v8783 = vsel %vm272, %v8703, 0
      %v8786 = vsel %vm272, %v8704, 0
      %v8789 = vsel %vm272, %v8705, 0
      %v8792 = vsel %vm272, %v8706, 0
      %v8795 = vsel %vm272, %v8707, 0
      %v8798 = vsel %vm272, %v8708, 0
      %v8801 = vsel %vm272, %v8709, 0
      %v8804 = vsel %vm272, %v8710, 0
      %v8807 = vsel %vm272, %v8711, 0
      %v8810 = vsel %vm272, %v8712, 0
      %v8813 = vsel %vm272, %v8713, 0
      %v8816 = vsel %vm272, %v8714, 0
      %v8819 = vsel %vm272, %v8715, 0
      %v8822 = vsel %vm272, %v8716, 0
      %v8825 = vsel %vm272, %v8717, 0
      %v8828 = vsel %vm272, %v8718, 0
      %v8831 = vsel %vm272, %v8719, 0
      %8833 = vmatpush.msra.mxu0 0.0
      %8834 = vmatpush.msra.mxu0 0.0
      %8835 = vmatpush.msra.mxu0 0.0
      %8836 = vmatpush.msra.mxu0 0.0
      %8837 = vmatpush.msra.mxu0 0.0
      %8838 = vmatpush.msra.mxu0 0.0
      %8839 = vmatpush.msra.mxu0 0.0
      %8840 = vmatpush.msra.mxu0 0.0
      %8841 = vmatpush.msra.mxu0 0.0
      %8842 = vmatpush.msra.mxu0 0.0
      %8843 = vmatpush.msra.mxu0 0.0
      %8844 = vmatpush.msra.mxu0 0.0
      %8845 = vmatpush.msra.mxu0 %v8724
      %8846 = vmatpush.msra.mxu0 %v8723
      %8847 = vmatpush.msra.mxu0 %v8722
      %8848 = vmatpush.msra.mxu0 %v8721
      %8849 = vmatmul.f32.gmra.mxu0 %v8726
      %v8850 = vpop.f32.mrf.mxu0
      %v8851 = vadd.f32 0.0, %v8850
      %8852 = vmatmul.f32.gmra.mxu0 %v8729
      %v8853 = vpop.f32.mrf.mxu0
      %v8854 = vadd.f32 0.0, %v8853
      %8855 = vmatmul.f32.gmra.mxu0 %v8732
      %v8856 = vpop.f32.mrf.mxu0
      %v8857 = vadd.f32 0.0, %v8856
      %8858 = vmatmul.f32.gmra.mxu0 %v8735
      %v8859 = vpop.f32.mrf.mxu0
      %v8860 = vadd.f32 0.0, %v8859
      %8861 = vmatmul.f32.gmra.mxu0 %v8738
      %v8862 = vpop.f32.mrf.mxu0
      %v8863 = vadd.f32 0.0, %v8862
      %8864 = vmatmul.f32.gmra.mxu0 %v8741
      %v8865 = vpop.f32.mrf.mxu0
      %v8866 = vadd.f32 0.0, %v8865
      %8867 = vmatmul.f32.gmra.mxu0 %v8744
      %v8868 = vpop.f32.mrf.mxu0
      %v8869 = vadd.f32 0.0, %v8868
      %8870 = vmatmul.f32.gmra.mxu0 %v8747
      %v8871 = vpop.f32.mrf.mxu0
      %v8872 = vadd.f32 0.0, %v8871
      %8873 = vmatmul.f32.gmra.mxu0 %v8750
      %v8874 = vpop.f32.mrf.mxu0
      %v8875 = vadd.f32 0.0, %v8874
      %8876 = vmatmul.f32.gmra.mxu0 %v8753
      %v8877 = vpop.f32.mrf.mxu0
      %v8878 = vadd.f32 0.0, %v8877
      %8879 = vmatmul.f32.gmra.mxu0 %v8756
      %v8880 = vpop.f32.mrf.mxu0
      %v8881 = vadd.f32 0.0, %v8880
      %8882 = vmatmul.f32.gmra.mxu0 %v8759
      %v8883 = vpop.f32.mrf.mxu0
      %v8884 = vadd.f32 0.0, %v8883
      %8885 = vmatmul.f32.gmra.mxu0 %v8762
      %v8886 = vpop.f32.mrf.mxu0
      %v8887 = vadd.f32 0.0, %v8886
      %8888 = vmatmul.f32.gmra.mxu0 %v8765
      %v8889 = vpop.f32.mrf.mxu0
      %v8890 = vadd.f32 0.0, %v8889
      %8891 = vmatmul.f32.gmra.mxu0 %v8768
      %v8892 = vpop.f32.mrf.mxu0
      %v8893 = vadd.f32 0.0, %v8892
      %8894 = vmatmul.f32.gmra.mxu0 %v8771
      %v8895 = vpop.f32.mrf.mxu0
      %v8896 = vadd.f32 0.0, %v8895
      %8897 = vmatmul.f32.gmra.mxu0 %v8774
      %v8898 = vpop.f32.mrf.mxu0
      %v8899 = vadd.f32 0.0, %v8898
      %8900 = vmatmul.f32.gmra.mxu0 %v8777
      %v8901 = vpop.f32.mrf.mxu0
      %v8902 = vadd.f32 0.0, %v8901
      %8903 = vmatmul.f32.gmra.mxu0 %v8780
      %v8904 = vpop.f32.mrf.mxu0
      %v8905 = vadd.f32 0.0, %v8904
      %8906 = vmatmul.f32.gmra.mxu0 %v8783
      %v8907 = vpop.f32.mrf.mxu0
      %v8908 = vadd.f32 0.0, %v8907
      %8909 = vmatmul.f32.gmra.mxu0 %v8786
      %v8910 = vpop.f32.mrf.mxu0
      %v8911 = vadd.f32 0.0, %v8910
      %8912 = vmatmul.f32.gmra.mxu0 %v8789
      %v8913 = vpop.f32.mrf.mxu0
      %v8914 = vadd.f32 0.0, %v8913
      %8915 = vmatmul.f32.gmra.mxu0 %v8792
      %v8916 = vpop.f32.mrf.mxu0
      %v8917 = vadd.f32 0.0, %v8916
      %8918 = vmatmul.f32.gmra.mxu0 %v8795
      %v8919 = vpop.f32.mrf.mxu0
      %v8920 = vadd.f32 0.0, %v8919
      %8921 = vmatmul.f32.gmra.mxu0 %v8798
      %v8922 = vpop.f32.mrf.mxu0
      %v8923 = vadd.f32 0.0, %v8922
      %8924 = vmatmul.f32.gmra.mxu0 %v8801
      %v8925 = vpop.f32.mrf.mxu0
      %v8926 = vadd.f32 0.0, %v8925
      %8927 = vmatmul.f32.gmra.mxu0 %v8804
      %v8928 = vpop.f32.mrf.mxu0
      %v8929 = vadd.f32 0.0, %v8928
      %8930 = vmatmul.f32.gmra.mxu0 %v8807
      %v8931 = vpop.f32.mrf.mxu0
      %v8932 = vadd.f32 0.0, %v8931
      %8933 = vmatmul.f32.gmra.mxu0 %v8810
      %v8934 = vpop.f32.mrf.mxu0
      %v8935 = vadd.f32 0.0, %v8934
      %8936 = vmatmul.f32.gmra.mxu0 %v8813
      %v8937 = vpop.f32.mrf.mxu0
      %v8938 = vadd.f32 0.0, %v8937
      %8939 = vmatmul.f32.gmra.mxu0 %v8816
      %v8940 = vpop.f32.mrf.mxu0
      %v8941 = vadd.f32 0.0, %v8940
      %8942 = vmatmul.f32.gmra.mxu0 %v8819
      %v8943 = vpop.f32.mrf.mxu0
      %v8944 = vadd.f32 0.0, %v8943
      %8945 = vmatmul.f32.gmra.mxu0 %v8822
      %v8946 = vpop.f32.mrf.mxu0
      %v8947 = vadd.f32 0.0, %v8946
      %8948 = vmatmul.f32.gmra.mxu0 %v8825
      %v8949 = vpop.f32.mrf.mxu0
      %v8950 = vadd.f32 0.0, %v8949
      %8951 = vmatmul.f32.gmra.mxu0 %v8828
      %v8952 = vpop.f32.mrf.mxu0
      %v8953 = vadd.f32 0.0, %v8952
      %8954 = vmatmul.f32.gmra.mxu0 %v8831
      %v8955 = vpop.f32.mrf.mxu0
      %v8956 = vadd.f32 0.0, %v8955
      %8957 = vdwg.mxu0
      %v8958 = vadd.f32 %v7957, %v8851
      %v8959 = vadd.f32 %v7960, %v8854
      %v8960 = vadd.f32 %v7963, %v8857
      %v8961 = vadd.f32 %v7966, %v8860
      %v8962 = vadd.f32 %v7969, %v8863
      %v8963 = vadd.f32 %v7972, %v8866
      %v8964 = vadd.f32 %v7975, %v8869
      %v8965 = vadd.f32 %v7978, %v8872
      %v8966 = vadd.f32 %v7981, %v8875
      %v8967 = vadd.f32 %v7984, %v8878
      %v8968 = vadd.f32 %v7987, %v8881
      %v8969 = vadd.f32 %v7990, %v8884
      %v8970 = vadd.f32 %v7993, %v8887
      %v8971 = vadd.f32 %v7996, %v8890
      %v8972 = vadd.f32 %v7999, %v8893
      %v8973 = vadd.f32 %v8002, %v8896
      %v8974 = vadd.f32 %v8005, %v8899
      %v8975 = vadd.f32 %v8008, %v8902
      %v8976 = vadd.f32 %v8011, %v8905
      %v8977 = vadd.f32 %v8014, %v8908
      %v8978 = vadd.f32 %v8017, %v8911
      %v8979 = vadd.f32 %v8020, %v8914
      %v8980 = vadd.f32 %v8023, %v8917
      %v8981 = vadd.f32 %v8026, %v8920
      %v8982 = vadd.f32 %v8029, %v8923
      %v8983 = vadd.f32 %v8032, %v8926
      %v8984 = vadd.f32 %v8035, %v8929
      %v8985 = vadd.f32 %v8038, %v8932
      %v8986 = vadd.f32 %v8041, %v8935
      %v8987 = vadd.f32 %v8044, %v8938
      %v8988 = vadd.f32 %v8047, %v8941
      %v8989 = vadd.f32 %v8050, %v8944
      %v8990 = vadd.f32 %v8053, %v8947
      %v8991 = vadd.f32 %v8056, %v8950
      %v8992 = vadd.f32 %v8059, %v8953
      %v8993 = vadd.f32 %v8062, %v8956
      %v8994 = vmul.f32 %v3074, %v8338
      %v8995 = vmul.f32 %v3079, %v8339
      %v8996 = vmul.f32 %v3084, %v8340
      %v8997 = vmul.f32 %v3089, %v8341
      %v8998 = vmul.f32 %v3094, %v8342
      %v8999 = vmul.f32 %v3099, %v8343
      %v9000 = vmul.f32 %v3104, %v8344
      %v9001 = vmul.f32 %v3109, %v8345
      %v9002 = vmul.f32 %v3114, %v8346
      %v9003 = vmul.f32 %v3119, %v8347
      %v9004 = vmul.f32 %v3124, %v8348
      %v9005 = vmul.f32 %v3129, %v8349
      %v9006 = vmul.f32 %v3134, %v8350
      %v9007 = vmul.f32 %v3139, %v8351
      %v9008 = vmul.f32 %v3144, %v8352
      %v9009 = vmul.f32 %v3149, %v8353
      %v9010 = vmul.f32 %v3154, %v8354
      %v9011 = vmul.f32 %v3159, %v8355
      %v9012 = vmul.f32 %v3164, %v8356
      %v9013 = vmul.f32 %v3169, %v8357
      %v9014 = vmul.f32 %v3174, %v8358
      %v9015 = vmul.f32 %v3179, %v8359
      %v9016 = vmul.f32 %v3184, %v8360
      %v9017 = vmul.f32 %v3189, %v8361
      %v9018 = vmul.f32 %v3194, %v8362
      %v9019 = vmul.f32 %v3199, %v8363
      %v9020 = vmul.f32 %v3204, %v8364
      %v9021 = vmul.f32 %v3209, %v8365
      %v9022 = vmul.f32 %v3214, %v8366
      %v9023 = vmul.f32 %v3219, %v8367
      %v9024 = vmul.f32 %v3224, %v8368
      %v9025 = vmul.f32 %v3229, %v8369
      %v9026 = vmul.f32 %v3234, %v8370
      %v9027 = vmul.f32 %v3239, %v8371
      %v9028 = vmul.f32 %v3244, %v8372
      %v9029 = vmul.f32 %v3249, %v8373
      %v9030 = vadd.f32 %v8648, %v8994
      %v9031 = vadd.f32 %v8649, %v8995
      %v9032 = vadd.f32 %v8650, %v8996
      %v9033 = vadd.f32 %v8651, %v8997
      %v9034 = vadd.f32 %v8652, %v8998
      %v9035 = vadd.f32 %v8653, %v8999
      %v9036 = vadd.f32 %v8654, %v9000
      %v9037 = vadd.f32 %v8655, %v9001
      %v9038 = vadd.f32 %v8656, %v9002
      %v9039 = vadd.f32 %v8657, %v9003
      %v9040 = vadd.f32 %v8658, %v9004
      %v9041 = vadd.f32 %v8659, %v9005
      %v9042 = vadd.f32 %v8660, %v9006
      %v9043 = vadd.f32 %v8661, %v9007
      %v9044 = vadd.f32 %v8662, %v9008
      %v9045 = vadd.f32 %v8663, %v9009
      %v9046 = vadd.f32 %v8664, %v9010
      %v9047 = vadd.f32 %v8665, %v9011
      %v9048 = vadd.f32 %v8666, %v9012
      %v9049 = vadd.f32 %v8667, %v9013
      %v9050 = vadd.f32 %v8668, %v9014
      %v9051 = vadd.f32 %v8669, %v9015
      %v9052 = vadd.f32 %v8670, %v9016
      %v9053 = vadd.f32 %v8671, %v9017
      %v9054 = vadd.f32 %v8672, %v9018
      %v9055 = vadd.f32 %v8673, %v9019
      %v9056 = vadd.f32 %v8674, %v9020
      %v9057 = vadd.f32 %v8675, %v9021
      %v9058 = vadd.f32 %v8676, %v9022
      %v9059 = vadd.f32 %v8677, %v9023
      %v9060 = vadd.f32 %v8678, %v9024
      %v9061 = vadd.f32 %v8679, %v9025
      %v9062 = vadd.f32 %v8680, %v9026
      %v9063 = vadd.f32 %v8681, %v9027
      %v9064 = vadd.f32 %v8682, %v9028
      %v9065 = vadd.f32 %v8683, %v9029
      %v9066 = vmul.f32 %v3325, %v8958
      %v9067 = vmul.f32 %v3329, %v8959
      %v9068 = vmul.f32 %v3333, %v8960
      %v9069 = vmul.f32 %v3337, %v8961
      %v9070 = vmul.f32 %v3341, %v8962
      %v9071 = vmul.f32 %v3345, %v8963
      %v9072 = vmul.f32 %v3349, %v8964
      %v9073 = vmul.f32 %v3353, %v8965
      %v9074 = vmul.f32 %v3357, %v8966
      %v9075 = vmul.f32 %v3361, %v8967
      %v9076 = vmul.f32 %v3365, %v8968
      %v9077 = vmul.f32 %v3369, %v8969
      %v9078 = vmul.f32 %v3373, %v8970
      %v9079 = vmul.f32 %v3377, %v8971
      %v9080 = vmul.f32 %v3381, %v8972
      %v9081 = vmul.f32 %v3385, %v8973
      %v9082 = vmul.f32 %v3389, %v8974
      %v9083 = vmul.f32 %v3393, %v8975
      %v9084 = vmul.f32 %v3397, %v8976
      %v9085 = vmul.f32 %v3401, %v8977
      %v9086 = vmul.f32 %v3405, %v8978
      %v9087 = vmul.f32 %v3409, %v8979
      %v9088 = vmul.f32 %v3413, %v8980
      %v9089 = vmul.f32 %v3417, %v8981
      %v9090 = vmul.f32 %v3421, %v8982
      %v9091 = vmul.f32 %v3425, %v8983
      %v9092 = vmul.f32 %v3429, %v8984
      %v9093 = vmul.f32 %v3433, %v8985
      %v9094 = vmul.f32 %v3437, %v8986
      %v9095 = vmul.f32 %v3441, %v8987
      %v9096 = vmul.f32 %v3445, %v8988
      %v9097 = vmul.f32 %v3449, %v8989
      %v9098 = vmul.f32 %v3453, %v8990
      %v9099 = vmul.f32 %v3457, %v8991
      %v9100 = vmul.f32 %v3461, %v8992
      %v9101 = vmul.f32 %v3465, %v8993
      %v9102 = vadd.f32 %v9030, %v9066
      %v9103 = vadd.f32 %v9031, %v9067
      %v9104 = vadd.f32 %v9032, %v9068
      %v9105 = vadd.f32 %v9033, %v9069
      %v9106 = vadd.f32 %v9034, %v9070
      %v9107 = vadd.f32 %v9035, %v9071
      %v9108 = vadd.f32 %v9036, %v9072
      %v9109 = vadd.f32 %v9037, %v9073
      %v9110 = vadd.f32 %v9038, %v9074
      %v9111 = vadd.f32 %v9039, %v9075
      %v9112 = vadd.f32 %v9040, %v9076
      %v9113 = vadd.f32 %v9041, %v9077
      %v9114 = vadd.f32 %v9042, %v9078
      %v9115 = vadd.f32 %v9043, %v9079
      %v9116 = vadd.f32 %v9044, %v9080
      %v9117 = vadd.f32 %v9045, %v9081
      %v9118 = vadd.f32 %v9046, %v9082
      %v9119 = vadd.f32 %v9047, %v9083
      %v9120 = vadd.f32 %v9048, %v9084
      %v9121 = vadd.f32 %v9049, %v9085
      %v9122 = vadd.f32 %v9050, %v9086
      %v9123 = vadd.f32 %v9051, %v9087
      %v9124 = vadd.f32 %v9052, %v9088
      %v9125 = vadd.f32 %v9053, %v9089
      %v9126 = vadd.f32 %v9054, %v9090
      %v9127 = vadd.f32 %v9055, %v9091
      %v9128 = vadd.f32 %v9056, %v9092
      %v9129 = vadd.f32 %v9057, %v9093
      %v9130 = vadd.f32 %v9058, %v9094
      %v9131 = vadd.f32 %v9059, %v9095
      %v9132 = vadd.f32 %v9060, %v9096
      %v9133 = vadd.f32 %v9061, %v9097
      %v9134 = vadd.f32 %v9062, %v9098
      %v9135 = vadd.f32 %v9063, %v9099
      %v9136 = vadd.f32 %v9064, %v9100
      %v9137 = vadd.f32 %v9065, %v9101
      %v9138 = vperm.slane %v6555, 0
      %v9139 = vadd.f32 %v9102, %v9138
      %v9140 = vadd.f32 %v9103, %v9138
      %v9141 = vadd.f32 %v9104, %v9138
      %v9142 = vadd.f32 %v9105, %v9138
      %v9143 = vadd.f32 %v9106, %v9138
      %v9144 = vadd.f32 %v9107, %v9138
      %v9145 = vadd.f32 %v9108, %v9138
      %v9146 = vadd.f32 %v9109, %v9138
      %v9147 = vadd.f32 %v9110, %v9138
      %v9148 = vadd.f32 %v9111, %v9138
      %v9149 = vadd.f32 %v9112, %v9138
      %v9150 = vadd.f32 %v9113, %v9138
      %v9151 = vadd.f32 %v9114, %v9138
      %v9152 = vadd.f32 %v9115, %v9138
      %v9153 = vadd.f32 %v9116, %v9138
      %v9154 = vadd.f32 %v9117, %v9138
      %v9155 = vadd.f32 %v9118, %v9138
      %v9156 = vadd.f32 %v9119, %v9138
      %v9157 = vadd.f32 %v9120, %v9138
      %v9158 = vadd.f32 %v9121, %v9138
      %v9159 = vadd.f32 %v9122, %v9138
      %v9160 = vadd.f32 %v9123, %v9138
      %v9161 = vadd.f32 %v9124, %v9138
      %v9162 = vadd.f32 %v9125, %v9138
      %v9163 = vadd.f32 %v9126, %v9138
      %v9164 = vadd.f32 %v9127, %v9138
      %v9165 = vadd.f32 %v9128, %v9138
      %v9166 = vadd.f32 %v9129, %v9138
      %v9167 = vadd.f32 %v9130, %v9138
      %v9168 = vadd.f32 %v9131, %v9138
      %v9169 = vadd.f32 %v9132, %v9138
      %v9170 = vadd.f32 %v9133, %v9138
      %v9171 = vadd.f32 %v9134, %v9138
      %v9172 = vadd.f32 %v9135, %v9138
      %v9173 = vadd.f32 %v9136, %v9138
      %v9174 = vadd.f32 %v9137, %v9138
      %v9175 = vld [vmem:[#allocation3 + $0x20] sm:$0xff]
      %v9176 = vld [vmem:[#allocation3 + $0x28] sm:$0xff]
      %v9177 = vld [vmem:[#allocation3 + $0x30] sm:$0xff]
      %v9178 = vld [vmem:[#allocation3 + $0x38] sm:$0xff]
      %v9179 = vld [vmem:[#allocation3 + $0x40] sm:$0xff]
      %v9180 = vld [vmem:[#allocation3 + $0x48] sm:$0xff]
      %v9181 = vld [vmem:[#allocation3 + $0x50] sm:$0xff]
      %v9182 = vld [vmem:[#allocation3 + $0x58] sm:$0xff]
      %v9183 = vld [vmem:[#allocation3 + $0x60] sm:$0xff]
      %v9184 = vld [vmem:[#allocation3 + $0x68] sm:$0xff]
      %v9185 = vld [vmem:[#allocation3 + $0x70] sm:$0xff]
      %v9186 = vld [vmem:[#allocation3 + $0x78] sm:$0xff]
      %v9187 = vld [vmem:[#allocation3 + $0x80] sm:$0xff]
      %v9188 = vld [vmem:[#allocation3 + $0x88] sm:$0xff]
      %v9189 = vld [vmem:[#allocation3 + $0x90] sm:$0xff]
      %v9190 = vld [vmem:[#allocation3 + $0x98] sm:$0xff]
      %v9191 = vld [vmem:[#allocation3 + $0xa0] sm:$0xff]
      %v9192 = vld [vmem:[#allocation3 + $0xa8] sm:$0xff]
      %v9193 = vld [vmem:[#allocation3 + $0xb0] sm:$0xff]
      %v9194 = vld [vmem:[#allocation3 + $0xb8] sm:$0xff]
      %v9195 = vld [vmem:[#allocation3 + $0xc0] sm:$0xff]
      %v9196 = vld [vmem:[#allocation3 + $0xc8] sm:$0xff]
      %v9197 = vld [vmem:[#allocation3 + $0xd0] sm:$0xff]
      %v9198 = vld [vmem:[#allocation3 + $0xd8] sm:$0xff]
      %v9199 = vld [vmem:[#allocation3 + $0xe0] sm:$0xff]
      %v9200 = vld [vmem:[#allocation3 + $0xe8] sm:$0xff]
      %v9201 = vld [vmem:[#allocation3 + $0xf0] sm:$0xff]
      %v9202 = vld [vmem:[#allocation3 + $0xf8] sm:$0xff]
      %v9203 = vld [vmem:[#allocation3 + $0x100] sm:$0xff]
      %v9204 = vld [vmem:[#allocation3 + $0x108] sm:$0xff]
      %v9205 = vld [vmem:[#allocation3 + $0x110] sm:$0xff]
      %v9206 = vld [vmem:[#allocation3 + $0x118] sm:$0xff]
      %v9207 = vld [vmem:[#allocation3 + $0x120] sm:$0xff]
      %v9208 = vld [vmem:[#allocation3 + $0x128] sm:$0xff]
      %v9209 = vld [vmem:[#allocation3 + $0x130] sm:$0xff]
      %v9210 = vld [vmem:[#allocation3 + $0x138] sm:$0xff]
      %v9211 = vadd.f32 %v9139, %v9175
      %v9212 = vadd.f32 %v9140, %v9176
      %v9213 = vadd.f32 %v9141, %v9177
      %v9214 = vadd.f32 %v9142, %v9178
      %v9215 = vadd.f32 %v9143, %v9179
      %v9216 = vadd.f32 %v9144, %v9180
      %v9217 = vadd.f32 %v9145, %v9181
      %v9218 = vadd.f32 %v9146, %v9182
      %v9219 = vadd.f32 %v9147, %v9183
      %v9220 = vadd.f32 %v9148, %v9184
      %v9221 = vadd.f32 %v9149, %v9185
      %v9222 = vadd.f32 %v9150, %v9186
      %v9223 = vadd.f32 %v9151, %v9187
      %v9224 = vadd.f32 %v9152, %v9188
      %v9225 = vadd.f32 %v9153, %v9189
      %v9226 = vadd.f32 %v9154, %v9190
      %v9227 = vadd.f32 %v9155, %v9191
      %v9228 = vadd.f32 %v9156, %v9192
      %v9229 = vadd.f32 %v9157, %v9193
      %v9230 = vadd.f32 %v9158, %v9194
      %v9231 = vadd.f32 %v9159, %v9195
      %v9232 = vadd.f32 %v9160, %v9196
      %v9233 = vadd.f32 %v9161, %v9197
      %v9234 = vadd.f32 %v9162, %v9198
      %v9235 = vadd.f32 %v9163, %v9199
      %v9236 = vadd.f32 %v9164, %v9200
      %v9237 = vadd.f32 %v9165, %v9201
      %v9238 = vadd.f32 %v9166, %v9202
      %v9239 = vadd.f32 %v9167, %v9203
      %v9240 = vadd.f32 %v9168, %v9204
      %v9241 = vadd.f32 %v9169, %v9205
      %v9242 = vadd.f32 %v9170, %v9206
      %v9243 = vadd.f32 %v9171, %v9207
      %v9244 = vadd.f32 %v9172, %v9208
      %v9245 = vadd.f32 %v9173, %v9209
      %v9246 = vadd.f32 %v9174, %v9210
      %v9247 = vmax.f32 %v9211, 0.0
      %v9248 = vmax.f32 %v9212, 0.0
      %v9249 = vmax.f32 %v9213, 0.0
      %v9250 = vmax.f32 %v9214, 0.0
      %v9251 = vmax.f32 %v9215, 0.0
      %v9252 = vmax.f32 %v9216, 0.0
      %v9253 = vmax.f32 %v9217, 0.0
      %v9254 = vmax.f32 %v9218, 0.0
      %v9255 = vmax.f32 %v9219, 0.0
      %v9256 = vmax.f32 %v9220, 0.0
      %v9257 = vmax.f32 %v9221, 0.0
      %v9258 = vmax.f32 %v9222, 0.0
      %v9259 = vmax.f32 %v9223, 0.0
      %v9260 = vmax.f32 %v9224, 0.0
      %v9261 = vmax.f32 %v9225, 0.0
      %v9262 = vmax.f32 %v9226, 0.0
      %v9263 = vmax.f32 %v9227, 0.0
      %v9264 = vmax.f32 %v9228, 0.0
      %v9265 = vmax.f32 %v9229, 0.0
      %v9266 = vmax.f32 %v9230, 0.0
      %v9267 = vmax.f32 %v9231, 0.0
      %v9268 = vmax.f32 %v9232, 0.0
      %v9269 = vmax.f32 %v9233, 0.0
      %v9270 = vmax.f32 %v9234, 0.0
      %v9271 = vmax.f32 %v9235, 0.0
      %v9272 = vmax.f32 %v9236, 0.0
      %v9273 = vmax.f32 %v9237, 0.0
      %v9274 = vmax.f32 %v9238, 0.0
      %v9275 = vmax.f32 %v9239, 0.0
      %v9276 = vmax.f32 %v9240, 0.0
      %v9277 = vmax.f32 %v9241, 0.0
      %v9278 = vmax.f32 %v9242, 0.0
      %v9279 = vmax.f32 %v9243, 0.0
      %v9280 = vmax.f32 %v9244, 0.0
      %v9281 = vmax.f32 %v9245, 0.0
      %v9282 = vmax.f32 %v9246, 0.0
      %v9283 = vld [vmem:[%s6] sm:$0xff]
      %v9285 = vsel %vm272, %v9283, 0
      %v9288 = vsel %vm272, %v9247, 0
      %v9291 = vsel %vm272, %v9248, 0
      %v9294 = vsel %vm272, %v9249, 0
      %v9297 = vsel %vm272, %v9250, 0
      %v9300 = vsel %vm272, %v9251, 0
      %v9303 = vsel %vm272, %v9252, 0
      %v9306 = vsel %vm272, %v9253, 0
      %v9309 = vsel %vm272, %v9254, 0
      %v9312 = vsel %vm272, %v9255, 0
      %v9315 = vsel %vm272, %v9256, 0
      %v9318 = vsel %vm272, %v9257, 0
      %v9321 = vsel %vm272, %v9258, 0
      %v9324 = vsel %vm272, %v9259, 0
      %v9327 = vsel %vm272, %v9260, 0
      %v9330 = vsel %vm272, %v9261, 0
      %v9333 = vsel %vm272, %v9262, 0
      %v9336 = vsel %vm272, %v9263, 0
      %v9339 = vsel %vm272, %v9264, 0
      %v9342 = vsel %vm272, %v9265, 0
      %v9345 = vsel %vm272, %v9266, 0
      %v9348 = vsel %vm272, %v9267, 0
      %v9351 = vsel %vm272, %v9268, 0
      %v9354 = vsel %vm272, %v9269, 0
      %v9357 = vsel %vm272, %v9270, 0
      %v9360 = vsel %vm272, %v9271, 0
      %v9363 = vsel %vm272, %v9272, 0
      %v9366 = vsel %vm272, %v9273, 0
      %v9369 = vsel %vm272, %v9274, 0
      %v9372 = vsel %vm272, %v9275, 0
      %v9375 = vsel %vm272, %v9276, 0
      %v9378 = vsel %vm272, %v9277, 0
      %v9381 = vsel %vm272, %v9278, 0
      %v9384 = vsel %vm272, %v9279, 0
      %v9387 = vsel %vm272, %v9280, 0
      %v9390 = vsel %vm272, %v9281, 0
      %v9393 = vsel %vm272, %v9282, 0
      %9395 = vmatpush.xpose.msra.mxu0 %v9333
      %9396 = vmatpush.xpose.msra.mxu0 %v9330
      %9397 = vmatpush.xpose.msra.mxu0 %v9327
      %9398 = vmatpush.xpose.msra.mxu0 %v9324
      %9399 = vmatpush.xpose.msra.mxu0 %v9321
      %9400 = vmatpush.xpose.msra.mxu0 %v9318
      %9401 = vmatpush.xpose.msra.mxu0 %v9315
      %9402 = vmatpush.xpose.msra.mxu0 %v9312
      %9403 = vmatpush.xpose.msra.mxu0 %v9309
      %9404 = vmatpush.xpose.msra.mxu0 %v9306
      %9405 = vmatpush.xpose.msra.mxu0 %v9303
      %9406 = vmatpush.xpose.msra.mxu0 %v9300
      %9407 = vmatpush.xpose.msra.mxu0 %v9297
      %9408 = vmatpush.xpose.msra.mxu0 %v9294
      %9409 = vmatpush.xpose.msra.mxu0 %v9291
      %9410 = vmatpush.xpose.msra.mxu0 %v9288
      %9411 = vmatmul.f32.gmra.mxu0 %v9285
      %v9412 = vpop.f32.mrf.mxu0
      %v9413 = vadd.f32 0.0, %v9412
      %9414 = vdwg.mxu0
      %9415 = vmatpush.xpose.msra.mxu0 %v9381
      %9416 = vmatpush.xpose.msra.mxu0 %v9378
      %9417 = vmatpush.xpose.msra.mxu0 %v9375
      %9418 = vmatpush.xpose.msra.mxu0 %v9372
      %9419 = vmatpush.xpose.msra.mxu0 %v9369
      %9420 = vmatpush.xpose.msra.mxu0 %v9366
      %9421 = vmatpush.xpose.msra.mxu0 %v9363
      %9422 = vmatpush.xpose.msra.mxu0 %v9360
      %9423 = vmatpush.xpose.msra.mxu0 %v9357
      %9424 = vmatpush.xpose.msra.mxu0 %v9354
      %9425 = vmatpush.xpose.msra.mxu0 %v9351
      %9426 = vmatpush.xpose.msra.mxu0 %v9348
      %9427 = vmatpush.xpose.msra.mxu0 %v9345
      %9428 = vmatpush.xpose.msra.mxu0 %v9342
      %9429 = vmatpush.xpose.msra.mxu0 %v9339
      %9430 = vmatpush.xpose.msra.mxu0 %v9336
      %9431 = vmatmul.f32.gmra.mxu0 %v9285
      %v9432 = vpop.f32.mrf.mxu0
      %v9433 = vadd.f32 0.0, %v9432
      %9434 = vdwg.mxu0
      %9435 = vmatpush.xpose.msra.mxu0 0.0
      %9436 = vmatpush.xpose.msra.mxu0 0.0
      %9437 = vmatpush.xpose.msra.mxu0 0.0
      %9438 = vmatpush.xpose.msra.mxu0 0.0
      %9439 = vmatpush.xpose.msra.mxu0 0.0
      %9440 = vmatpush.xpose.msra.mxu0 0.0
      %9441 = vmatpush.xpose.msra.mxu0 0.0
      %9442 = vmatpush.xpose.msra.mxu0 0.0
      %9443 = vmatpush.xpose.msra.mxu0 0.0
      %9444 = vmatpush.xpose.msra.mxu0 0.0
      %9445 = vmatpush.xpose.msra.mxu0 0.0
      %9446 = vmatpush.xpose.msra.mxu0 0.0
      %9447 = vmatpush.xpose.msra.mxu0 %v9393
      %9448 = vmatpush.xpose.msra.mxu0 %v9390
      %9449 = vmatpush.xpose.msra.mxu0 %v9387
      %9450 = vmatpush.xpose.msra.mxu0 %v9384
      %9451 = vmatmul.f32.gmra.mxu0 %v9285
      %v9452 = vpop.f32.mrf.mxu0
      %v9453 = vadd.f32 0.0, %v9452
      %9454 = vdwg.mxu0
      %9455 = vst [vmem:[%s262] sm:$0xff] %v9413
      %9456 = vst [vmem:[%s262 + $0x8] sm:$0xff] %v9433
      %9457 = vst.msk [vmem:[%s262 + $0x10] sm:$0xff] %vm272, %v9453
      %p9458 = scmp.lt.s32.totalorder %s26, 1
      %s9459 = scalar_select %p9458, %s26, 1
      %s9460 = smul.addr %s9459, 3
      %s9461 = smul.addr %s9460, 8
      %s9462 = scalar_lea.vmem %s7, %s9461
      // Predicated region
      $region45: #{board_wrapper_forward.1} parent=43 // pred_check
        %p9463 = pneg %p175
      $region46: #{board_wrapper_forward.1} parent=43 // pred_check_branch
        %9465 = sbr.rel (%p9463) target = $region48
      $region47: #{board_wrapper_forward.1} parent=43 // pred_region
        _
      $region48: #{board_wrapper_forward.1} parent=43 // pred_fallthru
        _
    $region44: #{board_wrapper_forward.1} parent=5 // pred_fallthru
      _
    %p9466 = scmp.le.s32.totalorder 2, %s21
    // Predicated region
    $region49: #{board_wrapper_forward.1} parent=5 // pred_check
      %p9467 = pneg %p9466
    $region50: #{board_wrapper_forward.1} parent=5 // pred_check_branch
      %9469 = sbr.rel (%p9467) target = $region52
    $region51: #{board_wrapper_forward.1} parent=5 // pred_region
      %s9470 = ssub.s32 %s21, 2
      // Predicated region
      $region53: #{board_wrapper_forward.1} parent=51 // pred_check
        %p9471 = pneg %p181
      $region54: #{board_wrapper_forward.1} parent=51 // pred_check_branch
        %9473 = sbr.rel (%p9471) target = $region56
      $region55: #{board_wrapper_forward.1} parent=51 // pred_region
        %p9474 = scmp.lt.s32.totalorder %s27, 1
        %s9475 = scalar_select %p9474, %s27, 1
        %s9476 = smul.addr %s9475, 3
        %s9477 = smul.addr %s9476, 8
        %s9478 = scalar_lea.vmem %s7, %s9477
      $region56: #{board_wrapper_forward.1} parent=51 // pred_fallthru
        _
    $region52: #{board_wrapper_forward.1} parent=5 // pred_fallthru
      _
  $region6: #{board_wrapper_forward.1} parent=0 // loop_footer
    %s25 = sadd.s32 1, %s21
  $region7: #{board_wrapper_forward.1} parent=0 // loop_footer_branch
    %20 = sbr.rel target = $region3
  $region8: #{board_wrapper_forward.1} parent=0 // loop_exit
    _

</llo_original>
